<compile_context>
chip_gen: v7x
topology: tpu7x:2x2x1
jax: 0.10.0
libtpu: 0.0.40
codegen_flags: <defaults>
</compile_context>

<pallas_src>
import functools

import jax
import jax.numpy as jnp
from jax.experimental import pallas as pl
from jax.experimental.pallas import tpu as pltpu


def _round_up(v, m):
    return ((v + m - 1) // m) * m


def _conv3x3s2_kernel(main_ref, halo_ref, w_ref, b_ref, o_ref):
    # main_ref: (4, th, WP, Cin)  4 space-to-batch phases, rows [i*th, i*th+th)
    # halo_ref: (2, 1, WP, Cin)   phase row i*th+th of the two even-row phases
    # w_ref:    (3, 3, Cin, tn)   (kh, kw, cin, cout) weight, VMEM resident
    # b_ref:    (1, tn) f32
    # o_ref:    (1, th, Wo, tn)
    th = main_ref.shape[1]
    cin = main_ref.shape[3]
    wo = o_ref.shape[2]
    tn = o_ref.shape[3]

    acc = jnp.zeros((th * wo, tn), dtype=jnp.float32)
    for kh in range(3):
        for kw in range(3):
            p = 2 * (kh % 2) + (kw % 2)          # phase plane for this tap
            rows = main_ref[p]                   # (th, WP, Cin)
            if kh == 2:                          # needs phase rows shifted by +1
                halo_row = halo_ref[kw % 2, 0]   # (WP, Cin)
                if th > 1:
                    rows = jnp.concatenate([rows[1:], halo_row[None]], axis=0)
                else:
                    rows = halo_row[None]
            tap = rows[:, kw // 2: kw // 2 + wo, :]          # (th, Wo, Cin)
            lhs = tap.reshape(th * wo, cin)
            acc += jnp.dot(lhs, w_ref[kh, kw],
                           preferred_element_type=jnp.float32,
                           precision=jax.lax.Precision.HIGHEST)
    out = (acc + b_ref[...]).astype(o_ref.dtype)             # bias folded in store
    o_ref[...] = out.reshape(1, th, wo, tn)


@functools.partial(jax.jit, static_argnames=("compute_dtype",))
def downsample_forward(x, weight, bias, *, compute_dtype=None):
    """Conv2d(kernel_size=3, stride=2, padding=1) forward.

    x:      [B, Cin, H, W]   (NCHW, as in the PyTorch module)
    weight: [Cout, Cin, 3, 3] (PyTorch OIHW)
    bias:   [Cout]
    returns [B, Cout, Ho, Wo],  Ho = (H-1)//2 + 1, Wo = (W-1)//2 + 1
    """
    B, Cin, H, W = x.shape
    Cout = weight.shape[0]
    Ho = (H - 1) // 2 + 1
    Wo = (W - 1) // 2 + 1
    if compute_dtype is None:
        compute_dtype = x.dtype
    isz = jnp.dtype(compute_dtype).itemsize
    osz = jnp.dtype(x.dtype).itemsize

    # ---- output-channel tiling (lane-dense; resident weight when it fits) ----
    Npad = _round_up(Cout, 128)
    if Npad <= 1024:
        tn = Npad                      # single N block -> weight DMA'd once, held
    else:
        tn = 512 if Npad % 512 == 0 else (256 if Npad % 256 == 0 else 128)

    # ---- output-row tiling: target ~512 matmul rows/step, explicit VMEM budget ----
    WP = Wo + 1
    th = max(1, min(Ho, 512 // max(Wo, 1)))

    def vmem_est(th_):
        main = 4 * th_ * WP * Cin * isz
        halo = 2 * WP * Cin * isz
        wgt = 9 * Cin * tn * isz
        out = th_ * Wo * tn * osz
        acc = th_ * Wo * tn * 4
        return 2 * (main + halo + out) + 2 * wgt + acc + 2 * tn * 4

    while th > 1 and vmem_est(th) > 24 * 1024 * 1024:   # keep well inside v7x 64MiB
        th = max(1, th // 2)

    Ho_pad = _round_up(Ho, th)
    HP = Ho_pad + 1
    nh = Ho_pad // th
    nn = Npad // tn

    # ---- 2x2 space-to-batch phase split (pure layout, ~1x data, cast EARLY) ----
    xh = jnp.transpose(x, (0, 2, 3, 1)).astype(compute_dtype)          # NHWC, bf16/f32
    xp = jnp.pad(xh, ((0, 0), (1, 2 * HP - 1 - H), (1, 2 * WP - 1 - W), (0, 0)))
    # ph[4*b + 2*hp + wp, i, j, c] == xp[b, 2*i + hp, 2*j + wp, c]
    ph = xp.reshape(B, HP, 2, WP, 2, Cin)
    ph = jnp.transpose(ph, (0, 2, 4, 1, 3, 5)).reshape(B * 4, HP, WP, Cin)

    # PyTorch OIHW -> (kh, kw, cin, cout), Cout padded to Npad lanes.
    w4 = jnp.transpose(weight, (2, 3, 1, 0)).astype(compute_dtype)
    w4 = jnp.pad(w4, ((0, 0), (0, 0), (0, 0), (0, Npad - Cout)))
    b2 = jnp.pad(bias.astype(jnp.float32), (0, Npad - Cout)).reshape(1, Npad)

    grid = (B, nh, nn)
    main_spec = pl.BlockSpec((4, th, WP, Cin), lambda b, i, n: (b, i, 0, 0))
    halo_spec = pl.BlockSpec((2, 1, WP, Cin),
                             lambda b, i, n: (2 * b, i * th + th, 0, 0))
    w_spec = pl.BlockSpec((3, 3, Cin, tn), lambda b, i, n: (0, 0, 0, n))
    b_spec = pl.BlockSpec((1, tn), lambda b, i, n: (0, n))
    o_spec = pl.BlockSpec((1, th, Wo, tn), lambda b, i, n: (b, i, 0, n))

    cost = pl.CostEstimate(
        flops=2 * B * Ho_pad * Wo * 9 * Cin * Npad,
        transcendentals=0,
        bytes_accessed=(ph.size * isz + w4.size * isz * nn
                        + B * Ho_pad * Wo * Npad * osz + Npad * 4),
    )

    out = pl.pallas_call(
        _conv3x3s2_kernel,
        out_shape=jax.ShapeDtypeStruct((B, Ho_pad, Wo, Npad), x.dtype),
        grid=grid,
        in_specs=[main_spec, halo_spec, w_spec, b_spec],
        out_specs=o_spec,
        compiler_params=pltpu.CompilerParams(
            dimension_semantics=("parallel", "parallel", "parallel"),
            vmem_limit_bytes=int(min(48 * 1024 * 1024,
                                     max(16 * 1024 * 1024,
                                         2 * vmem_est(th) + (4 << 20)))),
        ),
        cost_estimate=cost,
    )(ph, ph, w4, b2)

    out = out[:, :Ho, :, :Cout]                       # drop row/lane padding
    return jnp.transpose(out, (0, 3, 1, 2))           # NHWC -> NCHW


def reference_downsample(x, weight, bias):
    out = jax.lax.conv_general_dilated(
        x, weight, window_strides=(2, 2), padding=((1, 1), (1, 1)),
        dimension_numbers=("NCHW", "OIHW", "NCHW"),
        precision=jax.lax.Precision.HIGHEST)
    return out + bias[None, :, None, None]


if __name__ == "__main__":
    # Small shapes consistent with the module: Conv2d(4 -> 8, k=3, s=2, p=1).
    B, Cin, Cout, H, W = 2, 4, 8, 16, 16
    key = jax.random.PRNGKey(0)
    kx, kw, kb = jax.random.split(key, 3)

    x = jax.random.normal(kx, (B, Cin, H, W), dtype=jnp.float32)
    fan_in = Cin * 3 * 3
    w = jax.random.normal(kw, (Cout, Cin, 3, 3), dtype=jnp.float32) / (fan_in ** 0.5)
    b = 0.1 * jax.random.normal(kb, (Cout,), dtype=jnp.float32)

    ref = reference_downsample(x, w, b)

    out_f32 = jax.block_until_ready(
        downsample_forward(x, w, b, compute_dtype=jnp.float32))
    out_bf16 = jax.block_until_ready(
        downsample_forward(x, w, b, compute_dtype=jnp.bfloat16))

    Ho, Wo = (H - 1) // 2 + 1, (W - 1) // 2 + 1
    assert out_f32.shape == (B, Cout, Ho, Wo)
    assert jnp.allclose(out_f32, ref, atol=1e-4, rtol=1e-4), "f32 mismatch vs reference"
    assert jnp.allclose(out_bf16, ref, atol=5e-2, rtol=5e-2), "bf16 mismatch vs reference"

    print("KERNEL_OK")
</pallas_src>

<mosaic_0001>
module attributes {stable_mosaic.version = 11 : i64} {
  func.func @_conv3x3s2_kernel(%arg0: i32, %arg1: i32, %arg2: i32, %arg3: memref<4x8x9x4xf32, #tpu.memory_space<vmem>>, %arg4: memref<2x1x9x4xf32, #tpu.memory_space<vmem>>, %arg5: memref<3x3x4x128xf32, #tpu.memory_space<vmem>>, %arg6: memref<1x128xf32, #tpu.memory_space<vmem>>, %arg7: memref<1x8x8x128xf32, #tpu.memory_space<vmem>>) attributes {dimension_semantics = [#tpu.dimension_semantics<parallel>, #tpu.dimension_semantics<parallel>, #tpu.dimension_semantics<parallel>], iteration_bounds = array<i64: 2, 1, 1>, scalar_prefetch = 0 : i64, scratch_operands = 0 : i64, tpu.core_type = #tpu.core_type<tc>, window_params = [{transform_indices = @transform_0, window_bounds = array<i64: 4, 8, 9, 4>}, {transform_indices = @transform_1, window_bounds = array<i64: 2, 1, 9, 4>}, {transform_indices = @transform_2, window_bounds = array<i64: 3, 3, 4, 128>}, {transform_indices = @transform_3, window_bounds = array<i64: 1, 128>}, {transform_indices = @transform_4, window_bounds = array<i64: 1, 8, 8, 128>}]} {
    %cst = arith.constant 0.000000e+00 : f32
    %0 = vector.broadcast %cst : f32 to vector<64x128xf32>
    %c0 = arith.constant 0 : index
    %c0_0 = arith.constant 0 : index
    %c0_1 = arith.constant 0 : index
    %c0_2 = arith.constant 0 : index
    %1 = vector.load %arg3[%c0, %c0_0, %c0_1, %c0_2] : memref<4x8x9x4xf32, #tpu.memory_space<vmem>>, vector<1x8x9x4xf32>
    %2 = vector.shape_cast %1 : vector<1x8x9x4xf32> to vector<8x9x4xf32>
    %3 = vector.extract_strided_slice %2 {offsets = [0, 0, 0], sizes = [8, 8, 4], strides = [1, 1, 1]} : vector<8x9x4xf32> to vector<8x8x4xf32>
    %4 = vector.shape_cast %3 : vector<8x8x4xf32> to vector<64x4xf32>
    %c0_3 = arith.constant 0 : index
    %c0_4 = arith.constant 0 : index
    %c0_5 = arith.constant 0 : index
    %c0_6 = arith.constant 0 : index
    %5 = vector.load %arg5[%c0_3, %c0_4, %c0_5, %c0_6] : memref<3x3x4x128xf32, #tpu.memory_space<vmem>>, vector<1x1x4x128xf32>
    %6 = vector.shape_cast %5 : vector<1x1x4x128xf32> to vector<4x128xf32>
    %cst_7 = arith.constant dense<0.000000e+00> : vector<64x128xf32>
    %7 = tpu.matmul %4, %6, %cst_7 {dimension_numbers = #tpu.dot_dimension_numbers<[1], [0], [0], [1], [0, 0, 1, 1], [], []>, precision = #tpu.contract_precision<fp32>} : vector<64x4xf32>, vector<4x128xf32>, vector<64x128xf32> -> vector<64x128xf32>
    %8 = arith.addf %0, %7 : vector<64x128xf32>
    %c1 = arith.constant 1 : index
    %c0_8 = arith.constant 0 : index
    %c0_9 = arith.constant 0 : index
    %c0_10 = arith.constant 0 : index
    %9 = vector.load %arg3[%c1, %c0_8, %c0_9, %c0_10] : memref<4x8x9x4xf32, #tpu.memory_space<vmem>>, vector<1x8x9x4xf32>
    %10 = vector.shape_cast %9 : vector<1x8x9x4xf32> to vector<8x9x4xf32>
    %11 = vector.extract_strided_slice %10 {offsets = [0, 0, 0], sizes = [8, 8, 4], strides = [1, 1, 1]} : vector<8x9x4xf32> to vector<8x8x4xf32>
    %12 = vector.shape_cast %11 : vector<8x8x4xf32> to vector<64x4xf32>
    %c0_11 = arith.constant 0 : index
    %c1_12 = arith.constant 1 : index
    %c0_13 = arith.constant 0 : index
    %c0_14 = arith.constant 0 : index
    %13 = vector.load %arg5[%c0_11, %c1_12, %c0_13, %c0_14] : memref<3x3x4x128xf32, #tpu.memory_space<vmem>>, vector<1x1x4x128xf32>
    %14 = vector.shape_cast %13 : vector<1x1x4x128xf32> to vector<4x128xf32>
    %cst_15 = arith.constant dense<0.000000e+00> : vector<64x128xf32>
    %15 = tpu.matmul %12, %14, %cst_15 {dimension_numbers = #tpu.dot_dimension_numbers<[1], [0], [0], [1], [0, 0, 1, 1], [], []>, precision = #tpu.contract_precision<fp32>} : vector<64x4xf32>, vector<4x128xf32>, vector<64x128xf32> -> vector<64x128xf32>
    %16 = arith.addf %8, %15 : vector<64x128xf32>
    %c0_16 = arith.constant 0 : index
    %c0_17 = arith.constant 0 : index
    %c0_18 = arith.constant 0 : index
    %c0_19 = arith.constant 0 : index
    %17 = vector.load %arg3[%c0_16, %c0_17, %c0_18, %c0_19] : memref<4x8x9x4xf32, #tpu.memory_space<vmem>>, vector<1x8x9x4xf32>
    %18 = vector.shape_cast %17 : vector<1x8x9x4xf32> to vector<8x9x4xf32>
    %19 = vector.extract_strided_slice %18 {offsets = [0, 1, 0], sizes = [8, 8, 4], strides = [1, 1, 1]} : vector<8x9x4xf32> to vector<8x8x4xf32>
    %20 = vector.shape_cast %19 : vector<8x8x4xf32> to vector<64x4xf32>
    %c0_20 = arith.constant 0 : index
    %c2 = arith.constant 2 : index
    %c0_21 = arith.constant 0 : index
    %c0_22 = arith.constant 0 : index
    %21 = vector.load %arg5[%c0_20, %c2, %c0_21, %c0_22] : memref<3x3x4x128xf32, #tpu.memory_space<vmem>>, vector<1x1x4x128xf32>
    %22 = vector.shape_cast %21 : vector<1x1x4x128xf32> to vector<4x128xf32>
    %cst_23 = arith.constant dense<0.000000e+00> : vector<64x128xf32>
    %23 = tpu.matmul %20, %22, %cst_23 {dimension_numbers = #tpu.dot_dimension_numbers<[1], [0], [0], [1], [0, 0, 1, 1], [], []>, precision = #tpu.contract_precision<fp32>} : vector<64x4xf32>, vector<4x128xf32>, vector<64x128xf32> -> vector<64x128xf32>
    %24 = arith.addf %16, %23 : vector<64x128xf32>
    %c2_24 = arith.constant 2 : index
    %c0_25 = arith.constant 0 : index
    %c0_26 = arith.constant 0 : index
    %c0_27 = arith.constant 0 : index
    %25 = vector.load %arg3[%c2_24, %c0_25, %c0_26, %c0_27] : memref<4x8x9x4xf32, #tpu.memory_space<vmem>>, vector<1x8x9x4xf32>
    %26 = vector.shape_cast %25 : vector<1x8x9x4xf32> to vector<8x9x4xf32>
    %27 = vector.extract_strided_slice %26 {offsets = [0, 0, 0], sizes = [8, 8, 4], strides = [1, 1, 1]} : vector<8x9x4xf32> to vector<8x8x4xf32>
    %28 = vector.shape_cast %27 : vector<8x8x4xf32> to vector<64x4xf32>
    %c1_28 = arith.constant 1 : index
    %c0_29 = arith.constant 0 : index
    %c0_30 = arith.constant 0 : index
    %c0_31 = arith.constant 0 : index
    %29 = vector.load %arg5[%c1_28, %c0_29, %c0_30, %c0_31] : memref<3x3x4x128xf32, #tpu.memory_space<vmem>>, vector<1x1x4x128xf32>
    %30 = vector.shape_cast %29 : vector<1x1x4x128xf32> to vector<4x128xf32>
    %cst_32 = arith.constant dense<0.000000e+00> : vector<64x128xf32>
    %31 = tpu.matmul %28, %30, %cst_32 {dimension_numbers = #tpu.dot_dimension_numbers<[1], [0], [0], [1], [0, 0, 1, 1], [], []>, precision = #tpu.contract_precision<fp32>} : vector<64x4xf32>, vector<4x128xf32>, vector<64x128xf32> -> vector<64x128xf32>
    %32 = arith.addf %24, %31 : vector<64x128xf32>
    %c3 = arith.constant 3 : index
    %c0_33 = arith.constant 0 : index
    %c0_34 = arith.constant 0 : index
    %c0_35 = arith.constant 0 : index
    %33 = vector.load %arg3[%c3, %c0_33, %c0_34, %c0_35] : memref<4x8x9x4xf32, #tpu.memory_space<vmem>>, vector<1x8x9x4xf32>
    %34 = vector.shape_cast %33 : vector<1x8x9x4xf32> to vector<8x9x4xf32>
    %35 = vector.extract_strided_slice %34 {offsets = [0, 0, 0], sizes = [8, 8, 4], strides = [1, 1, 1]} : vector<8x9x4xf32> to vector<8x8x4xf32>
    %36 = vector.shape_cast %35 : vector<8x8x4xf32> to vector<64x4xf32>
    %c1_36 = arith.constant 1 : index
    %c1_37 = arith.constant 1 : index
    %c0_38 = arith.constant 0 : index
    %c0_39 = arith.constant 0 : index
    %37 = vector.load %arg5[%c1_36, %c1_37, %c0_38, %c0_39] : memref<3x3x4x128xf32, #tpu.memory_space<vmem>>, vector<1x1x4x128xf32>
    %38 = vector.shape_cast %37 : vector<1x1x4x128xf32> to vector<4x128xf32>
    %cst_40 = arith.constant dense<0.000000e+00> : vector<64x128xf32>
    %39 = tpu.matmul %36, %38, %cst_40 {dimension_numbers = #tpu.dot_dimension_numbers<[1], [0], [0], [1], [0, 0, 1, 1], [], []>, precision = #tpu.contract_precision<fp32>} : vector<64x4xf32>, vector<4x128xf32>, vector<64x128xf32> -> vector<64x128xf32>
    %40 = arith.addf %32, %39 : vector<64x128xf32>
    %c2_41 = arith.constant 2 : index
    %c0_42 = arith.constant 0 : index
    %c0_43 = arith.constant 0 : index
    %c0_44 = arith.constant 0 : index
    %41 = vector.load %arg3[%c2_41, %c0_42, %c0_43, %c0_44] : memref<4x8x9x4xf32, #tpu.memory_space<vmem>>, vector<1x8x9x4xf32>
    %42 = vector.shape_cast %41 : vector<1x8x9x4xf32> to vector<8x9x4xf32>
    %43 = vector.extract_strided_slice %42 {offsets = [0, 1, 0], sizes = [8, 8, 4], strides = [1, 1, 1]} : vector<8x9x4xf32> to vector<8x8x4xf32>
    %44 = vector.shape_cast %43 : vector<8x8x4xf32> to vector<64x4xf32>
    %c1_45 = arith.constant 1 : index
    %c2_46 = arith.constant 2 : index
    %c0_47 = arith.constant 0 : index
    %c0_48 = arith.constant 0 : index
    %45 = vector.load %arg5[%c1_45, %c2_46, %c0_47, %c0_48] : memref<3x3x4x128xf32, #tpu.memory_space<vmem>>, vector<1x1x4x128xf32>
    %46 = vector.shape_cast %45 : vector<1x1x4x128xf32> to vector<4x128xf32>
    %cst_49 = arith.constant dense<0.000000e+00> : vector<64x128xf32>
    %47 = tpu.matmul %44, %46, %cst_49 {dimension_numbers = #tpu.dot_dimension_numbers<[1], [0], [0], [1], [0, 0, 1, 1], [], []>, precision = #tpu.contract_precision<fp32>} : vector<64x4xf32>, vector<4x128xf32>, vector<64x128xf32> -> vector<64x128xf32>
    %48 = arith.addf %40, %47 : vector<64x128xf32>
    %c0_50 = arith.constant 0 : index
    %c0_51 = arith.constant 0 : index
    %c0_52 = arith.constant 0 : index
    %c0_53 = arith.constant 0 : index
    %49 = vector.load %arg3[%c0_50, %c0_51, %c0_52, %c0_53] : memref<4x8x9x4xf32, #tpu.memory_space<vmem>>, vector<1x8x9x4xf32>
    %50 = vector.shape_cast %49 : vector<1x8x9x4xf32> to vector<8x9x4xf32>
    %c0_54 = arith.constant 0 : index
    %c0_55 = arith.constant 0 : index
    %c0_56 = arith.constant 0 : index
    %c0_57 = arith.constant 0 : index
    %51 = vector.load %arg4[%c0_54, %c0_55, %c0_56, %c0_57] : memref<2x1x9x4xf32, #tpu.memory_space<vmem>>, vector<1x1x9x4xf32>
    %52 = vector.shape_cast %51 : vector<1x1x9x4xf32> to vector<9x4xf32>
    %53 = vector.extract_strided_slice %50 {offsets = [1, 0, 0], sizes = [7, 9, 4], strides = [1, 1, 1]} : vector<8x9x4xf32> to vector<7x9x4xf32>
    %54 = vector.shape_cast %52 : vector<9x4xf32> to vector<1x9x4xf32>
    %55 = tpu.concatenate %53, %54 in 0 : vector<7x9x4xf32>, vector<1x9x4xf32> -> vector<8x9x4xf32>
    %56 = vector.extract_strided_slice %55 {offsets = [0, 0, 0], sizes = [8, 8, 4], strides = [1, 1, 1]} : vector<8x9x4xf32> to vector<8x8x4xf32>
    %57 = vector.shape_cast %56 : vector<8x8x4xf32> to vector<64x4xf32>
    %c2_58 = arith.constant 2 : index
    %c0_59 = arith.constant 0 : index
    %c0_60 = arith.constant 0 : index
    %c0_61 = arith.constant 0 : index
    %58 = vector.load %arg5[%c2_58, %c0_59, %c0_60, %c0_61] : memref<3x3x4x128xf32, #tpu.memory_space<vmem>>, vector<1x1x4x128xf32>
    %59 = vector.shape_cast %58 : vector<1x1x4x128xf32> to vector<4x128xf32>
    %cst_62 = arith.constant dense<0.000000e+00> : vector<64x128xf32>
    %60 = tpu.matmul %57, %59, %cst_62 {dimension_numbers = #tpu.dot_dimension_numbers<[1], [0], [0], [1], [0, 0, 1, 1], [], []>, precision = #tpu.contract_precision<fp32>} : vector<64x4xf32>, vector<4x128xf32>, vector<64x128xf32> -> vector<64x128xf32>
    %61 = arith.addf %48, %60 : vector<64x128xf32>
    %c1_63 = arith.constant 1 : index
    %c0_64 = arith.constant 0 : index
    %c0_65 = arith.constant 0 : index
    %c0_66 = arith.constant 0 : index
    %62 = vector.load %arg3[%c1_63, %c0_64, %c0_65, %c0_66] : memref<4x8x9x4xf32, #tpu.memory_space<vmem>>, vector<1x8x9x4xf32>
    %63 = vector.shape_cast %62 : vector<1x8x9x4xf32> to vector<8x9x4xf32>
    %c1_67 = arith.constant 1 : index
    %c0_68 = arith.constant 0 : index
    %c0_69 = arith.constant 0 : index
    %c0_70 = arith.constant 0 : index
    %64 = vector.load %arg4[%c1_67, %c0_68, %c0_69, %c0_70] : memref<2x1x9x4xf32, #tpu.memory_space<vmem>>, vector<1x1x9x4xf32>
    %65 = vector.shape_cast %64 : vector<1x1x9x4xf32> to vector<9x4xf32>
    %66 = vector.extract_strided_slice %63 {offsets = [1, 0, 0], sizes = [7, 9, 4], strides = [1, 1, 1]} : vector<8x9x4xf32> to vector<7x9x4xf32>
    %67 = vector.shape_cast %65 : vector<9x4xf32> to vector<1x9x4xf32>
    %68 = tpu.concatenate %66, %67 in 0 : vector<7x9x4xf32>, vector<1x9x4xf32> -> vector<8x9x4xf32>
    %69 = vector.extract_strided_slice %68 {offsets = [0, 0, 0], sizes = [8, 8, 4], strides = [1, 1, 1]} : vector<8x9x4xf32> to vector<8x8x4xf32>
    %70 = vector.shape_cast %69 : vector<8x8x4xf32> to vector<64x4xf32>
    %c2_71 = arith.constant 2 : index
    %c1_72 = arith.constant 1 : index
    %c0_73 = arith.constant 0 : index
    %c0_74 = arith.constant 0 : index
    %71 = vector.load %arg5[%c2_71, %c1_72, %c0_73, %c0_74] : memref<3x3x4x128xf32, #tpu.memory_space<vmem>>, vector<1x1x4x128xf32>
    %72 = vector.shape_cast %71 : vector<1x1x4x128xf32> to vector<4x128xf32>
    %cst_75 = arith.constant dense<0.000000e+00> : vector<64x128xf32>
    %73 = tpu.matmul %70, %72, %cst_75 {dimension_numbers = #tpu.dot_dimension_numbers<[1], [0], [0], [1], [0, 0, 1, 1], [], []>, precision = #tpu.contract_precision<fp32>} : vector<64x4xf32>, vector<4x128xf32>, vector<64x128xf32> -> vector<64x128xf32>
    %74 = arith.addf %61, %73 : vector<64x128xf32>
    %c0_76 = arith.constant 0 : index
    %c0_77 = arith.constant 0 : index
    %c0_78 = arith.constant 0 : index
    %c0_79 = arith.constant 0 : index
    %75 = vector.load %arg3[%c0_76, %c0_77, %c0_78, %c0_79] : memref<4x8x9x4xf32, #tpu.memory_space<vmem>>, vector<1x8x9x4xf32>
    %76 = vector.shape_cast %75 : vector<1x8x9x4xf32> to vector<8x9x4xf32>
    %c0_80 = arith.constant 0 : index
    %c0_81 = arith.constant 0 : index
    %c0_82 = arith.constant 0 : index
    %c0_83 = arith.constant 0 : index
    %77 = vector.load %arg4[%c0_80, %c0_81, %c0_82, %c0_83] : memref<2x1x9x4xf32, #tpu.memory_space<vmem>>, vector<1x1x9x4xf32>
    %78 = vector.shape_cast %77 : vector<1x1x9x4xf32> to vector<9x4xf32>
    %79 = vector.extract_strided_slice %76 {offsets = [1, 0, 0], sizes = [7, 9, 4], strides = [1, 1, 1]} : vector<8x9x4xf32> to vector<7x9x4xf32>
    %80 = vector.shape_cast %78 : vector<9x4xf32> to vector<1x9x4xf32>
    %81 = tpu.concatenate %79, %80 in 0 : vector<7x9x4xf32>, vector<1x9x4xf32> -> vector<8x9x4xf32>
    %82 = vector.extract_strided_slice %81 {offsets = [0, 1, 0], sizes = [8, 8, 4], strides = [1, 1, 1]} : vector<8x9x4xf32> to vector<8x8x4xf32>
    %83 = vector.shape_cast %82 : vector<8x8x4xf32> to vector<64x4xf32>
    %c2_84 = arith.constant 2 : index
    %c2_85 = arith.constant 2 : index
    %c0_86 = arith.constant 0 : index
    %c0_87 = arith.constant 0 : index
    %84 = vector.load %arg5[%c2_84, %c2_85, %c0_86, %c0_87] : memref<3x3x4x128xf32, #tpu.memory_space<vmem>>, vector<1x1x4x128xf32>
    %85 = vector.shape_cast %84 : vector<1x1x4x128xf32> to vector<4x128xf32>
    %cst_88 = arith.constant dense<0.000000e+00> : vector<64x128xf32>
    %86 = tpu.matmul %83, %85, %cst_88 {dimension_numbers = #tpu.dot_dimension_numbers<[1], [0], [0], [1], [0, 0, 1, 1], [], []>, precision = #tpu.contract_precision<fp32>} : vector<64x4xf32>, vector<4x128xf32>, vector<64x128xf32> -> vector<64x128xf32>
    %87 = arith.addf %74, %86 : vector<64x128xf32>
    %c0_89 = arith.constant 0 : index
    %c0_90 = arith.constant 0 : index
    %88 = vector.load %arg6[%c0_89, %c0_90] : memref<1x128xf32, #tpu.memory_space<vmem>>, vector<1x128xf32>
    %89 = vector.broadcast %88 : vector<1x128xf32> to vector<64x128xf32>
    %90 = arith.addf %87, %89 : vector<64x128xf32>
    %91 = vector.shape_cast %90 : vector<64x128xf32> to vector<1x8x8x128xf32>
    %c0_91 = arith.constant 0 : index
    %c0_92 = arith.constant 0 : index
    %c0_93 = arith.constant 0 : index
    %c0_94 = arith.constant 0 : index
    %92 = vector.load %arg7[%c0_91, %c0_92, %c0_93, %c0_94] : memref<1x8x8x128xf32, #tpu.memory_space<vmem>>, vector<1x8x8x128xf32>
    tpu.vector_store %arg7[%c0_91, %c0_92, %c0_93, %c0_94], %91 {strides = array<i32>} : memref<1x8x8x128xf32, #tpu.memory_space<vmem>>, vector<1x8x8x128xf32>,
    return
  }
  func.func @transform_0(%arg0: i32, %arg1: i32, %arg2: i32) -> (i32, i32, i32, i32) {
    %c0_i32 = arith.constant 0 : i32
    %c0_i32_0 = arith.constant 0 : i32
    %c0_i32_1 = arith.constant 0 : i32
    return %arg0, %arg1, %c0_i32, %c0_i32_0 : i32, i32, i32, i32
  }
  func.func @transform_1(%arg0: i32, %arg1: i32, %arg2: i32) -> (i32, i32, i32, i32) {
    %c2_i32 = arith.constant 2 : i32
    %0 = arith.muli %c2_i32, %arg0 : i32
    %c8_i32 = arith.constant 8 : i32
    %1 = arith.muli %arg1, %c8_i32 : i32
    %c8_i32_0 = arith.constant 8 : i32
    %2 = arith.addi %1, %c8_i32_0 : i32
    %c0_i32 = arith.constant 0 : i32
    %c0_i32_1 = arith.constant 0 : i32
    %c0_i32_2 = arith.constant 0 : i32
    return %0, %2, %c0_i32, %c0_i32_1 : i32, i32, i32, i32
  }
  func.func @transform_2(%arg0: i32, %arg1: i32, %arg2: i32) -> (i32, i32, i32, i32) {
    %c0_i32 = arith.constant 0 : i32
    %c0_i32_0 = arith.constant 0 : i32
    %c0_i32_1 = arith.constant 0 : i32
    %c0_i32_2 = arith.constant 0 : i32
    return %c0_i32, %c0_i32_0, %c0_i32_1, %arg2 : i32, i32, i32, i32
  }
  func.func @transform_3(%arg0: i32, %arg1: i32, %arg2: i32) -> (i32, i32) {
    %c0_i32 = arith.constant 0 : i32
    %c0_i32_0 = arith.constant 0 : i32
    return %c0_i32, %arg2 : i32, i32
  }
  func.func @transform_4(%arg0: i32, %arg1: i32, %arg2: i32) -> (i32, i32, i32, i32) {
    %c0_i32 = arith.constant 0 : i32
    %c0_i32_0 = arith.constant 0 : i32
    return %arg0, %arg1, %c0_i32, %arg2 : i32, i32, i32, i32
  }
}

</mosaic_0001>

<llo_original>
// kernel: downsample_forward.1
$region0: #{downsample_forward.1}
  #allocation0 [shape = 'u32[]', space=smem, size = 0x4, offset = 0x4, fixed_abs, tag = 'smem constant byte address 0x4 - core index']
  #allocation1 [shape = 'u32[144,128]{1,0:T(1,128)}', space=vmem, size = 0x12000, scoped, tag = 'internal scratch']
  %s0 = inlined_call_operand.vmem [shape: f32[8,9,9,4], index: 0, kind: input, shape index: {}, may-alias: {0,1}]
  %s1 = inlined_call_operand.vmem [shape: f32[8,9,9,4], index: 1, kind: input, shape index: {}, may-alias: {0,1}]
  %s2 = inlined_call_operand.vmem [shape: f32[3,3,4,128], index: 2, kind: input, shape index: {}]
  %s3 = inlined_call_operand.vmem [shape: f32[1,128], index: 3, kind: input, shape index: {}]
  %s4 = inlined_call_operand.vmem [shape: f32[2,8,8,128], index: 4, kind: output, shape index: {}]
  %s5 = sld [smem:[#allocation0]]
  $region139: #{downsample_forward.1} parent=0
    _
  %s7 = ssub.s32 1, %s5
  %s8 = scalar_select 0, %s7, %s5
  $region1: #{downsample_forward.1} parent=0
    #allocation2 [shape = 'u8[524288]{0}', space=vmem, size = 0x80000, scoped, tag = 'input window, operand 0']
    #allocation3 [shape = 'u8[32768]{0}', space=vmem, size = 0x8000, scoped, tag = 'input window, operand 1']
    loop: start=0, step=1, limit=4
    $region2: #{downsample_forward.1} parent=1 // loop_pre_header
      _
    $region3: #{downsample_forward.1} parent=1 // loop_header
      %s10 = sphi 0, %s14
      %p11 = scmp.ge.s32.totalorder %s10, 4
      %s17 = sphi 0, %s36
      %s18 = sphi 0, %s32
      %s19 = sphi 0, %s28
      %s20 = sphi 0, %s17
      %s21 = sphi 0, %s18
      %s22 = sphi 0, %s19
      %s23 = sphi 0, %s20
      %s24 = sphi 0, %s21
      %s25 = sphi 0, %s22
      %s41 = sphi 0, %s43
      %s44 = sphi 0, %s41
      %s45 = sphi 0, %s44
      %s61 = sphi 0, %s45
      %s75 = sphi 0, %s77
      %s78 = sphi 0, %s75
      %s79 = sphi 0, %s78
      %s95 = sphi 0, %s79
      %s101 = sphi 0, %s103
      %s104 = sphi 0, %s101
      %s105 = sphi 0, %s104
      %s121 = sphi 0, %s105
      %s127 = sphi 0, %s129
      %s130 = sphi 0, %s127
      %s131 = sphi 0, %s130
      %s147 = sphi 0, %s131
      %s157 = sphi 0, %s159
      %s160 = sphi 0, %s157
      %s161 = sphi 0, %s160
      %s177 = sphi 0, %s161
    $region4: #{downsample_forward.1} parent=1 // loop_header_branch
      %13 = sbr.rel (%p11) target = $region8
    $region5: #{downsample_forward.1} parent=1 // loop_body
      %s15 = ssub.s32 %s10, 1
      %s16 = ssub.s32 %s10, 2
      %s26 = sadd.s32 1, %s19
      %p27 = scmp.ge.s32.totalorder %s26, 1
      %s28 = scalar_select %p27, 0, %s26
      %s29 = sadd.s32 1, %s18
      %s30 = scalar_select %p27, %s29, %s18
      %p31 = scmp.ge.s32.totalorder %s30, 1
      %s32 = scalar_select %p31, 0, %s30
      %s33 = sadd.s32 1, %s17
      %s34 = scalar_select %p31, %s33, %s17
      %p35 = scmp.ge.s32.totalorder %s34, 2
      %s36 = scalar_select %p35, 0, %s34
      %s37 = ssub.s32 %s17, %s36
      %s38 = ssub.s32 %s18, %s32
      %s39 = sor.u32 %s37, %s38
      %p40 = scmp.eq.s32.totalorder %s39, 0
      %s42 = sadd.s32 %s41, 1
      %s43 = scalar_select %p40, %s41, %s42
      %p46 = pneg %p40
      %p47 = scmp.eq.s32.totalorder %s10, 1
      %p48 = por %p46, %p47
      %p49 = scmp.ne.s32.totalorder %s41, %s44
      %p50 = scmp.eq.s32.totalorder %s10, 0
      %p51 = por %p49, %p50
      %p52 = scmp.ne.s32.totalorder %s41, %s44
      %p53 = scmp.eq.s32.totalorder %s15, 1
      %p54 = por %p52, %p53
      %p55 = scmp.ne.s32.totalorder %s44, %s45
      %p56 = scmp.eq.s32.totalorder %s15, 0
      %p57 = por %p55, %p56
      %p58 = scmp.ne.s32.totalorder %s44, %s45
      %p59 = scmp.eq.s32.totalorder %s16, 1
      %p60 = por %p58, %p59
      %p62 = scmp.ne.s32.totalorder %s45, %s61
      %p63 = scmp.eq.s32.totalorder %s16, 0
      %p64 = por %p62, %p63
      %s65 = smul.u32 %s17, 2
      %s66 = smul.u32 %s18, 8
      %s67 = sadd.s32 %s66, 8
      %s68 = smul.u32 %s36, 2
      %s69 = smul.u32 %s32, 8
      %s70 = sadd.s32 %s69, 8
      %s71 = ssub.s32 %s65, %s68
      %s72 = ssub.s32 %s67, %s70
      %s73 = sor.u32 %s71, %s72
      %p74 = scmp.eq.s32.totalorder %s73, 0
      %s76 = sadd.s32 %s75, 1
      %s77 = scalar_select %p74, %s75, %s76
      %p80 = pneg %p74
      %p81 = scmp.eq.s32.totalorder %s10, 1
      %p82 = por %p80, %p81
      %p83 = scmp.ne.s32.totalorder %s75, %s78
      %p84 = scmp.eq.s32.totalorder %s10, 0
      %p85 = por %p83, %p84
      %p86 = scmp.ne.s32.totalorder %s75, %s78
      %p87 = scmp.eq.s32.totalorder %s15, 1
      %p88 = por %p86, %p87
      %p89 = scmp.ne.s32.totalorder %s78, %s79
      %p90 = scmp.eq.s32.totalorder %s15, 0
      %p91 = por %p89, %p90
      %p92 = scmp.ne.s32.totalorder %s78, %s79
      %p93 = scmp.eq.s32.totalorder %s16, 1
      %p94 = por %p92, %p93
      %p96 = scmp.ne.s32.totalorder %s79, %s95
      %p97 = scmp.eq.s32.totalorder %s16, 0
      %p98 = por %p96, %p97
      %s99 = ssub.s32 %s19, %s28
      %p100 = scmp.eq.s32.totalorder %s99, 0
      %s102 = sadd.s32 %s101, 1
      %s103 = scalar_select %p100, %s101, %s102
      %p106 = pneg %p100
      %p107 = scmp.eq.s32.totalorder %s10, 1
      %p108 = por %p106, %p107
      %p109 = scmp.ne.s32.totalorder %s101, %s104
      %p110 = scmp.eq.s32.totalorder %s10, 0
      %p111 = por %p109, %p110
      %p112 = scmp.ne.s32.totalorder %s101, %s104
      %p113 = scmp.eq.s32.totalorder %s15, 1
      %p114 = por %p112, %p113
      %p115 = scmp.ne.s32.totalorder %s104, %s105
      %p116 = scmp.eq.s32.totalorder %s15, 0
      %p117 = por %p115, %p116
      %p118 = scmp.ne.s32.totalorder %s104, %s105
      %p119 = scmp.eq.s32.totalorder %s16, 1
      %p120 = por %p118, %p119
      %p122 = scmp.ne.s32.totalorder %s105, %s121
      %p123 = scmp.eq.s32.totalorder %s16, 0
      %p124 = por %p122, %p123
      %s125 = ssub.s32 %s19, %s28
      %p126 = scmp.eq.s32.totalorder %s125, 0
      %s128 = sadd.s32 %s127, 1
      %s129 = scalar_select %p126, %s127, %s128
      %p132 = pneg %p126
      %p133 = scmp.eq.s32.totalorder %s10, 1
      %p134 = por %p132, %p133
      %p135 = scmp.ne.s32.totalorder %s127, %s130
      %p136 = scmp.eq.s32.totalorder %s10, 0
      %p137 = por %p135, %p136
      %p138 = scmp.ne.s32.totalorder %s127, %s130
      %p139 = scmp.eq.s32.totalorder %s15, 1
      %p140 = por %p138, %p139
      %p141 = scmp.ne.s32.totalorder %s130, %s131
      %p142 = scmp.eq.s32.totalorder %s15, 0
      %p143 = por %p141, %p142
      %p144 = scmp.ne.s32.totalorder %s130, %s131
      %p145 = scmp.eq.s32.totalorder %s16, 1
      %p146 = por %p144, %p145
      %p148 = scmp.ne.s32.totalorder %s131, %s147
      %p149 = scmp.eq.s32.totalorder %s16, 0
      %p150 = por %p148, %p149
      %s151 = ssub.s32 %s17, %s36
      %s152 = ssub.s32 %s18, %s32
      %s153 = sor.u32 %s151, %s152
      %s154 = ssub.s32 %s19, %s28
      %s155 = sor.u32 %s153, %s154
      %p156 = scmp.eq.s32.totalorder %s155, 0
      %s158 = sadd.s32 %s157, 1
      %s159 = scalar_select %p156, %s157, %s158
      %p162 = pneg %p156
      %p163 = scmp.eq.s32.totalorder %s10, 1
      %p164 = por %p162, %p163
      %p165 = scmp.ne.s32.totalorder %s157, %s160
      %p166 = scmp.eq.s32.totalorder %s10, 0
      %p167 = por %p165, %p166
      %p168 = scmp.ne.s32.totalorder %s157, %s160
      %p169 = scmp.eq.s32.totalorder %s15, 1
      %p170 = por %p168, %p169
      %p171 = scmp.ne.s32.totalorder %s160, %s161
      %p172 = scmp.eq.s32.totalorder %s15, 0
      %p173 = por %p171, %p172
      %p174 = scmp.ne.s32.totalorder %s160, %s161
      %p175 = scmp.eq.s32.totalorder %s16, 1
      %p176 = por %p174, %p175
      %p178 = scmp.ne.s32.totalorder %s161, %s177
      %p179 = scmp.eq.s32.totalorder %s16, 0
      %p180 = por %p178, %p179
      %p181 = scmp.le.s32.totalorder 1, %s10
      %p182 = scmp.lt.s32.totalorder %s10, 3
      %p183 = pnand %p181, %p182
      %p184 = pneg %p183
      // Predicated region
      $region9: #{downsample_forward.1} parent=5 // pred_check
        _
      $region10: #{downsample_forward.1} parent=5 // pred_check_branch
        %186 = sbr.rel (%p183) target = $region12
      $region11: #{downsample_forward.1} parent=5 // pred_region
        %s187 = ssub.s32 %s10, 1
        // Predicated region
        $region13: #{downsample_forward.1} parent=11 // pred_check
          %p188 = pneg %p117
        $region14: #{downsample_forward.1} parent=11 // pred_check_branch
          %190 = sbr.rel (%p188) target = $region16
        $region15: #{downsample_forward.1} parent=11 // pred_region
          %p191 = scmp.lt.s32.totalorder %s22, 0
          %s192 = scalar_select %p191, %s22, 0
          %s193 = smul.addr %s192, 4
          %s194 = scalar_lea.vmem %s2, %s193
        $region16: #{downsample_forward.1} parent=11 // pred_fallthru
          _
        // Predicated region
        $region17: #{downsample_forward.1} parent=11 // pred_check
          %p195 = pneg %p143
        $region18: #{downsample_forward.1} parent=11 // pred_check_branch
          %197 = sbr.rel (%p195) target = $region20
        $region19: #{downsample_forward.1} parent=11 // pred_region
          %p198 = scmp.lt.s32.totalorder %s22, 0
          %s199 = scalar_select %p198, %s22, 0
          %s200 = scalar_lea.vmem %s3, %s199
        $region20: #{downsample_forward.1} parent=11 // pred_fallthru
          _
      $region12: #{downsample_forward.1} parent=5 // pred_fallthru
        _
      %p201 = scmp.lt.s32.totalorder %s10, 2
      // Predicated region
      $region21: #{downsample_forward.1} parent=5 // pred_check
        %p202 = pneg %p201
      $region22: #{downsample_forward.1} parent=5 // pred_check_branch
        %204 = sbr.rel (%p202) target = $region24
      $region23: #{downsample_forward.1} parent=5 // pred_region
        // Predicated region
        $region25: #{downsample_forward.1} parent=23 // pred_check
          %p205 = pneg %p51
        $region26: #{downsample_forward.1} parent=23 // pred_check_branch
          %207 = sbr.rel (%p205) target = $region28
        $region27: #{downsample_forward.1} parent=23 // pred_region
          %s208 = sand.u32 %s41, 1
          %s209 = sand.u32 %s41, 1
          %s210 = smul.addr %s209, 512
          %s211 = scalar_lea.vmem [#allocation2], %s210
          %s212 = smul.u32 4, %s17
          %s213 = smul.u32 8, %s18
          %s214 = ssub.s32 9, %s213
          %p215 = scmp.lt.s32.totalorder %s214, 8
          %s216 = scalar_select %p215, %s214, 8
          %s217 = smul.u32 512, %s216
          %s218 = smul.u32 %s217, 2
          %p219 = scmp.ne.s32.totalorder 0, %s218
          %s220 = smul.addr %s213, 2
          %s221 = smul.addr %s212, 18
          %s222 = sadd.s32 %s220, %s221
          %s223 = smul.addr %s222, 8
          %s224 = scalar_lea.vmem %s0, %s223
          %s225 = smul.u32 %s216, 2
          // Predicated region
          $region29: #{downsample_forward.1} parent=27 // pred_check
            %p226 = pneg %p219
          $region30: #{downsample_forward.1} parent=27 // pred_check_branch
            %228 = sbr.rel (%p226) target = $region32
          $region31: #{downsample_forward.1} parent=27 // pred_region
            // Predicated region
            $region33: #{downsample_forward.1} parent=31 // pred_check
              _
            $region34: #{downsample_forward.1} parent=31 // pred_check_branch
              %230 = sbr.rel (0) target = $region36
            $region35: #{downsample_forward.1} parent=31 // pred_region
              // Predicated region
              $region55: #{downsample_forward.1} parent=35 // pred_check
                _
              $region56: #{downsample_forward.1} parent=35 // pred_check_branch
                %411 = sbr.rel (0) target = $region58
              $region57: #{downsample_forward.1} parent=35 // pred_region
                %s412 = sshrl.u32 %s225, 4
                // While loop
                $region59: #{downsample_forward.1} parent=57 // loop_pre_header
                  _
                $region60: #{downsample_forward.1} parent=57 // loop_header
                  %s414 = sphi 0, %s416
                  %p415 = scmp.ge.s32.totalorder %s414, %s412
                  %s419 = sphi 0, %s552
                  %s420 = sphi %s224, %s555
                  %s421 = sphi %s211, %s556
                $region61: #{downsample_forward.1} parent=57 // loop_header_branch
                  %418 = sbr.rel (%p415) target = $region65
                $region62: #{downsample_forward.1} parent=57 // loop_body
                  %v422 = vld [vmem:[%s420] sm:$0xff]
                  %423 = vst [vmem:[%s421] sm:$0xff] %v422
                  %v424 = vld [vmem:[%s420 + $0x8] sm:$0xff]
                  %425 = vst [vmem:[%s421 + $0x8] sm:$0xff] %v424
                  %v426 = vld [vmem:[%s420 + $0x10] sm:$0xff]
                  %427 = vst [vmem:[%s421 + $0x10] sm:$0xff] %v426
                  %v428 = vld [vmem:[%s420 + $0x18] sm:$0xff]
                  %429 = vst [vmem:[%s421 + $0x18] sm:$0xff] %v428
                  %v430 = vld [vmem:[%s420 + $0x20] sm:$0xff]
                  %431 = vst [vmem:[%s421 + $0x20] sm:$0xff] %v430
                  %v432 = vld [vmem:[%s420 + $0x28] sm:$0xff]
                  %433 = vst [vmem:[%s421 + $0x28] sm:$0xff] %v432
                  %v434 = vld [vmem:[%s420 + $0x30] sm:$0xff]
                  %435 = vst [vmem:[%s421 + $0x30] sm:$0xff] %v434
                  %v436 = vld [vmem:[%s420 + $0x38] sm:$0xff]
                  %437 = vst [vmem:[%s421 + $0x38] sm:$0xff] %v436
                  %v438 = vld [vmem:[%s420 + $0x40] sm:$0xff]
                  %439 = vst [vmem:[%s421 + $0x40] sm:$0xff] %v438
                  %v440 = vld [vmem:[%s420 + $0x48] sm:$0xff]
                  %441 = vst [vmem:[%s421 + $0x48] sm:$0xff] %v440
                  %v442 = vld [vmem:[%s420 + $0x50] sm:$0xff]
                  %443 = vst [vmem:[%s421 + $0x50] sm:$0xff] %v442
                  %v444 = vld [vmem:[%s420 + $0x58] sm:$0xff]
                  %445 = vst [vmem:[%s421 + $0x58] sm:$0xff] %v444
                  %v446 = vld [vmem:[%s420 + $0x60] sm:$0xff]
                  %447 = vst [vmem:[%s421 + $0x60] sm:$0xff] %v446
                  %v448 = vld [vmem:[%s420 + $0x68] sm:$0xff]
                  %449 = vst [vmem:[%s421 + $0x68] sm:$0xff] %v448
                  %v450 = vld [vmem:[%s420 + $0x70] sm:$0xff]
                  %451 = vst [vmem:[%s421 + $0x70] sm:$0xff] %v450
                  %v452 = vld [vmem:[%s420 + $0x78] sm:$0xff]
                  %453 = vst [vmem:[%s421 + $0x78] sm:$0xff] %v452
                  %v454 = vld [vmem:[%s420 + $0x90] sm:$0xff]
                  %455 = vst [vmem:[%s421 + $0x80] sm:$0xff] %v454
                  %v456 = vld [vmem:[%s420 + $0x98] sm:$0xff]
                  %457 = vst [vmem:[%s421 + $0x88] sm:$0xff] %v456
                  %v458 = vld [vmem:[%s420 + $0xa0] sm:$0xff]
                  %459 = vst [vmem:[%s421 + $0x90] sm:$0xff] %v458
                  %v460 = vld [vmem:[%s420 + $0xa8] sm:$0xff]
                  %461 = vst [vmem:[%s421 + $0x98] sm:$0xff] %v460
                  %v462 = vld [vmem:[%s420 + $0xb0] sm:$0xff]
                  %463 = vst [vmem:[%s421 + $0xa0] sm:$0xff] %v462
                  %v464 = vld [vmem:[%s420 + $0xb8] sm:$0xff]
                  %465 = vst [vmem:[%s421 + $0xa8] sm:$0xff] %v464
                  %v466 = vld [vmem:[%s420 + $0xc0] sm:$0xff]
                  %467 = vst [vmem:[%s421 + $0xb0] sm:$0xff] %v466
                  %v468 = vld [vmem:[%s420 + $0xc8] sm:$0xff]
                  %469 = vst [vmem:[%s421 + $0xb8] sm:$0xff] %v468
                  %v470 = vld [vmem:[%s420 + $0xd0] sm:$0xff]
                  %471 = vst [vmem:[%s421 + $0xc0] sm:$0xff] %v470
                  %v472 = vld [vmem:[%s420 + $0xd8] sm:$0xff]
                  %473 = vst [vmem:[%s421 + $0xc8] sm:$0xff] %v472
                  %v474 = vld [vmem:[%s420 + $0xe0] sm:$0xff]
                  %475 = vst [vmem:[%s421 + $0xd0] sm:$0xff] %v474
                  %v476 = vld [vmem:[%s420 + $0xe8] sm:$0xff]
                  %477 = vst [vmem:[%s421 + $0xd8] sm:$0xff] %v476
                  %v478 = vld [vmem:[%s420 + $0xf0] sm:$0xff]
                  %479 = vst [vmem:[%s421 + $0xe0] sm:$0xff] %v478
                  %v480 = vld [vmem:[%s420 + $0xf8] sm:$0xff]
                  %481 = vst [vmem:[%s421 + $0xe8] sm:$0xff] %v480
                  %v482 = vld [vmem:[%s420 + $0x100] sm:$0xff]
                  %483 = vst [vmem:[%s421 + $0xf0] sm:$0xff] %v482
                  %v484 = vld [vmem:[%s420 + $0x108] sm:$0xff]
                  %485 = vst [vmem:[%s421 + $0xf8] sm:$0xff] %v484
                  %v486 = vld [vmem:[%s420 + $0x120] sm:$0xff]
                  %487 = vst [vmem:[%s421 + $0x100] sm:$0xff] %v486
                  %v488 = vld [vmem:[%s420 + $0x128] sm:$0xff]
                  %489 = vst [vmem:[%s421 + $0x108] sm:$0xff] %v488
                  %v490 = vld [vmem:[%s420 + $0x130] sm:$0xff]
                  %491 = vst [vmem:[%s421 + $0x110] sm:$0xff] %v490
                  %v492 = vld [vmem:[%s420 + $0x138] sm:$0xff]
                  %493 = vst [vmem:[%s421 + $0x118] sm:$0xff] %v492
                  %v494 = vld [vmem:[%s420 + $0x140] sm:$0xff]
                  %495 = vst [vmem:[%s421 + $0x120] sm:$0xff] %v494
                  %v496 = vld [vmem:[%s420 + $0x148] sm:$0xff]
                  %497 = vst [vmem:[%s421 + $0x128] sm:$0xff] %v496
                  %v498 = vld [vmem:[%s420 + $0x150] sm:$0xff]
                  %499 = vst [vmem:[%s421 + $0x130] sm:$0xff] %v498
                  %v500 = vld [vmem:[%s420 + $0x158] sm:$0xff]
                  %501 = vst [vmem:[%s421 + $0x138] sm:$0xff] %v500
                  %v502 = vld [vmem:[%s420 + $0x160] sm:$0xff]
                  %503 = vst [vmem:[%s421 + $0x140] sm:$0xff] %v502
                  %v504 = vld [vmem:[%s420 + $0x168] sm:$0xff]
                  %505 = vst [vmem:[%s421 + $0x148] sm:$0xff] %v504
                  %v506 = vld [vmem:[%s420 + $0x170] sm:$0xff]
                  %507 = vst [vmem:[%s421 + $0x150] sm:$0xff] %v506
                  %v508 = vld [vmem:[%s420 + $0x178] sm:$0xff]
                  %509 = vst [vmem:[%s421 + $0x158] sm:$0xff] %v508
                  %v510 = vld [vmem:[%s420 + $0x180] sm:$0xff]
                  %511 = vst [vmem:[%s421 + $0x160] sm:$0xff] %v510
                  %v512 = vld [vmem:[%s420 + $0x188] sm:$0xff]
                  %513 = vst [vmem:[%s421 + $0x168] sm:$0xff] %v512
                  %v514 = vld [vmem:[%s420 + $0x190] sm:$0xff]
                  %515 = vst [vmem:[%s421 + $0x170] sm:$0xff] %v514
                  %v516 = vld [vmem:[%s420 + $0x198] sm:$0xff]
                  %517 = vst [vmem:[%s421 + $0x178] sm:$0xff] %v516
                  %v518 = vld [vmem:[%s420 + $0x1b0] sm:$0xff]
                  %519 = vst [vmem:[%s421 + $0x180] sm:$0xff] %v518
                  %v520 = vld [vmem:[%s420 + $0x1b8] sm:$0xff]
                  %521 = vst [vmem:[%s421 + $0x188] sm:$0xff] %v520
                  %v522 = vld [vmem:[%s420 + $0x1c0] sm:$0xff]
                  %523 = vst [vmem:[%s421 + $0x190] sm:$0xff] %v522
                  %v524 = vld [vmem:[%s420 + $0x1c8] sm:$0xff]
                  %525 = vst [vmem:[%s421 + $0x198] sm:$0xff] %v524
                  %v526 = vld [vmem:[%s420 + $0x1d0] sm:$0xff]
                  %527 = vst [vmem:[%s421 + $0x1a0] sm:$0xff] %v526
                  %v528 = vld [vmem:[%s420 + $0x1d8] sm:$0xff]
                  %529 = vst [vmem:[%s421 + $0x1a8] sm:$0xff] %v528
                  %v530 = vld [vmem:[%s420 + $0x1e0] sm:$0xff]
                  %531 = vst [vmem:[%s421 + $0x1b0] sm:$0xff] %v530
                  %v532 = vld [vmem:[%s420 + $0x1e8] sm:$0xff]
                  %533 = vst [vmem:[%s421 + $0x1b8] sm:$0xff] %v532
                  %v534 = vld [vmem:[%s420 + $0x1f0] sm:$0xff]
                  %535 = vst [vmem:[%s421 + $0x1c0] sm:$0xff] %v534
                  %v536 = vld [vmem:[%s420 + $0x1f8] sm:$0xff]
                  %537 = vst [vmem:[%s421 + $0x1c8] sm:$0xff] %v536
                  %v538 = vld [vmem:[%s420 + $0x200] sm:$0xff]
                  %539 = vst [vmem:[%s421 + $0x1d0] sm:$0xff] %v538
                  %v540 = vld [vmem:[%s420 + $0x208] sm:$0xff]
                  %541 = vst [vmem:[%s421 + $0x1d8] sm:$0xff] %v540
                  %v542 = vld [vmem:[%s420 + $0x210] sm:$0xff]
                  %543 = vst [vmem:[%s421 + $0x1e0] sm:$0xff] %v542
                  %v544 = vld [vmem:[%s420 + $0x218] sm:$0xff]
                  %545 = vst [vmem:[%s421 + $0x1e8] sm:$0xff] %v544
                  %v546 = vld [vmem:[%s420 + $0x220] sm:$0xff]
                  %547 = vst [vmem:[%s421 + $0x1f0] sm:$0xff] %v546
                  %v548 = vld [vmem:[%s420 + $0x228] sm:$0xff]
                  %549 = vst [vmem:[%s421 + $0x1f8] sm:$0xff] %v548
                  %s550 = sadd.s32 1, %s419
                  %p551 = scmp.ge.s32.totalorder %s550, %s412
                  %s552 = scalar_select %p551, 0, %s550
                  %s553 = smul.u32 %s552, 128
                  %s554 = smul.u32 %s552, 128
                  %s555 = scalar_lea.vmem %s224, %s553
                  %s556 = scalar_lea.vmem %s211, %s554 [#allocation2]
                $region63: #{downsample_forward.1} parent=57 // loop_footer
                  %s416 = sadd.s32 %s414, 1
                $region64: #{downsample_forward.1} parent=57 // loop_footer_branch
                  %413 = sbr.rel target = $region60
                $region65: #{downsample_forward.1} parent=57 // loop_exit
                  _
                %s557 = sshrl.u32 %s225, 4
                %s558 = sand.u32 %s225, 15
                %s559 = smul.u32 %s557, 16
                %s560 = smul.u32 8, %s559
                %s561 = scalar_lea.vmem %s224, %s560
                %s562 = smul.u32 8, %s559
                %s563 = scalar_lea.vmem %s211, %s562 [#allocation2]
                // While loop
                $region66: #{downsample_forward.1} parent=57 // loop_pre_header
                  _
                $region67: #{downsample_forward.1} parent=57 // loop_header
                  %s565 = sphi 0, %s567
                  %p566 = scmp.ge.s32.totalorder %s565, %s558
                  %s570 = sphi 0, %s583
                  %s571 = sphi %s561, %s586
                  %s572 = sphi %s563, %s587
                $region68: #{downsample_forward.1} parent=57 // loop_header_branch
                  %569 = sbr.rel (%p566) target = $region72
                $region69: #{downsample_forward.1} parent=57 // loop_body
                  %v573 = vld [vmem:[%s571] sm:$0xff]
                  %574 = vst [vmem:[%s572] sm:$0xff] %v573
                  %v575 = vld [vmem:[%s571 + $0x90] sm:$0xff]
                  %576 = vst [vmem:[%s572 + $0x80] sm:$0xff] %v575
                  %v577 = vld [vmem:[%s571 + $0x120] sm:$0xff]
                  %578 = vst [vmem:[%s572 + $0x100] sm:$0xff] %v577
                  %v579 = vld [vmem:[%s571 + $0x1b0] sm:$0xff]
                  %580 = vst [vmem:[%s572 + $0x180] sm:$0xff] %v579
                  %s581 = sadd.s32 1, %s570
                  %p582 = scmp.ge.s32.totalorder %s581, %s558
                  %s583 = scalar_select %p582, 0, %s581
                  %s584 = smul.u32 %s583, 8
                  %s585 = smul.u32 %s583, 8
                  %s586 = scalar_lea.vmem %s561, %s584
                  %s587 = scalar_lea.vmem %s563, %s585 [#allocation2]
                $region70: #{downsample_forward.1} parent=57 // loop_footer
                  %s567 = sadd.s32 %s565, 1
                $region71: #{downsample_forward.1} parent=57 // loop_footer_branch
                  %564 = sbr.rel target = $region67
                $region72: #{downsample_forward.1} parent=57 // loop_exit
                  _
              $region58: #{downsample_forward.1} parent=35 // pred_fallthru
                _
              // Predicated region
              $region73: #{downsample_forward.1} parent=35 // pred_check
                _
              $region74: #{downsample_forward.1} parent=35 // pred_check_branch
                %589 = sbr.rel target = $region76
              $region75: #{downsample_forward.1} parent=35 // pred_region
                _
              $region76: #{downsample_forward.1} parent=35 // pred_fallthru
                _
            $region36: #{downsample_forward.1} parent=31 // pred_fallthru
              _
            // Predicated region
            $region37: #{downsample_forward.1} parent=31 // pred_check
              _
            $region38: #{downsample_forward.1} parent=31 // pred_check_branch
              %232 = sbr.rel target = $region40
            $region39: #{downsample_forward.1} parent=31 // pred_region
              %s234 = sshrl.u32 %s225, 4
              // While loop
              $region41: #{downsample_forward.1} parent=39 // loop_pre_header
                _
              $region42: #{downsample_forward.1} parent=39 // loop_header
                %s236 = sphi 0, %s238
                %p237 = scmp.ge.s32.totalorder %s236, %s234
                %s241 = sphi 0, %s374
                %s242 = sphi %s224, %s377
                %s243 = sphi %s211, %s378
              $region43: #{downsample_forward.1} parent=39 // loop_header_branch
                %240 = sbr.rel (%p237) target = $region47
              $region44: #{downsample_forward.1} parent=39 // loop_body
                %v244 = vld [vmem:[%s242] sm:$0xff]
                %245 = vst [vmem:[%s243] sm:$0xff] %v244
                %v246 = vld [vmem:[%s242 + $0x8] sm:$0xff]
                %247 = vst [vmem:[%s243 + $0x8] sm:$0xff] %v246
                %v248 = vld [vmem:[%s242 + $0x10] sm:$0xff]
                %249 = vst [vmem:[%s243 + $0x10] sm:$0xff] %v248
                %v250 = vld [vmem:[%s242 + $0x18] sm:$0xff]
                %251 = vst [vmem:[%s243 + $0x18] sm:$0xff] %v250
                %v252 = vld [vmem:[%s242 + $0x20] sm:$0xff]
                %253 = vst [vmem:[%s243 + $0x20] sm:$0xff] %v252
                %v254 = vld [vmem:[%s242 + $0x28] sm:$0xff]
                %255 = vst [vmem:[%s243 + $0x28] sm:$0xff] %v254
                %v256 = vld [vmem:[%s242 + $0x30] sm:$0xff]
                %257 = vst [vmem:[%s243 + $0x30] sm:$0xff] %v256
                %v258 = vld [vmem:[%s242 + $0x38] sm:$0xff]
                %259 = vst [vmem:[%s243 + $0x38] sm:$0xff] %v258
                %v260 = vld [vmem:[%s242 + $0x40] sm:$0xff]
                %261 = vst [vmem:[%s243 + $0x40] sm:$0xff] %v260
                %v262 = vld [vmem:[%s242 + $0x48] sm:$0xff]
                %263 = vst [vmem:[%s243 + $0x48] sm:$0xff] %v262
                %v264 = vld [vmem:[%s242 + $0x50] sm:$0xff]
                %265 = vst [vmem:[%s243 + $0x50] sm:$0xff] %v264
                %v266 = vld [vmem:[%s242 + $0x58] sm:$0xff]
                %267 = vst [vmem:[%s243 + $0x58] sm:$0xff] %v266
                %v268 = vld [vmem:[%s242 + $0x60] sm:$0xff]
                %269 = vst [vmem:[%s243 + $0x60] sm:$0xff] %v268
                %v270 = vld [vmem:[%s242 + $0x68] sm:$0xff]
                %271 = vst [vmem:[%s243 + $0x68] sm:$0xff] %v270
                %v272 = vld [vmem:[%s242 + $0x70] sm:$0xff]
                %273 = vst [vmem:[%s243 + $0x70] sm:$0xff] %v272
                %v274 = vld [vmem:[%s242 + $0x78] sm:$0xff]
                %275 = vst [vmem:[%s243 + $0x78] sm:$0xff] %v274
                %v276 = vld [vmem:[%s242 + $0x90] sm:$0xff]
                %277 = vst [vmem:[%s243 + $0x80] sm:$0xff] %v276
                %v278 = vld [vmem:[%s242 + $0x98] sm:$0xff]
                %279 = vst [vmem:[%s243 + $0x88] sm:$0xff] %v278
                %v280 = vld [vmem:[%s242 + $0xa0] sm:$0xff]
                %281 = vst [vmem:[%s243 + $0x90] sm:$0xff] %v280
                %v282 = vld [vmem:[%s242 + $0xa8] sm:$0xff]
                %283 = vst [vmem:[%s243 + $0x98] sm:$0xff] %v282
                %v284 = vld [vmem:[%s242 + $0xb0] sm:$0xff]
                %285 = vst [vmem:[%s243 + $0xa0] sm:$0xff] %v284
                %v286 = vld [vmem:[%s242 + $0xb8] sm:$0xff]
                %287 = vst [vmem:[%s243 + $0xa8] sm:$0xff] %v286
                %v288 = vld [vmem:[%s242 + $0xc0] sm:$0xff]
                %289 = vst [vmem:[%s243 + $0xb0] sm:$0xff] %v288
                %v290 = vld [vmem:[%s242 + $0xc8] sm:$0xff]
                %291 = vst [vmem:[%s243 + $0xb8] sm:$0xff] %v290
                %v292 = vld [vmem:[%s242 + $0xd0] sm:$0xff]
                %293 = vst [vmem:[%s243 + $0xc0] sm:$0xff] %v292
                %v294 = vld [vmem:[%s242 + $0xd8] sm:$0xff]
                %295 = vst [vmem:[%s243 + $0xc8] sm:$0xff] %v294
                %v296 = vld [vmem:[%s242 + $0xe0] sm:$0xff]
                %297 = vst [vmem:[%s243 + $0xd0] sm:$0xff] %v296
                %v298 = vld [vmem:[%s242 + $0xe8] sm:$0xff]
                %299 = vst [vmem:[%s243 + $0xd8] sm:$0xff] %v298
                %v300 = vld [vmem:[%s242 + $0xf0] sm:$0xff]
                %301 = vst [vmem:[%s243 + $0xe0] sm:$0xff] %v300
                %v302 = vld [vmem:[%s242 + $0xf8] sm:$0xff]
                %303 = vst [vmem:[%s243 + $0xe8] sm:$0xff] %v302
                %v304 = vld [vmem:[%s242 + $0x100] sm:$0xff]
                %305 = vst [vmem:[%s243 + $0xf0] sm:$0xff] %v304
                %v306 = vld [vmem:[%s242 + $0x108] sm:$0xff]
                %307 = vst [vmem:[%s243 + $0xf8] sm:$0xff] %v306
                %v308 = vld [vmem:[%s242 + $0x120] sm:$0xff]
                %309 = vst [vmem:[%s243 + $0x100] sm:$0xff] %v308
                %v310 = vld [vmem:[%s242 + $0x128] sm:$0xff]
                %311 = vst [vmem:[%s243 + $0x108] sm:$0xff] %v310
                %v312 = vld [vmem:[%s242 + $0x130] sm:$0xff]
                %313 = vst [vmem:[%s243 + $0x110] sm:$0xff] %v312
                %v314 = vld [vmem:[%s242 + $0x138] sm:$0xff]
                %315 = vst [vmem:[%s243 + $0x118] sm:$0xff] %v314
                %v316 = vld [vmem:[%s242 + $0x140] sm:$0xff]
                %317 = vst [vmem:[%s243 + $0x120] sm:$0xff] %v316
                %v318 = vld [vmem:[%s242 + $0x148] sm:$0xff]
                %319 = vst [vmem:[%s243 + $0x128] sm:$0xff] %v318
                %v320 = vld [vmem:[%s242 + $0x150] sm:$0xff]
                %321 = vst [vmem:[%s243 + $0x130] sm:$0xff] %v320
                %v322 = vld [vmem:[%s242 + $0x158] sm:$0xff]
                %323 = vst [vmem:[%s243 + $0x138] sm:$0xff] %v322
                %v324 = vld [vmem:[%s242 + $0x160] sm:$0xff]
                %325 = vst [vmem:[%s243 + $0x140] sm:$0xff] %v324
                %v326 = vld [vmem:[%s242 + $0x168] sm:$0xff]
                %327 = vst [vmem:[%s243 + $0x148] sm:$0xff] %v326
                %v328 = vld [vmem:[%s242 + $0x170] sm:$0xff]
                %329 = vst [vmem:[%s243 + $0x150] sm:$0xff] %v328
                %v330 = vld [vmem:[%s242 + $0x178] sm:$0xff]
                %331 = vst [vmem:[%s243 + $0x158] sm:$0xff] %v330
                %v332 = vld [vmem:[%s242 + $0x180] sm:$0xff]
                %333 = vst [vmem:[%s243 + $0x160] sm:$0xff] %v332
                %v334 = vld [vmem:[%s242 + $0x188] sm:$0xff]
                %335 = vst [vmem:[%s243 + $0x168] sm:$0xff] %v334
                %v336 = vld [vmem:[%s242 + $0x190] sm:$0xff]
                %337 = vst [vmem:[%s243 + $0x170] sm:$0xff] %v336
                %v338 = vld [vmem:[%s242 + $0x198] sm:$0xff]
                %339 = vst [vmem:[%s243 + $0x178] sm:$0xff] %v338
                %v340 = vld [vmem:[%s242 + $0x1b0] sm:$0xff]
                %341 = vst [vmem:[%s243 + $0x180] sm:$0xff] %v340
                %v342 = vld [vmem:[%s242 + $0x1b8] sm:$0xff]
                %343 = vst [vmem:[%s243 + $0x188] sm:$0xff] %v342
                %v344 = vld [vmem:[%s242 + $0x1c0] sm:$0xff]
                %345 = vst [vmem:[%s243 + $0x190] sm:$0xff] %v344
                %v346 = vld [vmem:[%s242 + $0x1c8] sm:$0xff]
                %347 = vst [vmem:[%s243 + $0x198] sm:$0xff] %v346
                %v348 = vld [vmem:[%s242 + $0x1d0] sm:$0xff]
                %349 = vst [vmem:[%s243 + $0x1a0] sm:$0xff] %v348
                %v350 = vld [vmem:[%s242 + $0x1d8] sm:$0xff]
                %351 = vst [vmem:[%s243 + $0x1a8] sm:$0xff] %v350
                %v352 = vld [vmem:[%s242 + $0x1e0] sm:$0xff]
                %353 = vst [vmem:[%s243 + $0x1b0] sm:$0xff] %v352
                %v354 = vld [vmem:[%s242 + $0x1e8] sm:$0xff]
                %355 = vst [vmem:[%s243 + $0x1b8] sm:$0xff] %v354
                %v356 = vld [vmem:[%s242 + $0x1f0] sm:$0xff]
                %357 = vst [vmem:[%s243 + $0x1c0] sm:$0xff] %v356
                %v358 = vld [vmem:[%s242 + $0x1f8] sm:$0xff]
                %359 = vst [vmem:[%s243 + $0x1c8] sm:$0xff] %v358
                %v360 = vld [vmem:[%s242 + $0x200] sm:$0xff]
                %361 = vst [vmem:[%s243 + $0x1d0] sm:$0xff] %v360
                %v362 = vld [vmem:[%s242 + $0x208] sm:$0xff]
                %363 = vst [vmem:[%s243 + $0x1d8] sm:$0xff] %v362
                %v364 = vld [vmem:[%s242 + $0x210] sm:$0xff]
                %365 = vst [vmem:[%s243 + $0x1e0] sm:$0xff] %v364
                %v366 = vld [vmem:[%s242 + $0x218] sm:$0xff]
                %367 = vst [vmem:[%s243 + $0x1e8] sm:$0xff] %v366
                %v368 = vld [vmem:[%s242 + $0x220] sm:$0xff]
                %369 = vst [vmem:[%s243 + $0x1f0] sm:$0xff] %v368
                %v370 = vld [vmem:[%s242 + $0x228] sm:$0xff]
                %371 = vst [vmem:[%s243 + $0x1f8] sm:$0xff] %v370
                %s372 = sadd.s32 1, %s241
                %p373 = scmp.ge.s32.totalorder %s372, %s234
                %s374 = scalar_select %p373, 0, %s372
                %s375 = smul.u32 %s374, 128
                %s376 = smul.u32 %s374, 128
                %s377 = scalar_lea.vmem %s224, %s375
                %s378 = scalar_lea.vmem %s211, %s376 [#allocation2]
              $region45: #{downsample_forward.1} parent=39 // loop_footer
                %s238 = sadd.s32 %s236, 1
              $region46: #{downsample_forward.1} parent=39 // loop_footer_branch
                %235 = sbr.rel target = $region42
              $region47: #{downsample_forward.1} parent=39 // loop_exit
                _
              %s379 = sshrl.u32 %s225, 4
              %s380 = sand.u32 %s225, 15
              %s381 = smul.u32 %s379, 16
              %s382 = smul.u32 8, %s381
              %s383 = scalar_lea.vmem %s224, %s382
              %s384 = smul.u32 8, %s381
              %s385 = scalar_lea.vmem %s211, %s384 [#allocation2]
              // While loop
              $region48: #{downsample_forward.1} parent=39 // loop_pre_header
                _
              $region49: #{downsample_forward.1} parent=39 // loop_header
                %s387 = sphi 0, %s389
                %p388 = scmp.ge.s32.totalorder %s387, %s380
                %s392 = sphi 0, %s405
                %s393 = sphi %s383, %s408
                %s394 = sphi %s385, %s409
              $region50: #{downsample_forward.1} parent=39 // loop_header_branch
                %391 = sbr.rel (%p388) target = $region54
              $region51: #{downsample_forward.1} parent=39 // loop_body
                %v395 = vld [vmem:[%s393] sm:$0xff]
                %396 = vst [vmem:[%s394] sm:$0xff] %v395
                %v397 = vld [vmem:[%s393 + $0x90] sm:$0xff]
                %398 = vst [vmem:[%s394 + $0x80] sm:$0xff] %v397
                %v399 = vld [vmem:[%s393 + $0x120] sm:$0xff]
                %400 = vst [vmem:[%s394 + $0x100] sm:$0xff] %v399
                %v401 = vld [vmem:[%s393 + $0x1b0] sm:$0xff]
                %402 = vst [vmem:[%s394 + $0x180] sm:$0xff] %v401
                %s403 = sadd.s32 1, %s392
                %p404 = scmp.ge.s32.totalorder %s403, %s380
                %s405 = scalar_select %p404, 0, %s403
                %s406 = smul.u32 %s405, 8
                %s407 = smul.u32 %s405, 8
                %s408 = scalar_lea.vmem %s383, %s406
                %s409 = scalar_lea.vmem %s385, %s407 [#allocation2]
              $region52: #{downsample_forward.1} parent=39 // loop_footer
                %s389 = sadd.s32 %s387, 1
              $region53: #{downsample_forward.1} parent=39 // loop_footer_branch
                %386 = sbr.rel target = $region49
              $region54: #{downsample_forward.1} parent=39 // loop_exit
                _
            $region40: #{downsample_forward.1} parent=31 // pred_fallthru
              _
          $region32: #{downsample_forward.1} parent=27 // pred_fallthru
            _
          %590 = vnop
        $region28: #{downsample_forward.1} parent=23 // pred_fallthru
          _
        // Predicated region
        $region77: #{downsample_forward.1} parent=23 // pred_check
          %p591 = pneg %p85
        $region78: #{downsample_forward.1} parent=23 // pred_check_branch
          %593 = sbr.rel (%p591) target = $region80
        $region79: #{downsample_forward.1} parent=23 // pred_region
          %s594 = sand.u32 %s75, 1
          %s595 = sand.u32 %s75, 1
          %s596 = smul.addr %s595, 32
          %s597 = scalar_lea.vmem [#allocation3], %s596
          %s598 = smul.u32 %s17, 2
          %s599 = smul.u32 %s18, 8
          %s600 = sadd.s32 %s599, 8
          %s601 = smul.u32 2, %s598
          %s602 = smul.addr %s600, 2
          %s603 = smul.addr %s601, 18
          %s604 = sadd.s32 %s602, %s603
          %s605 = smul.addr %s604, 8
          %s606 = scalar_lea.vmem %s1, %s605
          // Predicated region
          $region81: #{downsample_forward.1} parent=79 // pred_check
            _
          $region82: #{downsample_forward.1} parent=79 // pred_check_branch
            %608 = sbr.rel (0) target = $region84
          $region83: #{downsample_forward.1} parent=79 // pred_region
            // Predicated region
            $region85: #{downsample_forward.1} parent=83 // pred_check
              _
            $region86: #{downsample_forward.1} parent=83 // pred_check_branch
              %610 = sbr.rel (0) target = $region88
            $region87: #{downsample_forward.1} parent=83 // pred_region
              // Predicated region
              $region100: #{downsample_forward.1} parent=87 // pred_check
                _
              $region101: #{downsample_forward.1} parent=87 // pred_check_branch
                %631 = sbr.rel (0) target = $region103
              $region102: #{downsample_forward.1} parent=87 // pred_region
                loop: start=0, step=1, limit=1
                $region104: #{downsample_forward.1} parent=102 // loop_pre_header
                  _
                $region105: #{downsample_forward.1} parent=102 // loop_header
                  %s633 = sphi 0, %s637
                  %p634 = scmp.ge.s32.totalorder %s633, 1
                  %s638 = sphi %s606, %s606
                  %s639 = sphi %s597, %s597
                $region106: #{downsample_forward.1} parent=102 // loop_header_branch
                  %636 = sbr.rel (%p634) target = $region110
                $region107: #{downsample_forward.1} parent=102 // loop_body
                  %v640 = vld [vmem:[%s638] sm:$0xff]
                  %641 = vst [vmem:[%s639] sm:$0xff] %v640
                  %v642 = vld [vmem:[%s638 + $0x8] sm:$0xff]
                  %643 = vst [vmem:[%s639 + $0x8] sm:$0xff] %v642
                  %v644 = vld [vmem:[%s638 + $0x90] sm:$0xff]
                  %645 = vst [vmem:[%s639 + $0x10] sm:$0xff] %v644
                  %v646 = vld [vmem:[%s638 + $0x98] sm:$0xff]
                  %647 = vst [vmem:[%s639 + $0x18] sm:$0xff] %v646
                $region108: #{downsample_forward.1} parent=102 // loop_footer
                  %s637 = sadd.s32 1, %s633
                $region109: #{downsample_forward.1} parent=102 // loop_footer_branch
                  %632 = sbr.rel target = $region105
                $region110: #{downsample_forward.1} parent=102 // loop_exit
                  _
              $region103: #{downsample_forward.1} parent=87 // pred_fallthru
                _
              // Predicated region
              $region111: #{downsample_forward.1} parent=87 // pred_check
                _
              $region112: #{downsample_forward.1} parent=87 // pred_check_branch
                %649 = sbr.rel target = $region114
              $region113: #{downsample_forward.1} parent=87 // pred_region
                _
              $region114: #{downsample_forward.1} parent=87 // pred_fallthru
                _
            $region88: #{downsample_forward.1} parent=83 // pred_fallthru
              _
            // Predicated region
            $region89: #{downsample_forward.1} parent=83 // pred_check
              _
            $region90: #{downsample_forward.1} parent=83 // pred_check_branch
              %612 = sbr.rel target = $region92
            $region91: #{downsample_forward.1} parent=83 // pred_region
              loop: start=0, step=1, limit=1
              $region93: #{downsample_forward.1} parent=91 // loop_pre_header
                _
              $region94: #{downsample_forward.1} parent=91 // loop_header
                %s615 = sphi 0, %s619
                %p616 = scmp.ge.s32.totalorder %s615, 1
                %s620 = sphi %s606, %s606
                %s621 = sphi %s597, %s597
              $region95: #{downsample_forward.1} parent=91 // loop_header_branch
                %618 = sbr.rel (%p616) target = $region99
              $region96: #{downsample_forward.1} parent=91 // loop_body
                %v622 = vld [vmem:[%s620] sm:$0xff]
                %623 = vst [vmem:[%s621] sm:$0xff] %v622
                %v624 = vld [vmem:[%s620 + $0x8] sm:$0xff]
                %625 = vst [vmem:[%s621 + $0x8] sm:$0xff] %v624
                %v626 = vld [vmem:[%s620 + $0x90] sm:$0xff]
                %627 = vst [vmem:[%s621 + $0x10] sm:$0xff] %v626
                %v628 = vld [vmem:[%s620 + $0x98] sm:$0xff]
                %629 = vst [vmem:[%s621 + $0x18] sm:$0xff] %v628
              $region97: #{downsample_forward.1} parent=91 // loop_footer
                %s619 = sadd.s32 1, %s615
              $region98: #{downsample_forward.1} parent=91 // loop_footer_branch
                %614 = sbr.rel target = $region94
              $region99: #{downsample_forward.1} parent=91 // loop_exit
                _
            $region92: #{downsample_forward.1} parent=83 // pred_fallthru
              _
          $region84: #{downsample_forward.1} parent=79 // pred_fallthru
            _
          %650 = vnop
        $region80: #{downsample_forward.1} parent=23 // pred_fallthru
          _
      $region24: #{downsample_forward.1} parent=5 // pred_fallthru
        _
      %p651 = scmp.le.s32.totalorder 1, %s10
      %p652 = scmp.lt.s32.totalorder %s10, 3
      %p653 = pnand %p651, %p652
      %p654 = pneg %p653
      // Predicated region
      $region115: #{downsample_forward.1} parent=5 // pred_check
        _
      $region116: #{downsample_forward.1} parent=5 // pred_check_branch
        %656 = sbr.rel (%p653) target = $region118
      $region117: #{downsample_forward.1} parent=5 // pred_region
        %s657 = ssub.s32 %s10, 1
        %s658 = sand.u32 %s44, 1
        %s659 = sand.u32 %s44, 1
        %s660 = smul.addr %s659, 512
        %s661 = scalar_lea.vmem [#allocation2], %s660
        // Predicated region
        $region119: #{downsample_forward.1} parent=117 // pred_check
          %p662 = pneg %p57
        $region120: #{downsample_forward.1} parent=117 // pred_check_branch
          %664 = sbr.rel (%p662) target = $region122
        $region121: #{downsample_forward.1} parent=117 // pred_region
          _
        $region122: #{downsample_forward.1} parent=117 // pred_fallthru
          _
        %s665 = sand.u32 %s78, 1
        %s666 = sand.u32 %s78, 1
        %s667 = smul.addr %s666, 32
        %s668 = scalar_lea.vmem [#allocation3], %s667
        // Predicated region
        $region123: #{downsample_forward.1} parent=117 // pred_check
          %p669 = pneg %p91
        $region124: #{downsample_forward.1} parent=117 // pred_check_branch
          %671 = sbr.rel (%p669) target = $region126
        $region125: #{downsample_forward.1} parent=117 // pred_region
          _
        $region126: #{downsample_forward.1} parent=117 // pred_fallthru
          _
        %s672 = sand.u32 %s44, 1
        %s673 = sand.u32 %s44, 1
        %s674 = smul.addr %s673, 512
        %s675 = scalar_lea.vmem [#allocation2], %s674
        %p676 = pneg %p57
        %p677 = pneg %p54
        %s678 = sand.u32 %s78, 1
        %s679 = sand.u32 %s78, 1
        %s680 = smul.addr %s679, 32
        %s681 = scalar_lea.vmem [#allocation3], %s680
        %p682 = pneg %p91
        %p683 = pneg %p88
        %p684 = scmp.lt.s32.totalorder %s22, 0
        %s685 = scalar_select %p684, %s22, 0
        %s686 = smul.addr %s685, 4
        %s687 = scalar_lea.vmem %s2, %s686
        %p688 = pneg %p117
        %p689 = pneg %p114
        %p690 = scmp.lt.s32.totalorder %s22, 0
        %s691 = scalar_select %p690, %s22, 0
        %s692 = scalar_lea.vmem %s3, %s691
        %p693 = pneg %p143
        %p694 = pneg %p140
        %p695 = pneg %p173
        %p696 = pneg %p170
        %s697 = smul.u32 8, %s21
        %p698 = scmp.lt.s32.totalorder %s20, 1
        %s699 = scalar_select %p698, %s20, 1
        %p700 = scmp.lt.s32.totalorder %s697, 7
        %s701 = scalar_select %p700, %s697, 7
        %p702 = scmp.lt.s32.totalorder %s22, 0
        %s703 = scalar_select %p702, %s22, 0
        %s704 = sadd.s32 %s703, %s701
        %s705 = smul.addr %s699, 8
        %s706 = sadd.s32 %s704, %s705
        %s707 = smul.addr %s706, 8
        %s708 = scalar_lea.vmem %s4, %s707
        %s709 = smul.u32 4, %s20
        %s710 = smul.u32 8, %s21
        %s711 = ssub.s32 9, %s710
        %p712 = scmp.lt.s32.totalorder %s711, 8
        %s713 = scalar_select %p712, %s711, 8
        %s714 = smul.u32 512, %s713
        %s715 = smul.u32 %s714, 2
        %s716 = smul.u32 %s20, 2
        %s717 = smul.u32 %s21, 8
        %s718 = sadd.s32 %s717, 8
        %s719 = smul.u32 2, %s716
        %p720 = scmp.lt.s32.totalorder %s22, 0
        %s721 = scalar_select %p720, %s22, 0
        %s722 = smul.addr %s721, 4
        %s723 = scalar_lea.vmem %s2, %s722
        %p724 = scmp.lt.s32.totalorder %s22, 0
        %s725 = scalar_select %p724, %s22, 0
        %s726 = scalar_lea.vmem %s3, %s725
        %s727 = smul.u32 8, %s21
        %p728 = scmp.lt.s32.totalorder %s20, 1
        %s729 = scalar_select %p728, %s20, 1
        %p730 = scmp.lt.s32.totalorder %s727, 7
        %s731 = scalar_select %p730, %s727, 7
        %p732 = scmp.lt.s32.totalorder %s22, 0
        %s733 = scalar_select %p732, %s22, 0
        %s734 = sadd.s32 %s733, %s731
        %s735 = smul.addr %s729, 8
        %s736 = sadd.s32 %s734, %s735
        %s737 = smul.addr %s736, 8
        %s738 = scalar_lea.vmem %s4, %s737
        %s739 = smul.u32 8, %s21
        %v740 = vld [vmem:[%s661] sm:$0xff]
        %v741 = vld [vmem:[%s661 + $0x8] sm:$0x1]
        %v742 = vld [vmem:[%s661 + $0x10] sm:$0xff]
        %v743 = vld [vmem:[%s661 + $0x18] sm:$0x1]
        %v744 = vld [vmem:[%s661 + $0x20] sm:$0xff]
        %v745 = vld [vmem:[%s661 + $0x28] sm:$0x1]
        %v746 = vld [vmem:[%s661 + $0x30] sm:$0xff]
        %v747 = vld [vmem:[%s661 + $0x38] sm:$0x1]
        %v748 = vld [vmem:[%s661 + $0x40] sm:$0xff]
        %v749 = vld [vmem:[%s661 + $0x48] sm:$0x1]
        %v750 = vld [vmem:[%s661 + $0x50] sm:$0xff]
        %v751 = vld [vmem:[%s661 + $0x58] sm:$0x1]
        %v752 = vld [vmem:[%s661 + $0x60] sm:$0xff]
        %v753 = vld [vmem:[%s661 + $0x68] sm:$0x1]
        %v754 = vld [vmem:[%s661 + $0x70] sm:$0xff]
        %v755 = vld [vmem:[%s661 + $0x78] sm:$0x1]
        %v756 = vld [vmem:[%s723] sm:$0xf]
        %s757 = scalar_lea.vmem %s661, 128 [#allocation2]
        %v758 = vld [vmem:[%s757] sm:$0xff]
        %v759 = vld [vmem:[%s757 + $0x10] sm:$0xff]
        %v760 = vld [vmem:[%s757 + $0x20] sm:$0xff]
        %v761 = vld [vmem:[%s757 + $0x30] sm:$0xff]
        %v762 = vld [vmem:[%s757 + $0x40] sm:$0xff]
        %v763 = vld [vmem:[%s757 + $0x50] sm:$0xff]
        %v764 = vld [vmem:[%s757 + $0x60] sm:$0xff]
        %v765 = vld [vmem:[%s757 + $0x70] sm:$0xff]
        %s766 = scalar_lea.vmem %s723, 4
        %v767 = vld [vmem:[%s766] sm:$0xf]
        %vm768 = vcmask 31744
        %v770 = vsel %vm768, %v758, 0
        %v773 = vsel %vm768, %v759, 0
        %v776 = vsel %vm768, %v760, 0
        %v779 = vsel %vm768, %v761, 0
        %v782 = vsel %vm768, %v762, 0
        %v785 = vsel %vm768, %v763, 0
        %v788 = vsel %vm768, %v764, 0
        %v791 = vsel %vm768, %v765, 0
        %vm793 = vcmask 1043456
        %v795 = vsel %vm793, %v767, 0
        %797 = vmatprep.subr.mxu0 0.0
        %v798 = vand.u32 %v795, 4294901760
        %799 = vmatpush1.msra.mxu0 %v798
        %800 = vmatprep.subr.mxu0 0.0
        %801 = vmatpush1.msra.mxu0 0.0
        %802 = vmatprep.subr.mxu0 0.0
        %803 = vmatpush1.msra.mxu0 0.0
        %804 = vmatprep.subr.mxu0 0.0
        %805 = vmatpush1.msra.mxu0 0.0
        %806 = vmatprep.subr.mxu0 0.0
        %807 = vmatpush1.msra.mxu0 0.0
        %808 = vmatprep.subr.mxu0 0.0
        %809 = vmatpush1.msra.mxu0 0.0
        %810 = vmatprep.subr.mxu0 0.0
        %811 = vmatpush1.msra.mxu0 0.0
        %812 = vmatprep.subr.mxu0 0.0
        %813 = vmatpush1.msra.mxu0 0.0
        %814 = vmatprep.subr.mxu0 0.0
        %815 = vmatpush1.msra.mxu0 0.0
        %816 = vmatprep.subr.mxu0 0.0
        %817 = vmatpush1.msra.mxu0 0.0
        %818 = vmatprep.subr.mxu0 0.0
        %819 = vmatpush1.msra.mxu0 0.0
        %820 = vmatprep.subr.mxu0 0.0
        %821 = vmatpush1.msra.mxu0 0.0
        %822 = vmatprep.subr.mxu0 0.0
        %823 = vmatpush1.msra.mxu0 0.0
        %824 = vmatprep.subr.mxu0 0.0
        %825 = vmatpush1.msra.mxu0 0.0
        %826 = vmatprep.subr.mxu0 0.0
        %827 = vmatpush1.msra.mxu0 0.0
        %828 = vmatprep.subr.mxu0 0.0
        %829 = vmatpush1.msra.mxu0 0.0
        %830 = vmatprep.subr.mxu0 0.0
        %831 = vmatpush1.msra.mxu0 0.0
        %832 = vmatprep.subr.mxu0 0.0
        %833 = vmatpush1.msra.mxu0 0.0
        %834 = vmatprep.subr.mxu0 0.0
        %835 = vmatpush1.msra.mxu0 0.0
        %836 = vmatprep.subr.mxu0 0.0
        %837 = vmatpush1.msra.mxu0 0.0
        %838 = vmatprep.subr.mxu0 0.0
        %839 = vmatpush1.msra.mxu0 0.0
        %840 = vmatprep.subr.mxu0 0.0
        %841 = vmatpush1.msra.mxu0 0.0
        %842 = vmatprep.subr.mxu0 0.0
        %843 = vmatpush1.msra.mxu0 0.0
        %844 = vmatprep.subr.mxu0 0.0
        %845 = vmatpush1.msra.mxu0 0.0
        %846 = vmatprep.subr.mxu0 0.0
        %847 = vmatpush1.msra.mxu0 0.0
        %848 = vmatprep.subr.mxu0 0.0
        %849 = vmatpush1.msra.mxu0 0.0
        %850 = vmatprep.subr.mxu0 0.0
        %851 = vmatpush1.msra.mxu0 0.0
        %852 = vmatprep.subr.mxu0 0.0
        %853 = vmatpush1.msra.mxu0 0.0
        %854 = vmatprep.subr.mxu0 0.0
        %855 = vmatpush1.msra.mxu0 0.0
        %856 = vmatprep.subr.mxu0 0.0
        %857 = vmatpush1.msra.mxu0 0.0
        %858 = vmatprep.subr.mxu0 0.0
        %859 = vmatpush1.msra.mxu0 0.0
        %860 = vmatprep.subr.mxu0 0.0
        %861 = vmatpush1.msra.mxu0 0.0
        %862 = vmatprep.mubr.f32.mxu0 0.0
        %v863 = vand.u32 %v770, 4294901760
        %v864 = vsub.f32 %v770, %v863
        %v865 = vand.u32 %v864, 4294901760
        %v866 = vsub.f32 %v864, %v865
        %v867 = vand.u32 %v866, 4294901760
        %868 = vmatmul.mubr.f32.gmra.mrb[0].mxu0 %v867
        %v869 = vpop.f32.mrb[0].mxu0
        %v870 = vadd.f32 0.0, %v869
        %v871 = vpop.f32.mrb[0].mxu0
        %872 = vmatprep.mubr.f32.mxu0 0.0
        %v873 = vand.u32 %v773, 4294901760
        %v874 = vsub.f32 %v773, %v873
        %v875 = vand.u32 %v874, 4294901760
        %v876 = vsub.f32 %v874, %v875
        %v877 = vand.u32 %v876, 4294901760
        %878 = vmatmul.mubr.f32.gmra.mrb[0].mxu0 %v877
        %v879 = vpop.f32.mrb[0].mxu0
        %v880 = vadd.f32 0.0, %v879
        %v881 = vpop.f32.mrb[0].mxu0
        %882 = vmatprep.mubr.f32.mxu0 0.0
        %v883 = vand.u32 %v776, 4294901760
        %v884 = vsub.f32 %v776, %v883
        %v885 = vand.u32 %v884, 4294901760
        %v886 = vsub.f32 %v884, %v885
        %v887 = vand.u32 %v886, 4294901760
        %888 = vmatmul.mubr.f32.gmra.mrb[0].mxu0 %v887
        %v889 = vpop.f32.mrb[0].mxu0
        %v890 = vadd.f32 0.0, %v889
        %v891 = vpop.f32.mrb[0].mxu0
        %892 = vmatprep.mubr.f32.mxu0 0.0
        %v893 = vand.u32 %v779, 4294901760
        %v894 = vsub.f32 %v779, %v893
        %v895 = vand.u32 %v894, 4294901760
        %v896 = vsub.f32 %v894, %v895
        %v897 = vand.u32 %v896, 4294901760
        %898 = vmatmul.mubr.f32.gmra.mrb[0].mxu0 %v897
        %v899 = vpop.f32.mrb[0].mxu0
        %v900 = vadd.f32 0.0, %v899
        %v901 = vpop.f32.mrb[0].mxu0
        %902 = vmatprep.mubr.f32.mxu0 0.0
        %v903 = vand.u32 %v782, 4294901760
        %v904 = vsub.f32 %v782, %v903
        %v905 = vand.u32 %v904, 4294901760
        %v906 = vsub.f32 %v904, %v905
        %v907 = vand.u32 %v906, 4294901760
        %908 = vmatmul.mubr.f32.gmra.mrb[0].mxu0 %v907
        %v909 = vpop.f32.mrb[0].mxu0
        %v910 = vadd.f32 0.0, %v909
        %v911 = vpop.f32.mrb[0].mxu0
        %912 = vmatprep.mubr.f32.mxu0 0.0
        %v913 = vand.u32 %v785, 4294901760
        %v914 = vsub.f32 %v785, %v913
        %v915 = vand.u32 %v914, 4294901760
        %v916 = vsub.f32 %v914, %v915
        %v917 = vand.u32 %v916, 4294901760
        %918 = vmatmul.mubr.f32.gmra.mrb[0].mxu0 %v917
        %v919 = vpop.f32.mrb[0].mxu0
        %v920 = vadd.f32 0.0, %v919
        %v921 = vpop.f32.mrb[0].mxu0
        %922 = vmatprep.mubr.f32.mxu0 0.0
        %v923 = vand.u32 %v788, 4294901760
        %v924 = vsub.f32 %v788, %v923
        %v925 = vand.u32 %v924, 4294901760
        %v926 = vsub.f32 %v924, %v925
        %v927 = vand.u32 %v926, 4294901760
        %928 = vmatmul.mubr.f32.gmra.mrb[0].mxu0 %v927
        %v929 = vpop.f32.mrb[0].mxu0
        %v930 = vadd.f32 0.0, %v929
        %v931 = vpop.f32.mrb[0].mxu0
        %932 = vmatprep.mubr.f32.mxu0 0.0
        %v933 = vand.u32 %v791, 4294901760
        %v934 = vsub.f32 %v791, %v933
        %v935 = vand.u32 %v934, 4294901760
        %v936 = vsub.f32 %v934, %v935
        %v937 = vand.u32 %v936, 4294901760
        %938 = vmatmul.mubr.f32.gmra.mrb[0].mxu0 %v937
        %v939 = vpop.f32.mrb[0].mxu0
        %v940 = vadd.f32 0.0, %v939
        %v941 = vpop.f32.mrb[0].mxu0
        %942 = vdwg.mxu0
        %943 = vmatprep.subr.mxu0 0.0
        %v944 = vand.u32 %v795, 4294901760
        %v945 = vsub.f32 %v795, %v944
        %v946 = vand.u32 %v945, 4294901760
        %v947 = vsub.f32 %v945, %v946
        %v948 = vand.u32 %v947, 4294901760
        %949 = vmatpush1.msra.mxu0 %v948
        %950 = vmatprep.subr.mxu0 0.0
        %951 = vmatpush1.msra.mxu0 0.0
        %952 = vmatprep.subr.mxu0 0.0
        %953 = vmatpush1.msra.mxu0 0.0
        %954 = vmatprep.subr.mxu0 0.0
        %955 = vmatpush1.msra.mxu0 0.0
        %956 = vmatprep.subr.mxu0 0.0
        %957 = vmatpush1.msra.mxu0 0.0
        %958 = vmatprep.subr.mxu0 0.0
        %959 = vmatpush1.msra.mxu0 0.0
        %960 = vmatprep.subr.mxu0 0.0
        %961 = vmatpush1.msra.mxu0 0.0
        %962 = vmatprep.subr.mxu0 0.0
        %963 = vmatpush1.msra.mxu0 0.0
        %964 = vmatprep.subr.mxu0 0.0
        %965 = vmatpush1.msra.mxu0 0.0
        %966 = vmatprep.subr.mxu0 0.0
        %967 = vmatpush1.msra.mxu0 0.0
        %968 = vmatprep.subr.mxu0 0.0
        %969 = vmatpush1.msra.mxu0 0.0
        %970 = vmatprep.subr.mxu0 0.0
        %971 = vmatpush1.msra.mxu0 0.0
        %972 = vmatprep.subr.mxu0 0.0
        %973 = vmatpush1.msra.mxu0 0.0
        %974 = vmatprep.subr.mxu0 0.0
        %975 = vmatpush1.msra.mxu0 0.0
        %976 = vmatprep.subr.mxu0 0.0
        %977 = vmatpush1.msra.mxu0 0.0
        %978 = vmatprep.subr.mxu0 0.0
        %979 = vmatpush1.msra.mxu0 0.0
        %980 = vmatprep.subr.mxu0 0.0
        %981 = vmatpush1.msra.mxu0 0.0
        %982 = vmatprep.subr.mxu0 0.0
        %983 = vmatpush1.msra.mxu0 0.0
        %984 = vmatprep.subr.mxu0 0.0
        %985 = vmatpush1.msra.mxu0 0.0
        %986 = vmatprep.subr.mxu0 0.0
        %987 = vmatpush1.msra.mxu0 0.0
        %988 = vmatprep.subr.mxu0 0.0
        %989 = vmatpush1.msra.mxu0 0.0
        %990 = vmatprep.subr.mxu0 0.0
        %991 = vmatpush1.msra.mxu0 0.0
        %992 = vmatprep.subr.mxu0 0.0
        %993 = vmatpush1.msra.mxu0 0.0
        %994 = vmatprep.subr.mxu0 0.0
        %995 = vmatpush1.msra.mxu0 0.0
        %996 = vmatprep.subr.mxu0 0.0
        %997 = vmatpush1.msra.mxu0 0.0
        %998 = vmatprep.subr.mxu0 0.0
        %999 = vmatpush1.msra.mxu0 0.0
        %1000 = vmatprep.subr.mxu0 0.0
        %1001 = vmatpush1.msra.mxu0 0.0
        %1002 = vmatprep.subr.mxu0 0.0
        %1003 = vmatpush1.msra.mxu0 0.0
        %1004 = vmatprep.subr.mxu0 0.0
        %1005 = vmatpush1.msra.mxu0 0.0
        %1006 = vmatprep.subr.mxu0 0.0
        %1007 = vmatpush1.msra.mxu0 0.0
        %1008 = vmatprep.subr.mxu0 0.0
        %1009 = vmatpush1.msra.mxu0 0.0
        %1010 = vmatprep.subr.mxu0 0.0
        %1011 = vmatpush1.msra.mxu0 0.0
        %1012 = vmatprep.mubr.f32.mxu0 0.0
        %v1013 = vand.u32 %v770, 4294901760
        %1014 = vmatmul.mubr.f32.gmra.mrb[0].mxu0 %v1013
        %v1015 = vpop.f32.mrb[0].mxu0
        %v1016 = vadd.f32 %v870, %v1015
        %v1017 = vpop.f32.mrb[0].mxu0
        %1018 = vmatprep.mubr.f32.mxu0 0.0
        %v1019 = vand.u32 %v773, 4294901760
        %1020 = vmatmul.mubr.f32.gmra.mrb[0].mxu0 %v1019
        %v1021 = vpop.f32.mrb[0].mxu0
        %v1022 = vadd.f32 %v880, %v1021
        %v1023 = vpop.f32.mrb[0].mxu0
        %1024 = vmatprep.mubr.f32.mxu0 0.0
        %v1025 = vand.u32 %v776, 4294901760
        %1026 = vmatmul.mubr.f32.gmra.mrb[0].mxu0 %v1025
        %v1027 = vpop.f32.mrb[0].mxu0
        %v1028 = vadd.f32 %v890, %v1027
        %v1029 = vpop.f32.mrb[0].mxu0
        %1030 = vmatprep.mubr.f32.mxu0 0.0
        %v1031 = vand.u32 %v779, 4294901760
        %1032 = vmatmul.mubr.f32.gmra.mrb[0].mxu0 %v1031
        %v1033 = vpop.f32.mrb[0].mxu0
        %v1034 = vadd.f32 %v900, %v1033
        %v1035 = vpop.f32.mrb[0].mxu0
        %1036 = vmatprep.mubr.f32.mxu0 0.0
        %v1037 = vand.u32 %v782, 4294901760
        %1038 = vmatmul.mubr.f32.gmra.mrb[0].mxu0 %v1037
        %v1039 = vpop.f32.mrb[0].mxu0
        %v1040 = vadd.f32 %v910, %v1039
        %v1041 = vpop.f32.mrb[0].mxu0
        %1042 = vmatprep.mubr.f32.mxu0 0.0
        %v1043 = vand.u32 %v785, 4294901760
        %1044 = vmatmul.mubr.f32.gmra.mrb[0].mxu0 %v1043
        %v1045 = vpop.f32.mrb[0].mxu0
        %v1046 = vadd.f32 %v920, %v1045
        %v1047 = vpop.f32.mrb[0].mxu0
        %1048 = vmatprep.mubr.f32.mxu0 0.0
        %v1049 = vand.u32 %v788, 4294901760
        %1050 = vmatmul.mubr.f32.gmra.mrb[0].mxu0 %v1049
        %v1051 = vpop.f32.mrb[0].mxu0
        %v1052 = vadd.f32 %v930, %v1051
        %v1053 = vpop.f32.mrb[0].mxu0
        %1054 = vmatprep.mubr.f32.mxu0 0.0
        %v1055 = vand.u32 %v791, 4294901760
        %1056 = vmatmul.mubr.f32.gmra.mrb[0].mxu0 %v1055
        %v1057 = vpop.f32.mrb[0].mxu0
        %v1058 = vadd.f32 %v940, %v1057
        %v1059 = vpop.f32.mrb[0].mxu0
        %1060 = vdwg.mxu0
        %1061 = vmatprep.subr.mxu0 0.0
        %v1062 = vand.u32 %v795, 4294901760
        %v1063 = vsub.f32 %v795, %v1062
        %1064 = vmatpush1.msra.mxu0 %v1063
        %1065 = vmatprep.subr.mxu0 0.0
        %1066 = vmatpush1.msra.mxu0 0.0
        %1067 = vmatprep.subr.mxu0 0.0
        %1068 = vmatpush1.msra.mxu0 0.0
        %1069 = vmatprep.subr.mxu0 0.0
        %1070 = vmatpush1.msra.mxu0 0.0
        %1071 = vmatprep.subr.mxu0 0.0
        %1072 = vmatpush1.msra.mxu0 0.0
        %1073 = vmatprep.subr.mxu0 0.0
        %1074 = vmatpush1.msra.mxu0 0.0
        %1075 = vmatprep.subr.mxu0 0.0
        %1076 = vmatpush1.msra.mxu0 0.0
        %1077 = vmatprep.subr.mxu0 0.0
        %1078 = vmatpush1.msra.mxu0 0.0
        %1079 = vmatprep.subr.mxu0 0.0
        %1080 = vmatpush1.msra.mxu0 0.0
        %1081 = vmatprep.subr.mxu0 0.0
        %1082 = vmatpush1.msra.mxu0 0.0
        %1083 = vmatprep.subr.mxu0 0.0
        %1084 = vmatpush1.msra.mxu0 0.0
        %1085 = vmatprep.subr.mxu0 0.0
        %1086 = vmatpush1.msra.mxu0 0.0
        %1087 = vmatprep.subr.mxu0 0.0
        %1088 = vmatpush1.msra.mxu0 0.0
        %1089 = vmatprep.subr.mxu0 0.0
        %1090 = vmatpush1.msra.mxu0 0.0
        %1091 = vmatprep.subr.mxu0 0.0
        %1092 = vmatpush1.msra.mxu0 0.0
        %1093 = vmatprep.subr.mxu0 0.0
        %1094 = vmatpush1.msra.mxu0 0.0
        %1095 = vmatprep.subr.mxu0 0.0
        %1096 = vmatpush1.msra.mxu0 0.0
        %1097 = vmatprep.subr.mxu0 0.0
        %1098 = vmatpush1.msra.mxu0 0.0
        %1099 = vmatprep.subr.mxu0 0.0
        %1100 = vmatpush1.msra.mxu0 0.0
        %1101 = vmatprep.subr.mxu0 0.0
        %1102 = vmatpush1.msra.mxu0 0.0
        %1103 = vmatprep.subr.mxu0 0.0
        %1104 = vmatpush1.msra.mxu0 0.0
        %1105 = vmatprep.subr.mxu0 0.0
        %1106 = vmatpush1.msra.mxu0 0.0
        %1107 = vmatprep.subr.mxu0 0.0
        %1108 = vmatpush1.msra.mxu0 0.0
        %1109 = vmatprep.subr.mxu0 0.0
        %1110 = vmatpush1.msra.mxu0 0.0
        %1111 = vmatprep.subr.mxu0 0.0
        %1112 = vmatpush1.msra.mxu0 0.0
        %1113 = vmatprep.subr.mxu0 0.0
        %1114 = vmatpush1.msra.mxu0 0.0
        %1115 = vmatprep.subr.mxu0 0.0
        %1116 = vmatpush1.msra.mxu0 0.0
        %1117 = vmatprep.subr.mxu0 0.0
        %1118 = vmatpush1.msra.mxu0 0.0
        %1119 = vmatprep.subr.mxu0 0.0
        %1120 = vmatpush1.msra.mxu0 0.0
        %1121 = vmatprep.subr.mxu0 0.0
        %1122 = vmatpush1.msra.mxu0 0.0
        %1123 = vmatprep.subr.mxu0 0.0
        %1124 = vmatpush1.msra.mxu0 0.0
        %1125 = vmatprep.subr.mxu0 0.0
        %1126 = vmatpush1.msra.mxu0 0.0
        %1127 = vmatprep.mubr.f32.mxu0 0.0
        %v1128 = vand.u32 %v770, 4294901760
        %v1129 = vsub.f32 %v770, %v1128
        %1130 = vmatmul.mubr.f32.gmra.mrb[0].mxu0 %v1129
        %v1131 = vpop.f32.mrb[0].mxu0
        %v1132 = vadd.f32 %v1016, %v1131
        %v1133 = vpop.f32.mrb[0].mxu0
        %1134 = vmatprep.mubr.f32.mxu0 0.0
        %v1135 = vand.u32 %v773, 4294901760
        %v1136 = vsub.f32 %v773, %v1135
        %1137 = vmatmul.mubr.f32.gmra.mrb[0].mxu0 %v1136
        %v1138 = vpop.f32.mrb[0].mxu0
        %v1139 = vadd.f32 %v1022, %v1138
        %v1140 = vpop.f32.mrb[0].mxu0
        %1141 = vmatprep.mubr.f32.mxu0 0.0
        %v1142 = vand.u32 %v776, 4294901760
        %v1143 = vsub.f32 %v776, %v1142
        %1144 = vmatmul.mubr.f32.gmra.mrb[0].mxu0 %v1143
        %v1145 = vpop.f32.mrb[0].mxu0
        %v1146 = vadd.f32 %v1028, %v1145
        %v1147 = vpop.f32.mrb[0].mxu0
        %1148 = vmatprep.mubr.f32.mxu0 0.0
        %v1149 = vand.u32 %v779, 4294901760
        %v1150 = vsub.f32 %v779, %v1149
        %1151 = vmatmul.mubr.f32.gmra.mrb[0].mxu0 %v1150
        %v1152 = vpop.f32.mrb[0].mxu0
        %v1153 = vadd.f32 %v1034, %v1152
        %v1154 = vpop.f32.mrb[0].mxu0
        %1155 = vmatprep.mubr.f32.mxu0 0.0
        %v1156 = vand.u32 %v782, 4294901760
        %v1157 = vsub.f32 %v782, %v1156
        %1158 = vmatmul.mubr.f32.gmra.mrb[0].mxu0 %v1157
        %v1159 = vpop.f32.mrb[0].mxu0
        %v1160 = vadd.f32 %v1040, %v1159
        %v1161 = vpop.f32.mrb[0].mxu0
        %1162 = vmatprep.mubr.f32.mxu0 0.0
        %v1163 = vand.u32 %v785, 4294901760
        %v1164 = vsub.f32 %v785, %v1163
        %1165 = vmatmul.mubr.f32.gmra.mrb[0].mxu0 %v1164
        %v1166 = vpop.f32.mrb[0].mxu0
        %v1167 = vadd.f32 %v1046, %v1166
        %v1168 = vpop.f32.mrb[0].mxu0
        %1169 = vmatprep.mubr.f32.mxu0 0.0
        %v1170 = vand.u32 %v788, 4294901760
        %v1171 = vsub.f32 %v788, %v1170
        %1172 = vmatmul.mubr.f32.gmra.mrb[0].mxu0 %v1171
        %v1173 = vpop.f32.mrb[0].mxu0
        %v1174 = vadd.f32 %v1052, %v1173
        %v1175 = vpop.f32.mrb[0].mxu0
        %1176 = vmatprep.mubr.f32.mxu0 0.0
        %v1177 = vand.u32 %v791, 4294901760
        %v1178 = vsub.f32 %v791, %v1177
        %1179 = vmatmul.mubr.f32.gmra.mrb[0].mxu0 %v1178
        %v1180 = vpop.f32.mrb[0].mxu0
        %v1181 = vadd.f32 %v1058, %v1180
        %v1182 = vpop.f32.mrb[0].mxu0
        %1183 = vdwg.mxu0
        %1184 = vmatprep.subr.mxu0 0.0
        %v1185 = vand.u32 %v795, 4294901760
        %1186 = vmatpush1.msra.mxu0 %v1185
        %1187 = vmatprep.subr.mxu0 0.0
        %1188 = vmatpush1.msra.mxu0 0.0
        %1189 = vmatprep.subr.mxu0 0.0
        %1190 = vmatpush1.msra.mxu0 0.0
        %1191 = vmatprep.subr.mxu0 0.0
        %1192 = vmatpush1.msra.mxu0 0.0
        %1193 = vmatprep.subr.mxu0 0.0
        %1194 = vmatpush1.msra.mxu0 0.0
        %1195 = vmatprep.subr.mxu0 0.0
        %1196 = vmatpush1.msra.mxu0 0.0
        %1197 = vmatprep.subr.mxu0 0.0
        %1198 = vmatpush1.msra.mxu0 0.0
        %1199 = vmatprep.subr.mxu0 0.0
        %1200 = vmatpush1.msra.mxu0 0.0
        %1201 = vmatprep.subr.mxu0 0.0
        %1202 = vmatpush1.msra.mxu0 0.0
        %1203 = vmatprep.subr.mxu0 0.0
        %1204 = vmatpush1.msra.mxu0 0.0
        %1205 = vmatprep.subr.mxu0 0.0
        %1206 = vmatpush1.msra.mxu0 0.0
        %1207 = vmatprep.subr.mxu0 0.0
        %1208 = vmatpush1.msra.mxu0 0.0
        %1209 = vmatprep.subr.mxu0 0.0
        %1210 = vmatpush1.msra.mxu0 0.0
        %1211 = vmatprep.subr.mxu0 0.0
        %1212 = vmatpush1.msra.mxu0 0.0
        %1213 = vmatprep.subr.mxu0 0.0
        %1214 = vmatpush1.msra.mxu0 0.0
        %1215 = vmatprep.subr.mxu0 0.0
        %1216 = vmatpush1.msra.mxu0 0.0
        %1217 = vmatprep.subr.mxu0 0.0
        %1218 = vmatpush1.msra.mxu0 0.0
        %1219 = vmatprep.subr.mxu0 0.0
        %1220 = vmatpush1.msra.mxu0 0.0
        %1221 = vmatprep.subr.mxu0 0.0
        %1222 = vmatpush1.msra.mxu0 0.0
        %1223 = vmatprep.subr.mxu0 0.0
        %1224 = vmatpush1.msra.mxu0 0.0
        %1225 = vmatprep.subr.mxu0 0.0
        %1226 = vmatpush1.msra.mxu0 0.0
        %1227 = vmatprep.subr.mxu0 0.0
        %1228 = vmatpush1.msra.mxu0 0.0
        %1229 = vmatprep.subr.mxu0 0.0
        %1230 = vmatpush1.msra.mxu0 0.0
        %1231 = vmatprep.subr.mxu0 0.0
        %1232 = vmatpush1.msra.mxu0 0.0
        %1233 = vmatprep.subr.mxu0 0.0
        %1234 = vmatpush1.msra.mxu0 0.0
        %1235 = vmatprep.subr.mxu0 0.0
        %1236 = vmatpush1.msra.mxu0 0.0
        %1237 = vmatprep.subr.mxu0 0.0
        %1238 = vmatpush1.msra.mxu0 0.0
        %1239 = vmatprep.subr.mxu0 0.0
        %1240 = vmatpush1.msra.mxu0 0.0
        %1241 = vmatprep.subr.mxu0 0.0
        %1242 = vmatpush1.msra.mxu0 0.0
        %1243 = vmatprep.subr.mxu0 0.0
        %1244 = vmatpush1.msra.mxu0 0.0
        %1245 = vmatprep.subr.mxu0 0.0
        %1246 = vmatpush1.msra.mxu0 0.0
        %1247 = vmatprep.subr.mxu0 0.0
        %1248 = vmatpush1.msra.mxu0 0.0
        %1249 = vmatprep.mubr.f32.mxu0 0.0
        %v1250 = vand.u32 %v770, 4294901760
        %v1251 = vsub.f32 %v770, %v1250
        %v1252 = vand.u32 %v1251, 4294901760
        %1253 = vmatmul.mubr.f32.gmra.mrb[0].mxu0 %v1252
        %v1254 = vpop.f32.mrb[0].mxu0
        %v1255 = vadd.f32 %v1132, %v1254
        %v1256 = vpop.f32.mrb[0].mxu0
        %1257 = vmatprep.mubr.f32.mxu0 0.0
        %v1258 = vand.u32 %v773, 4294901760
        %v1259 = vsub.f32 %v773, %v1258
        %v1260 = vand.u32 %v1259, 4294901760
        %1261 = vmatmul.mubr.f32.gmra.mrb[0].mxu0 %v1260
        %v1262 = vpop.f32.mrb[0].mxu0
        %v1263 = vadd.f32 %v1139, %v1262
        %v1264 = vpop.f32.mrb[0].mxu0
        %1265 = vmatprep.mubr.f32.mxu0 0.0
        %v1266 = vand.u32 %v776, 4294901760
        %v1267 = vsub.f32 %v776, %v1266
        %v1268 = vand.u32 %v1267, 4294901760
        %1269 = vmatmul.mubr.f32.gmra.mrb[0].mxu0 %v1268
        %v1270 = vpop.f32.mrb[0].mxu0
        %v1271 = vadd.f32 %v1146, %v1270
        %v1272 = vpop.f32.mrb[0].mxu0
        %1273 = vmatprep.mubr.f32.mxu0 0.0
        %v1274 = vand.u32 %v779, 4294901760
        %v1275 = vsub.f32 %v779, %v1274
        %v1276 = vand.u32 %v1275, 4294901760
        %1277 = vmatmul.mubr.f32.gmra.mrb[0].mxu0 %v1276
        %v1278 = vpop.f32.mrb[0].mxu0
        %v1279 = vadd.f32 %v1153, %v1278
        %v1280 = vpop.f32.mrb[0].mxu0
        %1281 = vmatprep.mubr.f32.mxu0 0.0
        %v1282 = vand.u32 %v782, 4294901760
        %v1283 = vsub.f32 %v782, %v1282
        %v1284 = vand.u32 %v1283, 4294901760
        %1285 = vmatmul.mubr.f32.gmra.mrb[0].mxu0 %v1284
        %v1286 = vpop.f32.mrb[0].mxu0
        %v1287 = vadd.f32 %v1160, %v1286
        %v1288 = vpop.f32.mrb[0].mxu0
        %1289 = vmatprep.mubr.f32.mxu0 0.0
        %v1290 = vand.u32 %v785, 4294901760
        %v1291 = vsub.f32 %v785, %v1290
        %v1292 = vand.u32 %v1291, 4294901760
        %1293 = vmatmul.mubr.f32.gmra.mrb[0].mxu0 %v1292
        %v1294 = vpop.f32.mrb[0].mxu0
        %v1295 = vadd.f32 %v1167, %v1294
        %v1296 = vpop.f32.mrb[0].mxu0
        %1297 = vmatprep.mubr.f32.mxu0 0.0
        %v1298 = vand.u32 %v788, 4294901760
        %v1299 = vsub.f32 %v788, %v1298
        %v1300 = vand.u32 %v1299, 4294901760
        %1301 = vmatmul.mubr.f32.gmra.mrb[0].mxu0 %v1300
        %v1302 = vpop.f32.mrb[0].mxu0
        %v1303 = vadd.f32 %v1174, %v1302
        %v1304 = vpop.f32.mrb[0].mxu0
        %1305 = vmatprep.mubr.f32.mxu0 0.0
        %v1306 = vand.u32 %v791, 4294901760
        %v1307 = vsub.f32 %v791, %v1306
        %v1308 = vand.u32 %v1307, 4294901760
        %1309 = vmatmul.mubr.f32.gmra.mrb[0].mxu0 %v1308
        %v1310 = vpop.f32.mrb[0].mxu0
        %v1311 = vadd.f32 %v1181, %v1310
        %v1312 = vpop.f32.mrb[0].mxu0
        %1313 = vdwg.mxu0
        %1314 = vmatprep.subr.mxu0 0.0
        %v1315 = vand.u32 %v795, 4294901760
        %v1316 = vsub.f32 %v795, %v1315
        %v1317 = vand.u32 %v1316, 4294901760
        %1318 = vmatpush1.msra.mxu0 %v1317
        %1319 = vmatprep.subr.mxu0 0.0
        %1320 = vmatpush1.msra.mxu0 0.0
        %1321 = vmatprep.subr.mxu0 0.0
        %1322 = vmatpush1.msra.mxu0 0.0
        %1323 = vmatprep.subr.mxu0 0.0
        %1324 = vmatpush1.msra.mxu0 0.0
        %1325 = vmatprep.subr.mxu0 0.0
        %1326 = vmatpush1.msra.mxu0 0.0
        %1327 = vmatprep.subr.mxu0 0.0
        %1328 = vmatpush1.msra.mxu0 0.0
        %1329 = vmatprep.subr.mxu0 0.0
        %1330 = vmatpush1.msra.mxu0 0.0
        %1331 = vmatprep.subr.mxu0 0.0
        %1332 = vmatpush1.msra.mxu0 0.0
        %1333 = vmatprep.subr.mxu0 0.0
        %1334 = vmatpush1.msra.mxu0 0.0
        %1335 = vmatprep.subr.mxu0 0.0
        %1336 = vmatpush1.msra.mxu0 0.0
        %1337 = vmatprep.subr.mxu0 0.0
        %1338 = vmatpush1.msra.mxu0 0.0
        %1339 = vmatprep.subr.mxu0 0.0
        %1340 = vmatpush1.msra.mxu0 0.0
        %1341 = vmatprep.subr.mxu0 0.0
        %1342 = vmatpush1.msra.mxu0 0.0
        %1343 = vmatprep.subr.mxu0 0.0
        %1344 = vmatpush1.msra.mxu0 0.0
        %1345 = vmatprep.subr.mxu0 0.0
        %1346 = vmatpush1.msra.mxu0 0.0
        %1347 = vmatprep.subr.mxu0 0.0
        %1348 = vmatpush1.msra.mxu0 0.0
        %1349 = vmatprep.subr.mxu0 0.0
        %1350 = vmatpush1.msra.mxu0 0.0
        %1351 = vmatprep.subr.mxu0 0.0
        %1352 = vmatpush1.msra.mxu0 0.0
        %1353 = vmatprep.subr.mxu0 0.0
        %1354 = vmatpush1.msra.mxu0 0.0
        %1355 = vmatprep.subr.mxu0 0.0
        %1356 = vmatpush1.msra.mxu0 0.0
        %1357 = vmatprep.subr.mxu0 0.0
        %1358 = vmatpush1.msra.mxu0 0.0
        %1359 = vmatprep.subr.mxu0 0.0
        %1360 = vmatpush1.msra.mxu0 0.0
        %1361 = vmatprep.subr.mxu0 0.0
        %1362 = vmatpush1.msra.mxu0 0.0
        %1363 = vmatprep.subr.mxu0 0.0
        %1364 = vmatpush1.msra.mxu0 0.0
        %1365 = vmatprep.subr.mxu0 0.0
        %1366 = vmatpush1.msra.mxu0 0.0
        %1367 = vmatprep.subr.mxu0 0.0
        %1368 = vmatpush1.msra.mxu0 0.0
        %1369 = vmatprep.subr.mxu0 0.0
        %1370 = vmatpush1.msra.mxu0 0.0
        %1371 = vmatprep.subr.mxu0 0.0
        %1372 = vmatpush1.msra.mxu0 0.0
        %1373 = vmatprep.subr.mxu0 0.0
        %1374 = vmatpush1.msra.mxu0 0.0
        %1375 = vmatprep.subr.mxu0 0.0
        %1376 = vmatpush1.msra.mxu0 0.0
        %1377 = vmatprep.subr.mxu0 0.0
        %1378 = vmatpush1.msra.mxu0 0.0
        %1379 = vmatprep.subr.mxu0 0.0
        %1380 = vmatpush1.msra.mxu0 0.0
        %1381 = vmatprep.mubr.f32.mxu0 0.0
        %v1382 = vand.u32 %v770, 4294901760
        %1383 = vmatmul.mubr.f32.gmra.mrb[0].mxu0 %v1382
        %v1384 = vpop.f32.mrb[0].mxu0
        %v1385 = vadd.f32 %v1255, %v1384
        %v1386 = vpop.f32.mrb[0].mxu0
        %1387 = vmatprep.mubr.f32.mxu0 0.0
        %v1388 = vand.u32 %v773, 4294901760
        %1389 = vmatmul.mubr.f32.gmra.mrb[0].mxu0 %v1388
        %v1390 = vpop.f32.mrb[0].mxu0
        %v1391 = vadd.f32 %v1263, %v1390
        %v1392 = vpop.f32.mrb[0].mxu0
        %1393 = vmatprep.mubr.f32.mxu0 0.0
        %v1394 = vand.u32 %v776, 4294901760
        %1395 = vmatmul.mubr.f32.gmra.mrb[0].mxu0 %v1394
        %v1396 = vpop.f32.mrb[0].mxu0
        %v1397 = vadd.f32 %v1271, %v1396
        %v1398 = vpop.f32.mrb[0].mxu0
        %1399 = vmatprep.mubr.f32.mxu0 0.0
        %v1400 = vand.u32 %v779, 4294901760
        %1401 = vmatmul.mubr.f32.gmra.mrb[0].mxu0 %v1400
        %v1402 = vpop.f32.mrb[0].mxu0
        %v1403 = vadd.f32 %v1279, %v1402
        %v1404 = vpop.f32.mrb[0].mxu0
        %1405 = vmatprep.mubr.f32.mxu0 0.0
        %v1406 = vand.u32 %v782, 4294901760
        %1407 = vmatmul.mubr.f32.gmra.mrb[0].mxu0 %v1406
        %v1408 = vpop.f32.mrb[0].mxu0
        %v1409 = vadd.f32 %v1287, %v1408
        %v1410 = vpop.f32.mrb[0].mxu0
        %1411 = vmatprep.mubr.f32.mxu0 0.0
        %v1412 = vand.u32 %v785, 4294901760
        %1413 = vmatmul.mubr.f32.gmra.mrb[0].mxu0 %v1412
        %v1414 = vpop.f32.mrb[0].mxu0
        %v1415 = vadd.f32 %v1295, %v1414
        %v1416 = vpop.f32.mrb[0].mxu0
        %1417 = vmatprep.mubr.f32.mxu0 0.0
        %v1418 = vand.u32 %v788, 4294901760
        %1419 = vmatmul.mubr.f32.gmra.mrb[0].mxu0 %v1418
        %v1420 = vpop.f32.mrb[0].mxu0
        %v1421 = vadd.f32 %v1303, %v1420
        %v1422 = vpop.f32.mrb[0].mxu0
        %1423 = vmatprep.mubr.f32.mxu0 0.0
        %v1424 = vand.u32 %v791, 4294901760
        %1425 = vmatmul.mubr.f32.gmra.mrb[0].mxu0 %v1424
        %v1426 = vpop.f32.mrb[0].mxu0
        %v1427 = vadd.f32 %v1311, %v1426
        %v1428 = vpop.f32.mrb[0].mxu0
        %1429 = vdwg.mxu0
        %1430 = vmatprep.subr.mxu0 0.0
        %v1431 = vand.u32 %v795, 4294901760
        %1432 = vmatpush1.msra.mxu0 %v1431
        %1433 = vmatprep.subr.mxu0 0.0
        %1434 = vmatpush1.msra.mxu0 0.0
        %1435 = vmatprep.subr.mxu0 0.0
        %1436 = vmatpush1.msra.mxu0 0.0
        %1437 = vmatprep.subr.mxu0 0.0
        %1438 = vmatpush1.msra.mxu0 0.0
        %1439 = vmatprep.subr.mxu0 0.0
        %1440 = vmatpush1.msra.mxu0 0.0
        %1441 = vmatprep.subr.mxu0 0.0
        %1442 = vmatpush1.msra.mxu0 0.0
        %1443 = vmatprep.subr.mxu0 0.0
        %1444 = vmatpush1.msra.mxu0 0.0
        %1445 = vmatprep.subr.mxu0 0.0
        %1446 = vmatpush1.msra.mxu0 0.0
        %1447 = vmatprep.subr.mxu0 0.0
        %1448 = vmatpush1.msra.mxu0 0.0
        %1449 = vmatprep.subr.mxu0 0.0
        %1450 = vmatpush1.msra.mxu0 0.0
        %1451 = vmatprep.subr.mxu0 0.0
        %1452 = vmatpush1.msra.mxu0 0.0
        %1453 = vmatprep.subr.mxu0 0.0
        %1454 = vmatpush1.msra.mxu0 0.0
        %1455 = vmatprep.subr.mxu0 0.0
        %1456 = vmatpush1.msra.mxu0 0.0
        %1457 = vmatprep.subr.mxu0 0.0
        %1458 = vmatpush1.msra.mxu0 0.0
        %1459 = vmatprep.subr.mxu0 0.0
        %1460 = vmatpush1.msra.mxu0 0.0
        %1461 = vmatprep.subr.mxu0 0.0
        %1462 = vmatpush1.msra.mxu0 0.0
        %1463 = vmatprep.subr.mxu0 0.0
        %1464 = vmatpush1.msra.mxu0 0.0
        %1465 = vmatprep.subr.mxu0 0.0
        %1466 = vmatpush1.msra.mxu0 0.0
        %1467 = vmatprep.subr.mxu0 0.0
        %1468 = vmatpush1.msra.mxu0 0.0
        %1469 = vmatprep.subr.mxu0 0.0
        %1470 = vmatpush1.msra.mxu0 0.0
        %1471 = vmatprep.subr.mxu0 0.0
        %1472 = vmatpush1.msra.mxu0 0.0
        %1473 = vmatprep.subr.mxu0 0.0
        %1474 = vmatpush1.msra.mxu0 0.0
        %1475 = vmatprep.subr.mxu0 0.0
        %1476 = vmatpush1.msra.mxu0 0.0
        %1477 = vmatprep.subr.mxu0 0.0
        %1478 = vmatpush1.msra.mxu0 0.0
        %1479 = vmatprep.subr.mxu0 0.0
        %1480 = vmatpush1.msra.mxu0 0.0
        %1481 = vmatprep.subr.mxu0 0.0
        %1482 = vmatpush1.msra.mxu0 0.0
        %1483 = vmatprep.subr.mxu0 0.0
        %1484 = vmatpush1.msra.mxu0 0.0
        %1485 = vmatprep.subr.mxu0 0.0
        %1486 = vmatpush1.msra.mxu0 0.0
        %1487 = vmatprep.subr.mxu0 0.0
        %1488 = vmatpush1.msra.mxu0 0.0
        %1489 = vmatprep.subr.mxu0 0.0
        %1490 = vmatpush1.msra.mxu0 0.0
        %1491 = vmatprep.subr.mxu0 0.0
        %1492 = vmatpush1.msra.mxu0 0.0
        %1493 = vmatprep.subr.mxu0 0.0
        %1494 = vmatpush1.msra.mxu0 0.0
        %1495 = vmatprep.mubr.f32.mxu0 0.0
        %v1496 = vand.u32 %v770, 4294901760
        %1497 = vmatmul.mubr.f32.gmra.mrb[0].mxu0 %v1496
        %v1498 = vpop.f32.mrb[0].mxu0
        %v1499 = vadd.f32 %v1385, %v1498
        %v1500 = vpop.f32.mrb[0].mxu0
        %1501 = vmatprep.mubr.f32.mxu0 0.0
        %v1502 = vand.u32 %v773, 4294901760
        %1503 = vmatmul.mubr.f32.gmra.mrb[0].mxu0 %v1502
        %v1504 = vpop.f32.mrb[0].mxu0
        %v1505 = vadd.f32 %v1391, %v1504
        %v1506 = vpop.f32.mrb[0].mxu0
        %1507 = vmatprep.mubr.f32.mxu0 0.0
        %v1508 = vand.u32 %v776, 4294901760
        %1509 = vmatmul.mubr.f32.gmra.mrb[0].mxu0 %v1508
        %v1510 = vpop.f32.mrb[0].mxu0
        %v1511 = vadd.f32 %v1397, %v1510
        %v1512 = vpop.f32.mrb[0].mxu0
        %1513 = vmatprep.mubr.f32.mxu0 0.0
        %v1514 = vand.u32 %v779, 4294901760
        %1515 = vmatmul.mubr.f32.gmra.mrb[0].mxu0 %v1514
        %v1516 = vpop.f32.mrb[0].mxu0
        %v1517 = vadd.f32 %v1403, %v1516
        %v1518 = vpop.f32.mrb[0].mxu0
        %1519 = vmatprep.mubr.f32.mxu0 0.0
        %v1520 = vand.u32 %v782, 4294901760
        %1521 = vmatmul.mubr.f32.gmra.mrb[0].mxu0 %v1520
        %v1522 = vpop.f32.mrb[0].mxu0
        %v1523 = vadd.f32 %v1409, %v1522
        %v1524 = vpop.f32.mrb[0].mxu0
        %1525 = vmatprep.mubr.f32.mxu0 0.0
        %v1526 = vand.u32 %v785, 4294901760
        %1527 = vmatmul.mubr.f32.gmra.mrb[0].mxu0 %v1526
        %v1528 = vpop.f32.mrb[0].mxu0
        %v1529 = vadd.f32 %v1415, %v1528
        %v1530 = vpop.f32.mrb[0].mxu0
        %1531 = vmatprep.mubr.f32.mxu0 0.0
        %v1532 = vand.u32 %v788, 4294901760
        %1533 = vmatmul.mubr.f32.gmra.mrb[0].mxu0 %v1532
        %v1534 = vpop.f32.mrb[0].mxu0
        %v1535 = vadd.f32 %v1421, %v1534
        %v1536 = vpop.f32.mrb[0].mxu0
        %1537 = vmatprep.mubr.f32.mxu0 0.0
        %v1538 = vand.u32 %v791, 4294901760
        %1539 = vmatmul.mubr.f32.gmra.mrb[0].mxu0 %v1538
        %v1540 = vpop.f32.mrb[0].mxu0
        %v1541 = vadd.f32 %v1427, %v1540
        %v1542 = vpop.f32.mrb[0].mxu0
        %1543 = vdwg.mxu0
        %v1545 = vsel %vm768, %v740, 0
        %v1548 = vsel %vm768, %v742, 0
        %v1551 = vsel %vm768, %v744, 0
        %v1554 = vsel %vm768, %v746, 0
        %v1557 = vsel %vm768, %v748, 0
        %v1560 = vsel %vm768, %v750, 0
        %v1563 = vsel %vm768, %v752, 0
        %v1566 = vsel %vm768, %v754, 0
        %v1569 = vsel %vm793, %v756, 0
        %1571 = vmatprep.subr.mxu0 0.0
        %v1572 = vand.u32 %v1569, 4294901760
        %1573 = vmatpush1.msra.mxu0 %v1572
        %1574 = vmatprep.subr.mxu0 0.0
        %1575 = vmatpush1.msra.mxu0 0.0
        %1576 = vmatprep.subr.mxu0 0.0
        %1577 = vmatpush1.msra.mxu0 0.0
        %1578 = vmatprep.subr.mxu0 0.0
        %1579 = vmatpush1.msra.mxu0 0.0
        %1580 = vmatprep.subr.mxu0 0.0
        %1581 = vmatpush1.msra.mxu0 0.0
        %1582 = vmatprep.subr.mxu0 0.0
        %1583 = vmatpush1.msra.mxu0 0.0
        %1584 = vmatprep.subr.mxu0 0.0
        %1585 = vmatpush1.msra.mxu0 0.0
        %1586 = vmatprep.subr.mxu0 0.0
        %1587 = vmatpush1.msra.mxu0 0.0
        %1588 = vmatprep.subr.mxu0 0.0
        %1589 = vmatpush1.msra.mxu0 0.0
        %1590 = vmatprep.subr.mxu0 0.0
        %1591 = vmatpush1.msra.mxu0 0.0
        %1592 = vmatprep.subr.mxu0 0.0
        %1593 = vmatpush1.msra.mxu0 0.0
        %1594 = vmatprep.subr.mxu0 0.0
        %1595 = vmatpush1.msra.mxu0 0.0
        %1596 = vmatprep.subr.mxu0 0.0
        %1597 = vmatpush1.msra.mxu0 0.0
        %1598 = vmatprep.subr.mxu0 0.0
        %1599 = vmatpush1.msra.mxu0 0.0
        %1600 = vmatprep.subr.mxu0 0.0
        %1601 = vmatpush1.msra.mxu0 0.0
        %1602 = vmatprep.subr.mxu0 0.0
        %1603 = vmatpush1.msra.mxu0 0.0
        %1604 = vmatprep.subr.mxu0 0.0
        %1605 = vmatpush1.msra.mxu0 0.0
        %1606 = vmatprep.subr.mxu0 0.0
        %1607 = vmatpush1.msra.mxu0 0.0
        %1608 = vmatprep.subr.mxu0 0.0
        %1609 = vmatpush1.msra.mxu0 0.0
        %1610 = vmatprep.subr.mxu0 0.0
        %1611 = vmatpush1.msra.mxu0 0.0
        %1612 = vmatprep.subr.mxu0 0.0
        %1613 = vmatpush1.msra.mxu0 0.0
        %1614 = vmatprep.subr.mxu0 0.0
        %1615 = vmatpush1.msra.mxu0 0.0
        %1616 = vmatprep.subr.mxu0 0.0
        %1617 = vmatpush1.msra.mxu0 0.0
        %1618 = vmatprep.subr.mxu0 0.0
        %1619 = vmatpush1.msra.mxu0 0.0
        %1620 = vmatprep.subr.mxu0 0.0
        %1621 = vmatpush1.msra.mxu0 0.0
        %1622 = vmatprep.subr.mxu0 0.0
        %1623 = vmatpush1.msra.mxu0 0.0
        %1624 = vmatprep.subr.mxu0 0.0
        %1625 = vmatpush1.msra.mxu0 0.0
        %1626 = vmatprep.subr.mxu0 0.0
        %1627 = vmatpush1.msra.mxu0 0.0
        %1628 = vmatprep.subr.mxu0 0.0
        %1629 = vmatpush1.msra.mxu0 0.0
        %1630 = vmatprep.subr.mxu0 0.0
        %1631 = vmatpush1.msra.mxu0 0.0
        %1632 = vmatprep.subr.mxu0 0.0
        %1633 = vmatpush1.msra.mxu0 0.0
        %1634 = vmatprep.subr.mxu0 0.0
        %1635 = vmatpush1.msra.mxu0 0.0
        %1636 = vmatprep.mubr.f32.mxu0 0.0
        %v1637 = vand.u32 %v1545, 4294901760
        %v1638 = vsub.f32 %v1545, %v1637
        %v1639 = vand.u32 %v1638, 4294901760
        %v1640 = vsub.f32 %v1638, %v1639
        %v1641 = vand.u32 %v1640, 4294901760
        %1642 = vmatmul.mubr.f32.gmra.mrb[0].mxu0 %v1641
        %v1643 = vpop.f32.mrb[0].mxu0
        %v1644 = vadd.f32 %v1499, %v1643
        %v1645 = vpop.f32.mrb[0].mxu0
        %1646 = vmatprep.mubr.f32.mxu0 0.0
        %v1647 = vand.u32 %v1548, 4294901760
        %v1648 = vsub.f32 %v1548, %v1647
        %v1649 = vand.u32 %v1648, 4294901760
        %v1650 = vsub.f32 %v1648, %v1649
        %v1651 = vand.u32 %v1650, 4294901760
        %1652 = vmatmul.mubr.f32.gmra.mrb[0].mxu0 %v1651
        %v1653 = vpop.f32.mrb[0].mxu0
        %v1654 = vadd.f32 %v1505, %v1653
        %v1655 = vpop.f32.mrb[0].mxu0
        %1656 = vmatprep.mubr.f32.mxu0 0.0
        %v1657 = vand.u32 %v1551, 4294901760
        %v1658 = vsub.f32 %v1551, %v1657
        %v1659 = vand.u32 %v1658, 4294901760
        %v1660 = vsub.f32 %v1658, %v1659
        %v1661 = vand.u32 %v1660, 4294901760
        %1662 = vmatmul.mubr.f32.gmra.mrb[0].mxu0 %v1661
        %v1663 = vpop.f32.mrb[0].mxu0
        %v1664 = vadd.f32 %v1511, %v1663
        %v1665 = vpop.f32.mrb[0].mxu0
        %1666 = vmatprep.mubr.f32.mxu0 0.0
        %v1667 = vand.u32 %v1554, 4294901760
        %v1668 = vsub.f32 %v1554, %v1667
        %v1669 = vand.u32 %v1668, 4294901760
        %v1670 = vsub.f32 %v1668, %v1669
        %v1671 = vand.u32 %v1670, 4294901760
        %1672 = vmatmul.mubr.f32.gmra.mrb[0].mxu0 %v1671
        %v1673 = vpop.f32.mrb[0].mxu0
        %v1674 = vadd.f32 %v1517, %v1673
        %v1675 = vpop.f32.mrb[0].mxu0
        %1676 = vmatprep.mubr.f32.mxu0 0.0
        %v1677 = vand.u32 %v1557, 4294901760
        %v1678 = vsub.f32 %v1557, %v1677
        %v1679 = vand.u32 %v1678, 4294901760
        %v1680 = vsub.f32 %v1678, %v1679
        %v1681 = vand.u32 %v1680, 4294901760
        %1682 = vmatmul.mubr.f32.gmra.mrb[0].mxu0 %v1681
        %v1683 = vpop.f32.mrb[0].mxu0
        %v1684 = vadd.f32 %v1523, %v1683
        %v1685 = vpop.f32.mrb[0].mxu0
        %1686 = vmatprep.mubr.f32.mxu0 0.0
        %v1687 = vand.u32 %v1560, 4294901760
        %v1688 = vsub.f32 %v1560, %v1687
        %v1689 = vand.u32 %v1688, 4294901760
        %v1690 = vsub.f32 %v1688, %v1689
        %v1691 = vand.u32 %v1690, 4294901760
        %1692 = vmatmul.mubr.f32.gmra.mrb[0].mxu0 %v1691
        %v1693 = vpop.f32.mrb[0].mxu0
        %v1694 = vadd.f32 %v1529, %v1693
        %v1695 = vpop.f32.mrb[0].mxu0
        %1696 = vmatprep.mubr.f32.mxu0 0.0
        %v1697 = vand.u32 %v1563, 4294901760
        %v1698 = vsub.f32 %v1563, %v1697
        %v1699 = vand.u32 %v1698, 4294901760
        %v1700 = vsub.f32 %v1698, %v1699
        %v1701 = vand.u32 %v1700, 4294901760
        %1702 = vmatmul.mubr.f32.gmra.mrb[0].mxu0 %v1701
        %v1703 = vpop.f32.mrb[0].mxu0
        %v1704 = vadd.f32 %v1535, %v1703
        %v1705 = vpop.f32.mrb[0].mxu0
        %1706 = vmatprep.mubr.f32.mxu0 0.0
        %v1707 = vand.u32 %v1566, 4294901760
        %v1708 = vsub.f32 %v1566, %v1707
        %v1709 = vand.u32 %v1708, 4294901760
        %v1710 = vsub.f32 %v1708, %v1709
        %v1711 = vand.u32 %v1710, 4294901760
        %1712 = vmatmul.mubr.f32.gmra.mrb[0].mxu0 %v1711
        %v1713 = vpop.f32.mrb[0].mxu0
        %v1714 = vadd.f32 %v1541, %v1713
        %v1715 = vpop.f32.mrb[0].mxu0
        %1716 = vdwg.mxu0
        %1717 = vmatprep.subr.mxu0 0.0
        %v1718 = vand.u32 %v1569, 4294901760
        %v1719 = vsub.f32 %v1569, %v1718
        %v1720 = vand.u32 %v1719, 4294901760
        %v1721 = vsub.f32 %v1719, %v1720
        %v1722 = vand.u32 %v1721, 4294901760
        %1723 = vmatpush1.msra.mxu0 %v1722
        %1724 = vmatprep.subr.mxu0 0.0
        %1725 = vmatpush1.msra.mxu0 0.0
        %1726 = vmatprep.subr.mxu0 0.0
        %1727 = vmatpush1.msra.mxu0 0.0
        %1728 = vmatprep.subr.mxu0 0.0
        %1729 = vmatpush1.msra.mxu0 0.0
        %1730 = vmatprep.subr.mxu0 0.0
        %1731 = vmatpush1.msra.mxu0 0.0
        %1732 = vmatprep.subr.mxu0 0.0
        %1733 = vmatpush1.msra.mxu0 0.0
        %1734 = vmatprep.subr.mxu0 0.0
        %1735 = vmatpush1.msra.mxu0 0.0
        %1736 = vmatprep.subr.mxu0 0.0
        %1737 = vmatpush1.msra.mxu0 0.0
        %1738 = vmatprep.subr.mxu0 0.0
        %1739 = vmatpush1.msra.mxu0 0.0
        %1740 = vmatprep.subr.mxu0 0.0
        %1741 = vmatpush1.msra.mxu0 0.0
        %1742 = vmatprep.subr.mxu0 0.0
        %1743 = vmatpush1.msra.mxu0 0.0
        %1744 = vmatprep.subr.mxu0 0.0
        %1745 = vmatpush1.msra.mxu0 0.0
        %1746 = vmatprep.subr.mxu0 0.0
        %1747 = vmatpush1.msra.mxu0 0.0
        %1748 = vmatprep.subr.mxu0 0.0
        %1749 = vmatpush1.msra.mxu0 0.0
        %1750 = vmatprep.subr.mxu0 0.0
        %1751 = vmatpush1.msra.mxu0 0.0
        %1752 = vmatprep.subr.mxu0 0.0
        %1753 = vmatpush1.msra.mxu0 0.0
        %1754 = vmatprep.subr.mxu0 0.0
        %1755 = vmatpush1.msra.mxu0 0.0
        %1756 = vmatprep.subr.mxu0 0.0
        %1757 = vmatpush1.msra.mxu0 0.0
        %1758 = vmatprep.subr.mxu0 0.0
        %1759 = vmatpush1.msra.mxu0 0.0
        %1760 = vmatprep.subr.mxu0 0.0
        %1761 = vmatpush1.msra.mxu0 0.0
        %1762 = vmatprep.subr.mxu0 0.0
        %1763 = vmatpush1.msra.mxu0 0.0
        %1764 = vmatprep.subr.mxu0 0.0
        %1765 = vmatpush1.msra.mxu0 0.0
        %1766 = vmatprep.subr.mxu0 0.0
        %1767 = vmatpush1.msra.mxu0 0.0
        %1768 = vmatprep.subr.mxu0 0.0
        %1769 = vmatpush1.msra.mxu0 0.0
        %1770 = vmatprep.subr.mxu0 0.0
        %1771 = vmatpush1.msra.mxu0 0.0
        %1772 = vmatprep.subr.mxu0 0.0
        %1773 = vmatpush1.msra.mxu0 0.0
        %1774 = vmatprep.subr.mxu0 0.0
        %1775 = vmatpush1.msra.mxu0 0.0
        %1776 = vmatprep.subr.mxu0 0.0
        %1777 = vmatpush1.msra.mxu0 0.0
        %1778 = vmatprep.subr.mxu0 0.0
        %1779 = vmatpush1.msra.mxu0 0.0
        %1780 = vmatprep.subr.mxu0 0.0
        %1781 = vmatpush1.msra.mxu0 0.0
        %1782 = vmatprep.subr.mxu0 0.0
        %1783 = vmatpush1.msra.mxu0 0.0
        %1784 = vmatprep.subr.mxu0 0.0
        %1785 = vmatpush1.msra.mxu0 0.0
        %1786 = vmatprep.mubr.f32.mxu0 0.0
        %v1787 = vand.u32 %v1545, 4294901760
        %1788 = vmatmul.mubr.f32.gmra.mrb[0].mxu0 %v1787
        %v1789 = vpop.f32.mrb[0].mxu0
        %v1790 = vadd.f32 %v1644, %v1789
        %v1791 = vpop.f32.mrb[0].mxu0
        %1792 = vmatprep.mubr.f32.mxu0 0.0
        %v1793 = vand.u32 %v1548, 4294901760
        %1794 = vmatmul.mubr.f32.gmra.mrb[0].mxu0 %v1793
        %v1795 = vpop.f32.mrb[0].mxu0
        %v1796 = vadd.f32 %v1654, %v1795
        %v1797 = vpop.f32.mrb[0].mxu0
        %1798 = vmatprep.mubr.f32.mxu0 0.0
        %v1799 = vand.u32 %v1551, 4294901760
        %1800 = vmatmul.mubr.f32.gmra.mrb[0].mxu0 %v1799
        %v1801 = vpop.f32.mrb[0].mxu0
        %v1802 = vadd.f32 %v1664, %v1801
        %v1803 = vpop.f32.mrb[0].mxu0
        %1804 = vmatprep.mubr.f32.mxu0 0.0
        %v1805 = vand.u32 %v1554, 4294901760
        %1806 = vmatmul.mubr.f32.gmra.mrb[0].mxu0 %v1805
        %v1807 = vpop.f32.mrb[0].mxu0
        %v1808 = vadd.f32 %v1674, %v1807
        %v1809 = vpop.f32.mrb[0].mxu0
        %1810 = vmatprep.mubr.f32.mxu0 0.0
        %v1811 = vand.u32 %v1557, 4294901760
        %1812 = vmatmul.mubr.f32.gmra.mrb[0].mxu0 %v1811
        %v1813 = vpop.f32.mrb[0].mxu0
        %v1814 = vadd.f32 %v1684, %v1813
        %v1815 = vpop.f32.mrb[0].mxu0
        %1816 = vmatprep.mubr.f32.mxu0 0.0
        %v1817 = vand.u32 %v1560, 4294901760
        %1818 = vmatmul.mubr.f32.gmra.mrb[0].mxu0 %v1817
        %v1819 = vpop.f32.mrb[0].mxu0
        %v1820 = vadd.f32 %v1694, %v1819
        %v1821 = vpop.f32.mrb[0].mxu0
        %1822 = vmatprep.mubr.f32.mxu0 0.0
        %v1823 = vand.u32 %v1563, 4294901760
        %1824 = vmatmul.mubr.f32.gmra.mrb[0].mxu0 %v1823
        %v1825 = vpop.f32.mrb[0].mxu0
        %v1826 = vadd.f32 %v1704, %v1825
        %v1827 = vpop.f32.mrb[0].mxu0
        %1828 = vmatprep.mubr.f32.mxu0 0.0
        %v1829 = vand.u32 %v1566, 4294901760
        %1830 = vmatmul.mubr.f32.gmra.mrb[0].mxu0 %v1829
        %v1831 = vpop.f32.mrb[0].mxu0
        %v1832 = vadd.f32 %v1714, %v1831
        %v1833 = vpop.f32.mrb[0].mxu0
        %1834 = vdwg.mxu0
        %1835 = vmatprep.subr.mxu0 0.0
        %v1836 = vand.u32 %v1569, 4294901760
        %v1837 = vsub.f32 %v1569, %v1836
        %1838 = vmatpush1.msra.mxu0 %v1837
        %1839 = vmatprep.subr.mxu0 0.0
        %1840 = vmatpush1.msra.mxu0 0.0
        %1841 = vmatprep.subr.mxu0 0.0
        %1842 = vmatpush1.msra.mxu0 0.0
        %1843 = vmatprep.subr.mxu0 0.0
        %1844 = vmatpush1.msra.mxu0 0.0
        %1845 = vmatprep.subr.mxu0 0.0
        %1846 = vmatpush1.msra.mxu0 0.0
        %1847 = vmatprep.subr.mxu0 0.0
        %1848 = vmatpush1.msra.mxu0 0.0
        %1849 = vmatprep.subr.mxu0 0.0
        %1850 = vmatpush1.msra.mxu0 0.0
        %1851 = vmatprep.subr.mxu0 0.0
        %1852 = vmatpush1.msra.mxu0 0.0
        %1853 = vmatprep.subr.mxu0 0.0
        %1854 = vmatpush1.msra.mxu0 0.0
        %1855 = vmatprep.subr.mxu0 0.0
        %1856 = vmatpush1.msra.mxu0 0.0
        %1857 = vmatprep.subr.mxu0 0.0
        %1858 = vmatpush1.msra.mxu0 0.0
        %1859 = vmatprep.subr.mxu0 0.0
        %1860 = vmatpush1.msra.mxu0 0.0
        %1861 = vmatprep.subr.mxu0 0.0
        %1862 = vmatpush1.msra.mxu0 0.0
        %1863 = vmatprep.subr.mxu0 0.0
        %1864 = vmatpush1.msra.mxu0 0.0
        %1865 = vmatprep.subr.mxu0 0.0
        %1866 = vmatpush1.msra.mxu0 0.0
        %1867 = vmatprep.subr.mxu0 0.0
        %1868 = vmatpush1.msra.mxu0 0.0
        %1869 = vmatprep.subr.mxu0 0.0
        %1870 = vmatpush1.msra.mxu0 0.0
        %1871 = vmatprep.subr.mxu0 0.0
        %1872 = vmatpush1.msra.mxu0 0.0
        %1873 = vmatprep.subr.mxu0 0.0
        %1874 = vmatpush1.msra.mxu0 0.0
        %1875 = vmatprep.subr.mxu0 0.0
        %1876 = vmatpush1.msra.mxu0 0.0
        %1877 = vmatprep.subr.mxu0 0.0
        %1878 = vmatpush1.msra.mxu0 0.0
        %1879 = vmatprep.subr.mxu0 0.0
        %1880 = vmatpush1.msra.mxu0 0.0
        %1881 = vmatprep.subr.mxu0 0.0
        %1882 = vmatpush1.msra.mxu0 0.0
        %1883 = vmatprep.subr.mxu0 0.0
        %1884 = vmatpush1.msra.mxu0 0.0
        %1885 = vmatprep.subr.mxu0 0.0
        %1886 = vmatpush1.msra.mxu0 0.0
        %1887 = vmatprep.subr.mxu0 0.0
        %1888 = vmatpush1.msra.mxu0 0.0
        %1889 = vmatprep.subr.mxu0 0.0
        %1890 = vmatpush1.msra.mxu0 0.0
        %1891 = vmatprep.subr.mxu0 0.0
        %1892 = vmatpush1.msra.mxu0 0.0
        %1893 = vmatprep.subr.mxu0 0.0
        %1894 = vmatpush1.msra.mxu0 0.0
        %1895 = vmatprep.subr.mxu0 0.0
        %1896 = vmatpush1.msra.mxu0 0.0
        %1897 = vmatprep.subr.mxu0 0.0
        %1898 = vmatpush1.msra.mxu0 0.0
        %1899 = vmatprep.subr.mxu0 0.0
        %1900 = vmatpush1.msra.mxu0 0.0
        %1901 = vmatprep.mubr.f32.mxu0 0.0
        %v1902 = vand.u32 %v1545, 4294901760
        %v1903 = vsub.f32 %v1545, %v1902
        %1904 = vmatmul.mubr.f32.gmra.mrb[0].mxu0 %v1903
        %v1905 = vpop.f32.mrb[0].mxu0
        %v1906 = vadd.f32 %v1790, %v1905
        %v1907 = vpop.f32.mrb[0].mxu0
        %1908 = vmatprep.mubr.f32.mxu0 0.0
        %v1909 = vand.u32 %v1548, 4294901760
        %v1910 = vsub.f32 %v1548, %v1909
        %1911 = vmatmul.mubr.f32.gmra.mrb[0].mxu0 %v1910
        %v1912 = vpop.f32.mrb[0].mxu0
        %v1913 = vadd.f32 %v1796, %v1912
        %v1914 = vpop.f32.mrb[0].mxu0
        %1915 = vmatprep.mubr.f32.mxu0 0.0
        %v1916 = vand.u32 %v1551, 4294901760
        %v1917 = vsub.f32 %v1551, %v1916
        %1918 = vmatmul.mubr.f32.gmra.mrb[0].mxu0 %v1917
        %v1919 = vpop.f32.mrb[0].mxu0
        %v1920 = vadd.f32 %v1802, %v1919
        %v1921 = vpop.f32.mrb[0].mxu0
        %1922 = vmatprep.mubr.f32.mxu0 0.0
        %v1923 = vand.u32 %v1554, 4294901760
        %v1924 = vsub.f32 %v1554, %v1923
        %1925 = vmatmul.mubr.f32.gmra.mrb[0].mxu0 %v1924
        %v1926 = vpop.f32.mrb[0].mxu0
        %v1927 = vadd.f32 %v1808, %v1926
        %v1928 = vpop.f32.mrb[0].mxu0
        %1929 = vmatprep.mubr.f32.mxu0 0.0
        %v1930 = vand.u32 %v1557, 4294901760
        %v1931 = vsub.f32 %v1557, %v1930
        %1932 = vmatmul.mubr.f32.gmra.mrb[0].mxu0 %v1931
        %v1933 = vpop.f32.mrb[0].mxu0
        %v1934 = vadd.f32 %v1814, %v1933
        %v1935 = vpop.f32.mrb[0].mxu0
        %1936 = vmatprep.mubr.f32.mxu0 0.0
        %v1937 = vand.u32 %v1560, 4294901760
        %v1938 = vsub.f32 %v1560, %v1937
        %1939 = vmatmul.mubr.f32.gmra.mrb[0].mxu0 %v1938
        %v1940 = vpop.f32.mrb[0].mxu0
        %v1941 = vadd.f32 %v1820, %v1940
        %v1942 = vpop.f32.mrb[0].mxu0
        %1943 = vmatprep.mubr.f32.mxu0 0.0
        %v1944 = vand.u32 %v1563, 4294901760
        %v1945 = vsub.f32 %v1563, %v1944
        %1946 = vmatmul.mubr.f32.gmra.mrb[0].mxu0 %v1945
        %v1947 = vpop.f32.mrb[0].mxu0
        %v1948 = vadd.f32 %v1826, %v1947
        %v1949 = vpop.f32.mrb[0].mxu0
        %1950 = vmatprep.mubr.f32.mxu0 0.0
        %v1951 = vand.u32 %v1566, 4294901760
        %v1952 = vsub.f32 %v1566, %v1951
        %1953 = vmatmul.mubr.f32.gmra.mrb[0].mxu0 %v1952
        %v1954 = vpop.f32.mrb[0].mxu0
        %v1955 = vadd.f32 %v1832, %v1954
        %v1956 = vpop.f32.mrb[0].mxu0
        %1957 = vdwg.mxu0
        %1958 = vmatprep.subr.mxu0 0.0
        %v1959 = vand.u32 %v1569, 4294901760
        %1960 = vmatpush1.msra.mxu0 %v1959
        %1961 = vmatprep.subr.mxu0 0.0
        %1962 = vmatpush1.msra.mxu0 0.0
        %1963 = vmatprep.subr.mxu0 0.0
        %1964 = vmatpush1.msra.mxu0 0.0
        %1965 = vmatprep.subr.mxu0 0.0
        %1966 = vmatpush1.msra.mxu0 0.0
        %1967 = vmatprep.subr.mxu0 0.0
        %1968 = vmatpush1.msra.mxu0 0.0
        %1969 = vmatprep.subr.mxu0 0.0
        %1970 = vmatpush1.msra.mxu0 0.0
        %1971 = vmatprep.subr.mxu0 0.0
        %1972 = vmatpush1.msra.mxu0 0.0
        %1973 = vmatprep.subr.mxu0 0.0
        %1974 = vmatpush1.msra.mxu0 0.0
        %1975 = vmatprep.subr.mxu0 0.0
        %1976 = vmatpush1.msra.mxu0 0.0
        %1977 = vmatprep.subr.mxu0 0.0
        %1978 = vmatpush1.msra.mxu0 0.0
        %1979 = vmatprep.subr.mxu0 0.0
        %1980 = vmatpush1.msra.mxu0 0.0
        %1981 = vmatprep.subr.mxu0 0.0
        %1982 = vmatpush1.msra.mxu0 0.0
        %1983 = vmatprep.subr.mxu0 0.0
        %1984 = vmatpush1.msra.mxu0 0.0
        %1985 = vmatprep.subr.mxu0 0.0
        %1986 = vmatpush1.msra.mxu0 0.0
        %1987 = vmatprep.subr.mxu0 0.0
        %1988 = vmatpush1.msra.mxu0 0.0
        %1989 = vmatprep.subr.mxu0 0.0
        %1990 = vmatpush1.msra.mxu0 0.0
        %1991 = vmatprep.subr.mxu0 0.0
        %1992 = vmatpush1.msra.mxu0 0.0
        %1993 = vmatprep.subr.mxu0 0.0
        %1994 = vmatpush1.msra.mxu0 0.0
        %1995 = vmatprep.subr.mxu0 0.0
        %1996 = vmatpush1.msra.mxu0 0.0
        %1997 = vmatprep.subr.mxu0 0.0
        %1998 = vmatpush1.msra.mxu0 0.0
        %1999 = vmatprep.subr.mxu0 0.0
        %2000 = vmatpush1.msra.mxu0 0.0
        %2001 = vmatprep.subr.mxu0 0.0
        %2002 = vmatpush1.msra.mxu0 0.0
        %2003 = vmatprep.subr.mxu0 0.0
        %2004 = vmatpush1.msra.mxu0 0.0
        %2005 = vmatprep.subr.mxu0 0.0
        %2006 = vmatpush1.msra.mxu0 0.0
        %2007 = vmatprep.subr.mxu0 0.0
        %2008 = vmatpush1.msra.mxu0 0.0
        %2009 = vmatprep.subr.mxu0 0.0
        %2010 = vmatpush1.msra.mxu0 0.0
        %2011 = vmatprep.subr.mxu0 0.0
        %2012 = vmatpush1.msra.mxu0 0.0
        %2013 = vmatprep.subr.mxu0 0.0
        %2014 = vmatpush1.msra.mxu0 0.0
        %2015 = vmatprep.subr.mxu0 0.0
        %2016 = vmatpush1.msra.mxu0 0.0
        %2017 = vmatprep.subr.mxu0 0.0
        %2018 = vmatpush1.msra.mxu0 0.0
        %2019 = vmatprep.subr.mxu0 0.0
        %2020 = vmatpush1.msra.mxu0 0.0
        %2021 = vmatprep.subr.mxu0 0.0
        %2022 = vmatpush1.msra.mxu0 0.0
        %2023 = vmatprep.mubr.f32.mxu0 0.0
        %v2024 = vand.u32 %v1545, 4294901760
        %v2025 = vsub.f32 %v1545, %v2024
        %v2026 = vand.u32 %v2025, 4294901760
        %2027 = vmatmul.mubr.f32.gmra.mrb[0].mxu0 %v2026
        %v2028 = vpop.f32.mrb[0].mxu0
        %v2029 = vadd.f32 %v1906, %v2028
        %v2030 = vpop.f32.mrb[0].mxu0
        %2031 = vmatprep.mubr.f32.mxu0 0.0
        %v2032 = vand.u32 %v1548, 4294901760
        %v2033 = vsub.f32 %v1548, %v2032
        %v2034 = vand.u32 %v2033, 4294901760
        %2035 = vmatmul.mubr.f32.gmra.mrb[0].mxu0 %v2034
        %v2036 = vpop.f32.mrb[0].mxu0
        %v2037 = vadd.f32 %v1913, %v2036
        %v2038 = vpop.f32.mrb[0].mxu0
        %2039 = vmatprep.mubr.f32.mxu0 0.0
        %v2040 = vand.u32 %v1551, 4294901760
        %v2041 = vsub.f32 %v1551, %v2040
        %v2042 = vand.u32 %v2041, 4294901760
        %2043 = vmatmul.mubr.f32.gmra.mrb[0].mxu0 %v2042
        %v2044 = vpop.f32.mrb[0].mxu0
        %v2045 = vadd.f32 %v1920, %v2044
        %v2046 = vpop.f32.mrb[0].mxu0
        %2047 = vmatprep.mubr.f32.mxu0 0.0
        %v2048 = vand.u32 %v1554, 4294901760
        %v2049 = vsub.f32 %v1554, %v2048
        %v2050 = vand.u32 %v2049, 4294901760
        %2051 = vmatmul.mubr.f32.gmra.mrb[0].mxu0 %v2050
        %v2052 = vpop.f32.mrb[0].mxu0
        %v2053 = vadd.f32 %v1927, %v2052
        %v2054 = vpop.f32.mrb[0].mxu0
        %2055 = vmatprep.mubr.f32.mxu0 0.0
        %v2056 = vand.u32 %v1557, 4294901760
        %v2057 = vsub.f32 %v1557, %v2056
        %v2058 = vand.u32 %v2057, 4294901760
        %2059 = vmatmul.mubr.f32.gmra.mrb[0].mxu0 %v2058
        %v2060 = vpop.f32.mrb[0].mxu0
        %v2061 = vadd.f32 %v1934, %v2060
        %v2062 = vpop.f32.mrb[0].mxu0
        %2063 = vmatprep.mubr.f32.mxu0 0.0
        %v2064 = vand.u32 %v1560, 4294901760
        %v2065 = vsub.f32 %v1560, %v2064
        %v2066 = vand.u32 %v2065, 4294901760
        %2067 = vmatmul.mubr.f32.gmra.mrb[0].mxu0 %v2066
        %v2068 = vpop.f32.mrb[0].mxu0
        %v2069 = vadd.f32 %v1941, %v2068
        %v2070 = vpop.f32.mrb[0].mxu0
        %2071 = vmatprep.mubr.f32.mxu0 0.0
        %v2072 = vand.u32 %v1563, 4294901760
        %v2073 = vsub.f32 %v1563, %v2072
        %v2074 = vand.u32 %v2073, 4294901760
        %2075 = vmatmul.mubr.f32.gmra.mrb[0].mxu0 %v2074
        %v2076 = vpop.f32.mrb[0].mxu0
        %v2077 = vadd.f32 %v1948, %v2076
        %v2078 = vpop.f32.mrb[0].mxu0
        %2079 = vmatprep.mubr.f32.mxu0 0.0
        %v2080 = vand.u32 %v1566, 4294901760
        %v2081 = vsub.f32 %v1566, %v2080
        %v2082 = vand.u32 %v2081, 4294901760
        %2083 = vmatmul.mubr.f32.gmra.mrb[0].mxu0 %v2082
        %v2084 = vpop.f32.mrb[0].mxu0
        %v2085 = vadd.f32 %v1955, %v2084
        %v2086 = vpop.f32.mrb[0].mxu0
        %2087 = vdwg.mxu0
        %2088 = vmatprep.subr.mxu0 0.0
        %v2089 = vand.u32 %v1569, 4294901760
        %v2090 = vsub.f32 %v1569, %v2089
        %v2091 = vand.u32 %v2090, 4294901760
        %2092 = vmatpush1.msra.mxu0 %v2091
        %2093 = vmatprep.subr.mxu0 0.0
        %2094 = vmatpush1.msra.mxu0 0.0
        %2095 = vmatprep.subr.mxu0 0.0
        %2096 = vmatpush1.msra.mxu0 0.0
        %2097 = vmatprep.subr.mxu0 0.0
        %2098 = vmatpush1.msra.mxu0 0.0
        %2099 = vmatprep.subr.mxu0 0.0
        %2100 = vmatpush1.msra.mxu0 0.0
        %2101 = vmatprep.subr.mxu0 0.0
        %2102 = vmatpush1.msra.mxu0 0.0
        %2103 = vmatprep.subr.mxu0 0.0
        %2104 = vmatpush1.msra.mxu0 0.0
        %2105 = vmatprep.subr.mxu0 0.0
        %2106 = vmatpush1.msra.mxu0 0.0
        %2107 = vmatprep.subr.mxu0 0.0
        %2108 = vmatpush1.msra.mxu0 0.0
        %2109 = vmatprep.subr.mxu0 0.0
        %2110 = vmatpush1.msra.mxu0 0.0
        %2111 = vmatprep.subr.mxu0 0.0
        %2112 = vmatpush1.msra.mxu0 0.0
        %2113 = vmatprep.subr.mxu0 0.0
        %2114 = vmatpush1.msra.mxu0 0.0
        %2115 = vmatprep.subr.mxu0 0.0
        %2116 = vmatpush1.msra.mxu0 0.0
        %2117 = vmatprep.subr.mxu0 0.0
        %2118 = vmatpush1.msra.mxu0 0.0
        %2119 = vmatprep.subr.mxu0 0.0
        %2120 = vmatpush1.msra.mxu0 0.0
        %2121 = vmatprep.subr.mxu0 0.0
        %2122 = vmatpush1.msra.mxu0 0.0
        %2123 = vmatprep.subr.mxu0 0.0
        %2124 = vmatpush1.msra.mxu0 0.0
        %2125 = vmatprep.subr.mxu0 0.0
        %2126 = vmatpush1.msra.mxu0 0.0
        %2127 = vmatprep.subr.mxu0 0.0
        %2128 = vmatpush1.msra.mxu0 0.0
        %2129 = vmatprep.subr.mxu0 0.0
        %2130 = vmatpush1.msra.mxu0 0.0
        %2131 = vmatprep.subr.mxu0 0.0
        %2132 = vmatpush1.msra.mxu0 0.0
        %2133 = vmatprep.subr.mxu0 0.0
        %2134 = vmatpush1.msra.mxu0 0.0
        %2135 = vmatprep.subr.mxu0 0.0
        %2136 = vmatpush1.msra.mxu0 0.0
        %2137 = vmatprep.subr.mxu0 0.0
        %2138 = vmatpush1.msra.mxu0 0.0
        %2139 = vmatprep.subr.mxu0 0.0
        %2140 = vmatpush1.msra.mxu0 0.0
        %2141 = vmatprep.subr.mxu0 0.0
        %2142 = vmatpush1.msra.mxu0 0.0
        %2143 = vmatprep.subr.mxu0 0.0
        %2144 = vmatpush1.msra.mxu0 0.0
        %2145 = vmatprep.subr.mxu0 0.0
        %2146 = vmatpush1.msra.mxu0 0.0
        %2147 = vmatprep.subr.mxu0 0.0
        %2148 = vmatpush1.msra.mxu0 0.0
        %2149 = vmatprep.subr.mxu0 0.0
        %2150 = vmatpush1.msra.mxu0 0.0
        %2151 = vmatprep.subr.mxu0 0.0
        %2152 = vmatpush1.msra.mxu0 0.0
        %2153 = vmatprep.subr.mxu0 0.0
        %2154 = vmatpush1.msra.mxu0 0.0
        %2155 = vmatprep.mubr.f32.mxu0 0.0
        %v2156 = vand.u32 %v1545, 4294901760
        %2157 = vmatmul.mubr.f32.gmra.mrb[0].mxu0 %v2156
        %v2158 = vpop.f32.mrb[0].mxu0
        %v2159 = vadd.f32 %v2029, %v2158
        %v2160 = vpop.f32.mrb[0].mxu0
        %2161 = vmatprep.mubr.f32.mxu0 0.0
        %v2162 = vand.u32 %v1548, 4294901760
        %2163 = vmatmul.mubr.f32.gmra.mrb[0].mxu0 %v2162
        %v2164 = vpop.f32.mrb[0].mxu0
        %v2165 = vadd.f32 %v2037, %v2164
        %v2166 = vpop.f32.mrb[0].mxu0
        %2167 = vmatprep.mubr.f32.mxu0 0.0
        %v2168 = vand.u32 %v1551, 4294901760
        %2169 = vmatmul.mubr.f32.gmra.mrb[0].mxu0 %v2168
        %v2170 = vpop.f32.mrb[0].mxu0
        %v2171 = vadd.f32 %v2045, %v2170
        %v2172 = vpop.f32.mrb[0].mxu0
        %2173 = vmatprep.mubr.f32.mxu0 0.0
        %v2174 = vand.u32 %v1554, 4294901760
        %2175 = vmatmul.mubr.f32.gmra.mrb[0].mxu0 %v2174
        %v2176 = vpop.f32.mrb[0].mxu0
        %v2177 = vadd.f32 %v2053, %v2176
        %v2178 = vpop.f32.mrb[0].mxu0
        %2179 = vmatprep.mubr.f32.mxu0 0.0
        %v2180 = vand.u32 %v1557, 4294901760
        %2181 = vmatmul.mubr.f32.gmra.mrb[0].mxu0 %v2180
        %v2182 = vpop.f32.mrb[0].mxu0
        %v2183 = vadd.f32 %v2061, %v2182
        %v2184 = vpop.f32.mrb[0].mxu0
        %2185 = vmatprep.mubr.f32.mxu0 0.0
        %v2186 = vand.u32 %v1560, 4294901760
        %2187 = vmatmul.mubr.f32.gmra.mrb[0].mxu0 %v2186
        %v2188 = vpop.f32.mrb[0].mxu0
        %v2189 = vadd.f32 %v2069, %v2188
        %v2190 = vpop.f32.mrb[0].mxu0
        %2191 = vmatprep.mubr.f32.mxu0 0.0
        %v2192 = vand.u32 %v1563, 4294901760
        %2193 = vmatmul.mubr.f32.gmra.mrb[0].mxu0 %v2192
        %v2194 = vpop.f32.mrb[0].mxu0
        %v2195 = vadd.f32 %v2077, %v2194
        %v2196 = vpop.f32.mrb[0].mxu0
        %2197 = vmatprep.mubr.f32.mxu0 0.0
        %v2198 = vand.u32 %v1566, 4294901760
        %2199 = vmatmul.mubr.f32.gmra.mrb[0].mxu0 %v2198
        %v2200 = vpop.f32.mrb[0].mxu0
        %v2201 = vadd.f32 %v2085, %v2200
        %v2202 = vpop.f32.mrb[0].mxu0
        %2203 = vdwg.mxu0
        %2204 = vmatprep.subr.mxu0 0.0
        %v2205 = vand.u32 %v1569, 4294901760
        %2206 = vmatpush1.msra.mxu0 %v2205
        %2207 = vmatprep.subr.mxu0 0.0
        %2208 = vmatpush1.msra.mxu0 0.0
        %2209 = vmatprep.subr.mxu0 0.0
        %2210 = vmatpush1.msra.mxu0 0.0
        %2211 = vmatprep.subr.mxu0 0.0
        %2212 = vmatpush1.msra.mxu0 0.0
        %2213 = vmatprep.subr.mxu0 0.0
        %2214 = vmatpush1.msra.mxu0 0.0
        %2215 = vmatprep.subr.mxu0 0.0
        %2216 = vmatpush1.msra.mxu0 0.0
        %2217 = vmatprep.subr.mxu0 0.0
        %2218 = vmatpush1.msra.mxu0 0.0
        %2219 = vmatprep.subr.mxu0 0.0
        %2220 = vmatpush1.msra.mxu0 0.0
        %2221 = vmatprep.subr.mxu0 0.0
        %2222 = vmatpush1.msra.mxu0 0.0
        %2223 = vmatprep.subr.mxu0 0.0
        %2224 = vmatpush1.msra.mxu0 0.0
        %2225 = vmatprep.subr.mxu0 0.0
        %2226 = vmatpush1.msra.mxu0 0.0
        %2227 = vmatprep.subr.mxu0 0.0
        %2228 = vmatpush1.msra.mxu0 0.0
        %2229 = vmatprep.subr.mxu0 0.0
        %2230 = vmatpush1.msra.mxu0 0.0
        %2231 = vmatprep.subr.mxu0 0.0
        %2232 = vmatpush1.msra.mxu0 0.0
        %2233 = vmatprep.subr.mxu0 0.0
        %2234 = vmatpush1.msra.mxu0 0.0
        %2235 = vmatprep.subr.mxu0 0.0
        %2236 = vmatpush1.msra.mxu0 0.0
        %2237 = vmatprep.subr.mxu0 0.0
        %2238 = vmatpush1.msra.mxu0 0.0
        %2239 = vmatprep.subr.mxu0 0.0
        %2240 = vmatpush1.msra.mxu0 0.0
        %2241 = vmatprep.subr.mxu0 0.0
        %2242 = vmatpush1.msra.mxu0 0.0
        %2243 = vmatprep.subr.mxu0 0.0
        %2244 = vmatpush1.msra.mxu0 0.0
        %2245 = vmatprep.subr.mxu0 0.0
        %2246 = vmatpush1.msra.mxu0 0.0
        %2247 = vmatprep.subr.mxu0 0.0
        %2248 = vmatpush1.msra.mxu0 0.0
        %2249 = vmatprep.subr.mxu0 0.0
        %2250 = vmatpush1.msra.mxu0 0.0
        %2251 = vmatprep.subr.mxu0 0.0
        %2252 = vmatpush1.msra.mxu0 0.0
        %2253 = vmatprep.subr.mxu0 0.0
        %2254 = vmatpush1.msra.mxu0 0.0
        %2255 = vmatprep.subr.mxu0 0.0
        %2256 = vmatpush1.msra.mxu0 0.0
        %2257 = vmatprep.subr.mxu0 0.0
        %2258 = vmatpush1.msra.mxu0 0.0
        %2259 = vmatprep.subr.mxu0 0.0
        %2260 = vmatpush1.msra.mxu0 0.0
        %2261 = vmatprep.subr.mxu0 0.0
        %2262 = vmatpush1.msra.mxu0 0.0
        %2263 = vmatprep.subr.mxu0 0.0
        %2264 = vmatpush1.msra.mxu0 0.0
        %2265 = vmatprep.subr.mxu0 0.0
        %2266 = vmatpush1.msra.mxu0 0.0
        %2267 = vmatprep.subr.mxu0 0.0
        %2268 = vmatpush1.msra.mxu0 0.0
        %2269 = vmatprep.mubr.f32.mxu0 0.0
        %v2270 = vand.u32 %v1545, 4294901760
        %2271 = vmatmul.mubr.f32.gmra.mrb[0].mxu0 %v2270
        %v2272 = vpop.f32.mrb[0].mxu0
        %v2273 = vadd.f32 %v2159, %v2272
        %v2274 = vpop.f32.mrb[0].mxu0
        %2275 = vmatprep.mubr.f32.mxu0 0.0
        %v2276 = vand.u32 %v1548, 4294901760
        %2277 = vmatmul.mubr.f32.gmra.mrb[0].mxu0 %v2276
        %v2278 = vpop.f32.mrb[0].mxu0
        %v2279 = vadd.f32 %v2165, %v2278
        %v2280 = vpop.f32.mrb[0].mxu0
        %2281 = vmatprep.mubr.f32.mxu0 0.0
        %v2282 = vand.u32 %v1551, 4294901760
        %2283 = vmatmul.mubr.f32.gmra.mrb[0].mxu0 %v2282
        %v2284 = vpop.f32.mrb[0].mxu0
        %v2285 = vadd.f32 %v2171, %v2284
        %v2286 = vpop.f32.mrb[0].mxu0
        %2287 = vmatprep.mubr.f32.mxu0 0.0
        %v2288 = vand.u32 %v1554, 4294901760
        %2289 = vmatmul.mubr.f32.gmra.mrb[0].mxu0 %v2288
        %v2290 = vpop.f32.mrb[0].mxu0
        %v2291 = vadd.f32 %v2177, %v2290
        %v2292 = vpop.f32.mrb[0].mxu0
        %2293 = vmatprep.mubr.f32.mxu0 0.0
        %v2294 = vand.u32 %v1557, 4294901760
        %2295 = vmatmul.mubr.f32.gmra.mrb[0].mxu0 %v2294
        %v2296 = vpop.f32.mrb[0].mxu0
        %v2297 = vadd.f32 %v2183, %v2296
        %v2298 = vpop.f32.mrb[0].mxu0
        %2299 = vmatprep.mubr.f32.mxu0 0.0
        %v2300 = vand.u32 %v1560, 4294901760
        %2301 = vmatmul.mubr.f32.gmra.mrb[0].mxu0 %v2300
        %v2302 = vpop.f32.mrb[0].mxu0
        %v2303 = vadd.f32 %v2189, %v2302
        %v2304 = vpop.f32.mrb[0].mxu0
        %2305 = vmatprep.mubr.f32.mxu0 0.0
        %v2306 = vand.u32 %v1563, 4294901760
        %2307 = vmatmul.mubr.f32.gmra.mrb[0].mxu0 %v2306
        %v2308 = vpop.f32.mrb[0].mxu0
        %v2309 = vadd.f32 %v2195, %v2308
        %v2310 = vpop.f32.mrb[0].mxu0
        %2311 = vmatprep.mubr.f32.mxu0 0.0
        %v2312 = vand.u32 %v1566, 4294901760
        %2313 = vmatmul.mubr.f32.gmra.mrb[0].mxu0 %v2312
        %v2314 = vpop.f32.mrb[0].mxu0
        %v2315 = vadd.f32 %v2201, %v2314
        %v2316 = vpop.f32.mrb[0].mxu0
        %2317 = vdwg.mxu0
        %vm2326 = vcmask 1046528
        %v2327 = vrot.slane %v740, 1
        %v2328 = vrot.slane %v741, 1
        %v2329 = vsel %vm2326, %v2327, %v2328
        %v2330 = vrot.slane %v742, 1
        %v2331 = vrot.slane %v743, 1
        %v2332 = vsel %vm2326, %v2330, %v2331
        %v2333 = vrot.slane %v744, 1
        %v2334 = vrot.slane %v745, 1
        %v2335 = vsel %vm2326, %v2333, %v2334
        %v2336 = vrot.slane %v746, 1
        %v2337 = vrot.slane %v747, 1
        %v2338 = vsel %vm2326, %v2336, %v2337
        %v2339 = vrot.slane %v748, 1
        %v2340 = vrot.slane %v749, 1
        %v2341 = vsel %vm2326, %v2339, %v2340
        %v2342 = vrot.slane %v750, 1
        %v2343 = vrot.slane %v751, 1
        %v2344 = vsel %vm2326, %v2342, %v2343
        %v2345 = vrot.slane %v752, 1
        %v2346 = vrot.slane %v753, 1
        %v2347 = vsel %vm2326, %v2345, %v2346
        %v2348 = vrot.slane %v754, 1
        %v2349 = vrot.slane %v755, 1
        %v2350 = vsel %vm2326, %v2348, %v2349
        %s2351 = scalar_lea.vmem %s723, 8
        %v2352 = vld [vmem:[%s2351] sm:$0xf]
        %v2353 = vsel %vm768, %v2329, 0
        %v2355 = vsel %vm768, %v2332, 0
        %v2357 = vsel %vm768, %v2335, 0
        %v2359 = vsel %vm768, %v2338, 0
        %v2361 = vsel %vm768, %v2341, 0
        %v2363 = vsel %vm768, %v2344, 0
        %v2365 = vsel %vm768, %v2347, 0
        %v2367 = vsel %vm768, %v2350, 0
        %v2370 = vsel %vm793, %v2352, 0
        %2372 = vmatprep.subr.mxu0 0.0
        %v2373 = vand.u32 %v2370, 4294901760
        %2374 = vmatpush1.msra.mxu0 %v2373
        %2375 = vmatprep.subr.mxu0 0.0
        %2376 = vmatpush1.msra.mxu0 0.0
        %2377 = vmatprep.subr.mxu0 0.0
        %2378 = vmatpush1.msra.mxu0 0.0
        %2379 = vmatprep.subr.mxu0 0.0
        %2380 = vmatpush1.msra.mxu0 0.0
        %2381 = vmatprep.subr.mxu0 0.0
        %2382 = vmatpush1.msra.mxu0 0.0
        %2383 = vmatprep.subr.mxu0 0.0
        %2384 = vmatpush1.msra.mxu0 0.0
        %2385 = vmatprep.subr.mxu0 0.0
        %2386 = vmatpush1.msra.mxu0 0.0
        %2387 = vmatprep.subr.mxu0 0.0
        %2388 = vmatpush1.msra.mxu0 0.0
        %2389 = vmatprep.subr.mxu0 0.0
        %2390 = vmatpush1.msra.mxu0 0.0
        %2391 = vmatprep.subr.mxu0 0.0
        %2392 = vmatpush1.msra.mxu0 0.0
        %2393 = vmatprep.subr.mxu0 0.0
        %2394 = vmatpush1.msra.mxu0 0.0
        %2395 = vmatprep.subr.mxu0 0.0
        %2396 = vmatpush1.msra.mxu0 0.0
        %2397 = vmatprep.subr.mxu0 0.0
        %2398 = vmatpush1.msra.mxu0 0.0
        %2399 = vmatprep.subr.mxu0 0.0
        %2400 = vmatpush1.msra.mxu0 0.0
        %2401 = vmatprep.subr.mxu0 0.0
        %2402 = vmatpush1.msra.mxu0 0.0
        %2403 = vmatprep.subr.mxu0 0.0
        %2404 = vmatpush1.msra.mxu0 0.0
        %2405 = vmatprep.subr.mxu0 0.0
        %2406 = vmatpush1.msra.mxu0 0.0
        %2407 = vmatprep.subr.mxu0 0.0
        %2408 = vmatpush1.msra.mxu0 0.0
        %2409 = vmatprep.subr.mxu0 0.0
        %2410 = vmatpush1.msra.mxu0 0.0
        %2411 = vmatprep.subr.mxu0 0.0
        %2412 = vmatpush1.msra.mxu0 0.0
        %2413 = vmatprep.subr.mxu0 0.0
        %2414 = vmatpush1.msra.mxu0 0.0
        %2415 = vmatprep.subr.mxu0 0.0
        %2416 = vmatpush1.msra.mxu0 0.0
        %2417 = vmatprep.subr.mxu0 0.0
        %2418 = vmatpush1.msra.mxu0 0.0
        %2419 = vmatprep.subr.mxu0 0.0
        %2420 = vmatpush1.msra.mxu0 0.0
        %2421 = vmatprep.subr.mxu0 0.0
        %2422 = vmatpush1.msra.mxu0 0.0
        %2423 = vmatprep.subr.mxu0 0.0
        %2424 = vmatpush1.msra.mxu0 0.0
        %2425 = vmatprep.subr.mxu0 0.0
        %2426 = vmatpush1.msra.mxu0 0.0
        %2427 = vmatprep.subr.mxu0 0.0
        %2428 = vmatpush1.msra.mxu0 0.0
        %2429 = vmatprep.subr.mxu0 0.0
        %2430 = vmatpush1.msra.mxu0 0.0
        %2431 = vmatprep.subr.mxu0 0.0
        %2432 = vmatpush1.msra.mxu0 0.0
        %2433 = vmatprep.subr.mxu0 0.0
        %2434 = vmatpush1.msra.mxu0 0.0
        %2435 = vmatprep.subr.mxu0 0.0
        %2436 = vmatpush1.msra.mxu0 0.0
        %2437 = vmatprep.mubr.f32.mxu0 0.0
        %v2438 = vand.u32 %v2353, 4294901760
        %v2439 = vsub.f32 %v2353, %v2438
        %v2440 = vand.u32 %v2439, 4294901760
        %v2441 = vsub.f32 %v2439, %v2440
        %v2442 = vand.u32 %v2441, 4294901760
        %2443 = vmatmul.mubr.f32.gmra.mrb[0].mxu0 %v2442
        %v2444 = vpop.f32.mrb[0].mxu0
        %v2445 = vadd.f32 0.0, %v2444
        %v2446 = vpop.f32.mrb[0].mxu0
        %2447 = vmatprep.mubr.f32.mxu0 0.0
        %v2448 = vand.u32 %v2355, 4294901760
        %v2449 = vsub.f32 %v2355, %v2448
        %v2450 = vand.u32 %v2449, 4294901760
        %v2451 = vsub.f32 %v2449, %v2450
        %v2452 = vand.u32 %v2451, 4294901760
        %2453 = vmatmul.mubr.f32.gmra.mrb[0].mxu0 %v2452
        %v2454 = vpop.f32.mrb[0].mxu0
        %v2455 = vadd.f32 0.0, %v2454
        %v2456 = vpop.f32.mrb[0].mxu0
        %2457 = vmatprep.mubr.f32.mxu0 0.0
        %v2458 = vand.u32 %v2357, 4294901760
        %v2459 = vsub.f32 %v2357, %v2458
        %v2460 = vand.u32 %v2459, 4294901760
        %v2461 = vsub.f32 %v2459, %v2460
        %v2462 = vand.u32 %v2461, 4294901760
        %2463 = vmatmul.mubr.f32.gmra.mrb[0].mxu0 %v2462
        %v2464 = vpop.f32.mrb[0].mxu0
        %v2465 = vadd.f32 0.0, %v2464
        %v2466 = vpop.f32.mrb[0].mxu0
        %2467 = vmatprep.mubr.f32.mxu0 0.0
        %v2468 = vand.u32 %v2359, 4294901760
        %v2469 = vsub.f32 %v2359, %v2468
        %v2470 = vand.u32 %v2469, 4294901760
        %v2471 = vsub.f32 %v2469, %v2470
        %v2472 = vand.u32 %v2471, 4294901760
        %2473 = vmatmul.mubr.f32.gmra.mrb[0].mxu0 %v2472
        %v2474 = vpop.f32.mrb[0].mxu0
        %v2475 = vadd.f32 0.0, %v2474
        %v2476 = vpop.f32.mrb[0].mxu0
        %2477 = vmatprep.mubr.f32.mxu0 0.0
        %v2478 = vand.u32 %v2361, 4294901760
        %v2479 = vsub.f32 %v2361, %v2478
        %v2480 = vand.u32 %v2479, 4294901760
        %v2481 = vsub.f32 %v2479, %v2480
        %v2482 = vand.u32 %v2481, 4294901760
        %2483 = vmatmul.mubr.f32.gmra.mrb[0].mxu0 %v2482
        %v2484 = vpop.f32.mrb[0].mxu0
        %v2485 = vadd.f32 0.0, %v2484
        %v2486 = vpop.f32.mrb[0].mxu0
        %2487 = vmatprep.mubr.f32.mxu0 0.0
        %v2488 = vand.u32 %v2363, 4294901760
        %v2489 = vsub.f32 %v2363, %v2488
        %v2490 = vand.u32 %v2489, 4294901760
        %v2491 = vsub.f32 %v2489, %v2490
        %v2492 = vand.u32 %v2491, 4294901760
        %2493 = vmatmul.mubr.f32.gmra.mrb[0].mxu0 %v2492
        %v2494 = vpop.f32.mrb[0].mxu0
        %v2495 = vadd.f32 0.0, %v2494
        %v2496 = vpop.f32.mrb[0].mxu0
        %2497 = vmatprep.mubr.f32.mxu0 0.0
        %v2498 = vand.u32 %v2365, 4294901760
        %v2499 = vsub.f32 %v2365, %v2498
        %v2500 = vand.u32 %v2499, 4294901760
        %v2501 = vsub.f32 %v2499, %v2500
        %v2502 = vand.u32 %v2501, 4294901760
        %2503 = vmatmul.mubr.f32.gmra.mrb[0].mxu0 %v2502
        %v2504 = vpop.f32.mrb[0].mxu0
        %v2505 = vadd.f32 0.0, %v2504
        %v2506 = vpop.f32.mrb[0].mxu0
        %2507 = vmatprep.mubr.f32.mxu0 0.0
        %v2508 = vand.u32 %v2367, 4294901760
        %v2509 = vsub.f32 %v2367, %v2508
        %v2510 = vand.u32 %v2509, 4294901760
        %v2511 = vsub.f32 %v2509, %v2510
        %v2512 = vand.u32 %v2511, 4294901760
        %2513 = vmatmul.mubr.f32.gmra.mrb[0].mxu0 %v2512
        %v2514 = vpop.f32.mrb[0].mxu0
        %v2515 = vadd.f32 0.0, %v2514
        %v2516 = vpop.f32.mrb[0].mxu0
        %2517 = vdwg.mxu0
        %2518 = vmatprep.subr.mxu0 0.0
        %v2519 = vand.u32 %v2370, 4294901760
        %v2520 = vsub.f32 %v2370, %v2519
        %v2521 = vand.u32 %v2520, 4294901760
        %v2522 = vsub.f32 %v2520, %v2521
        %v2523 = vand.u32 %v2522, 4294901760
        %2524 = vmatpush1.msra.mxu0 %v2523
        %2525 = vmatprep.subr.mxu0 0.0
        %2526 = vmatpush1.msra.mxu0 0.0
        %2527 = vmatprep.subr.mxu0 0.0
        %2528 = vmatpush1.msra.mxu0 0.0
        %2529 = vmatprep.subr.mxu0 0.0
        %2530 = vmatpush1.msra.mxu0 0.0
        %2531 = vmatprep.subr.mxu0 0.0
        %2532 = vmatpush1.msra.mxu0 0.0
        %2533 = vmatprep.subr.mxu0 0.0
        %2534 = vmatpush1.msra.mxu0 0.0
        %2535 = vmatprep.subr.mxu0 0.0
        %2536 = vmatpush1.msra.mxu0 0.0
        %2537 = vmatprep.subr.mxu0 0.0
        %2538 = vmatpush1.msra.mxu0 0.0
        %2539 = vmatprep.subr.mxu0 0.0
        %2540 = vmatpush1.msra.mxu0 0.0
        %2541 = vmatprep.subr.mxu0 0.0
        %2542 = vmatpush1.msra.mxu0 0.0
        %2543 = vmatprep.subr.mxu0 0.0
        %2544 = vmatpush1.msra.mxu0 0.0
        %2545 = vmatprep.subr.mxu0 0.0
        %2546 = vmatpush1.msra.mxu0 0.0
        %2547 = vmatprep.subr.mxu0 0.0
        %2548 = vmatpush1.msra.mxu0 0.0
        %2549 = vmatprep.subr.mxu0 0.0
        %2550 = vmatpush1.msra.mxu0 0.0
        %2551 = vmatprep.subr.mxu0 0.0
        %2552 = vmatpush1.msra.mxu0 0.0
        %2553 = vmatprep.subr.mxu0 0.0
        %2554 = vmatpush1.msra.mxu0 0.0
        %2555 = vmatprep.subr.mxu0 0.0
        %2556 = vmatpush1.msra.mxu0 0.0
        %2557 = vmatprep.subr.mxu0 0.0
        %2558 = vmatpush1.msra.mxu0 0.0
        %2559 = vmatprep.subr.mxu0 0.0
        %2560 = vmatpush1.msra.mxu0 0.0
        %2561 = vmatprep.subr.mxu0 0.0
        %2562 = vmatpush1.msra.mxu0 0.0
        %2563 = vmatprep.subr.mxu0 0.0
        %2564 = vmatpush1.msra.mxu0 0.0
        %2565 = vmatprep.subr.mxu0 0.0
        %2566 = vmatpush1.msra.mxu0 0.0
        %2567 = vmatprep.subr.mxu0 0.0
        %2568 = vmatpush1.msra.mxu0 0.0
        %2569 = vmatprep.subr.mxu0 0.0
        %2570 = vmatpush1.msra.mxu0 0.0
        %2571 = vmatprep.subr.mxu0 0.0
        %2572 = vmatpush1.msra.mxu0 0.0
        %2573 = vmatprep.subr.mxu0 0.0
        %2574 = vmatpush1.msra.mxu0 0.0
        %2575 = vmatprep.subr.mxu0 0.0
        %2576 = vmatpush1.msra.mxu0 0.0
        %2577 = vmatprep.subr.mxu0 0.0
        %2578 = vmatpush1.msra.mxu0 0.0
        %2579 = vmatprep.subr.mxu0 0.0
        %2580 = vmatpush1.msra.mxu0 0.0
        %2581 = vmatprep.subr.mxu0 0.0
        %2582 = vmatpush1.msra.mxu0 0.0
        %2583 = vmatprep.subr.mxu0 0.0
        %2584 = vmatpush1.msra.mxu0 0.0
        %2585 = vmatprep.subr.mxu0 0.0
        %2586 = vmatpush1.msra.mxu0 0.0
        %2587 = vmatprep.mubr.f32.mxu0 0.0
        %v2588 = vand.u32 %v2353, 4294901760
        %2589 = vmatmul.mubr.f32.gmra.mrb[0].mxu0 %v2588
        %v2590 = vpop.f32.mrb[0].mxu0
        %v2591 = vadd.f32 %v2445, %v2590
        %v2592 = vpop.f32.mrb[0].mxu0
        %2593 = vmatprep.mubr.f32.mxu0 0.0
        %v2594 = vand.u32 %v2355, 4294901760
        %2595 = vmatmul.mubr.f32.gmra.mrb[0].mxu0 %v2594
        %v2596 = vpop.f32.mrb[0].mxu0
        %v2597 = vadd.f32 %v2455, %v2596
        %v2598 = vpop.f32.mrb[0].mxu0
        %2599 = vmatprep.mubr.f32.mxu0 0.0
        %v2600 = vand.u32 %v2357, 4294901760
        %2601 = vmatmul.mubr.f32.gmra.mrb[0].mxu0 %v2600
        %v2602 = vpop.f32.mrb[0].mxu0
        %v2603 = vadd.f32 %v2465, %v2602
        %v2604 = vpop.f32.mrb[0].mxu0
        %2605 = vmatprep.mubr.f32.mxu0 0.0
        %v2606 = vand.u32 %v2359, 4294901760
        %2607 = vmatmul.mubr.f32.gmra.mrb[0].mxu0 %v2606
        %v2608 = vpop.f32.mrb[0].mxu0
        %v2609 = vadd.f32 %v2475, %v2608
        %v2610 = vpop.f32.mrb[0].mxu0
        %2611 = vmatprep.mubr.f32.mxu0 0.0
        %v2612 = vand.u32 %v2361, 4294901760
        %2613 = vmatmul.mubr.f32.gmra.mrb[0].mxu0 %v2612
        %v2614 = vpop.f32.mrb[0].mxu0
        %v2615 = vadd.f32 %v2485, %v2614
        %v2616 = vpop.f32.mrb[0].mxu0
        %2617 = vmatprep.mubr.f32.mxu0 0.0
        %v2618 = vand.u32 %v2363, 4294901760
        %2619 = vmatmul.mubr.f32.gmra.mrb[0].mxu0 %v2618
        %v2620 = vpop.f32.mrb[0].mxu0
        %v2621 = vadd.f32 %v2495, %v2620
        %v2622 = vpop.f32.mrb[0].mxu0
        %2623 = vmatprep.mubr.f32.mxu0 0.0
        %v2624 = vand.u32 %v2365, 4294901760
        %2625 = vmatmul.mubr.f32.gmra.mrb[0].mxu0 %v2624
        %v2626 = vpop.f32.mrb[0].mxu0
        %v2627 = vadd.f32 %v2505, %v2626
        %v2628 = vpop.f32.mrb[0].mxu0
        %2629 = vmatprep.mubr.f32.mxu0 0.0
        %v2630 = vand.u32 %v2367, 4294901760
        %2631 = vmatmul.mubr.f32.gmra.mrb[0].mxu0 %v2630
        %v2632 = vpop.f32.mrb[0].mxu0
        %v2633 = vadd.f32 %v2515, %v2632
        %v2634 = vpop.f32.mrb[0].mxu0
        %2635 = vdwg.mxu0
        %2636 = vmatprep.subr.mxu0 0.0
        %v2637 = vand.u32 %v2370, 4294901760
        %v2638 = vsub.f32 %v2370, %v2637
        %2639 = vmatpush1.msra.mxu0 %v2638
        %2640 = vmatprep.subr.mxu0 0.0
        %2641 = vmatpush1.msra.mxu0 0.0
        %2642 = vmatprep.subr.mxu0 0.0
        %2643 = vmatpush1.msra.mxu0 0.0
        %2644 = vmatprep.subr.mxu0 0.0
        %2645 = vmatpush1.msra.mxu0 0.0
        %2646 = vmatprep.subr.mxu0 0.0
        %2647 = vmatpush1.msra.mxu0 0.0
        %2648 = vmatprep.subr.mxu0 0.0
        %2649 = vmatpush1.msra.mxu0 0.0
        %2650 = vmatprep.subr.mxu0 0.0
        %2651 = vmatpush1.msra.mxu0 0.0
        %2652 = vmatprep.subr.mxu0 0.0
        %2653 = vmatpush1.msra.mxu0 0.0
        %2654 = vmatprep.subr.mxu0 0.0
        %2655 = vmatpush1.msra.mxu0 0.0
        %2656 = vmatprep.subr.mxu0 0.0
        %2657 = vmatpush1.msra.mxu0 0.0
        %2658 = vmatprep.subr.mxu0 0.0
        %2659 = vmatpush1.msra.mxu0 0.0
        %2660 = vmatprep.subr.mxu0 0.0
        %2661 = vmatpush1.msra.mxu0 0.0
        %2662 = vmatprep.subr.mxu0 0.0
        %2663 = vmatpush1.msra.mxu0 0.0
        %2664 = vmatprep.subr.mxu0 0.0
        %2665 = vmatpush1.msra.mxu0 0.0
        %2666 = vmatprep.subr.mxu0 0.0
        %2667 = vmatpush1.msra.mxu0 0.0
        %2668 = vmatprep.subr.mxu0 0.0
        %2669 = vmatpush1.msra.mxu0 0.0
        %2670 = vmatprep.subr.mxu0 0.0
        %2671 = vmatpush1.msra.mxu0 0.0
        %2672 = vmatprep.subr.mxu0 0.0
        %2673 = vmatpush1.msra.mxu0 0.0
        %2674 = vmatprep.subr.mxu0 0.0
        %2675 = vmatpush1.msra.mxu0 0.0
        %2676 = vmatprep.subr.mxu0 0.0
        %2677 = vmatpush1.msra.mxu0 0.0
        %2678 = vmatprep.subr.mxu0 0.0
        %2679 = vmatpush1.msra.mxu0 0.0
        %2680 = vmatprep.subr.mxu0 0.0
        %2681 = vmatpush1.msra.mxu0 0.0
        %2682 = vmatprep.subr.mxu0 0.0
        %2683 = vmatpush1.msra.mxu0 0.0
        %2684 = vmatprep.subr.mxu0 0.0
        %2685 = vmatpush1.msra.mxu0 0.0
        %2686 = vmatprep.subr.mxu0 0.0
        %2687 = vmatpush1.msra.mxu0 0.0
        %2688 = vmatprep.subr.mxu0 0.0
        %2689 = vmatpush1.msra.mxu0 0.0
        %2690 = vmatprep.subr.mxu0 0.0
        %2691 = vmatpush1.msra.mxu0 0.0
        %2692 = vmatprep.subr.mxu0 0.0
        %2693 = vmatpush1.msra.mxu0 0.0
        %2694 = vmatprep.subr.mxu0 0.0
        %2695 = vmatpush1.msra.mxu0 0.0
        %2696 = vmatprep.subr.mxu0 0.0
        %2697 = vmatpush1.msra.mxu0 0.0
        %2698 = vmatprep.subr.mxu0 0.0
        %2699 = vmatpush1.msra.mxu0 0.0
        %2700 = vmatprep.subr.mxu0 0.0
        %2701 = vmatpush1.msra.mxu0 0.0
        %2702 = vmatprep.mubr.f32.mxu0 0.0
        %v2703 = vand.u32 %v2353, 4294901760
        %v2704 = vsub.f32 %v2353, %v2703
        %2705 = vmatmul.mubr.f32.gmra.mrb[0].mxu0 %v2704
        %v2706 = vpop.f32.mrb[0].mxu0
        %v2707 = vadd.f32 %v2591, %v2706
        %v2708 = vpop.f32.mrb[0].mxu0
        %2709 = vmatprep.mubr.f32.mxu0 0.0
        %v2710 = vand.u32 %v2355, 4294901760
        %v2711 = vsub.f32 %v2355, %v2710
        %2712 = vmatmul.mubr.f32.gmra.mrb[0].mxu0 %v2711
        %v2713 = vpop.f32.mrb[0].mxu0
        %v2714 = vadd.f32 %v2597, %v2713
        %v2715 = vpop.f32.mrb[0].mxu0
        %2716 = vmatprep.mubr.f32.mxu0 0.0
        %v2717 = vand.u32 %v2357, 4294901760
        %v2718 = vsub.f32 %v2357, %v2717
        %2719 = vmatmul.mubr.f32.gmra.mrb[0].mxu0 %v2718
        %v2720 = vpop.f32.mrb[0].mxu0
        %v2721 = vadd.f32 %v2603, %v2720
        %v2722 = vpop.f32.mrb[0].mxu0
        %2723 = vmatprep.mubr.f32.mxu0 0.0
        %v2724 = vand.u32 %v2359, 4294901760
        %v2725 = vsub.f32 %v2359, %v2724
        %2726 = vmatmul.mubr.f32.gmra.mrb[0].mxu0 %v2725
        %v2727 = vpop.f32.mrb[0].mxu0
        %v2728 = vadd.f32 %v2609, %v2727
        %v2729 = vpop.f32.mrb[0].mxu0
        %2730 = vmatprep.mubr.f32.mxu0 0.0
        %v2731 = vand.u32 %v2361, 4294901760
        %v2732 = vsub.f32 %v2361, %v2731
        %2733 = vmatmul.mubr.f32.gmra.mrb[0].mxu0 %v2732
        %v2734 = vpop.f32.mrb[0].mxu0
        %v2735 = vadd.f32 %v2615, %v2734
        %v2736 = vpop.f32.mrb[0].mxu0
        %2737 = vmatprep.mubr.f32.mxu0 0.0
        %v2738 = vand.u32 %v2363, 4294901760
        %v2739 = vsub.f32 %v2363, %v2738
        %2740 = vmatmul.mubr.f32.gmra.mrb[0].mxu0 %v2739
        %v2741 = vpop.f32.mrb[0].mxu0
        %v2742 = vadd.f32 %v2621, %v2741
        %v2743 = vpop.f32.mrb[0].mxu0
        %2744 = vmatprep.mubr.f32.mxu0 0.0
        %v2745 = vand.u32 %v2365, 4294901760
        %v2746 = vsub.f32 %v2365, %v2745
        %2747 = vmatmul.mubr.f32.gmra.mrb[0].mxu0 %v2746
        %v2748 = vpop.f32.mrb[0].mxu0
        %v2749 = vadd.f32 %v2627, %v2748
        %v2750 = vpop.f32.mrb[0].mxu0
        %2751 = vmatprep.mubr.f32.mxu0 0.0
        %v2752 = vand.u32 %v2367, 4294901760
        %v2753 = vsub.f32 %v2367, %v2752
        %2754 = vmatmul.mubr.f32.gmra.mrb[0].mxu0 %v2753
        %v2755 = vpop.f32.mrb[0].mxu0
        %v2756 = vadd.f32 %v2633, %v2755
        %v2757 = vpop.f32.mrb[0].mxu0
        %2758 = vdwg.mxu0
        %2759 = vmatprep.subr.mxu0 0.0
        %v2760 = vand.u32 %v2370, 4294901760
        %2761 = vmatpush1.msra.mxu0 %v2760
        %2762 = vmatprep.subr.mxu0 0.0
        %2763 = vmatpush1.msra.mxu0 0.0
        %2764 = vmatprep.subr.mxu0 0.0
        %2765 = vmatpush1.msra.mxu0 0.0
        %2766 = vmatprep.subr.mxu0 0.0
        %2767 = vmatpush1.msra.mxu0 0.0
        %2768 = vmatprep.subr.mxu0 0.0
        %2769 = vmatpush1.msra.mxu0 0.0
        %2770 = vmatprep.subr.mxu0 0.0
        %2771 = vmatpush1.msra.mxu0 0.0
        %2772 = vmatprep.subr.mxu0 0.0
        %2773 = vmatpush1.msra.mxu0 0.0
        %2774 = vmatprep.subr.mxu0 0.0
        %2775 = vmatpush1.msra.mxu0 0.0
        %2776 = vmatprep.subr.mxu0 0.0
        %2777 = vmatpush1.msra.mxu0 0.0
        %2778 = vmatprep.subr.mxu0 0.0
        %2779 = vmatpush1.msra.mxu0 0.0
        %2780 = vmatprep.subr.mxu0 0.0
        %2781 = vmatpush1.msra.mxu0 0.0
        %2782 = vmatprep.subr.mxu0 0.0
        %2783 = vmatpush1.msra.mxu0 0.0
        %2784 = vmatprep.subr.mxu0 0.0
        %2785 = vmatpush1.msra.mxu0 0.0
        %2786 = vmatprep.subr.mxu0 0.0
        %2787 = vmatpush1.msra.mxu0 0.0
        %2788 = vmatprep.subr.mxu0 0.0
        %2789 = vmatpush1.msra.mxu0 0.0
        %2790 = vmatprep.subr.mxu0 0.0
        %2791 = vmatpush1.msra.mxu0 0.0
        %2792 = vmatprep.subr.mxu0 0.0
        %2793 = vmatpush1.msra.mxu0 0.0
        %2794 = vmatprep.subr.mxu0 0.0
        %2795 = vmatpush1.msra.mxu0 0.0
        %2796 = vmatprep.subr.mxu0 0.0
        %2797 = vmatpush1.msra.mxu0 0.0
        %2798 = vmatprep.subr.mxu0 0.0
        %2799 = vmatpush1.msra.mxu0 0.0
        %2800 = vmatprep.subr.mxu0 0.0
        %2801 = vmatpush1.msra.mxu0 0.0
        %2802 = vmatprep.subr.mxu0 0.0
        %2803 = vmatpush1.msra.mxu0 0.0
        %2804 = vmatprep.subr.mxu0 0.0
        %2805 = vmatpush1.msra.mxu0 0.0
        %2806 = vmatprep.subr.mxu0 0.0
        %2807 = vmatpush1.msra.mxu0 0.0
        %2808 = vmatprep.subr.mxu0 0.0
        %2809 = vmatpush1.msra.mxu0 0.0
        %2810 = vmatprep.subr.mxu0 0.0
        %2811 = vmatpush1.msra.mxu0 0.0
        %2812 = vmatprep.subr.mxu0 0.0
        %2813 = vmatpush1.msra.mxu0 0.0
        %2814 = vmatprep.subr.mxu0 0.0
        %2815 = vmatpush1.msra.mxu0 0.0
        %2816 = vmatprep.subr.mxu0 0.0
        %2817 = vmatpush1.msra.mxu0 0.0
        %2818 = vmatprep.subr.mxu0 0.0
        %2819 = vmatpush1.msra.mxu0 0.0
        %2820 = vmatprep.subr.mxu0 0.0
        %2821 = vmatpush1.msra.mxu0 0.0
        %2822 = vmatprep.subr.mxu0 0.0
        %2823 = vmatpush1.msra.mxu0 0.0
        %2824 = vmatprep.mubr.f32.mxu0 0.0
        %v2825 = vand.u32 %v2353, 4294901760
        %v2826 = vsub.f32 %v2353, %v2825
        %v2827 = vand.u32 %v2826, 4294901760
        %2828 = vmatmul.mubr.f32.gmra.mrb[0].mxu0 %v2827
        %v2829 = vpop.f32.mrb[0].mxu0
        %v2830 = vadd.f32 %v2707, %v2829
        %v2831 = vpop.f32.mrb[0].mxu0
        %2832 = vmatprep.mubr.f32.mxu0 0.0
        %v2833 = vand.u32 %v2355, 4294901760
        %v2834 = vsub.f32 %v2355, %v2833
        %v2835 = vand.u32 %v2834, 4294901760
        %2836 = vmatmul.mubr.f32.gmra.mrb[0].mxu0 %v2835
        %v2837 = vpop.f32.mrb[0].mxu0
        %v2838 = vadd.f32 %v2714, %v2837
        %v2839 = vpop.f32.mrb[0].mxu0
        %2840 = vmatprep.mubr.f32.mxu0 0.0
        %v2841 = vand.u32 %v2357, 4294901760
        %v2842 = vsub.f32 %v2357, %v2841
        %v2843 = vand.u32 %v2842, 4294901760
        %2844 = vmatmul.mubr.f32.gmra.mrb[0].mxu0 %v2843
        %v2845 = vpop.f32.mrb[0].mxu0
        %v2846 = vadd.f32 %v2721, %v2845
        %v2847 = vpop.f32.mrb[0].mxu0
        %2848 = vmatprep.mubr.f32.mxu0 0.0
        %v2849 = vand.u32 %v2359, 4294901760
        %v2850 = vsub.f32 %v2359, %v2849
        %v2851 = vand.u32 %v2850, 4294901760
        %2852 = vmatmul.mubr.f32.gmra.mrb[0].mxu0 %v2851
        %v2853 = vpop.f32.mrb[0].mxu0
        %v2854 = vadd.f32 %v2728, %v2853
        %v2855 = vpop.f32.mrb[0].mxu0
        %2856 = vmatprep.mubr.f32.mxu0 0.0
        %v2857 = vand.u32 %v2361, 4294901760
        %v2858 = vsub.f32 %v2361, %v2857
        %v2859 = vand.u32 %v2858, 4294901760
        %2860 = vmatmul.mubr.f32.gmra.mrb[0].mxu0 %v2859
        %v2861 = vpop.f32.mrb[0].mxu0
        %v2862 = vadd.f32 %v2735, %v2861
        %v2863 = vpop.f32.mrb[0].mxu0
        %2864 = vmatprep.mubr.f32.mxu0 0.0
        %v2865 = vand.u32 %v2363, 4294901760
        %v2866 = vsub.f32 %v2363, %v2865
        %v2867 = vand.u32 %v2866, 4294901760
        %2868 = vmatmul.mubr.f32.gmra.mrb[0].mxu0 %v2867
        %v2869 = vpop.f32.mrb[0].mxu0
        %v2870 = vadd.f32 %v2742, %v2869
        %v2871 = vpop.f32.mrb[0].mxu0
        %2872 = vmatprep.mubr.f32.mxu0 0.0
        %v2873 = vand.u32 %v2365, 4294901760
        %v2874 = vsub.f32 %v2365, %v2873
        %v2875 = vand.u32 %v2874, 4294901760
        %2876 = vmatmul.mubr.f32.gmra.mrb[0].mxu0 %v2875
        %v2877 = vpop.f32.mrb[0].mxu0
        %v2878 = vadd.f32 %v2749, %v2877
        %v2879 = vpop.f32.mrb[0].mxu0
        %2880 = vmatprep.mubr.f32.mxu0 0.0
        %v2881 = vand.u32 %v2367, 4294901760
        %v2882 = vsub.f32 %v2367, %v2881
        %v2883 = vand.u32 %v2882, 4294901760
        %2884 = vmatmul.mubr.f32.gmra.mrb[0].mxu0 %v2883
        %v2885 = vpop.f32.mrb[0].mxu0
        %v2886 = vadd.f32 %v2756, %v2885
        %v2887 = vpop.f32.mrb[0].mxu0
        %2888 = vdwg.mxu0
        %2889 = vmatprep.subr.mxu0 0.0
        %v2890 = vand.u32 %v2370, 4294901760
        %v2891 = vsub.f32 %v2370, %v2890
        %v2892 = vand.u32 %v2891, 4294901760
        %2893 = vmatpush1.msra.mxu0 %v2892
        %2894 = vmatprep.subr.mxu0 0.0
        %2895 = vmatpush1.msra.mxu0 0.0
        %2896 = vmatprep.subr.mxu0 0.0
        %2897 = vmatpush1.msra.mxu0 0.0
        %2898 = vmatprep.subr.mxu0 0.0
        %2899 = vmatpush1.msra.mxu0 0.0
        %2900 = vmatprep.subr.mxu0 0.0
        %2901 = vmatpush1.msra.mxu0 0.0
        %2902 = vmatprep.subr.mxu0 0.0
        %2903 = vmatpush1.msra.mxu0 0.0
        %2904 = vmatprep.subr.mxu0 0.0
        %2905 = vmatpush1.msra.mxu0 0.0
        %2906 = vmatprep.subr.mxu0 0.0
        %2907 = vmatpush1.msra.mxu0 0.0
        %2908 = vmatprep.subr.mxu0 0.0
        %2909 = vmatpush1.msra.mxu0 0.0
        %2910 = vmatprep.subr.mxu0 0.0
        %2911 = vmatpush1.msra.mxu0 0.0
        %2912 = vmatprep.subr.mxu0 0.0
        %2913 = vmatpush1.msra.mxu0 0.0
        %2914 = vmatprep.subr.mxu0 0.0
        %2915 = vmatpush1.msra.mxu0 0.0
        %2916 = vmatprep.subr.mxu0 0.0
        %2917 = vmatpush1.msra.mxu0 0.0
        %2918 = vmatprep.subr.mxu0 0.0
        %2919 = vmatpush1.msra.mxu0 0.0
        %2920 = vmatprep.subr.mxu0 0.0
        %2921 = vmatpush1.msra.mxu0 0.0
        %2922 = vmatprep.subr.mxu0 0.0
        %2923 = vmatpush1.msra.mxu0 0.0
        %2924 = vmatprep.subr.mxu0 0.0
        %2925 = vmatpush1.msra.mxu0 0.0
        %2926 = vmatprep.subr.mxu0 0.0
        %2927 = vmatpush1.msra.mxu0 0.0
        %2928 = vmatprep.subr.mxu0 0.0
        %2929 = vmatpush1.msra.mxu0 0.0
        %2930 = vmatprep.subr.mxu0 0.0
        %2931 = vmatpush1.msra.mxu0 0.0
        %2932 = vmatprep.subr.mxu0 0.0
        %2933 = vmatpush1.msra.mxu0 0.0
        %2934 = vmatprep.subr.mxu0 0.0
        %2935 = vmatpush1.msra.mxu0 0.0
        %2936 = vmatprep.subr.mxu0 0.0
        %2937 = vmatpush1.msra.mxu0 0.0
        %2938 = vmatprep.subr.mxu0 0.0
        %2939 = vmatpush1.msra.mxu0 0.0
        %2940 = vmatprep.subr.mxu0 0.0
        %2941 = vmatpush1.msra.mxu0 0.0
        %2942 = vmatprep.subr.mxu0 0.0
        %2943 = vmatpush1.msra.mxu0 0.0
        %2944 = vmatprep.subr.mxu0 0.0
        %2945 = vmatpush1.msra.mxu0 0.0
        %2946 = vmatprep.subr.mxu0 0.0
        %2947 = vmatpush1.msra.mxu0 0.0
        %2948 = vmatprep.subr.mxu0 0.0
        %2949 = vmatpush1.msra.mxu0 0.0
        %2950 = vmatprep.subr.mxu0 0.0
        %2951 = vmatpush1.msra.mxu0 0.0
        %2952 = vmatprep.subr.mxu0 0.0
        %2953 = vmatpush1.msra.mxu0 0.0
        %2954 = vmatprep.subr.mxu0 0.0
        %2955 = vmatpush1.msra.mxu0 0.0
        %2956 = vmatprep.mubr.f32.mxu0 0.0
        %v2957 = vand.u32 %v2353, 4294901760
        %2958 = vmatmul.mubr.f32.gmra.mrb[0].mxu0 %v2957
        %v2959 = vpop.f32.mrb[0].mxu0
        %v2960 = vadd.f32 %v2830, %v2959
        %v2961 = vpop.f32.mrb[0].mxu0
        %2962 = vmatprep.mubr.f32.mxu0 0.0
        %v2963 = vand.u32 %v2355, 4294901760
        %2964 = vmatmul.mubr.f32.gmra.mrb[0].mxu0 %v2963
        %v2965 = vpop.f32.mrb[0].mxu0
        %v2966 = vadd.f32 %v2838, %v2965
        %v2967 = vpop.f32.mrb[0].mxu0
        %2968 = vmatprep.mubr.f32.mxu0 0.0
        %v2969 = vand.u32 %v2357, 4294901760
        %2970 = vmatmul.mubr.f32.gmra.mrb[0].mxu0 %v2969
        %v2971 = vpop.f32.mrb[0].mxu0
        %v2972 = vadd.f32 %v2846, %v2971
        %v2973 = vpop.f32.mrb[0].mxu0
        %2974 = vmatprep.mubr.f32.mxu0 0.0
        %v2975 = vand.u32 %v2359, 4294901760
        %2976 = vmatmul.mubr.f32.gmra.mrb[0].mxu0 %v2975
        %v2977 = vpop.f32.mrb[0].mxu0
        %v2978 = vadd.f32 %v2854, %v2977
        %v2979 = vpop.f32.mrb[0].mxu0
        %2980 = vmatprep.mubr.f32.mxu0 0.0
        %v2981 = vand.u32 %v2361, 4294901760
        %2982 = vmatmul.mubr.f32.gmra.mrb[0].mxu0 %v2981
        %v2983 = vpop.f32.mrb[0].mxu0
        %v2984 = vadd.f32 %v2862, %v2983
        %v2985 = vpop.f32.mrb[0].mxu0
        %2986 = vmatprep.mubr.f32.mxu0 0.0
        %v2987 = vand.u32 %v2363, 4294901760
        %2988 = vmatmul.mubr.f32.gmra.mrb[0].mxu0 %v2987
        %v2989 = vpop.f32.mrb[0].mxu0
        %v2990 = vadd.f32 %v2870, %v2989
        %v2991 = vpop.f32.mrb[0].mxu0
        %2992 = vmatprep.mubr.f32.mxu0 0.0
        %v2993 = vand.u32 %v2365, 4294901760
        %2994 = vmatmul.mubr.f32.gmra.mrb[0].mxu0 %v2993
        %v2995 = vpop.f32.mrb[0].mxu0
        %v2996 = vadd.f32 %v2878, %v2995
        %v2997 = vpop.f32.mrb[0].mxu0
        %2998 = vmatprep.mubr.f32.mxu0 0.0
        %v2999 = vand.u32 %v2367, 4294901760
        %3000 = vmatmul.mubr.f32.gmra.mrb[0].mxu0 %v2999
        %v3001 = vpop.f32.mrb[0].mxu0
        %v3002 = vadd.f32 %v2886, %v3001
        %v3003 = vpop.f32.mrb[0].mxu0
        %3004 = vdwg.mxu0
        %3005 = vmatprep.subr.mxu0 0.0
        %v3006 = vand.u32 %v2370, 4294901760
        %3007 = vmatpush1.msra.mxu0 %v3006
        %3008 = vmatprep.subr.mxu0 0.0
        %3009 = vmatpush1.msra.mxu0 0.0
        %3010 = vmatprep.subr.mxu0 0.0
        %3011 = vmatpush1.msra.mxu0 0.0
        %3012 = vmatprep.subr.mxu0 0.0
        %3013 = vmatpush1.msra.mxu0 0.0
        %3014 = vmatprep.subr.mxu0 0.0
        %3015 = vmatpush1.msra.mxu0 0.0
        %3016 = vmatprep.subr.mxu0 0.0
        %3017 = vmatpush1.msra.mxu0 0.0
        %3018 = vmatprep.subr.mxu0 0.0
        %3019 = vmatpush1.msra.mxu0 0.0
        %3020 = vmatprep.subr.mxu0 0.0
        %3021 = vmatpush1.msra.mxu0 0.0
        %3022 = vmatprep.subr.mxu0 0.0
        %3023 = vmatpush1.msra.mxu0 0.0
        %3024 = vmatprep.subr.mxu0 0.0
        %3025 = vmatpush1.msra.mxu0 0.0
        %3026 = vmatprep.subr.mxu0 0.0
        %3027 = vmatpush1.msra.mxu0 0.0
        %3028 = vmatprep.subr.mxu0 0.0
        %3029 = vmatpush1.msra.mxu0 0.0
        %3030 = vmatprep.subr.mxu0 0.0
        %3031 = vmatpush1.msra.mxu0 0.0
        %3032 = vmatprep.subr.mxu0 0.0
        %3033 = vmatpush1.msra.mxu0 0.0
        %3034 = vmatprep.subr.mxu0 0.0
        %3035 = vmatpush1.msra.mxu0 0.0
        %3036 = vmatprep.subr.mxu0 0.0
        %3037 = vmatpush1.msra.mxu0 0.0
        %3038 = vmatprep.subr.mxu0 0.0
        %3039 = vmatpush1.msra.mxu0 0.0
        %3040 = vmatprep.subr.mxu0 0.0
        %3041 = vmatpush1.msra.mxu0 0.0
        %3042 = vmatprep.subr.mxu0 0.0
        %3043 = vmatpush1.msra.mxu0 0.0
        %3044 = vmatprep.subr.mxu0 0.0
        %3045 = vmatpush1.msra.mxu0 0.0
        %3046 = vmatprep.subr.mxu0 0.0
        %3047 = vmatpush1.msra.mxu0 0.0
        %3048 = vmatprep.subr.mxu0 0.0
        %3049 = vmatpush1.msra.mxu0 0.0
        %3050 = vmatprep.subr.mxu0 0.0
        %3051 = vmatpush1.msra.mxu0 0.0
        %3052 = vmatprep.subr.mxu0 0.0
        %3053 = vmatpush1.msra.mxu0 0.0
        %3054 = vmatprep.subr.mxu0 0.0
        %3055 = vmatpush1.msra.mxu0 0.0
        %3056 = vmatprep.subr.mxu0 0.0
        %3057 = vmatpush1.msra.mxu0 0.0
        %3058 = vmatprep.subr.mxu0 0.0
        %3059 = vmatpush1.msra.mxu0 0.0
        %3060 = vmatprep.subr.mxu0 0.0
        %3061 = vmatpush1.msra.mxu0 0.0
        %3062 = vmatprep.subr.mxu0 0.0
        %3063 = vmatpush1.msra.mxu0 0.0
        %3064 = vmatprep.subr.mxu0 0.0
        %3065 = vmatpush1.msra.mxu0 0.0
        %3066 = vmatprep.subr.mxu0 0.0
        %3067 = vmatpush1.msra.mxu0 0.0
        %3068 = vmatprep.subr.mxu0 0.0
        %3069 = vmatpush1.msra.mxu0 0.0
        %3070 = vmatprep.mubr.f32.mxu0 0.0
        %v3071 = vand.u32 %v2353, 4294901760
        %3072 = vmatmul.mubr.f32.gmra.mrb[0].mxu0 %v3071
        %v3073 = vpop.f32.mrb[0].mxu0
        %v3074 = vadd.f32 %v2960, %v3073
        %v3075 = vpop.f32.mrb[0].mxu0
        %3076 = vmatprep.mubr.f32.mxu0 0.0
        %v3077 = vand.u32 %v2355, 4294901760
        %3078 = vmatmul.mubr.f32.gmra.mrb[0].mxu0 %v3077
        %v3079 = vpop.f32.mrb[0].mxu0
        %v3080 = vadd.f32 %v2966, %v3079
        %v3081 = vpop.f32.mrb[0].mxu0
        %3082 = vmatprep.mubr.f32.mxu0 0.0
        %v3083 = vand.u32 %v2357, 4294901760
        %3084 = vmatmul.mubr.f32.gmra.mrb[0].mxu0 %v3083
        %v3085 = vpop.f32.mrb[0].mxu0
        %v3086 = vadd.f32 %v2972, %v3085
        %v3087 = vpop.f32.mrb[0].mxu0
        %3088 = vmatprep.mubr.f32.mxu0 0.0
        %v3089 = vand.u32 %v2359, 4294901760
        %3090 = vmatmul.mubr.f32.gmra.mrb[0].mxu0 %v3089
        %v3091 = vpop.f32.mrb[0].mxu0
        %v3092 = vadd.f32 %v2978, %v3091
        %v3093 = vpop.f32.mrb[0].mxu0
        %3094 = vmatprep.mubr.f32.mxu0 0.0
        %v3095 = vand.u32 %v2361, 4294901760
        %3096 = vmatmul.mubr.f32.gmra.mrb[0].mxu0 %v3095
        %v3097 = vpop.f32.mrb[0].mxu0
        %v3098 = vadd.f32 %v2984, %v3097
        %v3099 = vpop.f32.mrb[0].mxu0
        %3100 = vmatprep.mubr.f32.mxu0 0.0
        %v3101 = vand.u32 %v2363, 4294901760
        %3102 = vmatmul.mubr.f32.gmra.mrb[0].mxu0 %v3101
        %v3103 = vpop.f32.mrb[0].mxu0
        %v3104 = vadd.f32 %v2990, %v3103
        %v3105 = vpop.f32.mrb[0].mxu0
        %3106 = vmatprep.mubr.f32.mxu0 0.0
        %v3107 = vand.u32 %v2365, 4294901760
        %3108 = vmatmul.mubr.f32.gmra.mrb[0].mxu0 %v3107
        %v3109 = vpop.f32.mrb[0].mxu0
        %v3110 = vadd.f32 %v2996, %v3109
        %v3111 = vpop.f32.mrb[0].mxu0
        %3112 = vmatprep.mubr.f32.mxu0 0.0
        %v3113 = vand.u32 %v2367, 4294901760
        %3114 = vmatmul.mubr.f32.gmra.mrb[0].mxu0 %v3113
        %v3115 = vpop.f32.mrb[0].mxu0
        %v3116 = vadd.f32 %v3002, %v3115
        %v3117 = vpop.f32.mrb[0].mxu0
        %3118 = vdwg.mxu0
        %v3119 = vadd.f32 %v2273, %v3074
        %v3120 = vadd.f32 %v2279, %v3080
        %v3121 = vadd.f32 %v2285, %v3086
        %v3122 = vadd.f32 %v2291, %v3092
        %v3123 = vadd.f32 %v2297, %v3098
        %v3124 = vadd.f32 %v2303, %v3104
        %v3125 = vadd.f32 %v2309, %v3110
        %v3126 = vadd.f32 %v2315, %v3116
        %s3127 = scalar_lea.vmem %s661, 256 [#allocation2]
        %v3128 = vld [vmem:[%s3127] sm:$0xff]
        %v3129 = vld [vmem:[%s3127 + $0x8] sm:$0x1]
        %v3130 = vld [vmem:[%s3127 + $0x10] sm:$0xff]
        %v3131 = vld [vmem:[%s3127 + $0x18] sm:$0x1]
        %v3132 = vld [vmem:[%s3127 + $0x20] sm:$0xff]
        %v3133 = vld [vmem:[%s3127 + $0x28] sm:$0x1]
        %v3134 = vld [vmem:[%s3127 + $0x30] sm:$0xff]
        %v3135 = vld [vmem:[%s3127 + $0x38] sm:$0x1]
        %v3136 = vld [vmem:[%s3127 + $0x40] sm:$0xff]
        %v3137 = vld [vmem:[%s3127 + $0x48] sm:$0x1]
        %v3138 = vld [vmem:[%s3127 + $0x50] sm:$0xff]
        %v3139 = vld [vmem:[%s3127 + $0x58] sm:$0x1]
        %v3140 = vld [vmem:[%s3127 + $0x60] sm:$0xff]
        %v3141 = vld [vmem:[%s3127 + $0x68] sm:$0x1]
        %v3142 = vld [vmem:[%s3127 + $0x70] sm:$0xff]
        %v3143 = vld [vmem:[%s3127 + $0x78] sm:$0x1]
        %s3144 = scalar_lea.vmem %s723, 12
        %v3145 = vld [vmem:[%s3144] sm:$0xf]
        %v3147 = vsel %vm768, %v3128, 0
        %v3150 = vsel %vm768, %v3130, 0
        %v3153 = vsel %vm768, %v3132, 0
        %v3156 = vsel %vm768, %v3134, 0
        %v3159 = vsel %vm768, %v3136, 0
        %v3162 = vsel %vm768, %v3138, 0
        %v3165 = vsel %vm768, %v3140, 0
        %v3168 = vsel %vm768, %v3142, 0
        %v3171 = vsel %vm793, %v3145, 0
        %3173 = vmatprep.subr.mxu0 0.0
        %v3174 = vand.u32 %v3171, 4294901760
        %3175 = vmatpush1.msra.mxu0 %v3174
        %3176 = vmatprep.subr.mxu0 0.0
        %3177 = vmatpush1.msra.mxu0 0.0
        %3178 = vmatprep.subr.mxu0 0.0
        %3179 = vmatpush1.msra.mxu0 0.0
        %3180 = vmatprep.subr.mxu0 0.0
        %3181 = vmatpush1.msra.mxu0 0.0
        %3182 = vmatprep.subr.mxu0 0.0
        %3183 = vmatpush1.msra.mxu0 0.0
        %3184 = vmatprep.subr.mxu0 0.0
        %3185 = vmatpush1.msra.mxu0 0.0
        %3186 = vmatprep.subr.mxu0 0.0
        %3187 = vmatpush1.msra.mxu0 0.0
        %3188 = vmatprep.subr.mxu0 0.0
        %3189 = vmatpush1.msra.mxu0 0.0
        %3190 = vmatprep.subr.mxu0 0.0
        %3191 = vmatpush1.msra.mxu0 0.0
        %3192 = vmatprep.subr.mxu0 0.0
        %3193 = vmatpush1.msra.mxu0 0.0
        %3194 = vmatprep.subr.mxu0 0.0
        %3195 = vmatpush1.msra.mxu0 0.0
        %3196 = vmatprep.subr.mxu0 0.0
        %3197 = vmatpush1.msra.mxu0 0.0
        %3198 = vmatprep.subr.mxu0 0.0
        %3199 = vmatpush1.msra.mxu0 0.0
        %3200 = vmatprep.subr.mxu0 0.0
        %3201 = vmatpush1.msra.mxu0 0.0
        %3202 = vmatprep.subr.mxu0 0.0
        %3203 = vmatpush1.msra.mxu0 0.0
        %3204 = vmatprep.subr.mxu0 0.0
        %3205 = vmatpush1.msra.mxu0 0.0
        %3206 = vmatprep.subr.mxu0 0.0
        %3207 = vmatpush1.msra.mxu0 0.0
        %3208 = vmatprep.subr.mxu0 0.0
        %3209 = vmatpush1.msra.mxu0 0.0
        %3210 = vmatprep.subr.mxu0 0.0
        %3211 = vmatpush1.msra.mxu0 0.0
        %3212 = vmatprep.subr.mxu0 0.0
        %3213 = vmatpush1.msra.mxu0 0.0
        %3214 = vmatprep.subr.mxu0 0.0
        %3215 = vmatpush1.msra.mxu0 0.0
        %3216 = vmatprep.subr.mxu0 0.0
        %3217 = vmatpush1.msra.mxu0 0.0
        %3218 = vmatprep.subr.mxu0 0.0
        %3219 = vmatpush1.msra.mxu0 0.0
        %3220 = vmatprep.subr.mxu0 0.0
        %3221 = vmatpush1.msra.mxu0 0.0
        %3222 = vmatprep.subr.mxu0 0.0
        %3223 = vmatpush1.msra.mxu0 0.0
        %3224 = vmatprep.subr.mxu0 0.0
        %3225 = vmatpush1.msra.mxu0 0.0
        %3226 = vmatprep.subr.mxu0 0.0
        %3227 = vmatpush1.msra.mxu0 0.0
        %3228 = vmatprep.subr.mxu0 0.0
        %3229 = vmatpush1.msra.mxu0 0.0
        %3230 = vmatprep.subr.mxu0 0.0
        %3231 = vmatpush1.msra.mxu0 0.0
        %3232 = vmatprep.subr.mxu0 0.0
        %3233 = vmatpush1.msra.mxu0 0.0
        %3234 = vmatprep.subr.mxu0 0.0
        %3235 = vmatpush1.msra.mxu0 0.0
        %3236 = vmatprep.subr.mxu0 0.0
        %3237 = vmatpush1.msra.mxu0 0.0
        %3238 = vmatprep.mubr.f32.mxu0 0.0
        %v3239 = vand.u32 %v3147, 4294901760
        %v3240 = vsub.f32 %v3147, %v3239
        %v3241 = vand.u32 %v3240, 4294901760
        %v3242 = vsub.f32 %v3240, %v3241
        %v3243 = vand.u32 %v3242, 4294901760
        %3244 = vmatmul.mubr.f32.gmra.mrb[0].mxu0 %v3243
        %v3245 = vpop.f32.mrb[0].mxu0
        %v3246 = vadd.f32 0.0, %v3245
        %v3247 = vpop.f32.mrb[0].mxu0
        %3248 = vmatprep.mubr.f32.mxu0 0.0
        %v3249 = vand.u32 %v3150, 4294901760
        %v3250 = vsub.f32 %v3150, %v3249
        %v3251 = vand.u32 %v3250, 4294901760
        %v3252 = vsub.f32 %v3250, %v3251
        %v3253 = vand.u32 %v3252, 4294901760
        %3254 = vmatmul.mubr.f32.gmra.mrb[0].mxu0 %v3253
        %v3255 = vpop.f32.mrb[0].mxu0
        %v3256 = vadd.f32 0.0, %v3255
        %v3257 = vpop.f32.mrb[0].mxu0
        %3258 = vmatprep.mubr.f32.mxu0 0.0
        %v3259 = vand.u32 %v3153, 4294901760
        %v3260 = vsub.f32 %v3153, %v3259
        %v3261 = vand.u32 %v3260, 4294901760
        %v3262 = vsub.f32 %v3260, %v3261
        %v3263 = vand.u32 %v3262, 4294901760
        %3264 = vmatmul.mubr.f32.gmra.mrb[0].mxu0 %v3263
        %v3265 = vpop.f32.mrb[0].mxu0
        %v3266 = vadd.f32 0.0, %v3265
        %v3267 = vpop.f32.mrb[0].mxu0
        %3268 = vmatprep.mubr.f32.mxu0 0.0
        %v3269 = vand.u32 %v3156, 4294901760
        %v3270 = vsub.f32 %v3156, %v3269
        %v3271 = vand.u32 %v3270, 4294901760
        %v3272 = vsub.f32 %v3270, %v3271
        %v3273 = vand.u32 %v3272, 4294901760
        %3274 = vmatmul.mubr.f32.gmra.mrb[0].mxu0 %v3273
        %v3275 = vpop.f32.mrb[0].mxu0
        %v3276 = vadd.f32 0.0, %v3275
        %v3277 = vpop.f32.mrb[0].mxu0
        %3278 = vmatprep.mubr.f32.mxu0 0.0
        %v3279 = vand.u32 %v3159, 4294901760
        %v3280 = vsub.f32 %v3159, %v3279
        %v3281 = vand.u32 %v3280, 4294901760
        %v3282 = vsub.f32 %v3280, %v3281
        %v3283 = vand.u32 %v3282, 4294901760
        %3284 = vmatmul.mubr.f32.gmra.mrb[0].mxu0 %v3283
        %v3285 = vpop.f32.mrb[0].mxu0
        %v3286 = vadd.f32 0.0, %v3285
        %v3287 = vpop.f32.mrb[0].mxu0
        %3288 = vmatprep.mubr.f32.mxu0 0.0
        %v3289 = vand.u32 %v3162, 4294901760
        %v3290 = vsub.f32 %v3162, %v3289
        %v3291 = vand.u32 %v3290, 4294901760
        %v3292 = vsub.f32 %v3290, %v3291
        %v3293 = vand.u32 %v3292, 4294901760
        %3294 = vmatmul.mubr.f32.gmra.mrb[0].mxu0 %v3293
        %v3295 = vpop.f32.mrb[0].mxu0
        %v3296 = vadd.f32 0.0, %v3295
        %v3297 = vpop.f32.mrb[0].mxu0
        %3298 = vmatprep.mubr.f32.mxu0 0.0
        %v3299 = vand.u32 %v3165, 4294901760
        %v3300 = vsub.f32 %v3165, %v3299
        %v3301 = vand.u32 %v3300, 4294901760
        %v3302 = vsub.f32 %v3300, %v3301
        %v3303 = vand.u32 %v3302, 4294901760
        %3304 = vmatmul.mubr.f32.gmra.mrb[0].mxu0 %v3303
        %v3305 = vpop.f32.mrb[0].mxu0
        %v3306 = vadd.f32 0.0, %v3305
        %v3307 = vpop.f32.mrb[0].mxu0
        %3308 = vmatprep.mubr.f32.mxu0 0.0
        %v3309 = vand.u32 %v3168, 4294901760
        %v3310 = vsub.f32 %v3168, %v3309
        %v3311 = vand.u32 %v3310, 4294901760
        %v3312 = vsub.f32 %v3310, %v3311
        %v3313 = vand.u32 %v3312, 4294901760
        %3314 = vmatmul.mubr.f32.gmra.mrb[0].mxu0 %v3313
        %v3315 = vpop.f32.mrb[0].mxu0
        %v3316 = vadd.f32 0.0, %v3315
        %v3317 = vpop.f32.mrb[0].mxu0
        %3318 = vdwg.mxu0
        %3319 = vmatprep.subr.mxu0 0.0
        %v3320 = vand.u32 %v3171, 4294901760
        %v3321 = vsub.f32 %v3171, %v3320
        %v3322 = vand.u32 %v3321, 4294901760
        %v3323 = vsub.f32 %v3321, %v3322
        %v3324 = vand.u32 %v3323, 4294901760
        %3325 = vmatpush1.msra.mxu0 %v3324
        %3326 = vmatprep.subr.mxu0 0.0
        %3327 = vmatpush1.msra.mxu0 0.0
        %3328 = vmatprep.subr.mxu0 0.0
        %3329 = vmatpush1.msra.mxu0 0.0
        %3330 = vmatprep.subr.mxu0 0.0
        %3331 = vmatpush1.msra.mxu0 0.0
        %3332 = vmatprep.subr.mxu0 0.0
        %3333 = vmatpush1.msra.mxu0 0.0
        %3334 = vmatprep.subr.mxu0 0.0
        %3335 = vmatpush1.msra.mxu0 0.0
        %3336 = vmatprep.subr.mxu0 0.0
        %3337 = vmatpush1.msra.mxu0 0.0
        %3338 = vmatprep.subr.mxu0 0.0
        %3339 = vmatpush1.msra.mxu0 0.0
        %3340 = vmatprep.subr.mxu0 0.0
        %3341 = vmatpush1.msra.mxu0 0.0
        %3342 = vmatprep.subr.mxu0 0.0
        %3343 = vmatpush1.msra.mxu0 0.0
        %3344 = vmatprep.subr.mxu0 0.0
        %3345 = vmatpush1.msra.mxu0 0.0
        %3346 = vmatprep.subr.mxu0 0.0
        %3347 = vmatpush1.msra.mxu0 0.0
        %3348 = vmatprep.subr.mxu0 0.0
        %3349 = vmatpush1.msra.mxu0 0.0
        %3350 = vmatprep.subr.mxu0 0.0
        %3351 = vmatpush1.msra.mxu0 0.0
        %3352 = vmatprep.subr.mxu0 0.0
        %3353 = vmatpush1.msra.mxu0 0.0
        %3354 = vmatprep.subr.mxu0 0.0
        %3355 = vmatpush1.msra.mxu0 0.0
        %3356 = vmatprep.subr.mxu0 0.0
        %3357 = vmatpush1.msra.mxu0 0.0
        %3358 = vmatprep.subr.mxu0 0.0
        %3359 = vmatpush1.msra.mxu0 0.0
        %3360 = vmatprep.subr.mxu0 0.0
        %3361 = vmatpush1.msra.mxu0 0.0
        %3362 = vmatprep.subr.mxu0 0.0
        %3363 = vmatpush1.msra.mxu0 0.0
        %3364 = vmatprep.subr.mxu0 0.0
        %3365 = vmatpush1.msra.mxu0 0.0
        %3366 = vmatprep.subr.mxu0 0.0
        %3367 = vmatpush1.msra.mxu0 0.0
        %3368 = vmatprep.subr.mxu0 0.0
        %3369 = vmatpush1.msra.mxu0 0.0
        %3370 = vmatprep.subr.mxu0 0.0
        %3371 = vmatpush1.msra.mxu0 0.0
        %3372 = vmatprep.subr.mxu0 0.0
        %3373 = vmatpush1.msra.mxu0 0.0
        %3374 = vmatprep.subr.mxu0 0.0
        %3375 = vmatpush1.msra.mxu0 0.0
        %3376 = vmatprep.subr.mxu0 0.0
        %3377 = vmatpush1.msra.mxu0 0.0
        %3378 = vmatprep.subr.mxu0 0.0
        %3379 = vmatpush1.msra.mxu0 0.0
        %3380 = vmatprep.subr.mxu0 0.0
        %3381 = vmatpush1.msra.mxu0 0.0
        %3382 = vmatprep.subr.mxu0 0.0
        %3383 = vmatpush1.msra.mxu0 0.0
        %3384 = vmatprep.subr.mxu0 0.0
        %3385 = vmatpush1.msra.mxu0 0.0
        %3386 = vmatprep.subr.mxu0 0.0
        %3387 = vmatpush1.msra.mxu0 0.0
        %3388 = vmatprep.mubr.f32.mxu0 0.0
        %v3389 = vand.u32 %v3147, 4294901760
        %3390 = vmatmul.mubr.f32.gmra.mrb[0].mxu0 %v3389
        %v3391 = vpop.f32.mrb[0].mxu0
        %v3392 = vadd.f32 %v3246, %v3391
        %v3393 = vpop.f32.mrb[0].mxu0
        %3394 = vmatprep.mubr.f32.mxu0 0.0
        %v3395 = vand.u32 %v3150, 4294901760
        %3396 = vmatmul.mubr.f32.gmra.mrb[0].mxu0 %v3395
        %v3397 = vpop.f32.mrb[0].mxu0
        %v3398 = vadd.f32 %v3256, %v3397
        %v3399 = vpop.f32.mrb[0].mxu0
        %3400 = vmatprep.mubr.f32.mxu0 0.0
        %v3401 = vand.u32 %v3153, 4294901760
        %3402 = vmatmul.mubr.f32.gmra.mrb[0].mxu0 %v3401
        %v3403 = vpop.f32.mrb[0].mxu0
        %v3404 = vadd.f32 %v3266, %v3403
        %v3405 = vpop.f32.mrb[0].mxu0
        %3406 = vmatprep.mubr.f32.mxu0 0.0
        %v3407 = vand.u32 %v3156, 4294901760
        %3408 = vmatmul.mubr.f32.gmra.mrb[0].mxu0 %v3407
        %v3409 = vpop.f32.mrb[0].mxu0
        %v3410 = vadd.f32 %v3276, %v3409
        %v3411 = vpop.f32.mrb[0].mxu0
        %3412 = vmatprep.mubr.f32.mxu0 0.0
        %v3413 = vand.u32 %v3159, 4294901760
        %3414 = vmatmul.mubr.f32.gmra.mrb[0].mxu0 %v3413
        %v3415 = vpop.f32.mrb[0].mxu0
        %v3416 = vadd.f32 %v3286, %v3415
        %v3417 = vpop.f32.mrb[0].mxu0
        %3418 = vmatprep.mubr.f32.mxu0 0.0
        %v3419 = vand.u32 %v3162, 4294901760
        %3420 = vmatmul.mubr.f32.gmra.mrb[0].mxu0 %v3419
        %v3421 = vpop.f32.mrb[0].mxu0
        %v3422 = vadd.f32 %v3296, %v3421
        %v3423 = vpop.f32.mrb[0].mxu0
        %3424 = vmatprep.mubr.f32.mxu0 0.0
        %v3425 = vand.u32 %v3165, 4294901760
        %3426 = vmatmul.mubr.f32.gmra.mrb[0].mxu0 %v3425
        %v3427 = vpop.f32.mrb[0].mxu0
        %v3428 = vadd.f32 %v3306, %v3427
        %v3429 = vpop.f32.mrb[0].mxu0
        %3430 = vmatprep.mubr.f32.mxu0 0.0
        %v3431 = vand.u32 %v3168, 4294901760
        %3432 = vmatmul.mubr.f32.gmra.mrb[0].mxu0 %v3431
        %v3433 = vpop.f32.mrb[0].mxu0
        %v3434 = vadd.f32 %v3316, %v3433
        %v3435 = vpop.f32.mrb[0].mxu0
        %3436 = vdwg.mxu0
        %3437 = vmatprep.subr.mxu0 0.0
        %v3438 = vand.u32 %v3171, 4294901760
        %v3439 = vsub.f32 %v3171, %v3438
        %3440 = vmatpush1.msra.mxu0 %v3439
        %3441 = vmatprep.subr.mxu0 0.0
        %3442 = vmatpush1.msra.mxu0 0.0
        %3443 = vmatprep.subr.mxu0 0.0
        %3444 = vmatpush1.msra.mxu0 0.0
        %3445 = vmatprep.subr.mxu0 0.0
        %3446 = vmatpush1.msra.mxu0 0.0
        %3447 = vmatprep.subr.mxu0 0.0
        %3448 = vmatpush1.msra.mxu0 0.0
        %3449 = vmatprep.subr.mxu0 0.0
        %3450 = vmatpush1.msra.mxu0 0.0
        %3451 = vmatprep.subr.mxu0 0.0
        %3452 = vmatpush1.msra.mxu0 0.0
        %3453 = vmatprep.subr.mxu0 0.0
        %3454 = vmatpush1.msra.mxu0 0.0
        %3455 = vmatprep.subr.mxu0 0.0
        %3456 = vmatpush1.msra.mxu0 0.0
        %3457 = vmatprep.subr.mxu0 0.0
        %3458 = vmatpush1.msra.mxu0 0.0
        %3459 = vmatprep.subr.mxu0 0.0
        %3460 = vmatpush1.msra.mxu0 0.0
        %3461 = vmatprep.subr.mxu0 0.0
        %3462 = vmatpush1.msra.mxu0 0.0
        %3463 = vmatprep.subr.mxu0 0.0
        %3464 = vmatpush1.msra.mxu0 0.0
        %3465 = vmatprep.subr.mxu0 0.0
        %3466 = vmatpush1.msra.mxu0 0.0
        %3467 = vmatprep.subr.mxu0 0.0
        %3468 = vmatpush1.msra.mxu0 0.0
        %3469 = vmatprep.subr.mxu0 0.0
        %3470 = vmatpush1.msra.mxu0 0.0
        %3471 = vmatprep.subr.mxu0 0.0
        %3472 = vmatpush1.msra.mxu0 0.0
        %3473 = vmatprep.subr.mxu0 0.0
        %3474 = vmatpush1.msra.mxu0 0.0
        %3475 = vmatprep.subr.mxu0 0.0
        %3476 = vmatpush1.msra.mxu0 0.0
        %3477 = vmatprep.subr.mxu0 0.0
        %3478 = vmatpush1.msra.mxu0 0.0
        %3479 = vmatprep.subr.mxu0 0.0
        %3480 = vmatpush1.msra.mxu0 0.0
        %3481 = vmatprep.subr.mxu0 0.0
        %3482 = vmatpush1.msra.mxu0 0.0
        %3483 = vmatprep.subr.mxu0 0.0
        %3484 = vmatpush1.msra.mxu0 0.0
        %3485 = vmatprep.subr.mxu0 0.0
        %3486 = vmatpush1.msra.mxu0 0.0
        %3487 = vmatprep.subr.mxu0 0.0
        %3488 = vmatpush1.msra.mxu0 0.0
        %3489 = vmatprep.subr.mxu0 0.0
        %3490 = vmatpush1.msra.mxu0 0.0
        %3491 = vmatprep.subr.mxu0 0.0
        %3492 = vmatpush1.msra.mxu0 0.0
        %3493 = vmatprep.subr.mxu0 0.0
        %3494 = vmatpush1.msra.mxu0 0.0
        %3495 = vmatprep.subr.mxu0 0.0
        %3496 = vmatpush1.msra.mxu0 0.0
        %3497 = vmatprep.subr.mxu0 0.0
        %3498 = vmatpush1.msra.mxu0 0.0
        %3499 = vmatprep.subr.mxu0 0.0
        %3500 = vmatpush1.msra.mxu0 0.0
        %3501 = vmatprep.subr.mxu0 0.0
        %3502 = vmatpush1.msra.mxu0 0.0
        %3503 = vmatprep.mubr.f32.mxu0 0.0
        %v3504 = vand.u32 %v3147, 4294901760
        %v3505 = vsub.f32 %v3147, %v3504
        %3506 = vmatmul.mubr.f32.gmra.mrb[0].mxu0 %v3505
        %v3507 = vpop.f32.mrb[0].mxu0
        %v3508 = vadd.f32 %v3392, %v3507
        %v3509 = vpop.f32.mrb[0].mxu0
        %3510 = vmatprep.mubr.f32.mxu0 0.0
        %v3511 = vand.u32 %v3150, 4294901760
        %v3512 = vsub.f32 %v3150, %v3511
        %3513 = vmatmul.mubr.f32.gmra.mrb[0].mxu0 %v3512
        %v3514 = vpop.f32.mrb[0].mxu0
        %v3515 = vadd.f32 %v3398, %v3514
        %v3516 = vpop.f32.mrb[0].mxu0
        %3517 = vmatprep.mubr.f32.mxu0 0.0
        %v3518 = vand.u32 %v3153, 4294901760
        %v3519 = vsub.f32 %v3153, %v3518
        %3520 = vmatmul.mubr.f32.gmra.mrb[0].mxu0 %v3519
        %v3521 = vpop.f32.mrb[0].mxu0
        %v3522 = vadd.f32 %v3404, %v3521
        %v3523 = vpop.f32.mrb[0].mxu0
        %3524 = vmatprep.mubr.f32.mxu0 0.0
        %v3525 = vand.u32 %v3156, 4294901760
        %v3526 = vsub.f32 %v3156, %v3525
        %3527 = vmatmul.mubr.f32.gmra.mrb[0].mxu0 %v3526
        %v3528 = vpop.f32.mrb[0].mxu0
        %v3529 = vadd.f32 %v3410, %v3528
        %v3530 = vpop.f32.mrb[0].mxu0
        %3531 = vmatprep.mubr.f32.mxu0 0.0
        %v3532 = vand.u32 %v3159, 4294901760
        %v3533 = vsub.f32 %v3159, %v3532
        %3534 = vmatmul.mubr.f32.gmra.mrb[0].mxu0 %v3533
        %v3535 = vpop.f32.mrb[0].mxu0
        %v3536 = vadd.f32 %v3416, %v3535
        %v3537 = vpop.f32.mrb[0].mxu0
        %3538 = vmatprep.mubr.f32.mxu0 0.0
        %v3539 = vand.u32 %v3162, 4294901760
        %v3540 = vsub.f32 %v3162, %v3539
        %3541 = vmatmul.mubr.f32.gmra.mrb[0].mxu0 %v3540
        %v3542 = vpop.f32.mrb[0].mxu0
        %v3543 = vadd.f32 %v3422, %v3542
        %v3544 = vpop.f32.mrb[0].mxu0
        %3545 = vmatprep.mubr.f32.mxu0 0.0
        %v3546 = vand.u32 %v3165, 4294901760
        %v3547 = vsub.f32 %v3165, %v3546
        %3548 = vmatmul.mubr.f32.gmra.mrb[0].mxu0 %v3547
        %v3549 = vpop.f32.mrb[0].mxu0
        %v3550 = vadd.f32 %v3428, %v3549
        %v3551 = vpop.f32.mrb[0].mxu0
        %3552 = vmatprep.mubr.f32.mxu0 0.0
        %v3553 = vand.u32 %v3168, 4294901760
        %v3554 = vsub.f32 %v3168, %v3553
        %3555 = vmatmul.mubr.f32.gmra.mrb[0].mxu0 %v3554
        %v3556 = vpop.f32.mrb[0].mxu0
        %v3557 = vadd.f32 %v3434, %v3556
        %v3558 = vpop.f32.mrb[0].mxu0
        %3559 = vdwg.mxu0
        %3560 = vmatprep.subr.mxu0 0.0
        %v3561 = vand.u32 %v3171, 4294901760
        %3562 = vmatpush1.msra.mxu0 %v3561
        %3563 = vmatprep.subr.mxu0 0.0
        %3564 = vmatpush1.msra.mxu0 0.0
        %3565 = vmatprep.subr.mxu0 0.0
        %3566 = vmatpush1.msra.mxu0 0.0
        %3567 = vmatprep.subr.mxu0 0.0
        %3568 = vmatpush1.msra.mxu0 0.0
        %3569 = vmatprep.subr.mxu0 0.0
        %3570 = vmatpush1.msra.mxu0 0.0
        %3571 = vmatprep.subr.mxu0 0.0
        %3572 = vmatpush1.msra.mxu0 0.0
        %3573 = vmatprep.subr.mxu0 0.0
        %3574 = vmatpush1.msra.mxu0 0.0
        %3575 = vmatprep.subr.mxu0 0.0
        %3576 = vmatpush1.msra.mxu0 0.0
        %3577 = vmatprep.subr.mxu0 0.0
        %3578 = vmatpush1.msra.mxu0 0.0
        %3579 = vmatprep.subr.mxu0 0.0
        %3580 = vmatpush1.msra.mxu0 0.0
        %3581 = vmatprep.subr.mxu0 0.0
        %3582 = vmatpush1.msra.mxu0 0.0
        %3583 = vmatprep.subr.mxu0 0.0
        %3584 = vmatpush1.msra.mxu0 0.0
        %3585 = vmatprep.subr.mxu0 0.0
        %3586 = vmatpush1.msra.mxu0 0.0
        %3587 = vmatprep.subr.mxu0 0.0
        %3588 = vmatpush1.msra.mxu0 0.0
        %3589 = vmatprep.subr.mxu0 0.0
        %3590 = vmatpush1.msra.mxu0 0.0
        %3591 = vmatprep.subr.mxu0 0.0
        %3592 = vmatpush1.msra.mxu0 0.0
        %3593 = vmatprep.subr.mxu0 0.0
        %3594 = vmatpush1.msra.mxu0 0.0
        %3595 = vmatprep.subr.mxu0 0.0
        %3596 = vmatpush1.msra.mxu0 0.0
        %3597 = vmatprep.subr.mxu0 0.0
        %3598 = vmatpush1.msra.mxu0 0.0
        %3599 = vmatprep.subr.mxu0 0.0
        %3600 = vmatpush1.msra.mxu0 0.0
        %3601 = vmatprep.subr.mxu0 0.0
        %3602 = vmatpush1.msra.mxu0 0.0
        %3603 = vmatprep.subr.mxu0 0.0
        %3604 = vmatpush1.msra.mxu0 0.0
        %3605 = vmatprep.subr.mxu0 0.0
        %3606 = vmatpush1.msra.mxu0 0.0
        %3607 = vmatprep.subr.mxu0 0.0
        %3608 = vmatpush1.msra.mxu0 0.0
        %3609 = vmatprep.subr.mxu0 0.0
        %3610 = vmatpush1.msra.mxu0 0.0
        %3611 = vmatprep.subr.mxu0 0.0
        %3612 = vmatpush1.msra.mxu0 0.0
        %3613 = vmatprep.subr.mxu0 0.0
        %3614 = vmatpush1.msra.mxu0 0.0
        %3615 = vmatprep.subr.mxu0 0.0
        %3616 = vmatpush1.msra.mxu0 0.0
        %3617 = vmatprep.subr.mxu0 0.0
        %3618 = vmatpush1.msra.mxu0 0.0
        %3619 = vmatprep.subr.mxu0 0.0
        %3620 = vmatpush1.msra.mxu0 0.0
        %3621 = vmatprep.subr.mxu0 0.0
        %3622 = vmatpush1.msra.mxu0 0.0
        %3623 = vmatprep.subr.mxu0 0.0
        %3624 = vmatpush1.msra.mxu0 0.0
        %3625 = vmatprep.mubr.f32.mxu0 0.0
        %v3626 = vand.u32 %v3147, 4294901760
        %v3627 = vsub.f32 %v3147, %v3626
        %v3628 = vand.u32 %v3627, 4294901760
        %3629 = vmatmul.mubr.f32.gmra.mrb[0].mxu0 %v3628
        %v3630 = vpop.f32.mrb[0].mxu0
        %v3631 = vadd.f32 %v3508, %v3630
        %v3632 = vpop.f32.mrb[0].mxu0
        %3633 = vmatprep.mubr.f32.mxu0 0.0
        %v3634 = vand.u32 %v3150, 4294901760
        %v3635 = vsub.f32 %v3150, %v3634
        %v3636 = vand.u32 %v3635, 4294901760
        %3637 = vmatmul.mubr.f32.gmra.mrb[0].mxu0 %v3636
        %v3638 = vpop.f32.mrb[0].mxu0
        %v3639 = vadd.f32 %v3515, %v3638
        %v3640 = vpop.f32.mrb[0].mxu0
        %3641 = vmatprep.mubr.f32.mxu0 0.0
        %v3642 = vand.u32 %v3153, 4294901760
        %v3643 = vsub.f32 %v3153, %v3642
        %v3644 = vand.u32 %v3643, 4294901760
        %3645 = vmatmul.mubr.f32.gmra.mrb[0].mxu0 %v3644
        %v3646 = vpop.f32.mrb[0].mxu0
        %v3647 = vadd.f32 %v3522, %v3646
        %v3648 = vpop.f32.mrb[0].mxu0
        %3649 = vmatprep.mubr.f32.mxu0 0.0
        %v3650 = vand.u32 %v3156, 4294901760
        %v3651 = vsub.f32 %v3156, %v3650
        %v3652 = vand.u32 %v3651, 4294901760
        %3653 = vmatmul.mubr.f32.gmra.mrb[0].mxu0 %v3652
        %v3654 = vpop.f32.mrb[0].mxu0
        %v3655 = vadd.f32 %v3529, %v3654
        %v3656 = vpop.f32.mrb[0].mxu0
        %3657 = vmatprep.mubr.f32.mxu0 0.0
        %v3658 = vand.u32 %v3159, 4294901760
        %v3659 = vsub.f32 %v3159, %v3658
        %v3660 = vand.u32 %v3659, 4294901760
        %3661 = vmatmul.mubr.f32.gmra.mrb[0].mxu0 %v3660
        %v3662 = vpop.f32.mrb[0].mxu0
        %v3663 = vadd.f32 %v3536, %v3662
        %v3664 = vpop.f32.mrb[0].mxu0
        %3665 = vmatprep.mubr.f32.mxu0 0.0
        %v3666 = vand.u32 %v3162, 4294901760
        %v3667 = vsub.f32 %v3162, %v3666
        %v3668 = vand.u32 %v3667, 4294901760
        %3669 = vmatmul.mubr.f32.gmra.mrb[0].mxu0 %v3668
        %v3670 = vpop.f32.mrb[0].mxu0
        %v3671 = vadd.f32 %v3543, %v3670
        %v3672 = vpop.f32.mrb[0].mxu0
        %3673 = vmatprep.mubr.f32.mxu0 0.0
        %v3674 = vand.u32 %v3165, 4294901760
        %v3675 = vsub.f32 %v3165, %v3674
        %v3676 = vand.u32 %v3675, 4294901760
        %3677 = vmatmul.mubr.f32.gmra.mrb[0].mxu0 %v3676
        %v3678 = vpop.f32.mrb[0].mxu0
        %v3679 = vadd.f32 %v3550, %v3678
        %v3680 = vpop.f32.mrb[0].mxu0
        %3681 = vmatprep.mubr.f32.mxu0 0.0
        %v3682 = vand.u32 %v3168, 4294901760
        %v3683 = vsub.f32 %v3168, %v3682
        %v3684 = vand.u32 %v3683, 4294901760
        %3685 = vmatmul.mubr.f32.gmra.mrb[0].mxu0 %v3684
        %v3686 = vpop.f32.mrb[0].mxu0
        %v3687 = vadd.f32 %v3557, %v3686
        %v3688 = vpop.f32.mrb[0].mxu0
        %3689 = vdwg.mxu0
        %3690 = vmatprep.subr.mxu0 0.0
        %v3691 = vand.u32 %v3171, 4294901760
        %v3692 = vsub.f32 %v3171, %v3691
        %v3693 = vand.u32 %v3692, 4294901760
        %3694 = vmatpush1.msra.mxu0 %v3693
        %3695 = vmatprep.subr.mxu0 0.0
        %3696 = vmatpush1.msra.mxu0 0.0
        %3697 = vmatprep.subr.mxu0 0.0
        %3698 = vmatpush1.msra.mxu0 0.0
        %3699 = vmatprep.subr.mxu0 0.0
        %3700 = vmatpush1.msra.mxu0 0.0
        %3701 = vmatprep.subr.mxu0 0.0
        %3702 = vmatpush1.msra.mxu0 0.0
        %3703 = vmatprep.subr.mxu0 0.0
        %3704 = vmatpush1.msra.mxu0 0.0
        %3705 = vmatprep.subr.mxu0 0.0
        %3706 = vmatpush1.msra.mxu0 0.0
        %3707 = vmatprep.subr.mxu0 0.0
        %3708 = vmatpush1.msra.mxu0 0.0
        %3709 = vmatprep.subr.mxu0 0.0
        %3710 = vmatpush1.msra.mxu0 0.0
        %3711 = vmatprep.subr.mxu0 0.0
        %3712 = vmatpush1.msra.mxu0 0.0
        %3713 = vmatprep.subr.mxu0 0.0
        %3714 = vmatpush1.msra.mxu0 0.0
        %3715 = vmatprep.subr.mxu0 0.0
        %3716 = vmatpush1.msra.mxu0 0.0
        %3717 = vmatprep.subr.mxu0 0.0
        %3718 = vmatpush1.msra.mxu0 0.0
        %3719 = vmatprep.subr.mxu0 0.0
        %3720 = vmatpush1.msra.mxu0 0.0
        %3721 = vmatprep.subr.mxu0 0.0
        %3722 = vmatpush1.msra.mxu0 0.0
        %3723 = vmatprep.subr.mxu0 0.0
        %3724 = vmatpush1.msra.mxu0 0.0
        %3725 = vmatprep.subr.mxu0 0.0
        %3726 = vmatpush1.msra.mxu0 0.0
        %3727 = vmatprep.subr.mxu0 0.0
        %3728 = vmatpush1.msra.mxu0 0.0
        %3729 = vmatprep.subr.mxu0 0.0
        %3730 = vmatpush1.msra.mxu0 0.0
        %3731 = vmatprep.subr.mxu0 0.0
        %3732 = vmatpush1.msra.mxu0 0.0
        %3733 = vmatprep.subr.mxu0 0.0
        %3734 = vmatpush1.msra.mxu0 0.0
        %3735 = vmatprep.subr.mxu0 0.0
        %3736 = vmatpush1.msra.mxu0 0.0
        %3737 = vmatprep.subr.mxu0 0.0
        %3738 = vmatpush1.msra.mxu0 0.0
        %3739 = vmatprep.subr.mxu0 0.0
        %3740 = vmatpush1.msra.mxu0 0.0
        %3741 = vmatprep.subr.mxu0 0.0
        %3742 = vmatpush1.msra.mxu0 0.0
        %3743 = vmatprep.subr.mxu0 0.0
        %3744 = vmatpush1.msra.mxu0 0.0
        %3745 = vmatprep.subr.mxu0 0.0
        %3746 = vmatpush1.msra.mxu0 0.0
        %3747 = vmatprep.subr.mxu0 0.0
        %3748 = vmatpush1.msra.mxu0 0.0
        %3749 = vmatprep.subr.mxu0 0.0
        %3750 = vmatpush1.msra.mxu0 0.0
        %3751 = vmatprep.subr.mxu0 0.0
        %3752 = vmatpush1.msra.mxu0 0.0
        %3753 = vmatprep.subr.mxu0 0.0
        %3754 = vmatpush1.msra.mxu0 0.0
        %3755 = vmatprep.subr.mxu0 0.0
        %3756 = vmatpush1.msra.mxu0 0.0
        %3757 = vmatprep.mubr.f32.mxu0 0.0
        %v3758 = vand.u32 %v3147, 4294901760
        %3759 = vmatmul.mubr.f32.gmra.mrb[0].mxu0 %v3758
        %v3760 = vpop.f32.mrb[0].mxu0
        %v3761 = vadd.f32 %v3631, %v3760
        %v3762 = vpop.f32.mrb[0].mxu0
        %3763 = vmatprep.mubr.f32.mxu0 0.0
        %v3764 = vand.u32 %v3150, 4294901760
        %3765 = vmatmul.mubr.f32.gmra.mrb[0].mxu0 %v3764
        %v3766 = vpop.f32.mrb[0].mxu0
        %v3767 = vadd.f32 %v3639, %v3766
        %v3768 = vpop.f32.mrb[0].mxu0
        %3769 = vmatprep.mubr.f32.mxu0 0.0
        %v3770 = vand.u32 %v3153, 4294901760
        %3771 = vmatmul.mubr.f32.gmra.mrb[0].mxu0 %v3770
        %v3772 = vpop.f32.mrb[0].mxu0
        %v3773 = vadd.f32 %v3647, %v3772
        %v3774 = vpop.f32.mrb[0].mxu0
        %3775 = vmatprep.mubr.f32.mxu0 0.0
        %v3776 = vand.u32 %v3156, 4294901760
        %3777 = vmatmul.mubr.f32.gmra.mrb[0].mxu0 %v3776
        %v3778 = vpop.f32.mrb[0].mxu0
        %v3779 = vadd.f32 %v3655, %v3778
        %v3780 = vpop.f32.mrb[0].mxu0
        %3781 = vmatprep.mubr.f32.mxu0 0.0
        %v3782 = vand.u32 %v3159, 4294901760
        %3783 = vmatmul.mubr.f32.gmra.mrb[0].mxu0 %v3782
        %v3784 = vpop.f32.mrb[0].mxu0
        %v3785 = vadd.f32 %v3663, %v3784
        %v3786 = vpop.f32.mrb[0].mxu0
        %3787 = vmatprep.mubr.f32.mxu0 0.0
        %v3788 = vand.u32 %v3162, 4294901760
        %3789 = vmatmul.mubr.f32.gmra.mrb[0].mxu0 %v3788
        %v3790 = vpop.f32.mrb[0].mxu0
        %v3791 = vadd.f32 %v3671, %v3790
        %v3792 = vpop.f32.mrb[0].mxu0
        %3793 = vmatprep.mubr.f32.mxu0 0.0
        %v3794 = vand.u32 %v3165, 4294901760
        %3795 = vmatmul.mubr.f32.gmra.mrb[0].mxu0 %v3794
        %v3796 = vpop.f32.mrb[0].mxu0
        %v3797 = vadd.f32 %v3679, %v3796
        %v3798 = vpop.f32.mrb[0].mxu0
        %3799 = vmatprep.mubr.f32.mxu0 0.0
        %v3800 = vand.u32 %v3168, 4294901760
        %3801 = vmatmul.mubr.f32.gmra.mrb[0].mxu0 %v3800
        %v3802 = vpop.f32.mrb[0].mxu0
        %v3803 = vadd.f32 %v3687, %v3802
        %v3804 = vpop.f32.mrb[0].mxu0
        %3805 = vdwg.mxu0
        %3806 = vmatprep.subr.mxu0 0.0
        %v3807 = vand.u32 %v3171, 4294901760
        %3808 = vmatpush1.msra.mxu0 %v3807
        %3809 = vmatprep.subr.mxu0 0.0
        %3810 = vmatpush1.msra.mxu0 0.0
        %3811 = vmatprep.subr.mxu0 0.0
        %3812 = vmatpush1.msra.mxu0 0.0
        %3813 = vmatprep.subr.mxu0 0.0
        %3814 = vmatpush1.msra.mxu0 0.0
        %3815 = vmatprep.subr.mxu0 0.0
        %3816 = vmatpush1.msra.mxu0 0.0
        %3817 = vmatprep.subr.mxu0 0.0
        %3818 = vmatpush1.msra.mxu0 0.0
        %3819 = vmatprep.subr.mxu0 0.0
        %3820 = vmatpush1.msra.mxu0 0.0
        %3821 = vmatprep.subr.mxu0 0.0
        %3822 = vmatpush1.msra.mxu0 0.0
        %3823 = vmatprep.subr.mxu0 0.0
        %3824 = vmatpush1.msra.mxu0 0.0
        %3825 = vmatprep.subr.mxu0 0.0
        %3826 = vmatpush1.msra.mxu0 0.0
        %3827 = vmatprep.subr.mxu0 0.0
        %3828 = vmatpush1.msra.mxu0 0.0
        %3829 = vmatprep.subr.mxu0 0.0
        %3830 = vmatpush1.msra.mxu0 0.0
        %3831 = vmatprep.subr.mxu0 0.0
        %3832 = vmatpush1.msra.mxu0 0.0
        %3833 = vmatprep.subr.mxu0 0.0
        %3834 = vmatpush1.msra.mxu0 0.0
        %3835 = vmatprep.subr.mxu0 0.0
        %3836 = vmatpush1.msra.mxu0 0.0
        %3837 = vmatprep.subr.mxu0 0.0
        %3838 = vmatpush1.msra.mxu0 0.0
        %3839 = vmatprep.subr.mxu0 0.0
        %3840 = vmatpush1.msra.mxu0 0.0
        %3841 = vmatprep.subr.mxu0 0.0
        %3842 = vmatpush1.msra.mxu0 0.0
        %3843 = vmatprep.subr.mxu0 0.0
        %3844 = vmatpush1.msra.mxu0 0.0
        %3845 = vmatprep.subr.mxu0 0.0
        %3846 = vmatpush1.msra.mxu0 0.0
        %3847 = vmatprep.subr.mxu0 0.0
        %3848 = vmatpush1.msra.mxu0 0.0
        %3849 = vmatprep.subr.mxu0 0.0
        %3850 = vmatpush1.msra.mxu0 0.0
        %3851 = vmatprep.subr.mxu0 0.0
        %3852 = vmatpush1.msra.mxu0 0.0
        %3853 = vmatprep.subr.mxu0 0.0
        %3854 = vmatpush1.msra.mxu0 0.0
        %3855 = vmatprep.subr.mxu0 0.0
        %3856 = vmatpush1.msra.mxu0 0.0
        %3857 = vmatprep.subr.mxu0 0.0
        %3858 = vmatpush1.msra.mxu0 0.0
        %3859 = vmatprep.subr.mxu0 0.0
        %3860 = vmatpush1.msra.mxu0 0.0
        %3861 = vmatprep.subr.mxu0 0.0
        %3862 = vmatpush1.msra.mxu0 0.0
        %3863 = vmatprep.subr.mxu0 0.0
        %3864 = vmatpush1.msra.mxu0 0.0
        %3865 = vmatprep.subr.mxu0 0.0
        %3866 = vmatpush1.msra.mxu0 0.0
        %3867 = vmatprep.subr.mxu0 0.0
        %3868 = vmatpush1.msra.mxu0 0.0
        %3869 = vmatprep.subr.mxu0 0.0
        %3870 = vmatpush1.msra.mxu0 0.0
        %3871 = vmatprep.mubr.f32.mxu0 0.0
        %v3872 = vand.u32 %v3147, 4294901760
        %3873 = vmatmul.mubr.f32.gmra.mrb[0].mxu0 %v3872
        %v3874 = vpop.f32.mrb[0].mxu0
        %v3875 = vadd.f32 %v3761, %v3874
        %v3876 = vpop.f32.mrb[0].mxu0
        %3877 = vmatprep.mubr.f32.mxu0 0.0
        %v3878 = vand.u32 %v3150, 4294901760
        %3879 = vmatmul.mubr.f32.gmra.mrb[0].mxu0 %v3878
        %v3880 = vpop.f32.mrb[0].mxu0
        %v3881 = vadd.f32 %v3767, %v3880
        %v3882 = vpop.f32.mrb[0].mxu0
        %3883 = vmatprep.mubr.f32.mxu0 0.0
        %v3884 = vand.u32 %v3153, 4294901760
        %3885 = vmatmul.mubr.f32.gmra.mrb[0].mxu0 %v3884
        %v3886 = vpop.f32.mrb[0].mxu0
        %v3887 = vadd.f32 %v3773, %v3886
        %v3888 = vpop.f32.mrb[0].mxu0
        %3889 = vmatprep.mubr.f32.mxu0 0.0
        %v3890 = vand.u32 %v3156, 4294901760
        %3891 = vmatmul.mubr.f32.gmra.mrb[0].mxu0 %v3890
        %v3892 = vpop.f32.mrb[0].mxu0
        %v3893 = vadd.f32 %v3779, %v3892
        %v3894 = vpop.f32.mrb[0].mxu0
        %3895 = vmatprep.mubr.f32.mxu0 0.0
        %v3896 = vand.u32 %v3159, 4294901760
        %3897 = vmatmul.mubr.f32.gmra.mrb[0].mxu0 %v3896
        %v3898 = vpop.f32.mrb[0].mxu0
        %v3899 = vadd.f32 %v3785, %v3898
        %v3900 = vpop.f32.mrb[0].mxu0
        %3901 = vmatprep.mubr.f32.mxu0 0.0
        %v3902 = vand.u32 %v3162, 4294901760
        %3903 = vmatmul.mubr.f32.gmra.mrb[0].mxu0 %v3902
        %v3904 = vpop.f32.mrb[0].mxu0
        %v3905 = vadd.f32 %v3791, %v3904
        %v3906 = vpop.f32.mrb[0].mxu0
        %3907 = vmatprep.mubr.f32.mxu0 0.0
        %v3908 = vand.u32 %v3165, 4294901760
        %3909 = vmatmul.mubr.f32.gmra.mrb[0].mxu0 %v3908
        %v3910 = vpop.f32.mrb[0].mxu0
        %v3911 = vadd.f32 %v3797, %v3910
        %v3912 = vpop.f32.mrb[0].mxu0
        %3913 = vmatprep.mubr.f32.mxu0 0.0
        %v3914 = vand.u32 %v3168, 4294901760
        %3915 = vmatmul.mubr.f32.gmra.mrb[0].mxu0 %v3914
        %v3916 = vpop.f32.mrb[0].mxu0
        %v3917 = vadd.f32 %v3803, %v3916
        %v3918 = vpop.f32.mrb[0].mxu0
        %3919 = vdwg.mxu0
        %v3920 = vadd.f32 %v3119, %v3875
        %v3921 = vadd.f32 %v3120, %v3881
        %v3922 = vadd.f32 %v3121, %v3887
        %v3923 = vadd.f32 %v3122, %v3893
        %v3924 = vadd.f32 %v3123, %v3899
        %v3925 = vadd.f32 %v3124, %v3905
        %v3926 = vadd.f32 %v3125, %v3911
        %v3927 = vadd.f32 %v3126, %v3917
        %s3928 = scalar_lea.vmem %s661, 384 [#allocation2]
        %v3929 = vld [vmem:[%s3928] sm:$0xff]
        %v3930 = vld [vmem:[%s3928 + $0x10] sm:$0xff]
        %v3931 = vld [vmem:[%s3928 + $0x20] sm:$0xff]
        %v3932 = vld [vmem:[%s3928 + $0x30] sm:$0xff]
        %v3933 = vld [vmem:[%s3928 + $0x40] sm:$0xff]
        %v3934 = vld [vmem:[%s3928 + $0x50] sm:$0xff]
        %v3935 = vld [vmem:[%s3928 + $0x60] sm:$0xff]
        %v3936 = vld [vmem:[%s3928 + $0x70] sm:$0xff]
        %s3937 = scalar_lea.vmem %s723, 16
        %v3938 = vld [vmem:[%s3937] sm:$0xf]
        %v3940 = vsel %vm768, %v3929, 0
        %v3943 = vsel %vm768, %v3930, 0
        %v3946 = vsel %vm768, %v3931, 0
        %v3949 = vsel %vm768, %v3932, 0
        %v3952 = vsel %vm768, %v3933, 0
        %v3955 = vsel %vm768, %v3934, 0
        %v3958 = vsel %vm768, %v3935, 0
        %v3961 = vsel %vm768, %v3936, 0
        %v3964 = vsel %vm793, %v3938, 0
        %3966 = vmatprep.subr.mxu0 0.0
        %v3967 = vand.u32 %v3964, 4294901760
        %3968 = vmatpush1.msra.mxu0 %v3967
        %3969 = vmatprep.subr.mxu0 0.0
        %3970 = vmatpush1.msra.mxu0 0.0
        %3971 = vmatprep.subr.mxu0 0.0
        %3972 = vmatpush1.msra.mxu0 0.0
        %3973 = vmatprep.subr.mxu0 0.0
        %3974 = vmatpush1.msra.mxu0 0.0
        %3975 = vmatprep.subr.mxu0 0.0
        %3976 = vmatpush1.msra.mxu0 0.0
        %3977 = vmatprep.subr.mxu0 0.0
        %3978 = vmatpush1.msra.mxu0 0.0
        %3979 = vmatprep.subr.mxu0 0.0
        %3980 = vmatpush1.msra.mxu0 0.0
        %3981 = vmatprep.subr.mxu0 0.0
        %3982 = vmatpush1.msra.mxu0 0.0
        %3983 = vmatprep.subr.mxu0 0.0
        %3984 = vmatpush1.msra.mxu0 0.0
        %3985 = vmatprep.subr.mxu0 0.0
        %3986 = vmatpush1.msra.mxu0 0.0
        %3987 = vmatprep.subr.mxu0 0.0
        %3988 = vmatpush1.msra.mxu0 0.0
        %3989 = vmatprep.subr.mxu0 0.0
        %3990 = vmatpush1.msra.mxu0 0.0
        %3991 = vmatprep.subr.mxu0 0.0
        %3992 = vmatpush1.msra.mxu0 0.0
        %3993 = vmatprep.subr.mxu0 0.0
        %3994 = vmatpush1.msra.mxu0 0.0
        %3995 = vmatprep.subr.mxu0 0.0
        %3996 = vmatpush1.msra.mxu0 0.0
        %3997 = vmatprep.subr.mxu0 0.0
        %3998 = vmatpush1.msra.mxu0 0.0
        %3999 = vmatprep.subr.mxu0 0.0
        %4000 = vmatpush1.msra.mxu0 0.0
        %4001 = vmatprep.subr.mxu0 0.0
        %4002 = vmatpush1.msra.mxu0 0.0
        %4003 = vmatprep.subr.mxu0 0.0
        %4004 = vmatpush1.msra.mxu0 0.0
        %4005 = vmatprep.subr.mxu0 0.0
        %4006 = vmatpush1.msra.mxu0 0.0
        %4007 = vmatprep.subr.mxu0 0.0
        %4008 = vmatpush1.msra.mxu0 0.0
        %4009 = vmatprep.subr.mxu0 0.0
        %4010 = vmatpush1.msra.mxu0 0.0
        %4011 = vmatprep.subr.mxu0 0.0
        %4012 = vmatpush1.msra.mxu0 0.0
        %4013 = vmatprep.subr.mxu0 0.0
        %4014 = vmatpush1.msra.mxu0 0.0
        %4015 = vmatprep.subr.mxu0 0.0
        %4016 = vmatpush1.msra.mxu0 0.0
        %4017 = vmatprep.subr.mxu0 0.0
        %4018 = vmatpush1.msra.mxu0 0.0
        %4019 = vmatprep.subr.mxu0 0.0
        %4020 = vmatpush1.msra.mxu0 0.0
        %4021 = vmatprep.subr.mxu0 0.0
        %4022 = vmatpush1.msra.mxu0 0.0
        %4023 = vmatprep.subr.mxu0 0.0
        %4024 = vmatpush1.msra.mxu0 0.0
        %4025 = vmatprep.subr.mxu0 0.0
        %4026 = vmatpush1.msra.mxu0 0.0
        %4027 = vmatprep.subr.mxu0 0.0
        %4028 = vmatpush1.msra.mxu0 0.0
        %4029 = vmatprep.subr.mxu0 0.0
        %4030 = vmatpush1.msra.mxu0 0.0
        %4031 = vmatprep.mubr.f32.mxu0 0.0
        %v4032 = vand.u32 %v3940, 4294901760
        %v4033 = vsub.f32 %v3940, %v4032
        %v4034 = vand.u32 %v4033, 4294901760
        %v4035 = vsub.f32 %v4033, %v4034
        %v4036 = vand.u32 %v4035, 4294901760
        %4037 = vmatmul.mubr.f32.gmra.mrb[0].mxu0 %v4036
        %v4038 = vpop.f32.mrb[0].mxu0
        %v4039 = vadd.f32 0.0, %v4038
        %v4040 = vpop.f32.mrb[0].mxu0
        %4041 = vmatprep.mubr.f32.mxu0 0.0
        %v4042 = vand.u32 %v3943, 4294901760
        %v4043 = vsub.f32 %v3943, %v4042
        %v4044 = vand.u32 %v4043, 4294901760
        %v4045 = vsub.f32 %v4043, %v4044
        %v4046 = vand.u32 %v4045, 4294901760
        %4047 = vmatmul.mubr.f32.gmra.mrb[0].mxu0 %v4046
        %v4048 = vpop.f32.mrb[0].mxu0
        %v4049 = vadd.f32 0.0, %v4048
        %v4050 = vpop.f32.mrb[0].mxu0
        %4051 = vmatprep.mubr.f32.mxu0 0.0
        %v4052 = vand.u32 %v3946, 4294901760
        %v4053 = vsub.f32 %v3946, %v4052
        %v4054 = vand.u32 %v4053, 4294901760
        %v4055 = vsub.f32 %v4053, %v4054
        %v4056 = vand.u32 %v4055, 4294901760
        %4057 = vmatmul.mubr.f32.gmra.mrb[0].mxu0 %v4056
        %v4058 = vpop.f32.mrb[0].mxu0
        %v4059 = vadd.f32 0.0, %v4058
        %v4060 = vpop.f32.mrb[0].mxu0
        %4061 = vmatprep.mubr.f32.mxu0 0.0
        %v4062 = vand.u32 %v3949, 4294901760
        %v4063 = vsub.f32 %v3949, %v4062
        %v4064 = vand.u32 %v4063, 4294901760
        %v4065 = vsub.f32 %v4063, %v4064
        %v4066 = vand.u32 %v4065, 4294901760
        %4067 = vmatmul.mubr.f32.gmra.mrb[0].mxu0 %v4066
        %v4068 = vpop.f32.mrb[0].mxu0
        %v4069 = vadd.f32 0.0, %v4068
        %v4070 = vpop.f32.mrb[0].mxu0
        %4071 = vmatprep.mubr.f32.mxu0 0.0
        %v4072 = vand.u32 %v3952, 4294901760
        %v4073 = vsub.f32 %v3952, %v4072
        %v4074 = vand.u32 %v4073, 4294901760
        %v4075 = vsub.f32 %v4073, %v4074
        %v4076 = vand.u32 %v4075, 4294901760
        %4077 = vmatmul.mubr.f32.gmra.mrb[0].mxu0 %v4076
        %v4078 = vpop.f32.mrb[0].mxu0
        %v4079 = vadd.f32 0.0, %v4078
        %v4080 = vpop.f32.mrb[0].mxu0
        %4081 = vmatprep.mubr.f32.mxu0 0.0
        %v4082 = vand.u32 %v3955, 4294901760
        %v4083 = vsub.f32 %v3955, %v4082
        %v4084 = vand.u32 %v4083, 4294901760
        %v4085 = vsub.f32 %v4083, %v4084
        %v4086 = vand.u32 %v4085, 4294901760
        %4087 = vmatmul.mubr.f32.gmra.mrb[0].mxu0 %v4086
        %v4088 = vpop.f32.mrb[0].mxu0
        %v4089 = vadd.f32 0.0, %v4088
        %v4090 = vpop.f32.mrb[0].mxu0
        %4091 = vmatprep.mubr.f32.mxu0 0.0
        %v4092 = vand.u32 %v3958, 4294901760
        %v4093 = vsub.f32 %v3958, %v4092
        %v4094 = vand.u32 %v4093, 4294901760
        %v4095 = vsub.f32 %v4093, %v4094
        %v4096 = vand.u32 %v4095, 4294901760
        %4097 = vmatmul.mubr.f32.gmra.mrb[0].mxu0 %v4096
        %v4098 = vpop.f32.mrb[0].mxu0
        %v4099 = vadd.f32 0.0, %v4098
        %v4100 = vpop.f32.mrb[0].mxu0
        %4101 = vmatprep.mubr.f32.mxu0 0.0
        %v4102 = vand.u32 %v3961, 4294901760
        %v4103 = vsub.f32 %v3961, %v4102
        %v4104 = vand.u32 %v4103, 4294901760
        %v4105 = vsub.f32 %v4103, %v4104
        %v4106 = vand.u32 %v4105, 4294901760
        %4107 = vmatmul.mubr.f32.gmra.mrb[0].mxu0 %v4106
        %v4108 = vpop.f32.mrb[0].mxu0
        %v4109 = vadd.f32 0.0, %v4108
        %v4110 = vpop.f32.mrb[0].mxu0
        %4111 = vdwg.mxu0
        %4112 = vmatprep.subr.mxu0 0.0
        %v4113 = vand.u32 %v3964, 4294901760
        %v4114 = vsub.f32 %v3964, %v4113
        %v4115 = vand.u32 %v4114, 4294901760
        %v4116 = vsub.f32 %v4114, %v4115
        %v4117 = vand.u32 %v4116, 4294901760
        %4118 = vmatpush1.msra.mxu0 %v4117
        %4119 = vmatprep.subr.mxu0 0.0
        %4120 = vmatpush1.msra.mxu0 0.0
        %4121 = vmatprep.subr.mxu0 0.0
        %4122 = vmatpush1.msra.mxu0 0.0
        %4123 = vmatprep.subr.mxu0 0.0
        %4124 = vmatpush1.msra.mxu0 0.0
        %4125 = vmatprep.subr.mxu0 0.0
        %4126 = vmatpush1.msra.mxu0 0.0
        %4127 = vmatprep.subr.mxu0 0.0
        %4128 = vmatpush1.msra.mxu0 0.0
        %4129 = vmatprep.subr.mxu0 0.0
        %4130 = vmatpush1.msra.mxu0 0.0
        %4131 = vmatprep.subr.mxu0 0.0
        %4132 = vmatpush1.msra.mxu0 0.0
        %4133 = vmatprep.subr.mxu0 0.0
        %4134 = vmatpush1.msra.mxu0 0.0
        %4135 = vmatprep.subr.mxu0 0.0
        %4136 = vmatpush1.msra.mxu0 0.0
        %4137 = vmatprep.subr.mxu0 0.0
        %4138 = vmatpush1.msra.mxu0 0.0
        %4139 = vmatprep.subr.mxu0 0.0
        %4140 = vmatpush1.msra.mxu0 0.0
        %4141 = vmatprep.subr.mxu0 0.0
        %4142 = vmatpush1.msra.mxu0 0.0
        %4143 = vmatprep.subr.mxu0 0.0
        %4144 = vmatpush1.msra.mxu0 0.0
        %4145 = vmatprep.subr.mxu0 0.0
        %4146 = vmatpush1.msra.mxu0 0.0
        %4147 = vmatprep.subr.mxu0 0.0
        %4148 = vmatpush1.msra.mxu0 0.0
        %4149 = vmatprep.subr.mxu0 0.0
        %4150 = vmatpush1.msra.mxu0 0.0
        %4151 = vmatprep.subr.mxu0 0.0
        %4152 = vmatpush1.msra.mxu0 0.0
        %4153 = vmatprep.subr.mxu0 0.0
        %4154 = vmatpush1.msra.mxu0 0.0
        %4155 = vmatprep.subr.mxu0 0.0
        %4156 = vmatpush1.msra.mxu0 0.0
        %4157 = vmatprep.subr.mxu0 0.0
        %4158 = vmatpush1.msra.mxu0 0.0
        %4159 = vmatprep.subr.mxu0 0.0
        %4160 = vmatpush1.msra.mxu0 0.0
        %4161 = vmatprep.subr.mxu0 0.0
        %4162 = vmatpush1.msra.mxu0 0.0
        %4163 = vmatprep.subr.mxu0 0.0
        %4164 = vmatpush1.msra.mxu0 0.0
        %4165 = vmatprep.subr.mxu0 0.0
        %4166 = vmatpush1.msra.mxu0 0.0
        %4167 = vmatprep.subr.mxu0 0.0
        %4168 = vmatpush1.msra.mxu0 0.0
        %4169 = vmatprep.subr.mxu0 0.0
        %4170 = vmatpush1.msra.mxu0 0.0
        %4171 = vmatprep.subr.mxu0 0.0
        %4172 = vmatpush1.msra.mxu0 0.0
        %4173 = vmatprep.subr.mxu0 0.0
        %4174 = vmatpush1.msra.mxu0 0.0
        %4175 = vmatprep.subr.mxu0 0.0
        %4176 = vmatpush1.msra.mxu0 0.0
        %4177 = vmatprep.subr.mxu0 0.0
        %4178 = vmatpush1.msra.mxu0 0.0
        %4179 = vmatprep.subr.mxu0 0.0
        %4180 = vmatpush1.msra.mxu0 0.0
        %4181 = vmatprep.mubr.f32.mxu0 0.0
        %v4182 = vand.u32 %v3940, 4294901760
        %4183 = vmatmul.mubr.f32.gmra.mrb[0].mxu0 %v4182
        %v4184 = vpop.f32.mrb[0].mxu0
        %v4185 = vadd.f32 %v4039, %v4184
        %v4186 = vpop.f32.mrb[0].mxu0
        %4187 = vmatprep.mubr.f32.mxu0 0.0
        %v4188 = vand.u32 %v3943, 4294901760
        %4189 = vmatmul.mubr.f32.gmra.mrb[0].mxu0 %v4188
        %v4190 = vpop.f32.mrb[0].mxu0
        %v4191 = vadd.f32 %v4049, %v4190
        %v4192 = vpop.f32.mrb[0].mxu0
        %4193 = vmatprep.mubr.f32.mxu0 0.0
        %v4194 = vand.u32 %v3946, 4294901760
        %4195 = vmatmul.mubr.f32.gmra.mrb[0].mxu0 %v4194
        %v4196 = vpop.f32.mrb[0].mxu0
        %v4197 = vadd.f32 %v4059, %v4196
        %v4198 = vpop.f32.mrb[0].mxu0
        %4199 = vmatprep.mubr.f32.mxu0 0.0
        %v4200 = vand.u32 %v3949, 4294901760
        %4201 = vmatmul.mubr.f32.gmra.mrb[0].mxu0 %v4200
        %v4202 = vpop.f32.mrb[0].mxu0
        %v4203 = vadd.f32 %v4069, %v4202
        %v4204 = vpop.f32.mrb[0].mxu0
        %4205 = vmatprep.mubr.f32.mxu0 0.0
        %v4206 = vand.u32 %v3952, 4294901760
        %4207 = vmatmul.mubr.f32.gmra.mrb[0].mxu0 %v4206
        %v4208 = vpop.f32.mrb[0].mxu0
        %v4209 = vadd.f32 %v4079, %v4208
        %v4210 = vpop.f32.mrb[0].mxu0
        %4211 = vmatprep.mubr.f32.mxu0 0.0
        %v4212 = vand.u32 %v3955, 4294901760
        %4213 = vmatmul.mubr.f32.gmra.mrb[0].mxu0 %v4212
        %v4214 = vpop.f32.mrb[0].mxu0
        %v4215 = vadd.f32 %v4089, %v4214
        %v4216 = vpop.f32.mrb[0].mxu0
        %4217 = vmatprep.mubr.f32.mxu0 0.0
        %v4218 = vand.u32 %v3958, 4294901760
        %4219 = vmatmul.mubr.f32.gmra.mrb[0].mxu0 %v4218
        %v4220 = vpop.f32.mrb[0].mxu0
        %v4221 = vadd.f32 %v4099, %v4220
        %v4222 = vpop.f32.mrb[0].mxu0
        %4223 = vmatprep.mubr.f32.mxu0 0.0
        %v4224 = vand.u32 %v3961, 4294901760
        %4225 = vmatmul.mubr.f32.gmra.mrb[0].mxu0 %v4224
        %v4226 = vpop.f32.mrb[0].mxu0
        %v4227 = vadd.f32 %v4109, %v4226
        %v4228 = vpop.f32.mrb[0].mxu0
        %4229 = vdwg.mxu0
        %4230 = vmatprep.subr.mxu0 0.0
        %v4231 = vand.u32 %v3964, 4294901760
        %v4232 = vsub.f32 %v3964, %v4231
        %4233 = vmatpush1.msra.mxu0 %v4232
        %4234 = vmatprep.subr.mxu0 0.0
        %4235 = vmatpush1.msra.mxu0 0.0
        %4236 = vmatprep.subr.mxu0 0.0
        %4237 = vmatpush1.msra.mxu0 0.0
        %4238 = vmatprep.subr.mxu0 0.0
        %4239 = vmatpush1.msra.mxu0 0.0
        %4240 = vmatprep.subr.mxu0 0.0
        %4241 = vmatpush1.msra.mxu0 0.0
        %4242 = vmatprep.subr.mxu0 0.0
        %4243 = vmatpush1.msra.mxu0 0.0
        %4244 = vmatprep.subr.mxu0 0.0
        %4245 = vmatpush1.msra.mxu0 0.0
        %4246 = vmatprep.subr.mxu0 0.0
        %4247 = vmatpush1.msra.mxu0 0.0
        %4248 = vmatprep.subr.mxu0 0.0
        %4249 = vmatpush1.msra.mxu0 0.0
        %4250 = vmatprep.subr.mxu0 0.0
        %4251 = vmatpush1.msra.mxu0 0.0
        %4252 = vmatprep.subr.mxu0 0.0
        %4253 = vmatpush1.msra.mxu0 0.0
        %4254 = vmatprep.subr.mxu0 0.0
        %4255 = vmatpush1.msra.mxu0 0.0
        %4256 = vmatprep.subr.mxu0 0.0
        %4257 = vmatpush1.msra.mxu0 0.0
        %4258 = vmatprep.subr.mxu0 0.0
        %4259 = vmatpush1.msra.mxu0 0.0
        %4260 = vmatprep.subr.mxu0 0.0
        %4261 = vmatpush1.msra.mxu0 0.0
        %4262 = vmatprep.subr.mxu0 0.0
        %4263 = vmatpush1.msra.mxu0 0.0
        %4264 = vmatprep.subr.mxu0 0.0
        %4265 = vmatpush1.msra.mxu0 0.0
        %4266 = vmatprep.subr.mxu0 0.0
        %4267 = vmatpush1.msra.mxu0 0.0
        %4268 = vmatprep.subr.mxu0 0.0
        %4269 = vmatpush1.msra.mxu0 0.0
        %4270 = vmatprep.subr.mxu0 0.0
        %4271 = vmatpush1.msra.mxu0 0.0
        %4272 = vmatprep.subr.mxu0 0.0
        %4273 = vmatpush1.msra.mxu0 0.0
        %4274 = vmatprep.subr.mxu0 0.0
        %4275 = vmatpush1.msra.mxu0 0.0
        %4276 = vmatprep.subr.mxu0 0.0
        %4277 = vmatpush1.msra.mxu0 0.0
        %4278 = vmatprep.subr.mxu0 0.0
        %4279 = vmatpush1.msra.mxu0 0.0
        %4280 = vmatprep.subr.mxu0 0.0
        %4281 = vmatpush1.msra.mxu0 0.0
        %4282 = vmatprep.subr.mxu0 0.0
        %4283 = vmatpush1.msra.mxu0 0.0
        %4284 = vmatprep.subr.mxu0 0.0
        %4285 = vmatpush1.msra.mxu0 0.0
        %4286 = vmatprep.subr.mxu0 0.0
        %4287 = vmatpush1.msra.mxu0 0.0
        %4288 = vmatprep.subr.mxu0 0.0
        %4289 = vmatpush1.msra.mxu0 0.0
        %4290 = vmatprep.subr.mxu0 0.0
        %4291 = vmatpush1.msra.mxu0 0.0
        %4292 = vmatprep.subr.mxu0 0.0
        %4293 = vmatpush1.msra.mxu0 0.0
        %4294 = vmatprep.subr.mxu0 0.0
        %4295 = vmatpush1.msra.mxu0 0.0
        %4296 = vmatprep.mubr.f32.mxu0 0.0
        %v4297 = vand.u32 %v3940, 4294901760
        %v4298 = vsub.f32 %v3940, %v4297
        %4299 = vmatmul.mubr.f32.gmra.mrb[0].mxu0 %v4298
        %v4300 = vpop.f32.mrb[0].mxu0
        %v4301 = vadd.f32 %v4185, %v4300
        %v4302 = vpop.f32.mrb[0].mxu0
        %4303 = vmatprep.mubr.f32.mxu0 0.0
        %v4304 = vand.u32 %v3943, 4294901760
        %v4305 = vsub.f32 %v3943, %v4304
        %4306 = vmatmul.mubr.f32.gmra.mrb[0].mxu0 %v4305
        %v4307 = vpop.f32.mrb[0].mxu0
        %v4308 = vadd.f32 %v4191, %v4307
        %v4309 = vpop.f32.mrb[0].mxu0
        %4310 = vmatprep.mubr.f32.mxu0 0.0
        %v4311 = vand.u32 %v3946, 4294901760
        %v4312 = vsub.f32 %v3946, %v4311
        %4313 = vmatmul.mubr.f32.gmra.mrb[0].mxu0 %v4312
        %v4314 = vpop.f32.mrb[0].mxu0
        %v4315 = vadd.f32 %v4197, %v4314
        %v4316 = vpop.f32.mrb[0].mxu0
        %4317 = vmatprep.mubr.f32.mxu0 0.0
        %v4318 = vand.u32 %v3949, 4294901760
        %v4319 = vsub.f32 %v3949, %v4318
        %4320 = vmatmul.mubr.f32.gmra.mrb[0].mxu0 %v4319
        %v4321 = vpop.f32.mrb[0].mxu0
        %v4322 = vadd.f32 %v4203, %v4321
        %v4323 = vpop.f32.mrb[0].mxu0
        %4324 = vmatprep.mubr.f32.mxu0 0.0
        %v4325 = vand.u32 %v3952, 4294901760
        %v4326 = vsub.f32 %v3952, %v4325
        %4327 = vmatmul.mubr.f32.gmra.mrb[0].mxu0 %v4326
        %v4328 = vpop.f32.mrb[0].mxu0
        %v4329 = vadd.f32 %v4209, %v4328
        %v4330 = vpop.f32.mrb[0].mxu0
        %4331 = vmatprep.mubr.f32.mxu0 0.0
        %v4332 = vand.u32 %v3955, 4294901760
        %v4333 = vsub.f32 %v3955, %v4332
        %4334 = vmatmul.mubr.f32.gmra.mrb[0].mxu0 %v4333
        %v4335 = vpop.f32.mrb[0].mxu0
        %v4336 = vadd.f32 %v4215, %v4335
        %v4337 = vpop.f32.mrb[0].mxu0
        %4338 = vmatprep.mubr.f32.mxu0 0.0
        %v4339 = vand.u32 %v3958, 4294901760
        %v4340 = vsub.f32 %v3958, %v4339
        %4341 = vmatmul.mubr.f32.gmra.mrb[0].mxu0 %v4340
        %v4342 = vpop.f32.mrb[0].mxu0
        %v4343 = vadd.f32 %v4221, %v4342
        %v4344 = vpop.f32.mrb[0].mxu0
        %4345 = vmatprep.mubr.f32.mxu0 0.0
        %v4346 = vand.u32 %v3961, 4294901760
        %v4347 = vsub.f32 %v3961, %v4346
        %4348 = vmatmul.mubr.f32.gmra.mrb[0].mxu0 %v4347
        %v4349 = vpop.f32.mrb[0].mxu0
        %v4350 = vadd.f32 %v4227, %v4349
        %v4351 = vpop.f32.mrb[0].mxu0
        %4352 = vdwg.mxu0
        %4353 = vmatprep.subr.mxu0 0.0
        %v4354 = vand.u32 %v3964, 4294901760
        %4355 = vmatpush1.msra.mxu0 %v4354
        %4356 = vmatprep.subr.mxu0 0.0
        %4357 = vmatpush1.msra.mxu0 0.0
        %4358 = vmatprep.subr.mxu0 0.0
        %4359 = vmatpush1.msra.mxu0 0.0
        %4360 = vmatprep.subr.mxu0 0.0
        %4361 = vmatpush1.msra.mxu0 0.0
        %4362 = vmatprep.subr.mxu0 0.0
        %4363 = vmatpush1.msra.mxu0 0.0
        %4364 = vmatprep.subr.mxu0 0.0
        %4365 = vmatpush1.msra.mxu0 0.0
        %4366 = vmatprep.subr.mxu0 0.0
        %4367 = vmatpush1.msra.mxu0 0.0
        %4368 = vmatprep.subr.mxu0 0.0
        %4369 = vmatpush1.msra.mxu0 0.0
        %4370 = vmatprep.subr.mxu0 0.0
        %4371 = vmatpush1.msra.mxu0 0.0
        %4372 = vmatprep.subr.mxu0 0.0
        %4373 = vmatpush1.msra.mxu0 0.0
        %4374 = vmatprep.subr.mxu0 0.0
        %4375 = vmatpush1.msra.mxu0 0.0
        %4376 = vmatprep.subr.mxu0 0.0
        %4377 = vmatpush1.msra.mxu0 0.0
        %4378 = vmatprep.subr.mxu0 0.0
        %4379 = vmatpush1.msra.mxu0 0.0
        %4380 = vmatprep.subr.mxu0 0.0
        %4381 = vmatpush1.msra.mxu0 0.0
        %4382 = vmatprep.subr.mxu0 0.0
        %4383 = vmatpush1.msra.mxu0 0.0
        %4384 = vmatprep.subr.mxu0 0.0
        %4385 = vmatpush1.msra.mxu0 0.0
        %4386 = vmatprep.subr.mxu0 0.0
        %4387 = vmatpush1.msra.mxu0 0.0
        %4388 = vmatprep.subr.mxu0 0.0
        %4389 = vmatpush1.msra.mxu0 0.0
        %4390 = vmatprep.subr.mxu0 0.0
        %4391 = vmatpush1.msra.mxu0 0.0
        %4392 = vmatprep.subr.mxu0 0.0
        %4393 = vmatpush1.msra.mxu0 0.0
        %4394 = vmatprep.subr.mxu0 0.0
        %4395 = vmatpush1.msra.mxu0 0.0
        %4396 = vmatprep.subr.mxu0 0.0
        %4397 = vmatpush1.msra.mxu0 0.0
        %4398 = vmatprep.subr.mxu0 0.0
        %4399 = vmatpush1.msra.mxu0 0.0
        %4400 = vmatprep.subr.mxu0 0.0
        %4401 = vmatpush1.msra.mxu0 0.0
        %4402 = vmatprep.subr.mxu0 0.0
        %4403 = vmatpush1.msra.mxu0 0.0
        %4404 = vmatprep.subr.mxu0 0.0
        %4405 = vmatpush1.msra.mxu0 0.0
        %4406 = vmatprep.subr.mxu0 0.0
        %4407 = vmatpush1.msra.mxu0 0.0
        %4408 = vmatprep.subr.mxu0 0.0
        %4409 = vmatpush1.msra.mxu0 0.0
        %4410 = vmatprep.subr.mxu0 0.0
        %4411 = vmatpush1.msra.mxu0 0.0
        %4412 = vmatprep.subr.mxu0 0.0
        %4413 = vmatpush1.msra.mxu0 0.0
        %4414 = vmatprep.subr.mxu0 0.0
        %4415 = vmatpush1.msra.mxu0 0.0
        %4416 = vmatprep.subr.mxu0 0.0
        %4417 = vmatpush1.msra.mxu0 0.0
        %4418 = vmatprep.mubr.f32.mxu0 0.0
        %v4419 = vand.u32 %v3940, 4294901760
        %v4420 = vsub.f32 %v3940, %v4419
        %v4421 = vand.u32 %v4420, 4294901760
        %4422 = vmatmul.mubr.f32.gmra.mrb[0].mxu0 %v4421
        %v4423 = vpop.f32.mrb[0].mxu0
        %v4424 = vadd.f32 %v4301, %v4423
        %v4425 = vpop.f32.mrb[0].mxu0
        %4426 = vmatprep.mubr.f32.mxu0 0.0
        %v4427 = vand.u32 %v3943, 4294901760
        %v4428 = vsub.f32 %v3943, %v4427
        %v4429 = vand.u32 %v4428, 4294901760
        %4430 = vmatmul.mubr.f32.gmra.mrb[0].mxu0 %v4429
        %v4431 = vpop.f32.mrb[0].mxu0
        %v4432 = vadd.f32 %v4308, %v4431
        %v4433 = vpop.f32.mrb[0].mxu0
        %4434 = vmatprep.mubr.f32.mxu0 0.0
        %v4435 = vand.u32 %v3946, 4294901760
        %v4436 = vsub.f32 %v3946, %v4435
        %v4437 = vand.u32 %v4436, 4294901760
        %4438 = vmatmul.mubr.f32.gmra.mrb[0].mxu0 %v4437
        %v4439 = vpop.f32.mrb[0].mxu0
        %v4440 = vadd.f32 %v4315, %v4439
        %v4441 = vpop.f32.mrb[0].mxu0
        %4442 = vmatprep.mubr.f32.mxu0 0.0
        %v4443 = vand.u32 %v3949, 4294901760
        %v4444 = vsub.f32 %v3949, %v4443
        %v4445 = vand.u32 %v4444, 4294901760
        %4446 = vmatmul.mubr.f32.gmra.mrb[0].mxu0 %v4445
        %v4447 = vpop.f32.mrb[0].mxu0
        %v4448 = vadd.f32 %v4322, %v4447
        %v4449 = vpop.f32.mrb[0].mxu0
        %4450 = vmatprep.mubr.f32.mxu0 0.0
        %v4451 = vand.u32 %v3952, 4294901760
        %v4452 = vsub.f32 %v3952, %v4451
        %v4453 = vand.u32 %v4452, 4294901760
        %4454 = vmatmul.mubr.f32.gmra.mrb[0].mxu0 %v4453
        %v4455 = vpop.f32.mrb[0].mxu0
        %v4456 = vadd.f32 %v4329, %v4455
        %v4457 = vpop.f32.mrb[0].mxu0
        %4458 = vmatprep.mubr.f32.mxu0 0.0
        %v4459 = vand.u32 %v3955, 4294901760
        %v4460 = vsub.f32 %v3955, %v4459
        %v4461 = vand.u32 %v4460, 4294901760
        %4462 = vmatmul.mubr.f32.gmra.mrb[0].mxu0 %v4461
        %v4463 = vpop.f32.mrb[0].mxu0
        %v4464 = vadd.f32 %v4336, %v4463
        %v4465 = vpop.f32.mrb[0].mxu0
        %4466 = vmatprep.mubr.f32.mxu0 0.0
        %v4467 = vand.u32 %v3958, 4294901760
        %v4468 = vsub.f32 %v3958, %v4467
        %v4469 = vand.u32 %v4468, 4294901760
        %4470 = vmatmul.mubr.f32.gmra.mrb[0].mxu0 %v4469
        %v4471 = vpop.f32.mrb[0].mxu0
        %v4472 = vadd.f32 %v4343, %v4471
        %v4473 = vpop.f32.mrb[0].mxu0
        %4474 = vmatprep.mubr.f32.mxu0 0.0
        %v4475 = vand.u32 %v3961, 4294901760
        %v4476 = vsub.f32 %v3961, %v4475
        %v4477 = vand.u32 %v4476, 4294901760
        %4478 = vmatmul.mubr.f32.gmra.mrb[0].mxu0 %v4477
        %v4479 = vpop.f32.mrb[0].mxu0
        %v4480 = vadd.f32 %v4350, %v4479
        %v4481 = vpop.f32.mrb[0].mxu0
        %4482 = vdwg.mxu0
        %4483 = vmatprep.subr.mxu0 0.0
        %v4484 = vand.u32 %v3964, 4294901760
        %v4485 = vsub.f32 %v3964, %v4484
        %v4486 = vand.u32 %v4485, 4294901760
        %4487 = vmatpush1.msra.mxu0 %v4486
        %4488 = vmatprep.subr.mxu0 0.0
        %4489 = vmatpush1.msra.mxu0 0.0
        %4490 = vmatprep.subr.mxu0 0.0
        %4491 = vmatpush1.msra.mxu0 0.0
        %4492 = vmatprep.subr.mxu0 0.0
        %4493 = vmatpush1.msra.mxu0 0.0
        %4494 = vmatprep.subr.mxu0 0.0
        %4495 = vmatpush1.msra.mxu0 0.0
        %4496 = vmatprep.subr.mxu0 0.0
        %4497 = vmatpush1.msra.mxu0 0.0
        %4498 = vmatprep.subr.mxu0 0.0
        %4499 = vmatpush1.msra.mxu0 0.0
        %4500 = vmatprep.subr.mxu0 0.0
        %4501 = vmatpush1.msra.mxu0 0.0
        %4502 = vmatprep.subr.mxu0 0.0
        %4503 = vmatpush1.msra.mxu0 0.0
        %4504 = vmatprep.subr.mxu0 0.0
        %4505 = vmatpush1.msra.mxu0 0.0
        %4506 = vmatprep.subr.mxu0 0.0
        %4507 = vmatpush1.msra.mxu0 0.0
        %4508 = vmatprep.subr.mxu0 0.0
        %4509 = vmatpush1.msra.mxu0 0.0
        %4510 = vmatprep.subr.mxu0 0.0
        %4511 = vmatpush1.msra.mxu0 0.0
        %4512 = vmatprep.subr.mxu0 0.0
        %4513 = vmatpush1.msra.mxu0 0.0
        %4514 = vmatprep.subr.mxu0 0.0
        %4515 = vmatpush1.msra.mxu0 0.0
        %4516 = vmatprep.subr.mxu0 0.0
        %4517 = vmatpush1.msra.mxu0 0.0
        %4518 = vmatprep.subr.mxu0 0.0
        %4519 = vmatpush1.msra.mxu0 0.0
        %4520 = vmatprep.subr.mxu0 0.0
        %4521 = vmatpush1.msra.mxu0 0.0
        %4522 = vmatprep.subr.mxu0 0.0
        %4523 = vmatpush1.msra.mxu0 0.0
        %4524 = vmatprep.subr.mxu0 0.0
        %4525 = vmatpush1.msra.mxu0 0.0
        %4526 = vmatprep.subr.mxu0 0.0
        %4527 = vmatpush1.msra.mxu0 0.0
        %4528 = vmatprep.subr.mxu0 0.0
        %4529 = vmatpush1.msra.mxu0 0.0
        %4530 = vmatprep.subr.mxu0 0.0
        %4531 = vmatpush1.msra.mxu0 0.0
        %4532 = vmatprep.subr.mxu0 0.0
        %4533 = vmatpush1.msra.mxu0 0.0
        %4534 = vmatprep.subr.mxu0 0.0
        %4535 = vmatpush1.msra.mxu0 0.0
        %4536 = vmatprep.subr.mxu0 0.0
        %4537 = vmatpush1.msra.mxu0 0.0
        %4538 = vmatprep.subr.mxu0 0.0
        %4539 = vmatpush1.msra.mxu0 0.0
        %4540 = vmatprep.subr.mxu0 0.0
        %4541 = vmatpush1.msra.mxu0 0.0
        %4542 = vmatprep.subr.mxu0 0.0
        %4543 = vmatpush1.msra.mxu0 0.0
        %4544 = vmatprep.subr.mxu0 0.0
        %4545 = vmatpush1.msra.mxu0 0.0
        %4546 = vmatprep.subr.mxu0 0.0
        %4547 = vmatpush1.msra.mxu0 0.0
        %4548 = vmatprep.subr.mxu0 0.0
        %4549 = vmatpush1.msra.mxu0 0.0
        %4550 = vmatprep.mubr.f32.mxu0 0.0
        %v4551 = vand.u32 %v3940, 4294901760
        %4552 = vmatmul.mubr.f32.gmra.mrb[0].mxu0 %v4551
        %v4553 = vpop.f32.mrb[0].mxu0
        %v4554 = vadd.f32 %v4424, %v4553
        %v4555 = vpop.f32.mrb[0].mxu0
        %4556 = vmatprep.mubr.f32.mxu0 0.0
        %v4557 = vand.u32 %v3943, 4294901760
        %4558 = vmatmul.mubr.f32.gmra.mrb[0].mxu0 %v4557
        %v4559 = vpop.f32.mrb[0].mxu0
        %v4560 = vadd.f32 %v4432, %v4559
        %v4561 = vpop.f32.mrb[0].mxu0
        %4562 = vmatprep.mubr.f32.mxu0 0.0
        %v4563 = vand.u32 %v3946, 4294901760
        %4564 = vmatmul.mubr.f32.gmra.mrb[0].mxu0 %v4563
        %v4565 = vpop.f32.mrb[0].mxu0
        %v4566 = vadd.f32 %v4440, %v4565
        %v4567 = vpop.f32.mrb[0].mxu0
        %4568 = vmatprep.mubr.f32.mxu0 0.0
        %v4569 = vand.u32 %v3949, 4294901760
        %4570 = vmatmul.mubr.f32.gmra.mrb[0].mxu0 %v4569
        %v4571 = vpop.f32.mrb[0].mxu0
        %v4572 = vadd.f32 %v4448, %v4571
        %v4573 = vpop.f32.mrb[0].mxu0
        %4574 = vmatprep.mubr.f32.mxu0 0.0
        %v4575 = vand.u32 %v3952, 4294901760
        %4576 = vmatmul.mubr.f32.gmra.mrb[0].mxu0 %v4575
        %v4577 = vpop.f32.mrb[0].mxu0
        %v4578 = vadd.f32 %v4456, %v4577
        %v4579 = vpop.f32.mrb[0].mxu0
        %4580 = vmatprep.mubr.f32.mxu0 0.0
        %v4581 = vand.u32 %v3955, 4294901760
        %4582 = vmatmul.mubr.f32.gmra.mrb[0].mxu0 %v4581
        %v4583 = vpop.f32.mrb[0].mxu0
        %v4584 = vadd.f32 %v4464, %v4583
        %v4585 = vpop.f32.mrb[0].mxu0
        %4586 = vmatprep.mubr.f32.mxu0 0.0
        %v4587 = vand.u32 %v3958, 4294901760
        %4588 = vmatmul.mubr.f32.gmra.mrb[0].mxu0 %v4587
        %v4589 = vpop.f32.mrb[0].mxu0
        %v4590 = vadd.f32 %v4472, %v4589
        %v4591 = vpop.f32.mrb[0].mxu0
        %4592 = vmatprep.mubr.f32.mxu0 0.0
        %v4593 = vand.u32 %v3961, 4294901760
        %4594 = vmatmul.mubr.f32.gmra.mrb[0].mxu0 %v4593
        %v4595 = vpop.f32.mrb[0].mxu0
        %v4596 = vadd.f32 %v4480, %v4595
        %v4597 = vpop.f32.mrb[0].mxu0
        %4598 = vdwg.mxu0
        %4599 = vmatprep.subr.mxu0 0.0
        %v4600 = vand.u32 %v3964, 4294901760
        %4601 = vmatpush1.msra.mxu0 %v4600
        %4602 = vmatprep.subr.mxu0 0.0
        %4603 = vmatpush1.msra.mxu0 0.0
        %4604 = vmatprep.subr.mxu0 0.0
        %4605 = vmatpush1.msra.mxu0 0.0
        %4606 = vmatprep.subr.mxu0 0.0
        %4607 = vmatpush1.msra.mxu0 0.0
        %4608 = vmatprep.subr.mxu0 0.0
        %4609 = vmatpush1.msra.mxu0 0.0
        %4610 = vmatprep.subr.mxu0 0.0
        %4611 = vmatpush1.msra.mxu0 0.0
        %4612 = vmatprep.subr.mxu0 0.0
        %4613 = vmatpush1.msra.mxu0 0.0
        %4614 = vmatprep.subr.mxu0 0.0
        %4615 = vmatpush1.msra.mxu0 0.0
        %4616 = vmatprep.subr.mxu0 0.0
        %4617 = vmatpush1.msra.mxu0 0.0
        %4618 = vmatprep.subr.mxu0 0.0
        %4619 = vmatpush1.msra.mxu0 0.0
        %4620 = vmatprep.subr.mxu0 0.0
        %4621 = vmatpush1.msra.mxu0 0.0
        %4622 = vmatprep.subr.mxu0 0.0
        %4623 = vmatpush1.msra.mxu0 0.0
        %4624 = vmatprep.subr.mxu0 0.0
        %4625 = vmatpush1.msra.mxu0 0.0
        %4626 = vmatprep.subr.mxu0 0.0
        %4627 = vmatpush1.msra.mxu0 0.0
        %4628 = vmatprep.subr.mxu0 0.0
        %4629 = vmatpush1.msra.mxu0 0.0
        %4630 = vmatprep.subr.mxu0 0.0
        %4631 = vmatpush1.msra.mxu0 0.0
        %4632 = vmatprep.subr.mxu0 0.0
        %4633 = vmatpush1.msra.mxu0 0.0
        %4634 = vmatprep.subr.mxu0 0.0
        %4635 = vmatpush1.msra.mxu0 0.0
        %4636 = vmatprep.subr.mxu0 0.0
        %4637 = vmatpush1.msra.mxu0 0.0
        %4638 = vmatprep.subr.mxu0 0.0
        %4639 = vmatpush1.msra.mxu0 0.0
        %4640 = vmatprep.subr.mxu0 0.0
        %4641 = vmatpush1.msra.mxu0 0.0
        %4642 = vmatprep.subr.mxu0 0.0
        %4643 = vmatpush1.msra.mxu0 0.0
        %4644 = vmatprep.subr.mxu0 0.0
        %4645 = vmatpush1.msra.mxu0 0.0
        %4646 = vmatprep.subr.mxu0 0.0
        %4647 = vmatpush1.msra.mxu0 0.0
        %4648 = vmatprep.subr.mxu0 0.0
        %4649 = vmatpush1.msra.mxu0 0.0
        %4650 = vmatprep.subr.mxu0 0.0
        %4651 = vmatpush1.msra.mxu0 0.0
        %4652 = vmatprep.subr.mxu0 0.0
        %4653 = vmatpush1.msra.mxu0 0.0
        %4654 = vmatprep.subr.mxu0 0.0
        %4655 = vmatpush1.msra.mxu0 0.0
        %4656 = vmatprep.subr.mxu0 0.0
        %4657 = vmatpush1.msra.mxu0 0.0
        %4658 = vmatprep.subr.mxu0 0.0
        %4659 = vmatpush1.msra.mxu0 0.0
        %4660 = vmatprep.subr.mxu0 0.0
        %4661 = vmatpush1.msra.mxu0 0.0
        %4662 = vmatprep.subr.mxu0 0.0
        %4663 = vmatpush1.msra.mxu0 0.0
        %4664 = vmatprep.mubr.f32.mxu0 0.0
        %v4665 = vand.u32 %v3940, 4294901760
        %4666 = vmatmul.mubr.f32.gmra.mrb[0].mxu0 %v4665
        %v4667 = vpop.f32.mrb[0].mxu0
        %v4668 = vadd.f32 %v4554, %v4667
        %v4669 = vpop.f32.mrb[0].mxu0
        %4670 = vmatprep.mubr.f32.mxu0 0.0
        %v4671 = vand.u32 %v3943, 4294901760
        %4672 = vmatmul.mubr.f32.gmra.mrb[0].mxu0 %v4671
        %v4673 = vpop.f32.mrb[0].mxu0
        %v4674 = vadd.f32 %v4560, %v4673
        %v4675 = vpop.f32.mrb[0].mxu0
        %4676 = vmatprep.mubr.f32.mxu0 0.0
        %v4677 = vand.u32 %v3946, 4294901760
        %4678 = vmatmul.mubr.f32.gmra.mrb[0].mxu0 %v4677
        %v4679 = vpop.f32.mrb[0].mxu0
        %v4680 = vadd.f32 %v4566, %v4679
        %v4681 = vpop.f32.mrb[0].mxu0
        %4682 = vmatprep.mubr.f32.mxu0 0.0
        %v4683 = vand.u32 %v3949, 4294901760
        %4684 = vmatmul.mubr.f32.gmra.mrb[0].mxu0 %v4683
        %v4685 = vpop.f32.mrb[0].mxu0
        %v4686 = vadd.f32 %v4572, %v4685
        %v4687 = vpop.f32.mrb[0].mxu0
        %4688 = vmatprep.mubr.f32.mxu0 0.0
        %v4689 = vand.u32 %v3952, 4294901760
        %4690 = vmatmul.mubr.f32.gmra.mrb[0].mxu0 %v4689
        %v4691 = vpop.f32.mrb[0].mxu0
        %v4692 = vadd.f32 %v4578, %v4691
        %v4693 = vpop.f32.mrb[0].mxu0
        %4694 = vmatprep.mubr.f32.mxu0 0.0
        %v4695 = vand.u32 %v3955, 4294901760
        %4696 = vmatmul.mubr.f32.gmra.mrb[0].mxu0 %v4695
        %v4697 = vpop.f32.mrb[0].mxu0
        %v4698 = vadd.f32 %v4584, %v4697
        %v4699 = vpop.f32.mrb[0].mxu0
        %4700 = vmatprep.mubr.f32.mxu0 0.0
        %v4701 = vand.u32 %v3958, 4294901760
        %4702 = vmatmul.mubr.f32.gmra.mrb[0].mxu0 %v4701
        %v4703 = vpop.f32.mrb[0].mxu0
        %v4704 = vadd.f32 %v4590, %v4703
        %v4705 = vpop.f32.mrb[0].mxu0
        %4706 = vmatprep.mubr.f32.mxu0 0.0
        %v4707 = vand.u32 %v3961, 4294901760
        %4708 = vmatmul.mubr.f32.gmra.mrb[0].mxu0 %v4707
        %v4709 = vpop.f32.mrb[0].mxu0
        %v4710 = vadd.f32 %v4596, %v4709
        %v4711 = vpop.f32.mrb[0].mxu0
        %4712 = vdwg.mxu0
        %v4713 = vadd.f32 %v3920, %v4668
        %v4714 = vadd.f32 %v3921, %v4674
        %v4715 = vadd.f32 %v3922, %v4680
        %v4716 = vadd.f32 %v3923, %v4686
        %v4717 = vadd.f32 %v3924, %v4692
        %v4718 = vadd.f32 %v3925, %v4698
        %v4719 = vadd.f32 %v3926, %v4704
        %v4720 = vadd.f32 %v3927, %v4710
        %v4729 = vrot.slane %v3128, 1
        %v4730 = vrot.slane %v3129, 1
        %v4731 = vsel %vm2326, %v4729, %v4730
        %v4732 = vrot.slane %v3130, 1
        %v4733 = vrot.slane %v3131, 1
        %v4734 = vsel %vm2326, %v4732, %v4733
        %v4735 = vrot.slane %v3132, 1
        %v4736 = vrot.slane %v3133, 1
        %v4737 = vsel %vm2326, %v4735, %v4736
        %v4738 = vrot.slane %v3134, 1
        %v4739 = vrot.slane %v3135, 1
        %v4740 = vsel %vm2326, %v4738, %v4739
        %v4741 = vrot.slane %v3136, 1
        %v4742 = vrot.slane %v3137, 1
        %v4743 = vsel %vm2326, %v4741, %v4742
        %v4744 = vrot.slane %v3138, 1
        %v4745 = vrot.slane %v3139, 1
        %v4746 = vsel %vm2326, %v4744, %v4745
        %v4747 = vrot.slane %v3140, 1
        %v4748 = vrot.slane %v3141, 1
        %v4749 = vsel %vm2326, %v4747, %v4748
        %v4750 = vrot.slane %v3142, 1
        %v4751 = vrot.slane %v3143, 1
        %v4752 = vsel %vm2326, %v4750, %v4751
        %s4753 = scalar_lea.vmem %s723, 20
        %v4754 = vld [vmem:[%s4753] sm:$0xf]
        %v4755 = vsel %vm768, %v4731, 0
        %v4757 = vsel %vm768, %v4734, 0
        %v4759 = vsel %vm768, %v4737, 0
        %v4761 = vsel %vm768, %v4740, 0
        %v4763 = vsel %vm768, %v4743, 0
        %v4765 = vsel %vm768, %v4746, 0
        %v4767 = vsel %vm768, %v4749, 0
        %v4769 = vsel %vm768, %v4752, 0
        %v4772 = vsel %vm793, %v4754, 0
        %4774 = vmatprep.subr.mxu0 0.0
        %v4775 = vand.u32 %v4772, 4294901760
        %4776 = vmatpush1.msra.mxu0 %v4775
        %4777 = vmatprep.subr.mxu0 0.0
        %4778 = vmatpush1.msra.mxu0 0.0
        %4779 = vmatprep.subr.mxu0 0.0
        %4780 = vmatpush1.msra.mxu0 0.0
        %4781 = vmatprep.subr.mxu0 0.0
        %4782 = vmatpush1.msra.mxu0 0.0
        %4783 = vmatprep.subr.mxu0 0.0
        %4784 = vmatpush1.msra.mxu0 0.0
        %4785 = vmatprep.subr.mxu0 0.0
        %4786 = vmatpush1.msra.mxu0 0.0
        %4787 = vmatprep.subr.mxu0 0.0
        %4788 = vmatpush1.msra.mxu0 0.0
        %4789 = vmatprep.subr.mxu0 0.0
        %4790 = vmatpush1.msra.mxu0 0.0
        %4791 = vmatprep.subr.mxu0 0.0
        %4792 = vmatpush1.msra.mxu0 0.0
        %4793 = vmatprep.subr.mxu0 0.0
        %4794 = vmatpush1.msra.mxu0 0.0
        %4795 = vmatprep.subr.mxu0 0.0
        %4796 = vmatpush1.msra.mxu0 0.0
        %4797 = vmatprep.subr.mxu0 0.0
        %4798 = vmatpush1.msra.mxu0 0.0
        %4799 = vmatprep.subr.mxu0 0.0
        %4800 = vmatpush1.msra.mxu0 0.0
        %4801 = vmatprep.subr.mxu0 0.0
        %4802 = vmatpush1.msra.mxu0 0.0
        %4803 = vmatprep.subr.mxu0 0.0
        %4804 = vmatpush1.msra.mxu0 0.0
        %4805 = vmatprep.subr.mxu0 0.0
        %4806 = vmatpush1.msra.mxu0 0.0
        %4807 = vmatprep.subr.mxu0 0.0
        %4808 = vmatpush1.msra.mxu0 0.0
        %4809 = vmatprep.subr.mxu0 0.0
        %4810 = vmatpush1.msra.mxu0 0.0
        %4811 = vmatprep.subr.mxu0 0.0
        %4812 = vmatpush1.msra.mxu0 0.0
        %4813 = vmatprep.subr.mxu0 0.0
        %4814 = vmatpush1.msra.mxu0 0.0
        %4815 = vmatprep.subr.mxu0 0.0
        %4816 = vmatpush1.msra.mxu0 0.0
        %4817 = vmatprep.subr.mxu0 0.0
        %4818 = vmatpush1.msra.mxu0 0.0
        %4819 = vmatprep.subr.mxu0 0.0
        %4820 = vmatpush1.msra.mxu0 0.0
        %4821 = vmatprep.subr.mxu0 0.0
        %4822 = vmatpush1.msra.mxu0 0.0
        %4823 = vmatprep.subr.mxu0 0.0
        %4824 = vmatpush1.msra.mxu0 0.0
        %4825 = vmatprep.subr.mxu0 0.0
        %4826 = vmatpush1.msra.mxu0 0.0
        %4827 = vmatprep.subr.mxu0 0.0
        %4828 = vmatpush1.msra.mxu0 0.0
        %4829 = vmatprep.subr.mxu0 0.0
        %4830 = vmatpush1.msra.mxu0 0.0
        %4831 = vmatprep.subr.mxu0 0.0
        %4832 = vmatpush1.msra.mxu0 0.0
        %4833 = vmatprep.subr.mxu0 0.0
        %4834 = vmatpush1.msra.mxu0 0.0
        %4835 = vmatprep.subr.mxu0 0.0
        %4836 = vmatpush1.msra.mxu0 0.0
        %4837 = vmatprep.subr.mxu0 0.0
        %4838 = vmatpush1.msra.mxu0 0.0
        %4839 = vmatprep.mubr.f32.mxu0 0.0
        %v4840 = vand.u32 %v4755, 4294901760
        %v4841 = vsub.f32 %v4755, %v4840
        %v4842 = vand.u32 %v4841, 4294901760
        %v4843 = vsub.f32 %v4841, %v4842
        %v4844 = vand.u32 %v4843, 4294901760
        %4845 = vmatmul.mubr.f32.gmra.mrb[0].mxu0 %v4844
        %v4846 = vpop.f32.mrb[0].mxu0
        %v4847 = vadd.f32 0.0, %v4846
        %v4848 = vpop.f32.mrb[0].mxu0
        %4849 = vmatprep.mubr.f32.mxu0 0.0
        %v4850 = vand.u32 %v4757, 4294901760
        %v4851 = vsub.f32 %v4757, %v4850
        %v4852 = vand.u32 %v4851, 4294901760
        %v4853 = vsub.f32 %v4851, %v4852
        %v4854 = vand.u32 %v4853, 4294901760
        %4855 = vmatmul.mubr.f32.gmra.mrb[0].mxu0 %v4854
        %v4856 = vpop.f32.mrb[0].mxu0
        %v4857 = vadd.f32 0.0, %v4856
        %v4858 = vpop.f32.mrb[0].mxu0
        %4859 = vmatprep.mubr.f32.mxu0 0.0
        %v4860 = vand.u32 %v4759, 4294901760
        %v4861 = vsub.f32 %v4759, %v4860
        %v4862 = vand.u32 %v4861, 4294901760
        %v4863 = vsub.f32 %v4861, %v4862
        %v4864 = vand.u32 %v4863, 4294901760
        %4865 = vmatmul.mubr.f32.gmra.mrb[0].mxu0 %v4864
        %v4866 = vpop.f32.mrb[0].mxu0
        %v4867 = vadd.f32 0.0, %v4866
        %v4868 = vpop.f32.mrb[0].mxu0
        %4869 = vmatprep.mubr.f32.mxu0 0.0
        %v4870 = vand.u32 %v4761, 4294901760
        %v4871 = vsub.f32 %v4761, %v4870
        %v4872 = vand.u32 %v4871, 4294901760
        %v4873 = vsub.f32 %v4871, %v4872
        %v4874 = vand.u32 %v4873, 4294901760
        %4875 = vmatmul.mubr.f32.gmra.mrb[0].mxu0 %v4874
        %v4876 = vpop.f32.mrb[0].mxu0
        %v4877 = vadd.f32 0.0, %v4876
        %v4878 = vpop.f32.mrb[0].mxu0
        %4879 = vmatprep.mubr.f32.mxu0 0.0
        %v4880 = vand.u32 %v4763, 4294901760
        %v4881 = vsub.f32 %v4763, %v4880
        %v4882 = vand.u32 %v4881, 4294901760
        %v4883 = vsub.f32 %v4881, %v4882
        %v4884 = vand.u32 %v4883, 4294901760
        %4885 = vmatmul.mubr.f32.gmra.mrb[0].mxu0 %v4884
        %v4886 = vpop.f32.mrb[0].mxu0
        %v4887 = vadd.f32 0.0, %v4886
        %v4888 = vpop.f32.mrb[0].mxu0
        %4889 = vmatprep.mubr.f32.mxu0 0.0
        %v4890 = vand.u32 %v4765, 4294901760
        %v4891 = vsub.f32 %v4765, %v4890
        %v4892 = vand.u32 %v4891, 4294901760
        %v4893 = vsub.f32 %v4891, %v4892
        %v4894 = vand.u32 %v4893, 4294901760
        %4895 = vmatmul.mubr.f32.gmra.mrb[0].mxu0 %v4894
        %v4896 = vpop.f32.mrb[0].mxu0
        %v4897 = vadd.f32 0.0, %v4896
        %v4898 = vpop.f32.mrb[0].mxu0
        %4899 = vmatprep.mubr.f32.mxu0 0.0
        %v4900 = vand.u32 %v4767, 4294901760
        %v4901 = vsub.f32 %v4767, %v4900
        %v4902 = vand.u32 %v4901, 4294901760
        %v4903 = vsub.f32 %v4901, %v4902
        %v4904 = vand.u32 %v4903, 4294901760
        %4905 = vmatmul.mubr.f32.gmra.mrb[0].mxu0 %v4904
        %v4906 = vpop.f32.mrb[0].mxu0
        %v4907 = vadd.f32 0.0, %v4906
        %v4908 = vpop.f32.mrb[0].mxu0
        %4909 = vmatprep.mubr.f32.mxu0 0.0
        %v4910 = vand.u32 %v4769, 4294901760
        %v4911 = vsub.f32 %v4769, %v4910
        %v4912 = vand.u32 %v4911, 4294901760
        %v4913 = vsub.f32 %v4911, %v4912
        %v4914 = vand.u32 %v4913, 4294901760
        %4915 = vmatmul.mubr.f32.gmra.mrb[0].mxu0 %v4914
        %v4916 = vpop.f32.mrb[0].mxu0
        %v4917 = vadd.f32 0.0, %v4916
        %v4918 = vpop.f32.mrb[0].mxu0
        %4919 = vdwg.mxu0
        %4920 = vmatprep.subr.mxu0 0.0
        %v4921 = vand.u32 %v4772, 4294901760
        %v4922 = vsub.f32 %v4772, %v4921
        %v4923 = vand.u32 %v4922, 4294901760
        %v4924 = vsub.f32 %v4922, %v4923
        %v4925 = vand.u32 %v4924, 4294901760
        %4926 = vmatpush1.msra.mxu0 %v4925
        %4927 = vmatprep.subr.mxu0 0.0
        %4928 = vmatpush1.msra.mxu0 0.0
        %4929 = vmatprep.subr.mxu0 0.0
        %4930 = vmatpush1.msra.mxu0 0.0
        %4931 = vmatprep.subr.mxu0 0.0
        %4932 = vmatpush1.msra.mxu0 0.0
        %4933 = vmatprep.subr.mxu0 0.0
        %4934 = vmatpush1.msra.mxu0 0.0
        %4935 = vmatprep.subr.mxu0 0.0
        %4936 = vmatpush1.msra.mxu0 0.0
        %4937 = vmatprep.subr.mxu0 0.0
        %4938 = vmatpush1.msra.mxu0 0.0
        %4939 = vmatprep.subr.mxu0 0.0
        %4940 = vmatpush1.msra.mxu0 0.0
        %4941 = vmatprep.subr.mxu0 0.0
        %4942 = vmatpush1.msra.mxu0 0.0
        %4943 = vmatprep.subr.mxu0 0.0
        %4944 = vmatpush1.msra.mxu0 0.0
        %4945 = vmatprep.subr.mxu0 0.0
        %4946 = vmatpush1.msra.mxu0 0.0
        %4947 = vmatprep.subr.mxu0 0.0
        %4948 = vmatpush1.msra.mxu0 0.0
        %4949 = vmatprep.subr.mxu0 0.0
        %4950 = vmatpush1.msra.mxu0 0.0
        %4951 = vmatprep.subr.mxu0 0.0
        %4952 = vmatpush1.msra.mxu0 0.0
        %4953 = vmatprep.subr.mxu0 0.0
        %4954 = vmatpush1.msra.mxu0 0.0
        %4955 = vmatprep.subr.mxu0 0.0
        %4956 = vmatpush1.msra.mxu0 0.0
        %4957 = vmatprep.subr.mxu0 0.0
        %4958 = vmatpush1.msra.mxu0 0.0
        %4959 = vmatprep.subr.mxu0 0.0
        %4960 = vmatpush1.msra.mxu0 0.0
        %4961 = vmatprep.subr.mxu0 0.0
        %4962 = vmatpush1.msra.mxu0 0.0
        %4963 = vmatprep.subr.mxu0 0.0
        %4964 = vmatpush1.msra.mxu0 0.0
        %4965 = vmatprep.subr.mxu0 0.0
        %4966 = vmatpush1.msra.mxu0 0.0
        %4967 = vmatprep.subr.mxu0 0.0
        %4968 = vmatpush1.msra.mxu0 0.0
        %4969 = vmatprep.subr.mxu0 0.0
        %4970 = vmatpush1.msra.mxu0 0.0
        %4971 = vmatprep.subr.mxu0 0.0
        %4972 = vmatpush1.msra.mxu0 0.0
        %4973 = vmatprep.subr.mxu0 0.0
        %4974 = vmatpush1.msra.mxu0 0.0
        %4975 = vmatprep.subr.mxu0 0.0
        %4976 = vmatpush1.msra.mxu0 0.0
        %4977 = vmatprep.subr.mxu0 0.0
        %4978 = vmatpush1.msra.mxu0 0.0
        %4979 = vmatprep.subr.mxu0 0.0
        %4980 = vmatpush1.msra.mxu0 0.0
        %4981 = vmatprep.subr.mxu0 0.0
        %4982 = vmatpush1.msra.mxu0 0.0
        %4983 = vmatprep.subr.mxu0 0.0
        %4984 = vmatpush1.msra.mxu0 0.0
        %4985 = vmatprep.subr.mxu0 0.0
        %4986 = vmatpush1.msra.mxu0 0.0
        %4987 = vmatprep.subr.mxu0 0.0
        %4988 = vmatpush1.msra.mxu0 0.0
        %4989 = vmatprep.mubr.f32.mxu0 0.0
        %v4990 = vand.u32 %v4755, 4294901760
        %4991 = vmatmul.mubr.f32.gmra.mrb[0].mxu0 %v4990
        %v4992 = vpop.f32.mrb[0].mxu0
        %v4993 = vadd.f32 %v4847, %v4992
        %v4994 = vpop.f32.mrb[0].mxu0
        %4995 = vmatprep.mubr.f32.mxu0 0.0
        %v4996 = vand.u32 %v4757, 4294901760
        %4997 = vmatmul.mubr.f32.gmra.mrb[0].mxu0 %v4996
        %v4998 = vpop.f32.mrb[0].mxu0
        %v4999 = vadd.f32 %v4857, %v4998
        %v5000 = vpop.f32.mrb[0].mxu0
        %5001 = vmatprep.mubr.f32.mxu0 0.0
        %v5002 = vand.u32 %v4759, 4294901760
        %5003 = vmatmul.mubr.f32.gmra.mrb[0].mxu0 %v5002
        %v5004 = vpop.f32.mrb[0].mxu0
        %v5005 = vadd.f32 %v4867, %v5004
        %v5006 = vpop.f32.mrb[0].mxu0
        %5007 = vmatprep.mubr.f32.mxu0 0.0
        %v5008 = vand.u32 %v4761, 4294901760
        %5009 = vmatmul.mubr.f32.gmra.mrb[0].mxu0 %v5008
        %v5010 = vpop.f32.mrb[0].mxu0
        %v5011 = vadd.f32 %v4877, %v5010
        %v5012 = vpop.f32.mrb[0].mxu0
        %5013 = vmatprep.mubr.f32.mxu0 0.0
        %v5014 = vand.u32 %v4763, 4294901760
        %5015 = vmatmul.mubr.f32.gmra.mrb[0].mxu0 %v5014
        %v5016 = vpop.f32.mrb[0].mxu0
        %v5017 = vadd.f32 %v4887, %v5016
        %v5018 = vpop.f32.mrb[0].mxu0
        %5019 = vmatprep.mubr.f32.mxu0 0.0
        %v5020 = vand.u32 %v4765, 4294901760
        %5021 = vmatmul.mubr.f32.gmra.mrb[0].mxu0 %v5020
        %v5022 = vpop.f32.mrb[0].mxu0
        %v5023 = vadd.f32 %v4897, %v5022
        %v5024 = vpop.f32.mrb[0].mxu0
        %5025 = vmatprep.mubr.f32.mxu0 0.0
        %v5026 = vand.u32 %v4767, 4294901760
        %5027 = vmatmul.mubr.f32.gmra.mrb[0].mxu0 %v5026
        %v5028 = vpop.f32.mrb[0].mxu0
        %v5029 = vadd.f32 %v4907, %v5028
        %v5030 = vpop.f32.mrb[0].mxu0
        %5031 = vmatprep.mubr.f32.mxu0 0.0
        %v5032 = vand.u32 %v4769, 4294901760
        %5033 = vmatmul.mubr.f32.gmra.mrb[0].mxu0 %v5032
        %v5034 = vpop.f32.mrb[0].mxu0
        %v5035 = vadd.f32 %v4917, %v5034
        %v5036 = vpop.f32.mrb[0].mxu0
        %5037 = vdwg.mxu0
        %5038 = vmatprep.subr.mxu0 0.0
        %v5039 = vand.u32 %v4772, 4294901760
        %v5040 = vsub.f32 %v4772, %v5039
        %5041 = vmatpush1.msra.mxu0 %v5040
        %5042 = vmatprep.subr.mxu0 0.0
        %5043 = vmatpush1.msra.mxu0 0.0
        %5044 = vmatprep.subr.mxu0 0.0
        %5045 = vmatpush1.msra.mxu0 0.0
        %5046 = vmatprep.subr.mxu0 0.0
        %5047 = vmatpush1.msra.mxu0 0.0
        %5048 = vmatprep.subr.mxu0 0.0
        %5049 = vmatpush1.msra.mxu0 0.0
        %5050 = vmatprep.subr.mxu0 0.0
        %5051 = vmatpush1.msra.mxu0 0.0
        %5052 = vmatprep.subr.mxu0 0.0
        %5053 = vmatpush1.msra.mxu0 0.0
        %5054 = vmatprep.subr.mxu0 0.0
        %5055 = vmatpush1.msra.mxu0 0.0
        %5056 = vmatprep.subr.mxu0 0.0
        %5057 = vmatpush1.msra.mxu0 0.0
        %5058 = vmatprep.subr.mxu0 0.0
        %5059 = vmatpush1.msra.mxu0 0.0
        %5060 = vmatprep.subr.mxu0 0.0
        %5061 = vmatpush1.msra.mxu0 0.0
        %5062 = vmatprep.subr.mxu0 0.0
        %5063 = vmatpush1.msra.mxu0 0.0
        %5064 = vmatprep.subr.mxu0 0.0
        %5065 = vmatpush1.msra.mxu0 0.0
        %5066 = vmatprep.subr.mxu0 0.0
        %5067 = vmatpush1.msra.mxu0 0.0
        %5068 = vmatprep.subr.mxu0 0.0
        %5069 = vmatpush1.msra.mxu0 0.0
        %5070 = vmatprep.subr.mxu0 0.0
        %5071 = vmatpush1.msra.mxu0 0.0
        %5072 = vmatprep.subr.mxu0 0.0
        %5073 = vmatpush1.msra.mxu0 0.0
        %5074 = vmatprep.subr.mxu0 0.0
        %5075 = vmatpush1.msra.mxu0 0.0
        %5076 = vmatprep.subr.mxu0 0.0
        %5077 = vmatpush1.msra.mxu0 0.0
        %5078 = vmatprep.subr.mxu0 0.0
        %5079 = vmatpush1.msra.mxu0 0.0
        %5080 = vmatprep.subr.mxu0 0.0
        %5081 = vmatpush1.msra.mxu0 0.0
        %5082 = vmatprep.subr.mxu0 0.0
        %5083 = vmatpush1.msra.mxu0 0.0
        %5084 = vmatprep.subr.mxu0 0.0
        %5085 = vmatpush1.msra.mxu0 0.0
        %5086 = vmatprep.subr.mxu0 0.0
        %5087 = vmatpush1.msra.mxu0 0.0
        %5088 = vmatprep.subr.mxu0 0.0
        %5089 = vmatpush1.msra.mxu0 0.0
        %5090 = vmatprep.subr.mxu0 0.0
        %5091 = vmatpush1.msra.mxu0 0.0
        %5092 = vmatprep.subr.mxu0 0.0
        %5093 = vmatpush1.msra.mxu0 0.0
        %5094 = vmatprep.subr.mxu0 0.0
        %5095 = vmatpush1.msra.mxu0 0.0
        %5096 = vmatprep.subr.mxu0 0.0
        %5097 = vmatpush1.msra.mxu0 0.0
        %5098 = vmatprep.subr.mxu0 0.0
        %5099 = vmatpush1.msra.mxu0 0.0
        %5100 = vmatprep.subr.mxu0 0.0
        %5101 = vmatpush1.msra.mxu0 0.0
        %5102 = vmatprep.subr.mxu0 0.0
        %5103 = vmatpush1.msra.mxu0 0.0
        %5104 = vmatprep.mubr.f32.mxu0 0.0
        %v5105 = vand.u32 %v4755, 4294901760
        %v5106 = vsub.f32 %v4755, %v5105
        %5107 = vmatmul.mubr.f32.gmra.mrb[0].mxu0 %v5106
        %v5108 = vpop.f32.mrb[0].mxu0
        %v5109 = vadd.f32 %v4993, %v5108
        %v5110 = vpop.f32.mrb[0].mxu0
        %5111 = vmatprep.mubr.f32.mxu0 0.0
        %v5112 = vand.u32 %v4757, 4294901760
        %v5113 = vsub.f32 %v4757, %v5112
        %5114 = vmatmul.mubr.f32.gmra.mrb[0].mxu0 %v5113
        %v5115 = vpop.f32.mrb[0].mxu0
        %v5116 = vadd.f32 %v4999, %v5115
        %v5117 = vpop.f32.mrb[0].mxu0
        %5118 = vmatprep.mubr.f32.mxu0 0.0
        %v5119 = vand.u32 %v4759, 4294901760
        %v5120 = vsub.f32 %v4759, %v5119
        %5121 = vmatmul.mubr.f32.gmra.mrb[0].mxu0 %v5120
        %v5122 = vpop.f32.mrb[0].mxu0
        %v5123 = vadd.f32 %v5005, %v5122
        %v5124 = vpop.f32.mrb[0].mxu0
        %5125 = vmatprep.mubr.f32.mxu0 0.0
        %v5126 = vand.u32 %v4761, 4294901760
        %v5127 = vsub.f32 %v4761, %v5126
        %5128 = vmatmul.mubr.f32.gmra.mrb[0].mxu0 %v5127
        %v5129 = vpop.f32.mrb[0].mxu0
        %v5130 = vadd.f32 %v5011, %v5129
        %v5131 = vpop.f32.mrb[0].mxu0
        %5132 = vmatprep.mubr.f32.mxu0 0.0
        %v5133 = vand.u32 %v4763, 4294901760
        %v5134 = vsub.f32 %v4763, %v5133
        %5135 = vmatmul.mubr.f32.gmra.mrb[0].mxu0 %v5134
        %v5136 = vpop.f32.mrb[0].mxu0
        %v5137 = vadd.f32 %v5017, %v5136
        %v5138 = vpop.f32.mrb[0].mxu0
        %5139 = vmatprep.mubr.f32.mxu0 0.0
        %v5140 = vand.u32 %v4765, 4294901760
        %v5141 = vsub.f32 %v4765, %v5140
        %5142 = vmatmul.mubr.f32.gmra.mrb[0].mxu0 %v5141
        %v5143 = vpop.f32.mrb[0].mxu0
        %v5144 = vadd.f32 %v5023, %v5143
        %v5145 = vpop.f32.mrb[0].mxu0
        %5146 = vmatprep.mubr.f32.mxu0 0.0
        %v5147 = vand.u32 %v4767, 4294901760
        %v5148 = vsub.f32 %v4767, %v5147
        %5149 = vmatmul.mubr.f32.gmra.mrb[0].mxu0 %v5148
        %v5150 = vpop.f32.mrb[0].mxu0
        %v5151 = vadd.f32 %v5029, %v5150
        %v5152 = vpop.f32.mrb[0].mxu0
        %5153 = vmatprep.mubr.f32.mxu0 0.0
        %v5154 = vand.u32 %v4769, 4294901760
        %v5155 = vsub.f32 %v4769, %v5154
        %5156 = vmatmul.mubr.f32.gmra.mrb[0].mxu0 %v5155
        %v5157 = vpop.f32.mrb[0].mxu0
        %v5158 = vadd.f32 %v5035, %v5157
        %v5159 = vpop.f32.mrb[0].mxu0
        %5160 = vdwg.mxu0
        %5161 = vmatprep.subr.mxu0 0.0
        %v5162 = vand.u32 %v4772, 4294901760
        %5163 = vmatpush1.msra.mxu0 %v5162
        %5164 = vmatprep.subr.mxu0 0.0
        %5165 = vmatpush1.msra.mxu0 0.0
        %5166 = vmatprep.subr.mxu0 0.0
        %5167 = vmatpush1.msra.mxu0 0.0
        %5168 = vmatprep.subr.mxu0 0.0
        %5169 = vmatpush1.msra.mxu0 0.0
        %5170 = vmatprep.subr.mxu0 0.0
        %5171 = vmatpush1.msra.mxu0 0.0
        %5172 = vmatprep.subr.mxu0 0.0
        %5173 = vmatpush1.msra.mxu0 0.0
        %5174 = vmatprep.subr.mxu0 0.0
        %5175 = vmatpush1.msra.mxu0 0.0
        %5176 = vmatprep.subr.mxu0 0.0
        %5177 = vmatpush1.msra.mxu0 0.0
        %5178 = vmatprep.subr.mxu0 0.0
        %5179 = vmatpush1.msra.mxu0 0.0
        %5180 = vmatprep.subr.mxu0 0.0
        %5181 = vmatpush1.msra.mxu0 0.0
        %5182 = vmatprep.subr.mxu0 0.0
        %5183 = vmatpush1.msra.mxu0 0.0
        %5184 = vmatprep.subr.mxu0 0.0
        %5185 = vmatpush1.msra.mxu0 0.0
        %5186 = vmatprep.subr.mxu0 0.0
        %5187 = vmatpush1.msra.mxu0 0.0
        %5188 = vmatprep.subr.mxu0 0.0
        %5189 = vmatpush1.msra.mxu0 0.0
        %5190 = vmatprep.subr.mxu0 0.0
        %5191 = vmatpush1.msra.mxu0 0.0
        %5192 = vmatprep.subr.mxu0 0.0
        %5193 = vmatpush1.msra.mxu0 0.0
        %5194 = vmatprep.subr.mxu0 0.0
        %5195 = vmatpush1.msra.mxu0 0.0
        %5196 = vmatprep.subr.mxu0 0.0
        %5197 = vmatpush1.msra.mxu0 0.0
        %5198 = vmatprep.subr.mxu0 0.0
        %5199 = vmatpush1.msra.mxu0 0.0
        %5200 = vmatprep.subr.mxu0 0.0
        %5201 = vmatpush1.msra.mxu0 0.0
        %5202 = vmatprep.subr.mxu0 0.0
        %5203 = vmatpush1.msra.mxu0 0.0
        %5204 = vmatprep.subr.mxu0 0.0
        %5205 = vmatpush1.msra.mxu0 0.0
        %5206 = vmatprep.subr.mxu0 0.0
        %5207 = vmatpush1.msra.mxu0 0.0
        %5208 = vmatprep.subr.mxu0 0.0
        %5209 = vmatpush1.msra.mxu0 0.0
        %5210 = vmatprep.subr.mxu0 0.0
        %5211 = vmatpush1.msra.mxu0 0.0
        %5212 = vmatprep.subr.mxu0 0.0
        %5213 = vmatpush1.msra.mxu0 0.0
        %5214 = vmatprep.subr.mxu0 0.0
        %5215 = vmatpush1.msra.mxu0 0.0
        %5216 = vmatprep.subr.mxu0 0.0
        %5217 = vmatpush1.msra.mxu0 0.0
        %5218 = vmatprep.subr.mxu0 0.0
        %5219 = vmatpush1.msra.mxu0 0.0
        %5220 = vmatprep.subr.mxu0 0.0
        %5221 = vmatpush1.msra.mxu0 0.0
        %5222 = vmatprep.subr.mxu0 0.0
        %5223 = vmatpush1.msra.mxu0 0.0
        %5224 = vmatprep.subr.mxu0 0.0
        %5225 = vmatpush1.msra.mxu0 0.0
        %5226 = vmatprep.mubr.f32.mxu0 0.0
        %v5227 = vand.u32 %v4755, 4294901760
        %v5228 = vsub.f32 %v4755, %v5227
        %v5229 = vand.u32 %v5228, 4294901760
        %5230 = vmatmul.mubr.f32.gmra.mrb[0].mxu0 %v5229
        %v5231 = vpop.f32.mrb[0].mxu0
        %v5232 = vadd.f32 %v5109, %v5231
        %v5233 = vpop.f32.mrb[0].mxu0
        %5234 = vmatprep.mubr.f32.mxu0 0.0
        %v5235 = vand.u32 %v4757, 4294901760
        %v5236 = vsub.f32 %v4757, %v5235
        %v5237 = vand.u32 %v5236, 4294901760
        %5238 = vmatmul.mubr.f32.gmra.mrb[0].mxu0 %v5237
        %v5239 = vpop.f32.mrb[0].mxu0
        %v5240 = vadd.f32 %v5116, %v5239
        %v5241 = vpop.f32.mrb[0].mxu0
        %5242 = vmatprep.mubr.f32.mxu0 0.0
        %v5243 = vand.u32 %v4759, 4294901760
        %v5244 = vsub.f32 %v4759, %v5243
        %v5245 = vand.u32 %v5244, 4294901760
        %5246 = vmatmul.mubr.f32.gmra.mrb[0].mxu0 %v5245
        %v5247 = vpop.f32.mrb[0].mxu0
        %v5248 = vadd.f32 %v5123, %v5247
        %v5249 = vpop.f32.mrb[0].mxu0
        %5250 = vmatprep.mubr.f32.mxu0 0.0
        %v5251 = vand.u32 %v4761, 4294901760
        %v5252 = vsub.f32 %v4761, %v5251
        %v5253 = vand.u32 %v5252, 4294901760
        %5254 = vmatmul.mubr.f32.gmra.mrb[0].mxu0 %v5253
        %v5255 = vpop.f32.mrb[0].mxu0
        %v5256 = vadd.f32 %v5130, %v5255
        %v5257 = vpop.f32.mrb[0].mxu0
        %5258 = vmatprep.mubr.f32.mxu0 0.0
        %v5259 = vand.u32 %v4763, 4294901760
        %v5260 = vsub.f32 %v4763, %v5259
        %v5261 = vand.u32 %v5260, 4294901760
        %5262 = vmatmul.mubr.f32.gmra.mrb[0].mxu0 %v5261
        %v5263 = vpop.f32.mrb[0].mxu0
        %v5264 = vadd.f32 %v5137, %v5263
        %v5265 = vpop.f32.mrb[0].mxu0
        %5266 = vmatprep.mubr.f32.mxu0 0.0
        %v5267 = vand.u32 %v4765, 4294901760
        %v5268 = vsub.f32 %v4765, %v5267
        %v5269 = vand.u32 %v5268, 4294901760
        %5270 = vmatmul.mubr.f32.gmra.mrb[0].mxu0 %v5269
        %v5271 = vpop.f32.mrb[0].mxu0
        %v5272 = vadd.f32 %v5144, %v5271
        %v5273 = vpop.f32.mrb[0].mxu0
        %5274 = vmatprep.mubr.f32.mxu0 0.0
        %v5275 = vand.u32 %v4767, 4294901760
        %v5276 = vsub.f32 %v4767, %v5275
        %v5277 = vand.u32 %v5276, 4294901760
        %5278 = vmatmul.mubr.f32.gmra.mrb[0].mxu0 %v5277
        %v5279 = vpop.f32.mrb[0].mxu0
        %v5280 = vadd.f32 %v5151, %v5279
        %v5281 = vpop.f32.mrb[0].mxu0
        %5282 = vmatprep.mubr.f32.mxu0 0.0
        %v5283 = vand.u32 %v4769, 4294901760
        %v5284 = vsub.f32 %v4769, %v5283
        %v5285 = vand.u32 %v5284, 4294901760
        %5286 = vmatmul.mubr.f32.gmra.mrb[0].mxu0 %v5285
        %v5287 = vpop.f32.mrb[0].mxu0
        %v5288 = vadd.f32 %v5158, %v5287
        %v5289 = vpop.f32.mrb[0].mxu0
        %5290 = vdwg.mxu0
        %5291 = vmatprep.subr.mxu0 0.0
        %v5292 = vand.u32 %v4772, 4294901760
        %v5293 = vsub.f32 %v4772, %v5292
        %v5294 = vand.u32 %v5293, 4294901760
        %5295 = vmatpush1.msra.mxu0 %v5294
        %5296 = vmatprep.subr.mxu0 0.0
        %5297 = vmatpush1.msra.mxu0 0.0
        %5298 = vmatprep.subr.mxu0 0.0
        %5299 = vmatpush1.msra.mxu0 0.0
        %5300 = vmatprep.subr.mxu0 0.0
        %5301 = vmatpush1.msra.mxu0 0.0
        %5302 = vmatprep.subr.mxu0 0.0
        %5303 = vmatpush1.msra.mxu0 0.0
        %5304 = vmatprep.subr.mxu0 0.0
        %5305 = vmatpush1.msra.mxu0 0.0
        %5306 = vmatprep.subr.mxu0 0.0
        %5307 = vmatpush1.msra.mxu0 0.0
        %5308 = vmatprep.subr.mxu0 0.0
        %5309 = vmatpush1.msra.mxu0 0.0
        %5310 = vmatprep.subr.mxu0 0.0
        %5311 = vmatpush1.msra.mxu0 0.0
        %5312 = vmatprep.subr.mxu0 0.0
        %5313 = vmatpush1.msra.mxu0 0.0
        %5314 = vmatprep.subr.mxu0 0.0
        %5315 = vmatpush1.msra.mxu0 0.0
        %5316 = vmatprep.subr.mxu0 0.0
        %5317 = vmatpush1.msra.mxu0 0.0
        %5318 = vmatprep.subr.mxu0 0.0
        %5319 = vmatpush1.msra.mxu0 0.0
        %5320 = vmatprep.subr.mxu0 0.0
        %5321 = vmatpush1.msra.mxu0 0.0
        %5322 = vmatprep.subr.mxu0 0.0
        %5323 = vmatpush1.msra.mxu0 0.0
        %5324 = vmatprep.subr.mxu0 0.0
        %5325 = vmatpush1.msra.mxu0 0.0
        %5326 = vmatprep.subr.mxu0 0.0
        %5327 = vmatpush1.msra.mxu0 0.0
        %5328 = vmatprep.subr.mxu0 0.0
        %5329 = vmatpush1.msra.mxu0 0.0
        %5330 = vmatprep.subr.mxu0 0.0
        %5331 = vmatpush1.msra.mxu0 0.0
        %5332 = vmatprep.subr.mxu0 0.0
        %5333 = vmatpush1.msra.mxu0 0.0
        %5334 = vmatprep.subr.mxu0 0.0
        %5335 = vmatpush1.msra.mxu0 0.0
        %5336 = vmatprep.subr.mxu0 0.0
        %5337 = vmatpush1.msra.mxu0 0.0
        %5338 = vmatprep.subr.mxu0 0.0
        %5339 = vmatpush1.msra.mxu0 0.0
        %5340 = vmatprep.subr.mxu0 0.0
        %5341 = vmatpush1.msra.mxu0 0.0
        %5342 = vmatprep.subr.mxu0 0.0
        %5343 = vmatpush1.msra.mxu0 0.0
        %5344 = vmatprep.subr.mxu0 0.0
        %5345 = vmatpush1.msra.mxu0 0.0
        %5346 = vmatprep.subr.mxu0 0.0
        %5347 = vmatpush1.msra.mxu0 0.0
        %5348 = vmatprep.subr.mxu0 0.0
        %5349 = vmatpush1.msra.mxu0 0.0
        %5350 = vmatprep.subr.mxu0 0.0
        %5351 = vmatpush1.msra.mxu0 0.0
        %5352 = vmatprep.subr.mxu0 0.0
        %5353 = vmatpush1.msra.mxu0 0.0
        %5354 = vmatprep.subr.mxu0 0.0
        %5355 = vmatpush1.msra.mxu0 0.0
        %5356 = vmatprep.subr.mxu0 0.0
        %5357 = vmatpush1.msra.mxu0 0.0
        %5358 = vmatprep.mubr.f32.mxu0 0.0
        %v5359 = vand.u32 %v4755, 4294901760
        %5360 = vmatmul.mubr.f32.gmra.mrb[0].mxu0 %v5359
        %v5361 = vpop.f32.mrb[0].mxu0
        %v5362 = vadd.f32 %v5232, %v5361
        %v5363 = vpop.f32.mrb[0].mxu0
        %5364 = vmatprep.mubr.f32.mxu0 0.0
        %v5365 = vand.u32 %v4757, 4294901760
        %5366 = vmatmul.mubr.f32.gmra.mrb[0].mxu0 %v5365
        %v5367 = vpop.f32.mrb[0].mxu0
        %v5368 = vadd.f32 %v5240, %v5367
        %v5369 = vpop.f32.mrb[0].mxu0
        %5370 = vmatprep.mubr.f32.mxu0 0.0
        %v5371 = vand.u32 %v4759, 4294901760
        %5372 = vmatmul.mubr.f32.gmra.mrb[0].mxu0 %v5371
        %v5373 = vpop.f32.mrb[0].mxu0
        %v5374 = vadd.f32 %v5248, %v5373
        %v5375 = vpop.f32.mrb[0].mxu0
        %5376 = vmatprep.mubr.f32.mxu0 0.0
        %v5377 = vand.u32 %v4761, 4294901760
        %5378 = vmatmul.mubr.f32.gmra.mrb[0].mxu0 %v5377
        %v5379 = vpop.f32.mrb[0].mxu0
        %v5380 = vadd.f32 %v5256, %v5379
        %v5381 = vpop.f32.mrb[0].mxu0
        %5382 = vmatprep.mubr.f32.mxu0 0.0
        %v5383 = vand.u32 %v4763, 4294901760
        %5384 = vmatmul.mubr.f32.gmra.mrb[0].mxu0 %v5383
        %v5385 = vpop.f32.mrb[0].mxu0
        %v5386 = vadd.f32 %v5264, %v5385
        %v5387 = vpop.f32.mrb[0].mxu0
        %5388 = vmatprep.mubr.f32.mxu0 0.0
        %v5389 = vand.u32 %v4765, 4294901760
        %5390 = vmatmul.mubr.f32.gmra.mrb[0].mxu0 %v5389
        %v5391 = vpop.f32.mrb[0].mxu0
        %v5392 = vadd.f32 %v5272, %v5391
        %v5393 = vpop.f32.mrb[0].mxu0
        %5394 = vmatprep.mubr.f32.mxu0 0.0
        %v5395 = vand.u32 %v4767, 4294901760
        %5396 = vmatmul.mubr.f32.gmra.mrb[0].mxu0 %v5395
        %v5397 = vpop.f32.mrb[0].mxu0
        %v5398 = vadd.f32 %v5280, %v5397
        %v5399 = vpop.f32.mrb[0].mxu0
        %5400 = vmatprep.mubr.f32.mxu0 0.0
        %v5401 = vand.u32 %v4769, 4294901760
        %5402 = vmatmul.mubr.f32.gmra.mrb[0].mxu0 %v5401
        %v5403 = vpop.f32.mrb[0].mxu0
        %v5404 = vadd.f32 %v5288, %v5403
        %v5405 = vpop.f32.mrb[0].mxu0
        %5406 = vdwg.mxu0
        %5407 = vmatprep.subr.mxu0 0.0
        %v5408 = vand.u32 %v4772, 4294901760
        %5409 = vmatpush1.msra.mxu0 %v5408
        %5410 = vmatprep.subr.mxu0 0.0
        %5411 = vmatpush1.msra.mxu0 0.0
        %5412 = vmatprep.subr.mxu0 0.0
        %5413 = vmatpush1.msra.mxu0 0.0
        %5414 = vmatprep.subr.mxu0 0.0
        %5415 = vmatpush1.msra.mxu0 0.0
        %5416 = vmatprep.subr.mxu0 0.0
        %5417 = vmatpush1.msra.mxu0 0.0
        %5418 = vmatprep.subr.mxu0 0.0
        %5419 = vmatpush1.msra.mxu0 0.0
        %5420 = vmatprep.subr.mxu0 0.0
        %5421 = vmatpush1.msra.mxu0 0.0
        %5422 = vmatprep.subr.mxu0 0.0
        %5423 = vmatpush1.msra.mxu0 0.0
        %5424 = vmatprep.subr.mxu0 0.0
        %5425 = vmatpush1.msra.mxu0 0.0
        %5426 = vmatprep.subr.mxu0 0.0
        %5427 = vmatpush1.msra.mxu0 0.0
        %5428 = vmatprep.subr.mxu0 0.0
        %5429 = vmatpush1.msra.mxu0 0.0
        %5430 = vmatprep.subr.mxu0 0.0
        %5431 = vmatpush1.msra.mxu0 0.0
        %5432 = vmatprep.subr.mxu0 0.0
        %5433 = vmatpush1.msra.mxu0 0.0
        %5434 = vmatprep.subr.mxu0 0.0
        %5435 = vmatpush1.msra.mxu0 0.0
        %5436 = vmatprep.subr.mxu0 0.0
        %5437 = vmatpush1.msra.mxu0 0.0
        %5438 = vmatprep.subr.mxu0 0.0
        %5439 = vmatpush1.msra.mxu0 0.0
        %5440 = vmatprep.subr.mxu0 0.0
        %5441 = vmatpush1.msra.mxu0 0.0
        %5442 = vmatprep.subr.mxu0 0.0
        %5443 = vmatpush1.msra.mxu0 0.0
        %5444 = vmatprep.subr.mxu0 0.0
        %5445 = vmatpush1.msra.mxu0 0.0
        %5446 = vmatprep.subr.mxu0 0.0
        %5447 = vmatpush1.msra.mxu0 0.0
        %5448 = vmatprep.subr.mxu0 0.0
        %5449 = vmatpush1.msra.mxu0 0.0
        %5450 = vmatprep.subr.mxu0 0.0
        %5451 = vmatpush1.msra.mxu0 0.0
        %5452 = vmatprep.subr.mxu0 0.0
        %5453 = vmatpush1.msra.mxu0 0.0
        %5454 = vmatprep.subr.mxu0 0.0
        %5455 = vmatpush1.msra.mxu0 0.0
        %5456 = vmatprep.subr.mxu0 0.0
        %5457 = vmatpush1.msra.mxu0 0.0
        %5458 = vmatprep.subr.mxu0 0.0
        %5459 = vmatpush1.msra.mxu0 0.0
        %5460 = vmatprep.subr.mxu0 0.0
        %5461 = vmatpush1.msra.mxu0 0.0
        %5462 = vmatprep.subr.mxu0 0.0
        %5463 = vmatpush1.msra.mxu0 0.0
        %5464 = vmatprep.subr.mxu0 0.0
        %5465 = vmatpush1.msra.mxu0 0.0
        %5466 = vmatprep.subr.mxu0 0.0
        %5467 = vmatpush1.msra.mxu0 0.0
        %5468 = vmatprep.subr.mxu0 0.0
        %5469 = vmatpush1.msra.mxu0 0.0
        %5470 = vmatprep.subr.mxu0 0.0
        %5471 = vmatpush1.msra.mxu0 0.0
        %5472 = vmatprep.mubr.f32.mxu0 0.0
        %v5473 = vand.u32 %v4755, 4294901760
        %5474 = vmatmul.mubr.f32.gmra.mrb[0].mxu0 %v5473
        %v5475 = vpop.f32.mrb[0].mxu0
        %v5476 = vadd.f32 %v5362, %v5475
        %v5477 = vpop.f32.mrb[0].mxu0
        %5478 = vmatprep.mubr.f32.mxu0 0.0
        %v5479 = vand.u32 %v4757, 4294901760
        %5480 = vmatmul.mubr.f32.gmra.mrb[0].mxu0 %v5479
        %v5481 = vpop.f32.mrb[0].mxu0
        %v5482 = vadd.f32 %v5368, %v5481
        %v5483 = vpop.f32.mrb[0].mxu0
        %5484 = vmatprep.mubr.f32.mxu0 0.0
        %v5485 = vand.u32 %v4759, 4294901760
        %5486 = vmatmul.mubr.f32.gmra.mrb[0].mxu0 %v5485
        %v5487 = vpop.f32.mrb[0].mxu0
        %v5488 = vadd.f32 %v5374, %v5487
        %v5489 = vpop.f32.mrb[0].mxu0
        %5490 = vmatprep.mubr.f32.mxu0 0.0
        %v5491 = vand.u32 %v4761, 4294901760
        %5492 = vmatmul.mubr.f32.gmra.mrb[0].mxu0 %v5491
        %v5493 = vpop.f32.mrb[0].mxu0
        %v5494 = vadd.f32 %v5380, %v5493
        %v5495 = vpop.f32.mrb[0].mxu0
        %5496 = vmatprep.mubr.f32.mxu0 0.0
        %v5497 = vand.u32 %v4763, 4294901760
        %5498 = vmatmul.mubr.f32.gmra.mrb[0].mxu0 %v5497
        %v5499 = vpop.f32.mrb[0].mxu0
        %v5500 = vadd.f32 %v5386, %v5499
        %v5501 = vpop.f32.mrb[0].mxu0
        %5502 = vmatprep.mubr.f32.mxu0 0.0
        %v5503 = vand.u32 %v4765, 4294901760
        %5504 = vmatmul.mubr.f32.gmra.mrb[0].mxu0 %v5503
        %v5505 = vpop.f32.mrb[0].mxu0
        %v5506 = vadd.f32 %v5392, %v5505
        %v5507 = vpop.f32.mrb[0].mxu0
        %5508 = vmatprep.mubr.f32.mxu0 0.0
        %v5509 = vand.u32 %v4767, 4294901760
        %5510 = vmatmul.mubr.f32.gmra.mrb[0].mxu0 %v5509
        %v5511 = vpop.f32.mrb[0].mxu0
        %v5512 = vadd.f32 %v5398, %v5511
        %v5513 = vpop.f32.mrb[0].mxu0
        %5514 = vmatprep.mubr.f32.mxu0 0.0
        %v5515 = vand.u32 %v4769, 4294901760
        %5516 = vmatmul.mubr.f32.gmra.mrb[0].mxu0 %v5515
        %v5517 = vpop.f32.mrb[0].mxu0
        %v5518 = vadd.f32 %v5404, %v5517
        %v5519 = vpop.f32.mrb[0].mxu0
        %5520 = vdwg.mxu0
        %v5521 = vadd.f32 %v4713, %v5476
        %v5522 = vadd.f32 %v4714, %v5482
        %v5523 = vadd.f32 %v4715, %v5488
        %v5524 = vadd.f32 %v4716, %v5494
        %v5525 = vadd.f32 %v4717, %v5500
        %v5526 = vadd.f32 %v4718, %v5506
        %v5527 = vadd.f32 %v4719, %v5512
        %v5528 = vadd.f32 %v4720, %v5518
        %v5529 = vld [vmem:[%s668] sm:$0xff]
        %v5530 = vld [vmem:[%s668 + $0x8] sm:$0x1]
        %s5531 = scalar_lea.vmem %s723, 24
        %v5532 = vld [vmem:[%s5531] sm:$0xf]
        %v5534 = vsel %vm768, %v5529, 0
        %v5537 = vsel %vm793, %v5532, 0
        %5539 = vmatprep.subr.mxu0 0.0
        %v5540 = vand.u32 %v5537, 4294901760
        %5541 = vmatpush1.msra.mxu0 %v5540
        %5542 = vmatprep.subr.mxu0 0.0
        %5543 = vmatpush1.msra.mxu0 0.0
        %5544 = vmatprep.subr.mxu0 0.0
        %5545 = vmatpush1.msra.mxu0 0.0
        %5546 = vmatprep.subr.mxu0 0.0
        %5547 = vmatpush1.msra.mxu0 0.0
        %5548 = vmatprep.subr.mxu0 0.0
        %5549 = vmatpush1.msra.mxu0 0.0
        %5550 = vmatprep.subr.mxu0 0.0
        %5551 = vmatpush1.msra.mxu0 0.0
        %5552 = vmatprep.subr.mxu0 0.0
        %5553 = vmatpush1.msra.mxu0 0.0
        %5554 = vmatprep.subr.mxu0 0.0
        %5555 = vmatpush1.msra.mxu0 0.0
        %5556 = vmatprep.subr.mxu0 0.0
        %5557 = vmatpush1.msra.mxu0 0.0
        %5558 = vmatprep.subr.mxu0 0.0
        %5559 = vmatpush1.msra.mxu0 0.0
        %5560 = vmatprep.subr.mxu0 0.0
        %5561 = vmatpush1.msra.mxu0 0.0
        %5562 = vmatprep.subr.mxu0 0.0
        %5563 = vmatpush1.msra.mxu0 0.0
        %5564 = vmatprep.subr.mxu0 0.0
        %5565 = vmatpush1.msra.mxu0 0.0
        %5566 = vmatprep.subr.mxu0 0.0
        %5567 = vmatpush1.msra.mxu0 0.0
        %5568 = vmatprep.subr.mxu0 0.0
        %5569 = vmatpush1.msra.mxu0 0.0
        %5570 = vmatprep.subr.mxu0 0.0
        %5571 = vmatpush1.msra.mxu0 0.0
        %5572 = vmatprep.subr.mxu0 0.0
        %5573 = vmatpush1.msra.mxu0 0.0
        %5574 = vmatprep.subr.mxu0 0.0
        %5575 = vmatpush1.msra.mxu0 0.0
        %5576 = vmatprep.subr.mxu0 0.0
        %5577 = vmatpush1.msra.mxu0 0.0
        %5578 = vmatprep.subr.mxu0 0.0
        %5579 = vmatpush1.msra.mxu0 0.0
        %5580 = vmatprep.subr.mxu0 0.0
        %5581 = vmatpush1.msra.mxu0 0.0
        %5582 = vmatprep.subr.mxu0 0.0
        %5583 = vmatpush1.msra.mxu0 0.0
        %5584 = vmatprep.subr.mxu0 0.0
        %5585 = vmatpush1.msra.mxu0 0.0
        %5586 = vmatprep.subr.mxu0 0.0
        %5587 = vmatpush1.msra.mxu0 0.0
        %5588 = vmatprep.subr.mxu0 0.0
        %5589 = vmatpush1.msra.mxu0 0.0
        %5590 = vmatprep.subr.mxu0 0.0
        %5591 = vmatpush1.msra.mxu0 0.0
        %5592 = vmatprep.subr.mxu0 0.0
        %5593 = vmatpush1.msra.mxu0 0.0
        %5594 = vmatprep.subr.mxu0 0.0
        %5595 = vmatpush1.msra.mxu0 0.0
        %5596 = vmatprep.subr.mxu0 0.0
        %5597 = vmatpush1.msra.mxu0 0.0
        %5598 = vmatprep.subr.mxu0 0.0
        %5599 = vmatpush1.msra.mxu0 0.0
        %5600 = vmatprep.subr.mxu0 0.0
        %5601 = vmatpush1.msra.mxu0 0.0
        %5602 = vmatprep.subr.mxu0 0.0
        %5603 = vmatpush1.msra.mxu0 0.0
        %5604 = vmatprep.mubr.f32.mxu0 0.0
        %v5605 = vand.u32 %v1548, 4294901760
        %v5606 = vsub.f32 %v1548, %v5605
        %v5607 = vand.u32 %v5606, 4294901760
        %v5608 = vsub.f32 %v5606, %v5607
        %v5609 = vand.u32 %v5608, 4294901760
        %5610 = vmatmul.mubr.f32.gmra.mrb[0].mxu0 %v5609
        %v5611 = vpop.f32.mrb[0].mxu0
        %v5612 = vadd.f32 0.0, %v5611
        %v5613 = vpop.f32.mrb[0].mxu0
        %5614 = vmatprep.mubr.f32.mxu0 0.0
        %v5615 = vand.u32 %v1551, 4294901760
        %v5616 = vsub.f32 %v1551, %v5615
        %v5617 = vand.u32 %v5616, 4294901760
        %v5618 = vsub.f32 %v5616, %v5617
        %v5619 = vand.u32 %v5618, 4294901760
        %5620 = vmatmul.mubr.f32.gmra.mrb[0].mxu0 %v5619
        %v5621 = vpop.f32.mrb[0].mxu0
        %v5622 = vadd.f32 0.0, %v5621
        %v5623 = vpop.f32.mrb[0].mxu0
        %5624 = vmatprep.mubr.f32.mxu0 0.0
        %v5625 = vand.u32 %v1554, 4294901760
        %v5626 = vsub.f32 %v1554, %v5625
        %v5627 = vand.u32 %v5626, 4294901760
        %v5628 = vsub.f32 %v5626, %v5627
        %v5629 = vand.u32 %v5628, 4294901760
        %5630 = vmatmul.mubr.f32.gmra.mrb[0].mxu0 %v5629
        %v5631 = vpop.f32.mrb[0].mxu0
        %v5632 = vadd.f32 0.0, %v5631
        %v5633 = vpop.f32.mrb[0].mxu0
        %5634 = vmatprep.mubr.f32.mxu0 0.0
        %v5635 = vand.u32 %v1557, 4294901760
        %v5636 = vsub.f32 %v1557, %v5635
        %v5637 = vand.u32 %v5636, 4294901760
        %v5638 = vsub.f32 %v5636, %v5637
        %v5639 = vand.u32 %v5638, 4294901760
        %5640 = vmatmul.mubr.f32.gmra.mrb[0].mxu0 %v5639
        %v5641 = vpop.f32.mrb[0].mxu0
        %v5642 = vadd.f32 0.0, %v5641
        %v5643 = vpop.f32.mrb[0].mxu0
        %5644 = vmatprep.mubr.f32.mxu0 0.0
        %v5645 = vand.u32 %v1560, 4294901760
        %v5646 = vsub.f32 %v1560, %v5645
        %v5647 = vand.u32 %v5646, 4294901760
        %v5648 = vsub.f32 %v5646, %v5647
        %v5649 = vand.u32 %v5648, 4294901760
        %5650 = vmatmul.mubr.f32.gmra.mrb[0].mxu0 %v5649
        %v5651 = vpop.f32.mrb[0].mxu0
        %v5652 = vadd.f32 0.0, %v5651
        %v5653 = vpop.f32.mrb[0].mxu0
        %5654 = vmatprep.mubr.f32.mxu0 0.0
        %v5655 = vand.u32 %v1563, 4294901760
        %v5656 = vsub.f32 %v1563, %v5655
        %v5657 = vand.u32 %v5656, 4294901760
        %v5658 = vsub.f32 %v5656, %v5657
        %v5659 = vand.u32 %v5658, 4294901760
        %5660 = vmatmul.mubr.f32.gmra.mrb[0].mxu0 %v5659
        %v5661 = vpop.f32.mrb[0].mxu0
        %v5662 = vadd.f32 0.0, %v5661
        %v5663 = vpop.f32.mrb[0].mxu0
        %5664 = vmatprep.mubr.f32.mxu0 0.0
        %v5665 = vand.u32 %v1566, 4294901760
        %v5666 = vsub.f32 %v1566, %v5665
        %v5667 = vand.u32 %v5666, 4294901760
        %v5668 = vsub.f32 %v5666, %v5667
        %v5669 = vand.u32 %v5668, 4294901760
        %5670 = vmatmul.mubr.f32.gmra.mrb[0].mxu0 %v5669
        %v5671 = vpop.f32.mrb[0].mxu0
        %v5672 = vadd.f32 0.0, %v5671
        %v5673 = vpop.f32.mrb[0].mxu0
        %5674 = vmatprep.mubr.f32.mxu0 0.0
        %v5675 = vand.u32 %v5534, 4294901760
        %v5676 = vsub.f32 %v5534, %v5675
        %v5677 = vand.u32 %v5676, 4294901760
        %v5678 = vsub.f32 %v5676, %v5677
        %v5679 = vand.u32 %v5678, 4294901760
        %5680 = vmatmul.mubr.f32.gmra.mrb[0].mxu0 %v5679
        %v5681 = vpop.f32.mrb[0].mxu0
        %v5682 = vadd.f32 0.0, %v5681
        %v5683 = vpop.f32.mrb[0].mxu0
        %5684 = vdwg.mxu0
        %5685 = vmatprep.subr.mxu0 0.0
        %v5686 = vand.u32 %v5537, 4294901760
        %v5687 = vsub.f32 %v5537, %v5686
        %v5688 = vand.u32 %v5687, 4294901760
        %v5689 = vsub.f32 %v5687, %v5688
        %v5690 = vand.u32 %v5689, 4294901760
        %5691 = vmatpush1.msra.mxu0 %v5690
        %5692 = vmatprep.subr.mxu0 0.0
        %5693 = vmatpush1.msra.mxu0 0.0
        %5694 = vmatprep.subr.mxu0 0.0
        %5695 = vmatpush1.msra.mxu0 0.0
        %5696 = vmatprep.subr.mxu0 0.0
        %5697 = vmatpush1.msra.mxu0 0.0
        %5698 = vmatprep.subr.mxu0 0.0
        %5699 = vmatpush1.msra.mxu0 0.0
        %5700 = vmatprep.subr.mxu0 0.0
        %5701 = vmatpush1.msra.mxu0 0.0
        %5702 = vmatprep.subr.mxu0 0.0
        %5703 = vmatpush1.msra.mxu0 0.0
        %5704 = vmatprep.subr.mxu0 0.0
        %5705 = vmatpush1.msra.mxu0 0.0
        %5706 = vmatprep.subr.mxu0 0.0
        %5707 = vmatpush1.msra.mxu0 0.0
        %5708 = vmatprep.subr.mxu0 0.0
        %5709 = vmatpush1.msra.mxu0 0.0
        %5710 = vmatprep.subr.mxu0 0.0
        %5711 = vmatpush1.msra.mxu0 0.0
        %5712 = vmatprep.subr.mxu0 0.0
        %5713 = vmatpush1.msra.mxu0 0.0
        %5714 = vmatprep.subr.mxu0 0.0
        %5715 = vmatpush1.msra.mxu0 0.0
        %5716 = vmatprep.subr.mxu0 0.0
        %5717 = vmatpush1.msra.mxu0 0.0
        %5718 = vmatprep.subr.mxu0 0.0
        %5719 = vmatpush1.msra.mxu0 0.0
        %5720 = vmatprep.subr.mxu0 0.0
        %5721 = vmatpush1.msra.mxu0 0.0
        %5722 = vmatprep.subr.mxu0 0.0
        %5723 = vmatpush1.msra.mxu0 0.0
        %5724 = vmatprep.subr.mxu0 0.0
        %5725 = vmatpush1.msra.mxu0 0.0
        %5726 = vmatprep.subr.mxu0 0.0
        %5727 = vmatpush1.msra.mxu0 0.0
        %5728 = vmatprep.subr.mxu0 0.0
        %5729 = vmatpush1.msra.mxu0 0.0
        %5730 = vmatprep.subr.mxu0 0.0
        %5731 = vmatpush1.msra.mxu0 0.0
        %5732 = vmatprep.subr.mxu0 0.0
        %5733 = vmatpush1.msra.mxu0 0.0
        %5734 = vmatprep.subr.mxu0 0.0
        %5735 = vmatpush1.msra.mxu0 0.0
        %5736 = vmatprep.subr.mxu0 0.0
        %5737 = vmatpush1.msra.mxu0 0.0
        %5738 = vmatprep.subr.mxu0 0.0
        %5739 = vmatpush1.msra.mxu0 0.0
        %5740 = vmatprep.subr.mxu0 0.0
        %5741 = vmatpush1.msra.mxu0 0.0
        %5742 = vmatprep.subr.mxu0 0.0
        %5743 = vmatpush1.msra.mxu0 0.0
        %5744 = vmatprep.subr.mxu0 0.0
        %5745 = vmatpush1.msra.mxu0 0.0
        %5746 = vmatprep.subr.mxu0 0.0
        %5747 = vmatpush1.msra.mxu0 0.0
        %5748 = vmatprep.subr.mxu0 0.0
        %5749 = vmatpush1.msra.mxu0 0.0
        %5750 = vmatprep.subr.mxu0 0.0
        %5751 = vmatpush1.msra.mxu0 0.0
        %5752 = vmatprep.subr.mxu0 0.0
        %5753 = vmatpush1.msra.mxu0 0.0
        %5754 = vmatprep.mubr.f32.mxu0 0.0
        %v5755 = vand.u32 %v1548, 4294901760
        %5756 = vmatmul.mubr.f32.gmra.mrb[0].mxu0 %v5755
        %v5757 = vpop.f32.mrb[0].mxu0
        %v5758 = vadd.f32 %v5612, %v5757
        %v5759 = vpop.f32.mrb[0].mxu0
        %5760 = vmatprep.mubr.f32.mxu0 0.0
        %v5761 = vand.u32 %v1551, 4294901760
        %5762 = vmatmul.mubr.f32.gmra.mrb[0].mxu0 %v5761
        %v5763 = vpop.f32.mrb[0].mxu0
        %v5764 = vadd.f32 %v5622, %v5763
        %v5765 = vpop.f32.mrb[0].mxu0
        %5766 = vmatprep.mubr.f32.mxu0 0.0
        %v5767 = vand.u32 %v1554, 4294901760
        %5768 = vmatmul.mubr.f32.gmra.mrb[0].mxu0 %v5767
        %v5769 = vpop.f32.mrb[0].mxu0
        %v5770 = vadd.f32 %v5632, %v5769
        %v5771 = vpop.f32.mrb[0].mxu0
        %5772 = vmatprep.mubr.f32.mxu0 0.0
        %v5773 = vand.u32 %v1557, 4294901760
        %5774 = vmatmul.mubr.f32.gmra.mrb[0].mxu0 %v5773
        %v5775 = vpop.f32.mrb[0].mxu0
        %v5776 = vadd.f32 %v5642, %v5775
        %v5777 = vpop.f32.mrb[0].mxu0
        %5778 = vmatprep.mubr.f32.mxu0 0.0
        %v5779 = vand.u32 %v1560, 4294901760
        %5780 = vmatmul.mubr.f32.gmra.mrb[0].mxu0 %v5779
        %v5781 = vpop.f32.mrb[0].mxu0
        %v5782 = vadd.f32 %v5652, %v5781
        %v5783 = vpop.f32.mrb[0].mxu0
        %5784 = vmatprep.mubr.f32.mxu0 0.0
        %v5785 = vand.u32 %v1563, 4294901760
        %5786 = vmatmul.mubr.f32.gmra.mrb[0].mxu0 %v5785
        %v5787 = vpop.f32.mrb[0].mxu0
        %v5788 = vadd.f32 %v5662, %v5787
        %v5789 = vpop.f32.mrb[0].mxu0
        %5790 = vmatprep.mubr.f32.mxu0 0.0
        %v5791 = vand.u32 %v1566, 4294901760
        %5792 = vmatmul.mubr.f32.gmra.mrb[0].mxu0 %v5791
        %v5793 = vpop.f32.mrb[0].mxu0
        %v5794 = vadd.f32 %v5672, %v5793
        %v5795 = vpop.f32.mrb[0].mxu0
        %5796 = vmatprep.mubr.f32.mxu0 0.0
        %v5797 = vand.u32 %v5534, 4294901760
        %5798 = vmatmul.mubr.f32.gmra.mrb[0].mxu0 %v5797
        %v5799 = vpop.f32.mrb[0].mxu0
        %v5800 = vadd.f32 %v5682, %v5799
        %v5801 = vpop.f32.mrb[0].mxu0
        %5802 = vdwg.mxu0
        %5803 = vmatprep.subr.mxu0 0.0
        %v5804 = vand.u32 %v5537, 4294901760
        %v5805 = vsub.f32 %v5537, %v5804
        %5806 = vmatpush1.msra.mxu0 %v5805
        %5807 = vmatprep.subr.mxu0 0.0
        %5808 = vmatpush1.msra.mxu0 0.0
        %5809 = vmatprep.subr.mxu0 0.0
        %5810 = vmatpush1.msra.mxu0 0.0
        %5811 = vmatprep.subr.mxu0 0.0
        %5812 = vmatpush1.msra.mxu0 0.0
        %5813 = vmatprep.subr.mxu0 0.0
        %5814 = vmatpush1.msra.mxu0 0.0
        %5815 = vmatprep.subr.mxu0 0.0
        %5816 = vmatpush1.msra.mxu0 0.0
        %5817 = vmatprep.subr.mxu0 0.0
        %5818 = vmatpush1.msra.mxu0 0.0
        %5819 = vmatprep.subr.mxu0 0.0
        %5820 = vmatpush1.msra.mxu0 0.0
        %5821 = vmatprep.subr.mxu0 0.0
        %5822 = vmatpush1.msra.mxu0 0.0
        %5823 = vmatprep.subr.mxu0 0.0
        %5824 = vmatpush1.msra.mxu0 0.0
        %5825 = vmatprep.subr.mxu0 0.0
        %5826 = vmatpush1.msra.mxu0 0.0
        %5827 = vmatprep.subr.mxu0 0.0
        %5828 = vmatpush1.msra.mxu0 0.0
        %5829 = vmatprep.subr.mxu0 0.0
        %5830 = vmatpush1.msra.mxu0 0.0
        %5831 = vmatprep.subr.mxu0 0.0
        %5832 = vmatpush1.msra.mxu0 0.0
        %5833 = vmatprep.subr.mxu0 0.0
        %5834 = vmatpush1.msra.mxu0 0.0
        %5835 = vmatprep.subr.mxu0 0.0
        %5836 = vmatpush1.msra.mxu0 0.0
        %5837 = vmatprep.subr.mxu0 0.0
        %5838 = vmatpush1.msra.mxu0 0.0
        %5839 = vmatprep.subr.mxu0 0.0
        %5840 = vmatpush1.msra.mxu0 0.0
        %5841 = vmatprep.subr.mxu0 0.0
        %5842 = vmatpush1.msra.mxu0 0.0
        %5843 = vmatprep.subr.mxu0 0.0
        %5844 = vmatpush1.msra.mxu0 0.0
        %5845 = vmatprep.subr.mxu0 0.0
        %5846 = vmatpush1.msra.mxu0 0.0
        %5847 = vmatprep.subr.mxu0 0.0
        %5848 = vmatpush1.msra.mxu0 0.0
        %5849 = vmatprep.subr.mxu0 0.0
        %5850 = vmatpush1.msra.mxu0 0.0
        %5851 = vmatprep.subr.mxu0 0.0
        %5852 = vmatpush1.msra.mxu0 0.0
        %5853 = vmatprep.subr.mxu0 0.0
        %5854 = vmatpush1.msra.mxu0 0.0
        %5855 = vmatprep.subr.mxu0 0.0
        %5856 = vmatpush1.msra.mxu0 0.0
        %5857 = vmatprep.subr.mxu0 0.0
        %5858 = vmatpush1.msra.mxu0 0.0
        %5859 = vmatprep.subr.mxu0 0.0
        %5860 = vmatpush1.msra.mxu0 0.0
        %5861 = vmatprep.subr.mxu0 0.0
        %5862 = vmatpush1.msra.mxu0 0.0
        %5863 = vmatprep.subr.mxu0 0.0
        %5864 = vmatpush1.msra.mxu0 0.0
        %5865 = vmatprep.subr.mxu0 0.0
        %5866 = vmatpush1.msra.mxu0 0.0
        %5867 = vmatprep.subr.mxu0 0.0
        %5868 = vmatpush1.msra.mxu0 0.0
        %5869 = vmatprep.mubr.f32.mxu0 0.0
        %v5870 = vand.u32 %v1548, 4294901760
        %v5871 = vsub.f32 %v1548, %v5870
        %5872 = vmatmul.mubr.f32.gmra.mrb[0].mxu0 %v5871
        %v5873 = vpop.f32.mrb[0].mxu0
        %v5874 = vadd.f32 %v5758, %v5873
        %v5875 = vpop.f32.mrb[0].mxu0
        %5876 = vmatprep.mubr.f32.mxu0 0.0
        %v5877 = vand.u32 %v1551, 4294901760
        %v5878 = vsub.f32 %v1551, %v5877
        %5879 = vmatmul.mubr.f32.gmra.mrb[0].mxu0 %v5878
        %v5880 = vpop.f32.mrb[0].mxu0
        %v5881 = vadd.f32 %v5764, %v5880
        %v5882 = vpop.f32.mrb[0].mxu0
        %5883 = vmatprep.mubr.f32.mxu0 0.0
        %v5884 = vand.u32 %v1554, 4294901760
        %v5885 = vsub.f32 %v1554, %v5884
        %5886 = vmatmul.mubr.f32.gmra.mrb[0].mxu0 %v5885
        %v5887 = vpop.f32.mrb[0].mxu0
        %v5888 = vadd.f32 %v5770, %v5887
        %v5889 = vpop.f32.mrb[0].mxu0
        %5890 = vmatprep.mubr.f32.mxu0 0.0
        %v5891 = vand.u32 %v1557, 4294901760
        %v5892 = vsub.f32 %v1557, %v5891
        %5893 = vmatmul.mubr.f32.gmra.mrb[0].mxu0 %v5892
        %v5894 = vpop.f32.mrb[0].mxu0
        %v5895 = vadd.f32 %v5776, %v5894
        %v5896 = vpop.f32.mrb[0].mxu0
        %5897 = vmatprep.mubr.f32.mxu0 0.0
        %v5898 = vand.u32 %v1560, 4294901760
        %v5899 = vsub.f32 %v1560, %v5898
        %5900 = vmatmul.mubr.f32.gmra.mrb[0].mxu0 %v5899
        %v5901 = vpop.f32.mrb[0].mxu0
        %v5902 = vadd.f32 %v5782, %v5901
        %v5903 = vpop.f32.mrb[0].mxu0
        %5904 = vmatprep.mubr.f32.mxu0 0.0
        %v5905 = vand.u32 %v1563, 4294901760
        %v5906 = vsub.f32 %v1563, %v5905
        %5907 = vmatmul.mubr.f32.gmra.mrb[0].mxu0 %v5906
        %v5908 = vpop.f32.mrb[0].mxu0
        %v5909 = vadd.f32 %v5788, %v5908
        %v5910 = vpop.f32.mrb[0].mxu0
        %5911 = vmatprep.mubr.f32.mxu0 0.0
        %v5912 = vand.u32 %v1566, 4294901760
        %v5913 = vsub.f32 %v1566, %v5912
        %5914 = vmatmul.mubr.f32.gmra.mrb[0].mxu0 %v5913
        %v5915 = vpop.f32.mrb[0].mxu0
        %v5916 = vadd.f32 %v5794, %v5915
        %v5917 = vpop.f32.mrb[0].mxu0
        %5918 = vmatprep.mubr.f32.mxu0 0.0
        %v5919 = vand.u32 %v5534, 4294901760
        %v5920 = vsub.f32 %v5534, %v5919
        %5921 = vmatmul.mubr.f32.gmra.mrb[0].mxu0 %v5920
        %v5922 = vpop.f32.mrb[0].mxu0
        %v5923 = vadd.f32 %v5800, %v5922
        %v5924 = vpop.f32.mrb[0].mxu0
        %5925 = vdwg.mxu0
        %5926 = vmatprep.subr.mxu0 0.0
        %v5927 = vand.u32 %v5537, 4294901760
        %5928 = vmatpush1.msra.mxu0 %v5927
        %5929 = vmatprep.subr.mxu0 0.0
        %5930 = vmatpush1.msra.mxu0 0.0
        %5931 = vmatprep.subr.mxu0 0.0
        %5932 = vmatpush1.msra.mxu0 0.0
        %5933 = vmatprep.subr.mxu0 0.0
        %5934 = vmatpush1.msra.mxu0 0.0
        %5935 = vmatprep.subr.mxu0 0.0
        %5936 = vmatpush1.msra.mxu0 0.0
        %5937 = vmatprep.subr.mxu0 0.0
        %5938 = vmatpush1.msra.mxu0 0.0
        %5939 = vmatprep.subr.mxu0 0.0
        %5940 = vmatpush1.msra.mxu0 0.0
        %5941 = vmatprep.subr.mxu0 0.0
        %5942 = vmatpush1.msra.mxu0 0.0
        %5943 = vmatprep.subr.mxu0 0.0
        %5944 = vmatpush1.msra.mxu0 0.0
        %5945 = vmatprep.subr.mxu0 0.0
        %5946 = vmatpush1.msra.mxu0 0.0
        %5947 = vmatprep.subr.mxu0 0.0
        %5948 = vmatpush1.msra.mxu0 0.0
        %5949 = vmatprep.subr.mxu0 0.0
        %5950 = vmatpush1.msra.mxu0 0.0
        %5951 = vmatprep.subr.mxu0 0.0
        %5952 = vmatpush1.msra.mxu0 0.0
        %5953 = vmatprep.subr.mxu0 0.0
        %5954 = vmatpush1.msra.mxu0 0.0
        %5955 = vmatprep.subr.mxu0 0.0
        %5956 = vmatpush1.msra.mxu0 0.0
        %5957 = vmatprep.subr.mxu0 0.0
        %5958 = vmatpush1.msra.mxu0 0.0
        %5959 = vmatprep.subr.mxu0 0.0
        %5960 = vmatpush1.msra.mxu0 0.0
        %5961 = vmatprep.subr.mxu0 0.0
        %5962 = vmatpush1.msra.mxu0 0.0
        %5963 = vmatprep.subr.mxu0 0.0
        %5964 = vmatpush1.msra.mxu0 0.0
        %5965 = vmatprep.subr.mxu0 0.0
        %5966 = vmatpush1.msra.mxu0 0.0
        %5967 = vmatprep.subr.mxu0 0.0
        %5968 = vmatpush1.msra.mxu0 0.0
        %5969 = vmatprep.subr.mxu0 0.0
        %5970 = vmatpush1.msra.mxu0 0.0
        %5971 = vmatprep.subr.mxu0 0.0
        %5972 = vmatpush1.msra.mxu0 0.0
        %5973 = vmatprep.subr.mxu0 0.0
        %5974 = vmatpush1.msra.mxu0 0.0
        %5975 = vmatprep.subr.mxu0 0.0
        %5976 = vmatpush1.msra.mxu0 0.0
        %5977 = vmatprep.subr.mxu0 0.0
        %5978 = vmatpush1.msra.mxu0 0.0
        %5979 = vmatprep.subr.mxu0 0.0
        %5980 = vmatpush1.msra.mxu0 0.0
        %5981 = vmatprep.subr.mxu0 0.0
        %5982 = vmatpush1.msra.mxu0 0.0
        %5983 = vmatprep.subr.mxu0 0.0
        %5984 = vmatpush1.msra.mxu0 0.0
        %5985 = vmatprep.subr.mxu0 0.0
        %5986 = vmatpush1.msra.mxu0 0.0
        %5987 = vmatprep.subr.mxu0 0.0
        %5988 = vmatpush1.msra.mxu0 0.0
        %5989 = vmatprep.subr.mxu0 0.0
        %5990 = vmatpush1.msra.mxu0 0.0
        %5991 = vmatprep.mubr.f32.mxu0 0.0
        %v5992 = vand.u32 %v1548, 4294901760
        %v5993 = vsub.f32 %v1548, %v5992
        %v5994 = vand.u32 %v5993, 4294901760
        %5995 = vmatmul.mubr.f32.gmra.mrb[0].mxu0 %v5994
        %v5996 = vpop.f32.mrb[0].mxu0
        %v5997 = vadd.f32 %v5874, %v5996
        %v5998 = vpop.f32.mrb[0].mxu0
        %5999 = vmatprep.mubr.f32.mxu0 0.0
        %v6000 = vand.u32 %v1551, 4294901760
        %v6001 = vsub.f32 %v1551, %v6000
        %v6002 = vand.u32 %v6001, 4294901760
        %6003 = vmatmul.mubr.f32.gmra.mrb[0].mxu0 %v6002
        %v6004 = vpop.f32.mrb[0].mxu0
        %v6005 = vadd.f32 %v5881, %v6004
        %v6006 = vpop.f32.mrb[0].mxu0
        %6007 = vmatprep.mubr.f32.mxu0 0.0
        %v6008 = vand.u32 %v1554, 4294901760
        %v6009 = vsub.f32 %v1554, %v6008
        %v6010 = vand.u32 %v6009, 4294901760
        %6011 = vmatmul.mubr.f32.gmra.mrb[0].mxu0 %v6010
        %v6012 = vpop.f32.mrb[0].mxu0
        %v6013 = vadd.f32 %v5888, %v6012
        %v6014 = vpop.f32.mrb[0].mxu0
        %6015 = vmatprep.mubr.f32.mxu0 0.0
        %v6016 = vand.u32 %v1557, 4294901760
        %v6017 = vsub.f32 %v1557, %v6016
        %v6018 = vand.u32 %v6017, 4294901760
        %6019 = vmatmul.mubr.f32.gmra.mrb[0].mxu0 %v6018
        %v6020 = vpop.f32.mrb[0].mxu0
        %v6021 = vadd.f32 %v5895, %v6020
        %v6022 = vpop.f32.mrb[0].mxu0
        %6023 = vmatprep.mubr.f32.mxu0 0.0
        %v6024 = vand.u32 %v1560, 4294901760
        %v6025 = vsub.f32 %v1560, %v6024
        %v6026 = vand.u32 %v6025, 4294901760
        %6027 = vmatmul.mubr.f32.gmra.mrb[0].mxu0 %v6026
        %v6028 = vpop.f32.mrb[0].mxu0
        %v6029 = vadd.f32 %v5902, %v6028
        %v6030 = vpop.f32.mrb[0].mxu0
        %6031 = vmatprep.mubr.f32.mxu0 0.0
        %v6032 = vand.u32 %v1563, 4294901760
        %v6033 = vsub.f32 %v1563, %v6032
        %v6034 = vand.u32 %v6033, 4294901760
        %6035 = vmatmul.mubr.f32.gmra.mrb[0].mxu0 %v6034
        %v6036 = vpop.f32.mrb[0].mxu0
        %v6037 = vadd.f32 %v5909, %v6036
        %v6038 = vpop.f32.mrb[0].mxu0
        %6039 = vmatprep.mubr.f32.mxu0 0.0
        %v6040 = vand.u32 %v1566, 4294901760
        %v6041 = vsub.f32 %v1566, %v6040
        %v6042 = vand.u32 %v6041, 4294901760
        %6043 = vmatmul.mubr.f32.gmra.mrb[0].mxu0 %v6042
        %v6044 = vpop.f32.mrb[0].mxu0
        %v6045 = vadd.f32 %v5916, %v6044
        %v6046 = vpop.f32.mrb[0].mxu0
        %6047 = vmatprep.mubr.f32.mxu0 0.0
        %v6048 = vand.u32 %v5534, 4294901760
        %v6049 = vsub.f32 %v5534, %v6048
        %v6050 = vand.u32 %v6049, 4294901760
        %6051 = vmatmul.mubr.f32.gmra.mrb[0].mxu0 %v6050
        %v6052 = vpop.f32.mrb[0].mxu0
        %v6053 = vadd.f32 %v5923, %v6052
        %v6054 = vpop.f32.mrb[0].mxu0
        %6055 = vdwg.mxu0
        %6056 = vmatprep.subr.mxu0 0.0
        %v6057 = vand.u32 %v5537, 4294901760
        %v6058 = vsub.f32 %v5537, %v6057
        %v6059 = vand.u32 %v6058, 4294901760
        %6060 = vmatpush1.msra.mxu0 %v6059
        %6061 = vmatprep.subr.mxu0 0.0
        %6062 = vmatpush1.msra.mxu0 0.0
        %6063 = vmatprep.subr.mxu0 0.0
        %6064 = vmatpush1.msra.mxu0 0.0
        %6065 = vmatprep.subr.mxu0 0.0
        %6066 = vmatpush1.msra.mxu0 0.0
        %6067 = vmatprep.subr.mxu0 0.0
        %6068 = vmatpush1.msra.mxu0 0.0
        %6069 = vmatprep.subr.mxu0 0.0
        %6070 = vmatpush1.msra.mxu0 0.0
        %6071 = vmatprep.subr.mxu0 0.0
        %6072 = vmatpush1.msra.mxu0 0.0
        %6073 = vmatprep.subr.mxu0 0.0
        %6074 = vmatpush1.msra.mxu0 0.0
        %6075 = vmatprep.subr.mxu0 0.0
        %6076 = vmatpush1.msra.mxu0 0.0
        %6077 = vmatprep.subr.mxu0 0.0
        %6078 = vmatpush1.msra.mxu0 0.0
        %6079 = vmatprep.subr.mxu0 0.0
        %6080 = vmatpush1.msra.mxu0 0.0
        %6081 = vmatprep.subr.mxu0 0.0
        %6082 = vmatpush1.msra.mxu0 0.0
        %6083 = vmatprep.subr.mxu0 0.0
        %6084 = vmatpush1.msra.mxu0 0.0
        %6085 = vmatprep.subr.mxu0 0.0
        %6086 = vmatpush1.msra.mxu0 0.0
        %6087 = vmatprep.subr.mxu0 0.0
        %6088 = vmatpush1.msra.mxu0 0.0
        %6089 = vmatprep.subr.mxu0 0.0
        %6090 = vmatpush1.msra.mxu0 0.0
        %6091 = vmatprep.subr.mxu0 0.0
        %6092 = vmatpush1.msra.mxu0 0.0
        %6093 = vmatprep.subr.mxu0 0.0
        %6094 = vmatpush1.msra.mxu0 0.0
        %6095 = vmatprep.subr.mxu0 0.0
        %6096 = vmatpush1.msra.mxu0 0.0
        %6097 = vmatprep.subr.mxu0 0.0
        %6098 = vmatpush1.msra.mxu0 0.0
        %6099 = vmatprep.subr.mxu0 0.0
        %6100 = vmatpush1.msra.mxu0 0.0
        %6101 = vmatprep.subr.mxu0 0.0
        %6102 = vmatpush1.msra.mxu0 0.0
        %6103 = vmatprep.subr.mxu0 0.0
        %6104 = vmatpush1.msra.mxu0 0.0
        %6105 = vmatprep.subr.mxu0 0.0
        %6106 = vmatpush1.msra.mxu0 0.0
        %6107 = vmatprep.subr.mxu0 0.0
        %6108 = vmatpush1.msra.mxu0 0.0
        %6109 = vmatprep.subr.mxu0 0.0
        %6110 = vmatpush1.msra.mxu0 0.0
        %6111 = vmatprep.subr.mxu0 0.0
        %6112 = vmatpush1.msra.mxu0 0.0
        %6113 = vmatprep.subr.mxu0 0.0
        %6114 = vmatpush1.msra.mxu0 0.0
        %6115 = vmatprep.subr.mxu0 0.0
        %6116 = vmatpush1.msra.mxu0 0.0
        %6117 = vmatprep.subr.mxu0 0.0
        %6118 = vmatpush1.msra.mxu0 0.0
        %6119 = vmatprep.subr.mxu0 0.0
        %6120 = vmatpush1.msra.mxu0 0.0
        %6121 = vmatprep.subr.mxu0 0.0
        %6122 = vmatpush1.msra.mxu0 0.0
        %6123 = vmatprep.mubr.f32.mxu0 0.0
        %v6124 = vand.u32 %v1548, 4294901760
        %6125 = vmatmul.mubr.f32.gmra.mrb[0].mxu0 %v6124
        %v6126 = vpop.f32.mrb[0].mxu0
        %v6127 = vadd.f32 %v5997, %v6126
        %v6128 = vpop.f32.mrb[0].mxu0
        %6129 = vmatprep.mubr.f32.mxu0 0.0
        %v6130 = vand.u32 %v1551, 4294901760
        %6131 = vmatmul.mubr.f32.gmra.mrb[0].mxu0 %v6130
        %v6132 = vpop.f32.mrb[0].mxu0
        %v6133 = vadd.f32 %v6005, %v6132
        %v6134 = vpop.f32.mrb[0].mxu0
        %6135 = vmatprep.mubr.f32.mxu0 0.0
        %v6136 = vand.u32 %v1554, 4294901760
        %6137 = vmatmul.mubr.f32.gmra.mrb[0].mxu0 %v6136
        %v6138 = vpop.f32.mrb[0].mxu0
        %v6139 = vadd.f32 %v6013, %v6138
        %v6140 = vpop.f32.mrb[0].mxu0
        %6141 = vmatprep.mubr.f32.mxu0 0.0
        %v6142 = vand.u32 %v1557, 4294901760
        %6143 = vmatmul.mubr.f32.gmra.mrb[0].mxu0 %v6142
        %v6144 = vpop.f32.mrb[0].mxu0
        %v6145 = vadd.f32 %v6021, %v6144
        %v6146 = vpop.f32.mrb[0].mxu0
        %6147 = vmatprep.mubr.f32.mxu0 0.0
        %v6148 = vand.u32 %v1560, 4294901760
        %6149 = vmatmul.mubr.f32.gmra.mrb[0].mxu0 %v6148
        %v6150 = vpop.f32.mrb[0].mxu0
        %v6151 = vadd.f32 %v6029, %v6150
        %v6152 = vpop.f32.mrb[0].mxu0
        %6153 = vmatprep.mubr.f32.mxu0 0.0
        %v6154 = vand.u32 %v1563, 4294901760
        %6155 = vmatmul.mubr.f32.gmra.mrb[0].mxu0 %v6154
        %v6156 = vpop.f32.mrb[0].mxu0
        %v6157 = vadd.f32 %v6037, %v6156
        %v6158 = vpop.f32.mrb[0].mxu0
        %6159 = vmatprep.mubr.f32.mxu0 0.0
        %v6160 = vand.u32 %v1566, 4294901760
        %6161 = vmatmul.mubr.f32.gmra.mrb[0].mxu0 %v6160
        %v6162 = vpop.f32.mrb[0].mxu0
        %v6163 = vadd.f32 %v6045, %v6162
        %v6164 = vpop.f32.mrb[0].mxu0
        %6165 = vmatprep.mubr.f32.mxu0 0.0
        %v6166 = vand.u32 %v5534, 4294901760
        %6167 = vmatmul.mubr.f32.gmra.mrb[0].mxu0 %v6166
        %v6168 = vpop.f32.mrb[0].mxu0
        %v6169 = vadd.f32 %v6053, %v6168
        %v6170 = vpop.f32.mrb[0].mxu0
        %6171 = vdwg.mxu0
        %6172 = vmatprep.subr.mxu0 0.0
        %v6173 = vand.u32 %v5537, 4294901760
        %6174 = vmatpush1.msra.mxu0 %v6173
        %6175 = vmatprep.subr.mxu0 0.0
        %6176 = vmatpush1.msra.mxu0 0.0
        %6177 = vmatprep.subr.mxu0 0.0
        %6178 = vmatpush1.msra.mxu0 0.0
        %6179 = vmatprep.subr.mxu0 0.0
        %6180 = vmatpush1.msra.mxu0 0.0
        %6181 = vmatprep.subr.mxu0 0.0
        %6182 = vmatpush1.msra.mxu0 0.0
        %6183 = vmatprep.subr.mxu0 0.0
        %6184 = vmatpush1.msra.mxu0 0.0
        %6185 = vmatprep.subr.mxu0 0.0
        %6186 = vmatpush1.msra.mxu0 0.0
        %6187 = vmatprep.subr.mxu0 0.0
        %6188 = vmatpush1.msra.mxu0 0.0
        %6189 = vmatprep.subr.mxu0 0.0
        %6190 = vmatpush1.msra.mxu0 0.0
        %6191 = vmatprep.subr.mxu0 0.0
        %6192 = vmatpush1.msra.mxu0 0.0
        %6193 = vmatprep.subr.mxu0 0.0
        %6194 = vmatpush1.msra.mxu0 0.0
        %6195 = vmatprep.subr.mxu0 0.0
        %6196 = vmatpush1.msra.mxu0 0.0
        %6197 = vmatprep.subr.mxu0 0.0
        %6198 = vmatpush1.msra.mxu0 0.0
        %6199 = vmatprep.subr.mxu0 0.0
        %6200 = vmatpush1.msra.mxu0 0.0
        %6201 = vmatprep.subr.mxu0 0.0
        %6202 = vmatpush1.msra.mxu0 0.0
        %6203 = vmatprep.subr.mxu0 0.0
        %6204 = vmatpush1.msra.mxu0 0.0
        %6205 = vmatprep.subr.mxu0 0.0
        %6206 = vmatpush1.msra.mxu0 0.0
        %6207 = vmatprep.subr.mxu0 0.0
        %6208 = vmatpush1.msra.mxu0 0.0
        %6209 = vmatprep.subr.mxu0 0.0
        %6210 = vmatpush1.msra.mxu0 0.0
        %6211 = vmatprep.subr.mxu0 0.0
        %6212 = vmatpush1.msra.mxu0 0.0
        %6213 = vmatprep.subr.mxu0 0.0
        %6214 = vmatpush1.msra.mxu0 0.0
        %6215 = vmatprep.subr.mxu0 0.0
        %6216 = vmatpush1.msra.mxu0 0.0
        %6217 = vmatprep.subr.mxu0 0.0
        %6218 = vmatpush1.msra.mxu0 0.0
        %6219 = vmatprep.subr.mxu0 0.0
        %6220 = vmatpush1.msra.mxu0 0.0
        %6221 = vmatprep.subr.mxu0 0.0
        %6222 = vmatpush1.msra.mxu0 0.0
        %6223 = vmatprep.subr.mxu0 0.0
        %6224 = vmatpush1.msra.mxu0 0.0
        %6225 = vmatprep.subr.mxu0 0.0
        %6226 = vmatpush1.msra.mxu0 0.0
        %6227 = vmatprep.subr.mxu0 0.0
        %6228 = vmatpush1.msra.mxu0 0.0
        %6229 = vmatprep.subr.mxu0 0.0
        %6230 = vmatpush1.msra.mxu0 0.0
        %6231 = vmatprep.subr.mxu0 0.0
        %6232 = vmatpush1.msra.mxu0 0.0
        %6233 = vmatprep.subr.mxu0 0.0
        %6234 = vmatpush1.msra.mxu0 0.0
        %6235 = vmatprep.subr.mxu0 0.0
        %6236 = vmatpush1.msra.mxu0 0.0
        %6237 = vmatprep.mubr.f32.mxu0 0.0
        %v6238 = vand.u32 %v1548, 4294901760
        %6239 = vmatmul.mubr.f32.gmra.mrb[0].mxu0 %v6238
        %v6240 = vpop.f32.mrb[0].mxu0
        %v6241 = vadd.f32 %v6127, %v6240
        %v6242 = vpop.f32.mrb[0].mxu0
        %6243 = vmatprep.mubr.f32.mxu0 0.0
        %v6244 = vand.u32 %v1551, 4294901760
        %6245 = vmatmul.mubr.f32.gmra.mrb[0].mxu0 %v6244
        %v6246 = vpop.f32.mrb[0].mxu0
        %v6247 = vadd.f32 %v6133, %v6246
        %v6248 = vpop.f32.mrb[0].mxu0
        %6249 = vmatprep.mubr.f32.mxu0 0.0
        %v6250 = vand.u32 %v1554, 4294901760
        %6251 = vmatmul.mubr.f32.gmra.mrb[0].mxu0 %v6250
        %v6252 = vpop.f32.mrb[0].mxu0
        %v6253 = vadd.f32 %v6139, %v6252
        %v6254 = vpop.f32.mrb[0].mxu0
        %6255 = vmatprep.mubr.f32.mxu0 0.0
        %v6256 = vand.u32 %v1557, 4294901760
        %6257 = vmatmul.mubr.f32.gmra.mrb[0].mxu0 %v6256
        %v6258 = vpop.f32.mrb[0].mxu0
        %v6259 = vadd.f32 %v6145, %v6258
        %v6260 = vpop.f32.mrb[0].mxu0
        %6261 = vmatprep.mubr.f32.mxu0 0.0
        %v6262 = vand.u32 %v1560, 4294901760
        %6263 = vmatmul.mubr.f32.gmra.mrb[0].mxu0 %v6262
        %v6264 = vpop.f32.mrb[0].mxu0
        %v6265 = vadd.f32 %v6151, %v6264
        %v6266 = vpop.f32.mrb[0].mxu0
        %6267 = vmatprep.mubr.f32.mxu0 0.0
        %v6268 = vand.u32 %v1563, 4294901760
        %6269 = vmatmul.mubr.f32.gmra.mrb[0].mxu0 %v6268
        %v6270 = vpop.f32.mrb[0].mxu0
        %v6271 = vadd.f32 %v6157, %v6270
        %v6272 = vpop.f32.mrb[0].mxu0
        %6273 = vmatprep.mubr.f32.mxu0 0.0
        %v6274 = vand.u32 %v1566, 4294901760
        %6275 = vmatmul.mubr.f32.gmra.mrb[0].mxu0 %v6274
        %v6276 = vpop.f32.mrb[0].mxu0
        %v6277 = vadd.f32 %v6163, %v6276
        %v6278 = vpop.f32.mrb[0].mxu0
        %6279 = vmatprep.mubr.f32.mxu0 0.0
        %v6280 = vand.u32 %v5534, 4294901760
        %6281 = vmatmul.mubr.f32.gmra.mrb[0].mxu0 %v6280
        %v6282 = vpop.f32.mrb[0].mxu0
        %v6283 = vadd.f32 %v6169, %v6282
        %v6284 = vpop.f32.mrb[0].mxu0
        %6285 = vdwg.mxu0
        %v6286 = vadd.f32 %v5521, %v6241
        %v6287 = vadd.f32 %v5522, %v6247
        %v6288 = vadd.f32 %v5523, %v6253
        %v6289 = vadd.f32 %v5524, %v6259
        %v6290 = vadd.f32 %v5525, %v6265
        %v6291 = vadd.f32 %v5526, %v6271
        %v6292 = vadd.f32 %v5527, %v6277
        %v6293 = vadd.f32 %v5528, %v6283
        %s6294 = scalar_lea.vmem %s668, 16 [#allocation3]
        %v6295 = vld [vmem:[%s6294] sm:$0xff]
        %s6296 = scalar_lea.vmem %s723, 28
        %v6297 = vld [vmem:[%s6296] sm:$0xf]
        %v6299 = vsel %vm768, %v6295, 0
        %v6302 = vsel %vm793, %v6297, 0
        %6304 = vmatprep.subr.mxu0 0.0
        %v6305 = vand.u32 %v6302, 4294901760
        %6306 = vmatpush1.msra.mxu0 %v6305
        %6307 = vmatprep.subr.mxu0 0.0
        %6308 = vmatpush1.msra.mxu0 0.0
        %6309 = vmatprep.subr.mxu0 0.0
        %6310 = vmatpush1.msra.mxu0 0.0
        %6311 = vmatprep.subr.mxu0 0.0
        %6312 = vmatpush1.msra.mxu0 0.0
        %6313 = vmatprep.subr.mxu0 0.0
        %6314 = vmatpush1.msra.mxu0 0.0
        %6315 = vmatprep.subr.mxu0 0.0
        %6316 = vmatpush1.msra.mxu0 0.0
        %6317 = vmatprep.subr.mxu0 0.0
        %6318 = vmatpush1.msra.mxu0 0.0
        %6319 = vmatprep.subr.mxu0 0.0
        %6320 = vmatpush1.msra.mxu0 0.0
        %6321 = vmatprep.subr.mxu0 0.0
        %6322 = vmatpush1.msra.mxu0 0.0
        %6323 = vmatprep.subr.mxu0 0.0
        %6324 = vmatpush1.msra.mxu0 0.0
        %6325 = vmatprep.subr.mxu0 0.0
        %6326 = vmatpush1.msra.mxu0 0.0
        %6327 = vmatprep.subr.mxu0 0.0
        %6328 = vmatpush1.msra.mxu0 0.0
        %6329 = vmatprep.subr.mxu0 0.0
        %6330 = vmatpush1.msra.mxu0 0.0
        %6331 = vmatprep.subr.mxu0 0.0
        %6332 = vmatpush1.msra.mxu0 0.0
        %6333 = vmatprep.subr.mxu0 0.0
        %6334 = vmatpush1.msra.mxu0 0.0
        %6335 = vmatprep.subr.mxu0 0.0
        %6336 = vmatpush1.msra.mxu0 0.0
        %6337 = vmatprep.subr.mxu0 0.0
        %6338 = vmatpush1.msra.mxu0 0.0
        %6339 = vmatprep.subr.mxu0 0.0
        %6340 = vmatpush1.msra.mxu0 0.0
        %6341 = vmatprep.subr.mxu0 0.0
        %6342 = vmatpush1.msra.mxu0 0.0
        %6343 = vmatprep.subr.mxu0 0.0
        %6344 = vmatpush1.msra.mxu0 0.0
        %6345 = vmatprep.subr.mxu0 0.0
        %6346 = vmatpush1.msra.mxu0 0.0
        %6347 = vmatprep.subr.mxu0 0.0
        %6348 = vmatpush1.msra.mxu0 0.0
        %6349 = vmatprep.subr.mxu0 0.0
        %6350 = vmatpush1.msra.mxu0 0.0
        %6351 = vmatprep.subr.mxu0 0.0
        %6352 = vmatpush1.msra.mxu0 0.0
        %6353 = vmatprep.subr.mxu0 0.0
        %6354 = vmatpush1.msra.mxu0 0.0
        %6355 = vmatprep.subr.mxu0 0.0
        %6356 = vmatpush1.msra.mxu0 0.0
        %6357 = vmatprep.subr.mxu0 0.0
        %6358 = vmatpush1.msra.mxu0 0.0
        %6359 = vmatprep.subr.mxu0 0.0
        %6360 = vmatpush1.msra.mxu0 0.0
        %6361 = vmatprep.subr.mxu0 0.0
        %6362 = vmatpush1.msra.mxu0 0.0
        %6363 = vmatprep.subr.mxu0 0.0
        %6364 = vmatpush1.msra.mxu0 0.0
        %6365 = vmatprep.subr.mxu0 0.0
        %6366 = vmatpush1.msra.mxu0 0.0
        %6367 = vmatprep.subr.mxu0 0.0
        %6368 = vmatpush1.msra.mxu0 0.0
        %6369 = vmatprep.mubr.f32.mxu0 0.0
        %v6370 = vand.u32 %v773, 4294901760
        %v6371 = vsub.f32 %v773, %v6370
        %v6372 = vand.u32 %v6371, 4294901760
        %v6373 = vsub.f32 %v6371, %v6372
        %v6374 = vand.u32 %v6373, 4294901760
        %6375 = vmatmul.mubr.f32.gmra.mrb[0].mxu0 %v6374
        %v6376 = vpop.f32.mrb[0].mxu0
        %v6377 = vadd.f32 0.0, %v6376
        %v6378 = vpop.f32.mrb[0].mxu0
        %6379 = vmatprep.mubr.f32.mxu0 0.0
        %v6380 = vand.u32 %v776, 4294901760
        %v6381 = vsub.f32 %v776, %v6380
        %v6382 = vand.u32 %v6381, 4294901760
        %v6383 = vsub.f32 %v6381, %v6382
        %v6384 = vand.u32 %v6383, 4294901760
        %6385 = vmatmul.mubr.f32.gmra.mrb[0].mxu0 %v6384
        %v6386 = vpop.f32.mrb[0].mxu0
        %v6387 = vadd.f32 0.0, %v6386
        %v6388 = vpop.f32.mrb[0].mxu0
        %6389 = vmatprep.mubr.f32.mxu0 0.0
        %v6390 = vand.u32 %v779, 4294901760
        %v6391 = vsub.f32 %v779, %v6390
        %v6392 = vand.u32 %v6391, 4294901760
        %v6393 = vsub.f32 %v6391, %v6392
        %v6394 = vand.u32 %v6393, 4294901760
        %6395 = vmatmul.mubr.f32.gmra.mrb[0].mxu0 %v6394
        %v6396 = vpop.f32.mrb[0].mxu0
        %v6397 = vadd.f32 0.0, %v6396
        %v6398 = vpop.f32.mrb[0].mxu0
        %6399 = vmatprep.mubr.f32.mxu0 0.0
        %v6400 = vand.u32 %v782, 4294901760
        %v6401 = vsub.f32 %v782, %v6400
        %v6402 = vand.u32 %v6401, 4294901760
        %v6403 = vsub.f32 %v6401, %v6402
        %v6404 = vand.u32 %v6403, 4294901760
        %6405 = vmatmul.mubr.f32.gmra.mrb[0].mxu0 %v6404
        %v6406 = vpop.f32.mrb[0].mxu0
        %v6407 = vadd.f32 0.0, %v6406
        %v6408 = vpop.f32.mrb[0].mxu0
        %6409 = vmatprep.mubr.f32.mxu0 0.0
        %v6410 = vand.u32 %v785, 4294901760
        %v6411 = vsub.f32 %v785, %v6410
        %v6412 = vand.u32 %v6411, 4294901760
        %v6413 = vsub.f32 %v6411, %v6412
        %v6414 = vand.u32 %v6413, 4294901760
        %6415 = vmatmul.mubr.f32.gmra.mrb[0].mxu0 %v6414
        %v6416 = vpop.f32.mrb[0].mxu0
        %v6417 = vadd.f32 0.0, %v6416
        %v6418 = vpop.f32.mrb[0].mxu0
        %6419 = vmatprep.mubr.f32.mxu0 0.0
        %v6420 = vand.u32 %v788, 4294901760
        %v6421 = vsub.f32 %v788, %v6420
        %v6422 = vand.u32 %v6421, 4294901760
        %v6423 = vsub.f32 %v6421, %v6422
        %v6424 = vand.u32 %v6423, 4294901760
        %6425 = vmatmul.mubr.f32.gmra.mrb[0].mxu0 %v6424
        %v6426 = vpop.f32.mrb[0].mxu0
        %v6427 = vadd.f32 0.0, %v6426
        %v6428 = vpop.f32.mrb[0].mxu0
        %6429 = vmatprep.mubr.f32.mxu0 0.0
        %v6430 = vand.u32 %v791, 4294901760
        %v6431 = vsub.f32 %v791, %v6430
        %v6432 = vand.u32 %v6431, 4294901760
        %v6433 = vsub.f32 %v6431, %v6432
        %v6434 = vand.u32 %v6433, 4294901760
        %6435 = vmatmul.mubr.f32.gmra.mrb[0].mxu0 %v6434
        %v6436 = vpop.f32.mrb[0].mxu0
        %v6437 = vadd.f32 0.0, %v6436
        %v6438 = vpop.f32.mrb[0].mxu0
        %6439 = vmatprep.mubr.f32.mxu0 0.0
        %v6440 = vand.u32 %v6299, 4294901760
        %v6441 = vsub.f32 %v6299, %v6440
        %v6442 = vand.u32 %v6441, 4294901760
        %v6443 = vsub.f32 %v6441, %v6442
        %v6444 = vand.u32 %v6443, 4294901760
        %6445 = vmatmul.mubr.f32.gmra.mrb[0].mxu0 %v6444
        %v6446 = vpop.f32.mrb[0].mxu0
        %v6447 = vadd.f32 0.0, %v6446
        %v6448 = vpop.f32.mrb[0].mxu0
        %6449 = vdwg.mxu0
        %6450 = vmatprep.subr.mxu0 0.0
        %v6451 = vand.u32 %v6302, 4294901760
        %v6452 = vsub.f32 %v6302, %v6451
        %v6453 = vand.u32 %v6452, 4294901760
        %v6454 = vsub.f32 %v6452, %v6453
        %v6455 = vand.u32 %v6454, 4294901760
        %6456 = vmatpush1.msra.mxu0 %v6455
        %6457 = vmatprep.subr.mxu0 0.0
        %6458 = vmatpush1.msra.mxu0 0.0
        %6459 = vmatprep.subr.mxu0 0.0
        %6460 = vmatpush1.msra.mxu0 0.0
        %6461 = vmatprep.subr.mxu0 0.0
        %6462 = vmatpush1.msra.mxu0 0.0
        %6463 = vmatprep.subr.mxu0 0.0
        %6464 = vmatpush1.msra.mxu0 0.0
        %6465 = vmatprep.subr.mxu0 0.0
        %6466 = vmatpush1.msra.mxu0 0.0
        %6467 = vmatprep.subr.mxu0 0.0
        %6468 = vmatpush1.msra.mxu0 0.0
        %6469 = vmatprep.subr.mxu0 0.0
        %6470 = vmatpush1.msra.mxu0 0.0
        %6471 = vmatprep.subr.mxu0 0.0
        %6472 = vmatpush1.msra.mxu0 0.0
        %6473 = vmatprep.subr.mxu0 0.0
        %6474 = vmatpush1.msra.mxu0 0.0
        %6475 = vmatprep.subr.mxu0 0.0
        %6476 = vmatpush1.msra.mxu0 0.0
        %6477 = vmatprep.subr.mxu0 0.0
        %6478 = vmatpush1.msra.mxu0 0.0
        %6479 = vmatprep.subr.mxu0 0.0
        %6480 = vmatpush1.msra.mxu0 0.0
        %6481 = vmatprep.subr.mxu0 0.0
        %6482 = vmatpush1.msra.mxu0 0.0
        %6483 = vmatprep.subr.mxu0 0.0
        %6484 = vmatpush1.msra.mxu0 0.0
        %6485 = vmatprep.subr.mxu0 0.0
        %6486 = vmatpush1.msra.mxu0 0.0
        %6487 = vmatprep.subr.mxu0 0.0
        %6488 = vmatpush1.msra.mxu0 0.0
        %6489 = vmatprep.subr.mxu0 0.0
        %6490 = vmatpush1.msra.mxu0 0.0
        %6491 = vmatprep.subr.mxu0 0.0
        %6492 = vmatpush1.msra.mxu0 0.0
        %6493 = vmatprep.subr.mxu0 0.0
        %6494 = vmatpush1.msra.mxu0 0.0
        %6495 = vmatprep.subr.mxu0 0.0
        %6496 = vmatpush1.msra.mxu0 0.0
        %6497 = vmatprep.subr.mxu0 0.0
        %6498 = vmatpush1.msra.mxu0 0.0
        %6499 = vmatprep.subr.mxu0 0.0
        %6500 = vmatpush1.msra.mxu0 0.0
        %6501 = vmatprep.subr.mxu0 0.0
        %6502 = vmatpush1.msra.mxu0 0.0
        %6503 = vmatprep.subr.mxu0 0.0
        %6504 = vmatpush1.msra.mxu0 0.0
        %6505 = vmatprep.subr.mxu0 0.0
        %6506 = vmatpush1.msra.mxu0 0.0
        %6507 = vmatprep.subr.mxu0 0.0
        %6508 = vmatpush1.msra.mxu0 0.0
        %6509 = vmatprep.subr.mxu0 0.0
        %6510 = vmatpush1.msra.mxu0 0.0
        %6511 = vmatprep.subr.mxu0 0.0
        %6512 = vmatpush1.msra.mxu0 0.0
        %6513 = vmatprep.subr.mxu0 0.0
        %6514 = vmatpush1.msra.mxu0 0.0
        %6515 = vmatprep.subr.mxu0 0.0
        %6516 = vmatpush1.msra.mxu0 0.0
        %6517 = vmatprep.subr.mxu0 0.0
        %6518 = vmatpush1.msra.mxu0 0.0
        %6519 = vmatprep.mubr.f32.mxu0 0.0
        %v6520 = vand.u32 %v773, 4294901760
        %6521 = vmatmul.mubr.f32.gmra.mrb[0].mxu0 %v6520
        %v6522 = vpop.f32.mrb[0].mxu0
        %v6523 = vadd.f32 %v6377, %v6522
        %v6524 = vpop.f32.mrb[0].mxu0
        %6525 = vmatprep.mubr.f32.mxu0 0.0
        %v6526 = vand.u32 %v776, 4294901760
        %6527 = vmatmul.mubr.f32.gmra.mrb[0].mxu0 %v6526
        %v6528 = vpop.f32.mrb[0].mxu0
        %v6529 = vadd.f32 %v6387, %v6528
        %v6530 = vpop.f32.mrb[0].mxu0
        %6531 = vmatprep.mubr.f32.mxu0 0.0
        %v6532 = vand.u32 %v779, 4294901760
        %6533 = vmatmul.mubr.f32.gmra.mrb[0].mxu0 %v6532
        %v6534 = vpop.f32.mrb[0].mxu0
        %v6535 = vadd.f32 %v6397, %v6534
        %v6536 = vpop.f32.mrb[0].mxu0
        %6537 = vmatprep.mubr.f32.mxu0 0.0
        %v6538 = vand.u32 %v782, 4294901760
        %6539 = vmatmul.mubr.f32.gmra.mrb[0].mxu0 %v6538
        %v6540 = vpop.f32.mrb[0].mxu0
        %v6541 = vadd.f32 %v6407, %v6540
        %v6542 = vpop.f32.mrb[0].mxu0
        %6543 = vmatprep.mubr.f32.mxu0 0.0
        %v6544 = vand.u32 %v785, 4294901760
        %6545 = vmatmul.mubr.f32.gmra.mrb[0].mxu0 %v6544
        %v6546 = vpop.f32.mrb[0].mxu0
        %v6547 = vadd.f32 %v6417, %v6546
        %v6548 = vpop.f32.mrb[0].mxu0
        %6549 = vmatprep.mubr.f32.mxu0 0.0
        %v6550 = vand.u32 %v788, 4294901760
        %6551 = vmatmul.mubr.f32.gmra.mrb[0].mxu0 %v6550
        %v6552 = vpop.f32.mrb[0].mxu0
        %v6553 = vadd.f32 %v6427, %v6552
        %v6554 = vpop.f32.mrb[0].mxu0
        %6555 = vmatprep.mubr.f32.mxu0 0.0
        %v6556 = vand.u32 %v791, 4294901760
        %6557 = vmatmul.mubr.f32.gmra.mrb[0].mxu0 %v6556
        %v6558 = vpop.f32.mrb[0].mxu0
        %v6559 = vadd.f32 %v6437, %v6558
        %v6560 = vpop.f32.mrb[0].mxu0
        %6561 = vmatprep.mubr.f32.mxu0 0.0
        %v6562 = vand.u32 %v6299, 4294901760
        %6563 = vmatmul.mubr.f32.gmra.mrb[0].mxu0 %v6562
        %v6564 = vpop.f32.mrb[0].mxu0
        %v6565 = vadd.f32 %v6447, %v6564
        %v6566 = vpop.f32.mrb[0].mxu0
        %6567 = vdwg.mxu0
        %6568 = vmatprep.subr.mxu0 0.0
        %v6569 = vand.u32 %v6302, 4294901760
        %v6570 = vsub.f32 %v6302, %v6569
        %6571 = vmatpush1.msra.mxu0 %v6570
        %6572 = vmatprep.subr.mxu0 0.0
        %6573 = vmatpush1.msra.mxu0 0.0
        %6574 = vmatprep.subr.mxu0 0.0
        %6575 = vmatpush1.msra.mxu0 0.0
        %6576 = vmatprep.subr.mxu0 0.0
        %6577 = vmatpush1.msra.mxu0 0.0
        %6578 = vmatprep.subr.mxu0 0.0
        %6579 = vmatpush1.msra.mxu0 0.0
        %6580 = vmatprep.subr.mxu0 0.0
        %6581 = vmatpush1.msra.mxu0 0.0
        %6582 = vmatprep.subr.mxu0 0.0
        %6583 = vmatpush1.msra.mxu0 0.0
        %6584 = vmatprep.subr.mxu0 0.0
        %6585 = vmatpush1.msra.mxu0 0.0
        %6586 = vmatprep.subr.mxu0 0.0
        %6587 = vmatpush1.msra.mxu0 0.0
        %6588 = vmatprep.subr.mxu0 0.0
        %6589 = vmatpush1.msra.mxu0 0.0
        %6590 = vmatprep.subr.mxu0 0.0
        %6591 = vmatpush1.msra.mxu0 0.0
        %6592 = vmatprep.subr.mxu0 0.0
        %6593 = vmatpush1.msra.mxu0 0.0
        %6594 = vmatprep.subr.mxu0 0.0
        %6595 = vmatpush1.msra.mxu0 0.0
        %6596 = vmatprep.subr.mxu0 0.0
        %6597 = vmatpush1.msra.mxu0 0.0
        %6598 = vmatprep.subr.mxu0 0.0
        %6599 = vmatpush1.msra.mxu0 0.0
        %6600 = vmatprep.subr.mxu0 0.0
        %6601 = vmatpush1.msra.mxu0 0.0
        %6602 = vmatprep.subr.mxu0 0.0
        %6603 = vmatpush1.msra.mxu0 0.0
        %6604 = vmatprep.subr.mxu0 0.0
        %6605 = vmatpush1.msra.mxu0 0.0
        %6606 = vmatprep.subr.mxu0 0.0
        %6607 = vmatpush1.msra.mxu0 0.0
        %6608 = vmatprep.subr.mxu0 0.0
        %6609 = vmatpush1.msra.mxu0 0.0
        %6610 = vmatprep.subr.mxu0 0.0
        %6611 = vmatpush1.msra.mxu0 0.0
        %6612 = vmatprep.subr.mxu0 0.0
        %6613 = vmatpush1.msra.mxu0 0.0
        %6614 = vmatprep.subr.mxu0 0.0
        %6615 = vmatpush1.msra.mxu0 0.0
        %6616 = vmatprep.subr.mxu0 0.0
        %6617 = vmatpush1.msra.mxu0 0.0
        %6618 = vmatprep.subr.mxu0 0.0
        %6619 = vmatpush1.msra.mxu0 0.0
        %6620 = vmatprep.subr.mxu0 0.0
        %6621 = vmatpush1.msra.mxu0 0.0
        %6622 = vmatprep.subr.mxu0 0.0
        %6623 = vmatpush1.msra.mxu0 0.0
        %6624 = vmatprep.subr.mxu0 0.0
        %6625 = vmatpush1.msra.mxu0 0.0
        %6626 = vmatprep.subr.mxu0 0.0
        %6627 = vmatpush1.msra.mxu0 0.0
        %6628 = vmatprep.subr.mxu0 0.0
        %6629 = vmatpush1.msra.mxu0 0.0
        %6630 = vmatprep.subr.mxu0 0.0
        %6631 = vmatpush1.msra.mxu0 0.0
        %6632 = vmatprep.subr.mxu0 0.0
        %6633 = vmatpush1.msra.mxu0 0.0
        %6634 = vmatprep.mubr.f32.mxu0 0.0
        %v6635 = vand.u32 %v773, 4294901760
        %v6636 = vsub.f32 %v773, %v6635
        %6637 = vmatmul.mubr.f32.gmra.mrb[0].mxu0 %v6636
        %v6638 = vpop.f32.mrb[0].mxu0
        %v6639 = vadd.f32 %v6523, %v6638
        %v6640 = vpop.f32.mrb[0].mxu0
        %6641 = vmatprep.mubr.f32.mxu0 0.0
        %v6642 = vand.u32 %v776, 4294901760
        %v6643 = vsub.f32 %v776, %v6642
        %6644 = vmatmul.mubr.f32.gmra.mrb[0].mxu0 %v6643
        %v6645 = vpop.f32.mrb[0].mxu0
        %v6646 = vadd.f32 %v6529, %v6645
        %v6647 = vpop.f32.mrb[0].mxu0
        %6648 = vmatprep.mubr.f32.mxu0 0.0
        %v6649 = vand.u32 %v779, 4294901760
        %v6650 = vsub.f32 %v779, %v6649
        %6651 = vmatmul.mubr.f32.gmra.mrb[0].mxu0 %v6650
        %v6652 = vpop.f32.mrb[0].mxu0
        %v6653 = vadd.f32 %v6535, %v6652
        %v6654 = vpop.f32.mrb[0].mxu0
        %6655 = vmatprep.mubr.f32.mxu0 0.0
        %v6656 = vand.u32 %v782, 4294901760
        %v6657 = vsub.f32 %v782, %v6656
        %6658 = vmatmul.mubr.f32.gmra.mrb[0].mxu0 %v6657
        %v6659 = vpop.f32.mrb[0].mxu0
        %v6660 = vadd.f32 %v6541, %v6659
        %v6661 = vpop.f32.mrb[0].mxu0
        %6662 = vmatprep.mubr.f32.mxu0 0.0
        %v6663 = vand.u32 %v785, 4294901760
        %v6664 = vsub.f32 %v785, %v6663
        %6665 = vmatmul.mubr.f32.gmra.mrb[0].mxu0 %v6664
        %v6666 = vpop.f32.mrb[0].mxu0
        %v6667 = vadd.f32 %v6547, %v6666
        %v6668 = vpop.f32.mrb[0].mxu0
        %6669 = vmatprep.mubr.f32.mxu0 0.0
        %v6670 = vand.u32 %v788, 4294901760
        %v6671 = vsub.f32 %v788, %v6670
        %6672 = vmatmul.mubr.f32.gmra.mrb[0].mxu0 %v6671
        %v6673 = vpop.f32.mrb[0].mxu0
        %v6674 = vadd.f32 %v6553, %v6673
        %v6675 = vpop.f32.mrb[0].mxu0
        %6676 = vmatprep.mubr.f32.mxu0 0.0
        %v6677 = vand.u32 %v791, 4294901760
        %v6678 = vsub.f32 %v791, %v6677
        %6679 = vmatmul.mubr.f32.gmra.mrb[0].mxu0 %v6678
        %v6680 = vpop.f32.mrb[0].mxu0
        %v6681 = vadd.f32 %v6559, %v6680
        %v6682 = vpop.f32.mrb[0].mxu0
        %6683 = vmatprep.mubr.f32.mxu0 0.0
        %v6684 = vand.u32 %v6299, 4294901760
        %v6685 = vsub.f32 %v6299, %v6684
        %6686 = vmatmul.mubr.f32.gmra.mrb[0].mxu0 %v6685
        %v6687 = vpop.f32.mrb[0].mxu0
        %v6688 = vadd.f32 %v6565, %v6687
        %v6689 = vpop.f32.mrb[0].mxu0
        %6690 = vdwg.mxu0
        %6691 = vmatprep.subr.mxu0 0.0
        %v6692 = vand.u32 %v6302, 4294901760
        %6693 = vmatpush1.msra.mxu0 %v6692
        %6694 = vmatprep.subr.mxu0 0.0
        %6695 = vmatpush1.msra.mxu0 0.0
        %6696 = vmatprep.subr.mxu0 0.0
        %6697 = vmatpush1.msra.mxu0 0.0
        %6698 = vmatprep.subr.mxu0 0.0
        %6699 = vmatpush1.msra.mxu0 0.0
        %6700 = vmatprep.subr.mxu0 0.0
        %6701 = vmatpush1.msra.mxu0 0.0
        %6702 = vmatprep.subr.mxu0 0.0
        %6703 = vmatpush1.msra.mxu0 0.0
        %6704 = vmatprep.subr.mxu0 0.0
        %6705 = vmatpush1.msra.mxu0 0.0
        %6706 = vmatprep.subr.mxu0 0.0
        %6707 = vmatpush1.msra.mxu0 0.0
        %6708 = vmatprep.subr.mxu0 0.0
        %6709 = vmatpush1.msra.mxu0 0.0
        %6710 = vmatprep.subr.mxu0 0.0
        %6711 = vmatpush1.msra.mxu0 0.0
        %6712 = vmatprep.subr.mxu0 0.0
        %6713 = vmatpush1.msra.mxu0 0.0
        %6714 = vmatprep.subr.mxu0 0.0
        %6715 = vmatpush1.msra.mxu0 0.0
        %6716 = vmatprep.subr.mxu0 0.0
        %6717 = vmatpush1.msra.mxu0 0.0
        %6718 = vmatprep.subr.mxu0 0.0
        %6719 = vmatpush1.msra.mxu0 0.0
        %6720 = vmatprep.subr.mxu0 0.0
        %6721 = vmatpush1.msra.mxu0 0.0
        %6722 = vmatprep.subr.mxu0 0.0
        %6723 = vmatpush1.msra.mxu0 0.0
        %6724 = vmatprep.subr.mxu0 0.0
        %6725 = vmatpush1.msra.mxu0 0.0
        %6726 = vmatprep.subr.mxu0 0.0
        %6727 = vmatpush1.msra.mxu0 0.0
        %6728 = vmatprep.subr.mxu0 0.0
        %6729 = vmatpush1.msra.mxu0 0.0
        %6730 = vmatprep.subr.mxu0 0.0
        %6731 = vmatpush1.msra.mxu0 0.0
        %6732 = vmatprep.subr.mxu0 0.0
        %6733 = vmatpush1.msra.mxu0 0.0
        %6734 = vmatprep.subr.mxu0 0.0
        %6735 = vmatpush1.msra.mxu0 0.0
        %6736 = vmatprep.subr.mxu0 0.0
        %6737 = vmatpush1.msra.mxu0 0.0
        %6738 = vmatprep.subr.mxu0 0.0
        %6739 = vmatpush1.msra.mxu0 0.0
        %6740 = vmatprep.subr.mxu0 0.0
        %6741 = vmatpush1.msra.mxu0 0.0
        %6742 = vmatprep.subr.mxu0 0.0
        %6743 = vmatpush1.msra.mxu0 0.0
        %6744 = vmatprep.subr.mxu0 0.0
        %6745 = vmatpush1.msra.mxu0 0.0
        %6746 = vmatprep.subr.mxu0 0.0
        %6747 = vmatpush1.msra.mxu0 0.0
        %6748 = vmatprep.subr.mxu0 0.0
        %6749 = vmatpush1.msra.mxu0 0.0
        %6750 = vmatprep.subr.mxu0 0.0
        %6751 = vmatpush1.msra.mxu0 0.0
        %6752 = vmatprep.subr.mxu0 0.0
        %6753 = vmatpush1.msra.mxu0 0.0
        %6754 = vmatprep.subr.mxu0 0.0
        %6755 = vmatpush1.msra.mxu0 0.0
        %6756 = vmatprep.mubr.f32.mxu0 0.0
        %v6757 = vand.u32 %v773, 4294901760
        %v6758 = vsub.f32 %v773, %v6757
        %v6759 = vand.u32 %v6758, 4294901760
        %6760 = vmatmul.mubr.f32.gmra.mrb[0].mxu0 %v6759
        %v6761 = vpop.f32.mrb[0].mxu0
        %v6762 = vadd.f32 %v6639, %v6761
        %v6763 = vpop.f32.mrb[0].mxu0
        %6764 = vmatprep.mubr.f32.mxu0 0.0
        %v6765 = vand.u32 %v776, 4294901760
        %v6766 = vsub.f32 %v776, %v6765
        %v6767 = vand.u32 %v6766, 4294901760
        %6768 = vmatmul.mubr.f32.gmra.mrb[0].mxu0 %v6767
        %v6769 = vpop.f32.mrb[0].mxu0
        %v6770 = vadd.f32 %v6646, %v6769
        %v6771 = vpop.f32.mrb[0].mxu0
        %6772 = vmatprep.mubr.f32.mxu0 0.0
        %v6773 = vand.u32 %v779, 4294901760
        %v6774 = vsub.f32 %v779, %v6773
        %v6775 = vand.u32 %v6774, 4294901760
        %6776 = vmatmul.mubr.f32.gmra.mrb[0].mxu0 %v6775
        %v6777 = vpop.f32.mrb[0].mxu0
        %v6778 = vadd.f32 %v6653, %v6777
        %v6779 = vpop.f32.mrb[0].mxu0
        %6780 = vmatprep.mubr.f32.mxu0 0.0
        %v6781 = vand.u32 %v782, 4294901760
        %v6782 = vsub.f32 %v782, %v6781
        %v6783 = vand.u32 %v6782, 4294901760
        %6784 = vmatmul.mubr.f32.gmra.mrb[0].mxu0 %v6783
        %v6785 = vpop.f32.mrb[0].mxu0
        %v6786 = vadd.f32 %v6660, %v6785
        %v6787 = vpop.f32.mrb[0].mxu0
        %6788 = vmatprep.mubr.f32.mxu0 0.0
        %v6789 = vand.u32 %v785, 4294901760
        %v6790 = vsub.f32 %v785, %v6789
        %v6791 = vand.u32 %v6790, 4294901760
        %6792 = vmatmul.mubr.f32.gmra.mrb[0].mxu0 %v6791
        %v6793 = vpop.f32.mrb[0].mxu0
        %v6794 = vadd.f32 %v6667, %v6793
        %v6795 = vpop.f32.mrb[0].mxu0
        %6796 = vmatprep.mubr.f32.mxu0 0.0
        %v6797 = vand.u32 %v788, 4294901760
        %v6798 = vsub.f32 %v788, %v6797
        %v6799 = vand.u32 %v6798, 4294901760
        %6800 = vmatmul.mubr.f32.gmra.mrb[0].mxu0 %v6799
        %v6801 = vpop.f32.mrb[0].mxu0
        %v6802 = vadd.f32 %v6674, %v6801
        %v6803 = vpop.f32.mrb[0].mxu0
        %6804 = vmatprep.mubr.f32.mxu0 0.0
        %v6805 = vand.u32 %v791, 4294901760
        %v6806 = vsub.f32 %v791, %v6805
        %v6807 = vand.u32 %v6806, 4294901760
        %6808 = vmatmul.mubr.f32.gmra.mrb[0].mxu0 %v6807
        %v6809 = vpop.f32.mrb[0].mxu0
        %v6810 = vadd.f32 %v6681, %v6809
        %v6811 = vpop.f32.mrb[0].mxu0
        %6812 = vmatprep.mubr.f32.mxu0 0.0
        %v6813 = vand.u32 %v6299, 4294901760
        %v6814 = vsub.f32 %v6299, %v6813
        %v6815 = vand.u32 %v6814, 4294901760
        %6816 = vmatmul.mubr.f32.gmra.mrb[0].mxu0 %v6815
        %v6817 = vpop.f32.mrb[0].mxu0
        %v6818 = vadd.f32 %v6688, %v6817
        %v6819 = vpop.f32.mrb[0].mxu0
        %6820 = vdwg.mxu0
        %6821 = vmatprep.subr.mxu0 0.0
        %v6822 = vand.u32 %v6302, 4294901760
        %v6823 = vsub.f32 %v6302, %v6822
        %v6824 = vand.u32 %v6823, 4294901760
        %6825 = vmatpush1.msra.mxu0 %v6824
        %6826 = vmatprep.subr.mxu0 0.0
        %6827 = vmatpush1.msra.mxu0 0.0
        %6828 = vmatprep.subr.mxu0 0.0
        %6829 = vmatpush1.msra.mxu0 0.0
        %6830 = vmatprep.subr.mxu0 0.0
        %6831 = vmatpush1.msra.mxu0 0.0
        %6832 = vmatprep.subr.mxu0 0.0
        %6833 = vmatpush1.msra.mxu0 0.0
        %6834 = vmatprep.subr.mxu0 0.0
        %6835 = vmatpush1.msra.mxu0 0.0
        %6836 = vmatprep.subr.mxu0 0.0
        %6837 = vmatpush1.msra.mxu0 0.0
        %6838 = vmatprep.subr.mxu0 0.0
        %6839 = vmatpush1.msra.mxu0 0.0
        %6840 = vmatprep.subr.mxu0 0.0
        %6841 = vmatpush1.msra.mxu0 0.0
        %6842 = vmatprep.subr.mxu0 0.0
        %6843 = vmatpush1.msra.mxu0 0.0
        %6844 = vmatprep.subr.mxu0 0.0
        %6845 = vmatpush1.msra.mxu0 0.0
        %6846 = vmatprep.subr.mxu0 0.0
        %6847 = vmatpush1.msra.mxu0 0.0
        %6848 = vmatprep.subr.mxu0 0.0
        %6849 = vmatpush1.msra.mxu0 0.0
        %6850 = vmatprep.subr.mxu0 0.0
        %6851 = vmatpush1.msra.mxu0 0.0
        %6852 = vmatprep.subr.mxu0 0.0
        %6853 = vmatpush1.msra.mxu0 0.0
        %6854 = vmatprep.subr.mxu0 0.0
        %6855 = vmatpush1.msra.mxu0 0.0
        %6856 = vmatprep.subr.mxu0 0.0
        %6857 = vmatpush1.msra.mxu0 0.0
        %6858 = vmatprep.subr.mxu0 0.0
        %6859 = vmatpush1.msra.mxu0 0.0
        %6860 = vmatprep.subr.mxu0 0.0
        %6861 = vmatpush1.msra.mxu0 0.0
        %6862 = vmatprep.subr.mxu0 0.0
        %6863 = vmatpush1.msra.mxu0 0.0
        %6864 = vmatprep.subr.mxu0 0.0
        %6865 = vmatpush1.msra.mxu0 0.0
        %6866 = vmatprep.subr.mxu0 0.0
        %6867 = vmatpush1.msra.mxu0 0.0
        %6868 = vmatprep.subr.mxu0 0.0
        %6869 = vmatpush1.msra.mxu0 0.0
        %6870 = vmatprep.subr.mxu0 0.0
        %6871 = vmatpush1.msra.mxu0 0.0
        %6872 = vmatprep.subr.mxu0 0.0
        %6873 = vmatpush1.msra.mxu0 0.0
        %6874 = vmatprep.subr.mxu0 0.0
        %6875 = vmatpush1.msra.mxu0 0.0
        %6876 = vmatprep.subr.mxu0 0.0
        %6877 = vmatpush1.msra.mxu0 0.0
        %6878 = vmatprep.subr.mxu0 0.0
        %6879 = vmatpush1.msra.mxu0 0.0
        %6880 = vmatprep.subr.mxu0 0.0
        %6881 = vmatpush1.msra.mxu0 0.0
        %6882 = vmatprep.subr.mxu0 0.0
        %6883 = vmatpush1.msra.mxu0 0.0
        %6884 = vmatprep.subr.mxu0 0.0
        %6885 = vmatpush1.msra.mxu0 0.0
        %6886 = vmatprep.subr.mxu0 0.0
        %6887 = vmatpush1.msra.mxu0 0.0
        %6888 = vmatprep.mubr.f32.mxu0 0.0
        %v6889 = vand.u32 %v773, 4294901760
        %6890 = vmatmul.mubr.f32.gmra.mrb[0].mxu0 %v6889
        %v6891 = vpop.f32.mrb[0].mxu0
        %v6892 = vadd.f32 %v6762, %v6891
        %v6893 = vpop.f32.mrb[0].mxu0
        %6894 = vmatprep.mubr.f32.mxu0 0.0
        %v6895 = vand.u32 %v776, 4294901760
        %6896 = vmatmul.mubr.f32.gmra.mrb[0].mxu0 %v6895
        %v6897 = vpop.f32.mrb[0].mxu0
        %v6898 = vadd.f32 %v6770, %v6897
        %v6899 = vpop.f32.mrb[0].mxu0
        %6900 = vmatprep.mubr.f32.mxu0 0.0
        %v6901 = vand.u32 %v779, 4294901760
        %6902 = vmatmul.mubr.f32.gmra.mrb[0].mxu0 %v6901
        %v6903 = vpop.f32.mrb[0].mxu0
        %v6904 = vadd.f32 %v6778, %v6903
        %v6905 = vpop.f32.mrb[0].mxu0
        %6906 = vmatprep.mubr.f32.mxu0 0.0
        %v6907 = vand.u32 %v782, 4294901760
        %6908 = vmatmul.mubr.f32.gmra.mrb[0].mxu0 %v6907
        %v6909 = vpop.f32.mrb[0].mxu0
        %v6910 = vadd.f32 %v6786, %v6909
        %v6911 = vpop.f32.mrb[0].mxu0
        %6912 = vmatprep.mubr.f32.mxu0 0.0
        %v6913 = vand.u32 %v785, 4294901760
        %6914 = vmatmul.mubr.f32.gmra.mrb[0].mxu0 %v6913
        %v6915 = vpop.f32.mrb[0].mxu0
        %v6916 = vadd.f32 %v6794, %v6915
        %v6917 = vpop.f32.mrb[0].mxu0
        %6918 = vmatprep.mubr.f32.mxu0 0.0
        %v6919 = vand.u32 %v788, 4294901760
        %6920 = vmatmul.mubr.f32.gmra.mrb[0].mxu0 %v6919
        %v6921 = vpop.f32.mrb[0].mxu0
        %v6922 = vadd.f32 %v6802, %v6921
        %v6923 = vpop.f32.mrb[0].mxu0
        %6924 = vmatprep.mubr.f32.mxu0 0.0
        %v6925 = vand.u32 %v791, 4294901760
        %6926 = vmatmul.mubr.f32.gmra.mrb[0].mxu0 %v6925
        %v6927 = vpop.f32.mrb[0].mxu0
        %v6928 = vadd.f32 %v6810, %v6927
        %v6929 = vpop.f32.mrb[0].mxu0
        %6930 = vmatprep.mubr.f32.mxu0 0.0
        %v6931 = vand.u32 %v6299, 4294901760
        %6932 = vmatmul.mubr.f32.gmra.mrb[0].mxu0 %v6931
        %v6933 = vpop.f32.mrb[0].mxu0
        %v6934 = vadd.f32 %v6818, %v6933
        %v6935 = vpop.f32.mrb[0].mxu0
        %6936 = vdwg.mxu0
        %6937 = vmatprep.subr.mxu0 0.0
        %v6938 = vand.u32 %v6302, 4294901760
        %6939 = vmatpush1.msra.mxu0 %v6938
        %6940 = vmatprep.subr.mxu0 0.0
        %6941 = vmatpush1.msra.mxu0 0.0
        %6942 = vmatprep.subr.mxu0 0.0
        %6943 = vmatpush1.msra.mxu0 0.0
        %6944 = vmatprep.subr.mxu0 0.0
        %6945 = vmatpush1.msra.mxu0 0.0
        %6946 = vmatprep.subr.mxu0 0.0
        %6947 = vmatpush1.msra.mxu0 0.0
        %6948 = vmatprep.subr.mxu0 0.0
        %6949 = vmatpush1.msra.mxu0 0.0
        %6950 = vmatprep.subr.mxu0 0.0
        %6951 = vmatpush1.msra.mxu0 0.0
        %6952 = vmatprep.subr.mxu0 0.0
        %6953 = vmatpush1.msra.mxu0 0.0
        %6954 = vmatprep.subr.mxu0 0.0
        %6955 = vmatpush1.msra.mxu0 0.0
        %6956 = vmatprep.subr.mxu0 0.0
        %6957 = vmatpush1.msra.mxu0 0.0
        %6958 = vmatprep.subr.mxu0 0.0
        %6959 = vmatpush1.msra.mxu0 0.0
        %6960 = vmatprep.subr.mxu0 0.0
        %6961 = vmatpush1.msra.mxu0 0.0
        %6962 = vmatprep.subr.mxu0 0.0
        %6963 = vmatpush1.msra.mxu0 0.0
        %6964 = vmatprep.subr.mxu0 0.0
        %6965 = vmatpush1.msra.mxu0 0.0
        %6966 = vmatprep.subr.mxu0 0.0
        %6967 = vmatpush1.msra.mxu0 0.0
        %6968 = vmatprep.subr.mxu0 0.0
        %6969 = vmatpush1.msra.mxu0 0.0
        %6970 = vmatprep.subr.mxu0 0.0
        %6971 = vmatpush1.msra.mxu0 0.0
        %6972 = vmatprep.subr.mxu0 0.0
        %6973 = vmatpush1.msra.mxu0 0.0
        %6974 = vmatprep.subr.mxu0 0.0
        %6975 = vmatpush1.msra.mxu0 0.0
        %6976 = vmatprep.subr.mxu0 0.0
        %6977 = vmatpush1.msra.mxu0 0.0
        %6978 = vmatprep.subr.mxu0 0.0
        %6979 = vmatpush1.msra.mxu0 0.0
        %6980 = vmatprep.subr.mxu0 0.0
        %6981 = vmatpush1.msra.mxu0 0.0
        %6982 = vmatprep.subr.mxu0 0.0
        %6983 = vmatpush1.msra.mxu0 0.0
        %6984 = vmatprep.subr.mxu0 0.0
        %6985 = vmatpush1.msra.mxu0 0.0
        %6986 = vmatprep.subr.mxu0 0.0
        %6987 = vmatpush1.msra.mxu0 0.0
        %6988 = vmatprep.subr.mxu0 0.0
        %6989 = vmatpush1.msra.mxu0 0.0
        %6990 = vmatprep.subr.mxu0 0.0
        %6991 = vmatpush1.msra.mxu0 0.0
        %6992 = vmatprep.subr.mxu0 0.0
        %6993 = vmatpush1.msra.mxu0 0.0
        %6994 = vmatprep.subr.mxu0 0.0
        %6995 = vmatpush1.msra.mxu0 0.0
        %6996 = vmatprep.subr.mxu0 0.0
        %6997 = vmatpush1.msra.mxu0 0.0
        %6998 = vmatprep.subr.mxu0 0.0
        %6999 = vmatpush1.msra.mxu0 0.0
        %7000 = vmatprep.subr.mxu0 0.0
        %7001 = vmatpush1.msra.mxu0 0.0
        %7002 = vmatprep.mubr.f32.mxu0 0.0
        %v7003 = vand.u32 %v773, 4294901760
        %7004 = vmatmul.mubr.f32.gmra.mrb[0].mxu0 %v7003
        %v7005 = vpop.f32.mrb[0].mxu0
        %v7006 = vadd.f32 %v6892, %v7005
        %v7007 = vpop.f32.mrb[0].mxu0
        %7008 = vmatprep.mubr.f32.mxu0 0.0
        %v7009 = vand.u32 %v776, 4294901760
        %7010 = vmatmul.mubr.f32.gmra.mrb[0].mxu0 %v7009
        %v7011 = vpop.f32.mrb[0].mxu0
        %v7012 = vadd.f32 %v6898, %v7011
        %v7013 = vpop.f32.mrb[0].mxu0
        %7014 = vmatprep.mubr.f32.mxu0 0.0
        %v7015 = vand.u32 %v779, 4294901760
        %7016 = vmatmul.mubr.f32.gmra.mrb[0].mxu0 %v7015
        %v7017 = vpop.f32.mrb[0].mxu0
        %v7018 = vadd.f32 %v6904, %v7017
        %v7019 = vpop.f32.mrb[0].mxu0
        %7020 = vmatprep.mubr.f32.mxu0 0.0
        %v7021 = vand.u32 %v782, 4294901760
        %7022 = vmatmul.mubr.f32.gmra.mrb[0].mxu0 %v7021
        %v7023 = vpop.f32.mrb[0].mxu0
        %v7024 = vadd.f32 %v6910, %v7023
        %v7025 = vpop.f32.mrb[0].mxu0
        %7026 = vmatprep.mubr.f32.mxu0 0.0
        %v7027 = vand.u32 %v785, 4294901760
        %7028 = vmatmul.mubr.f32.gmra.mrb[0].mxu0 %v7027
        %v7029 = vpop.f32.mrb[0].mxu0
        %v7030 = vadd.f32 %v6916, %v7029
        %v7031 = vpop.f32.mrb[0].mxu0
        %7032 = vmatprep.mubr.f32.mxu0 0.0
        %v7033 = vand.u32 %v788, 4294901760
        %7034 = vmatmul.mubr.f32.gmra.mrb[0].mxu0 %v7033
        %v7035 = vpop.f32.mrb[0].mxu0
        %v7036 = vadd.f32 %v6922, %v7035
        %v7037 = vpop.f32.mrb[0].mxu0
        %7038 = vmatprep.mubr.f32.mxu0 0.0
        %v7039 = vand.u32 %v791, 4294901760
        %7040 = vmatmul.mubr.f32.gmra.mrb[0].mxu0 %v7039
        %v7041 = vpop.f32.mrb[0].mxu0
        %v7042 = vadd.f32 %v6928, %v7041
        %v7043 = vpop.f32.mrb[0].mxu0
        %7044 = vmatprep.mubr.f32.mxu0 0.0
        %v7045 = vand.u32 %v6299, 4294901760
        %7046 = vmatmul.mubr.f32.gmra.mrb[0].mxu0 %v7045
        %v7047 = vpop.f32.mrb[0].mxu0
        %v7048 = vadd.f32 %v6934, %v7047
        %v7049 = vpop.f32.mrb[0].mxu0
        %7050 = vdwg.mxu0
        %v7051 = vadd.f32 %v6286, %v7006
        %v7052 = vadd.f32 %v6287, %v7012
        %v7053 = vadd.f32 %v6288, %v7018
        %v7054 = vadd.f32 %v6289, %v7024
        %v7055 = vadd.f32 %v6290, %v7030
        %v7056 = vadd.f32 %v6291, %v7036
        %v7057 = vadd.f32 %v6292, %v7042
        %v7058 = vadd.f32 %v6293, %v7048
        %v7060 = vrot.slane %v5529, 1
        %v7061 = vrot.slane %v5530, 1
        %v7062 = vsel %vm2326, %v7060, %v7061
        %s7063 = scalar_lea.vmem %s723, 32
        %v7064 = vld [vmem:[%s7063] sm:$0xf]
        %v7065 = vsel %vm768, %v7062, 0
        %v7068 = vsel %vm793, %v7064, 0
        %7070 = vmatprep.subr.mxu0 0.0
        %v7071 = vand.u32 %v7068, 4294901760
        %7072 = vmatpush1.msra.mxu0 %v7071
        %7073 = vmatprep.subr.mxu0 0.0
        %7074 = vmatpush1.msra.mxu0 0.0
        %7075 = vmatprep.subr.mxu0 0.0
        %7076 = vmatpush1.msra.mxu0 0.0
        %7077 = vmatprep.subr.mxu0 0.0
        %7078 = vmatpush1.msra.mxu0 0.0
        %7079 = vmatprep.subr.mxu0 0.0
        %7080 = vmatpush1.msra.mxu0 0.0
        %7081 = vmatprep.subr.mxu0 0.0
        %7082 = vmatpush1.msra.mxu0 0.0
        %7083 = vmatprep.subr.mxu0 0.0
        %7084 = vmatpush1.msra.mxu0 0.0
        %7085 = vmatprep.subr.mxu0 0.0
        %7086 = vmatpush1.msra.mxu0 0.0
        %7087 = vmatprep.subr.mxu0 0.0
        %7088 = vmatpush1.msra.mxu0 0.0
        %7089 = vmatprep.subr.mxu0 0.0
        %7090 = vmatpush1.msra.mxu0 0.0
        %7091 = vmatprep.subr.mxu0 0.0
        %7092 = vmatpush1.msra.mxu0 0.0
        %7093 = vmatprep.subr.mxu0 0.0
        %7094 = vmatpush1.msra.mxu0 0.0
        %7095 = vmatprep.subr.mxu0 0.0
        %7096 = vmatpush1.msra.mxu0 0.0
        %7097 = vmatprep.subr.mxu0 0.0
        %7098 = vmatpush1.msra.mxu0 0.0
        %7099 = vmatprep.subr.mxu0 0.0
        %7100 = vmatpush1.msra.mxu0 0.0
        %7101 = vmatprep.subr.mxu0 0.0
        %7102 = vmatpush1.msra.mxu0 0.0
        %7103 = vmatprep.subr.mxu0 0.0
        %7104 = vmatpush1.msra.mxu0 0.0
        %7105 = vmatprep.subr.mxu0 0.0
        %7106 = vmatpush1.msra.mxu0 0.0
        %7107 = vmatprep.subr.mxu0 0.0
        %7108 = vmatpush1.msra.mxu0 0.0
        %7109 = vmatprep.subr.mxu0 0.0
        %7110 = vmatpush1.msra.mxu0 0.0
        %7111 = vmatprep.subr.mxu0 0.0
        %7112 = vmatpush1.msra.mxu0 0.0
        %7113 = vmatprep.subr.mxu0 0.0
        %7114 = vmatpush1.msra.mxu0 0.0
        %7115 = vmatprep.subr.mxu0 0.0
        %7116 = vmatpush1.msra.mxu0 0.0
        %7117 = vmatprep.subr.mxu0 0.0
        %7118 = vmatpush1.msra.mxu0 0.0
        %7119 = vmatprep.subr.mxu0 0.0
        %7120 = vmatpush1.msra.mxu0 0.0
        %7121 = vmatprep.subr.mxu0 0.0
        %7122 = vmatpush1.msra.mxu0 0.0
        %7123 = vmatprep.subr.mxu0 0.0
        %7124 = vmatpush1.msra.mxu0 0.0
        %7125 = vmatprep.subr.mxu0 0.0
        %7126 = vmatpush1.msra.mxu0 0.0
        %7127 = vmatprep.subr.mxu0 0.0
        %7128 = vmatpush1.msra.mxu0 0.0
        %7129 = vmatprep.subr.mxu0 0.0
        %7130 = vmatpush1.msra.mxu0 0.0
        %7131 = vmatprep.subr.mxu0 0.0
        %7132 = vmatpush1.msra.mxu0 0.0
        %7133 = vmatprep.subr.mxu0 0.0
        %7134 = vmatpush1.msra.mxu0 0.0
        %7135 = vmatprep.mubr.f32.mxu0 0.0
        %v7136 = vand.u32 %v2355, 4294901760
        %v7137 = vsub.f32 %v2355, %v7136
        %v7138 = vand.u32 %v7137, 4294901760
        %v7139 = vsub.f32 %v7137, %v7138
        %v7140 = vand.u32 %v7139, 4294901760
        %7141 = vmatmul.mubr.f32.gmra.mrb[0].mxu0 %v7140
        %v7142 = vpop.f32.mrb[0].mxu0
        %v7143 = vadd.f32 0.0, %v7142
        %v7144 = vpop.f32.mrb[0].mxu0
        %7145 = vmatprep.mubr.f32.mxu0 0.0
        %v7146 = vand.u32 %v2357, 4294901760
        %v7147 = vsub.f32 %v2357, %v7146
        %v7148 = vand.u32 %v7147, 4294901760
        %v7149 = vsub.f32 %v7147, %v7148
        %v7150 = vand.u32 %v7149, 4294901760
        %7151 = vmatmul.mubr.f32.gmra.mrb[0].mxu0 %v7150
        %v7152 = vpop.f32.mrb[0].mxu0
        %v7153 = vadd.f32 0.0, %v7152
        %v7154 = vpop.f32.mrb[0].mxu0
        %7155 = vmatprep.mubr.f32.mxu0 0.0
        %v7156 = vand.u32 %v2359, 4294901760
        %v7157 = vsub.f32 %v2359, %v7156
        %v7158 = vand.u32 %v7157, 4294901760
        %v7159 = vsub.f32 %v7157, %v7158
        %v7160 = vand.u32 %v7159, 4294901760
        %7161 = vmatmul.mubr.f32.gmra.mrb[0].mxu0 %v7160
        %v7162 = vpop.f32.mrb[0].mxu0
        %v7163 = vadd.f32 0.0, %v7162
        %v7164 = vpop.f32.mrb[0].mxu0
        %7165 = vmatprep.mubr.f32.mxu0 0.0
        %v7166 = vand.u32 %v2361, 4294901760
        %v7167 = vsub.f32 %v2361, %v7166
        %v7168 = vand.u32 %v7167, 4294901760
        %v7169 = vsub.f32 %v7167, %v7168
        %v7170 = vand.u32 %v7169, 4294901760
        %7171 = vmatmul.mubr.f32.gmra.mrb[0].mxu0 %v7170
        %v7172 = vpop.f32.mrb[0].mxu0
        %v7173 = vadd.f32 0.0, %v7172
        %v7174 = vpop.f32.mrb[0].mxu0
        %7175 = vmatprep.mubr.f32.mxu0 0.0
        %v7176 = vand.u32 %v2363, 4294901760
        %v7177 = vsub.f32 %v2363, %v7176
        %v7178 = vand.u32 %v7177, 4294901760
        %v7179 = vsub.f32 %v7177, %v7178
        %v7180 = vand.u32 %v7179, 4294901760
        %7181 = vmatmul.mubr.f32.gmra.mrb[0].mxu0 %v7180
        %v7182 = vpop.f32.mrb[0].mxu0
        %v7183 = vadd.f32 0.0, %v7182
        %v7184 = vpop.f32.mrb[0].mxu0
        %7185 = vmatprep.mubr.f32.mxu0 0.0
        %v7186 = vand.u32 %v2365, 4294901760
        %v7187 = vsub.f32 %v2365, %v7186
        %v7188 = vand.u32 %v7187, 4294901760
        %v7189 = vsub.f32 %v7187, %v7188
        %v7190 = vand.u32 %v7189, 4294901760
        %7191 = vmatmul.mubr.f32.gmra.mrb[0].mxu0 %v7190
        %v7192 = vpop.f32.mrb[0].mxu0
        %v7193 = vadd.f32 0.0, %v7192
        %v7194 = vpop.f32.mrb[0].mxu0
        %7195 = vmatprep.mubr.f32.mxu0 0.0
        %v7196 = vand.u32 %v2367, 4294901760
        %v7197 = vsub.f32 %v2367, %v7196
        %v7198 = vand.u32 %v7197, 4294901760
        %v7199 = vsub.f32 %v7197, %v7198
        %v7200 = vand.u32 %v7199, 4294901760
        %7201 = vmatmul.mubr.f32.gmra.mrb[0].mxu0 %v7200
        %v7202 = vpop.f32.mrb[0].mxu0
        %v7203 = vadd.f32 0.0, %v7202
        %v7204 = vpop.f32.mrb[0].mxu0
        %7205 = vmatprep.mubr.f32.mxu0 0.0
        %v7206 = vand.u32 %v7065, 4294901760
        %v7207 = vsub.f32 %v7065, %v7206
        %v7208 = vand.u32 %v7207, 4294901760
        %v7209 = vsub.f32 %v7207, %v7208
        %v7210 = vand.u32 %v7209, 4294901760
        %7211 = vmatmul.mubr.f32.gmra.mrb[0].mxu0 %v7210
        %v7212 = vpop.f32.mrb[0].mxu0
        %v7213 = vadd.f32 0.0, %v7212
        %v7214 = vpop.f32.mrb[0].mxu0
        %7215 = vdwg.mxu0
        %7216 = vmatprep.subr.mxu0 0.0
        %v7217 = vand.u32 %v7068, 4294901760
        %v7218 = vsub.f32 %v7068, %v7217
        %v7219 = vand.u32 %v7218, 4294901760
        %v7220 = vsub.f32 %v7218, %v7219
        %v7221 = vand.u32 %v7220, 4294901760
        %7222 = vmatpush1.msra.mxu0 %v7221
        %7223 = vmatprep.subr.mxu0 0.0
        %7224 = vmatpush1.msra.mxu0 0.0
        %7225 = vmatprep.subr.mxu0 0.0
        %7226 = vmatpush1.msra.mxu0 0.0
        %7227 = vmatprep.subr.mxu0 0.0
        %7228 = vmatpush1.msra.mxu0 0.0
        %7229 = vmatprep.subr.mxu0 0.0
        %7230 = vmatpush1.msra.mxu0 0.0
        %7231 = vmatprep.subr.mxu0 0.0
        %7232 = vmatpush1.msra.mxu0 0.0
        %7233 = vmatprep.subr.mxu0 0.0
        %7234 = vmatpush1.msra.mxu0 0.0
        %7235 = vmatprep.subr.mxu0 0.0
        %7236 = vmatpush1.msra.mxu0 0.0
        %7237 = vmatprep.subr.mxu0 0.0
        %7238 = vmatpush1.msra.mxu0 0.0
        %7239 = vmatprep.subr.mxu0 0.0
        %7240 = vmatpush1.msra.mxu0 0.0
        %7241 = vmatprep.subr.mxu0 0.0
        %7242 = vmatpush1.msra.mxu0 0.0
        %7243 = vmatprep.subr.mxu0 0.0
        %7244 = vmatpush1.msra.mxu0 0.0
        %7245 = vmatprep.subr.mxu0 0.0
        %7246 = vmatpush1.msra.mxu0 0.0
        %7247 = vmatprep.subr.mxu0 0.0
        %7248 = vmatpush1.msra.mxu0 0.0
        %7249 = vmatprep.subr.mxu0 0.0
        %7250 = vmatpush1.msra.mxu0 0.0
        %7251 = vmatprep.subr.mxu0 0.0
        %7252 = vmatpush1.msra.mxu0 0.0
        %7253 = vmatprep.subr.mxu0 0.0
        %7254 = vmatpush1.msra.mxu0 0.0
        %7255 = vmatprep.subr.mxu0 0.0
        %7256 = vmatpush1.msra.mxu0 0.0
        %7257 = vmatprep.subr.mxu0 0.0
        %7258 = vmatpush1.msra.mxu0 0.0
        %7259 = vmatprep.subr.mxu0 0.0
        %7260 = vmatpush1.msra.mxu0 0.0
        %7261 = vmatprep.subr.mxu0 0.0
        %7262 = vmatpush1.msra.mxu0 0.0
        %7263 = vmatprep.subr.mxu0 0.0
        %7264 = vmatpush1.msra.mxu0 0.0
        %7265 = vmatprep.subr.mxu0 0.0
        %7266 = vmatpush1.msra.mxu0 0.0
        %7267 = vmatprep.subr.mxu0 0.0
        %7268 = vmatpush1.msra.mxu0 0.0
        %7269 = vmatprep.subr.mxu0 0.0
        %7270 = vmatpush1.msra.mxu0 0.0
        %7271 = vmatprep.subr.mxu0 0.0
        %7272 = vmatpush1.msra.mxu0 0.0
        %7273 = vmatprep.subr.mxu0 0.0
        %7274 = vmatpush1.msra.mxu0 0.0
        %7275 = vmatprep.subr.mxu0 0.0
        %7276 = vmatpush1.msra.mxu0 0.0
        %7277 = vmatprep.subr.mxu0 0.0
        %7278 = vmatpush1.msra.mxu0 0.0
        %7279 = vmatprep.subr.mxu0 0.0
        %7280 = vmatpush1.msra.mxu0 0.0
        %7281 = vmatprep.subr.mxu0 0.0
        %7282 = vmatpush1.msra.mxu0 0.0
        %7283 = vmatprep.subr.mxu0 0.0
        %7284 = vmatpush1.msra.mxu0 0.0
        %7285 = vmatprep.mubr.f32.mxu0 0.0
        %v7286 = vand.u32 %v2355, 4294901760
        %7287 = vmatmul.mubr.f32.gmra.mrb[0].mxu0 %v7286
        %v7288 = vpop.f32.mrb[0].mxu0
        %v7289 = vadd.f32 %v7143, %v7288
        %v7290 = vpop.f32.mrb[0].mxu0
        %7291 = vmatprep.mubr.f32.mxu0 0.0
        %v7292 = vand.u32 %v2357, 4294901760
        %7293 = vmatmul.mubr.f32.gmra.mrb[0].mxu0 %v7292
        %v7294 = vpop.f32.mrb[0].mxu0
        %v7295 = vadd.f32 %v7153, %v7294
        %v7296 = vpop.f32.mrb[0].mxu0
        %7297 = vmatprep.mubr.f32.mxu0 0.0
        %v7298 = vand.u32 %v2359, 4294901760
        %7299 = vmatmul.mubr.f32.gmra.mrb[0].mxu0 %v7298
        %v7300 = vpop.f32.mrb[0].mxu0
        %v7301 = vadd.f32 %v7163, %v7300
        %v7302 = vpop.f32.mrb[0].mxu0
        %7303 = vmatprep.mubr.f32.mxu0 0.0
        %v7304 = vand.u32 %v2361, 4294901760
        %7305 = vmatmul.mubr.f32.gmra.mrb[0].mxu0 %v7304
        %v7306 = vpop.f32.mrb[0].mxu0
        %v7307 = vadd.f32 %v7173, %v7306
        %v7308 = vpop.f32.mrb[0].mxu0
        %7309 = vmatprep.mubr.f32.mxu0 0.0
        %v7310 = vand.u32 %v2363, 4294901760
        %7311 = vmatmul.mubr.f32.gmra.mrb[0].mxu0 %v7310
        %v7312 = vpop.f32.mrb[0].mxu0
        %v7313 = vadd.f32 %v7183, %v7312
        %v7314 = vpop.f32.mrb[0].mxu0
        %7315 = vmatprep.mubr.f32.mxu0 0.0
        %v7316 = vand.u32 %v2365, 4294901760
        %7317 = vmatmul.mubr.f32.gmra.mrb[0].mxu0 %v7316
        %v7318 = vpop.f32.mrb[0].mxu0
        %v7319 = vadd.f32 %v7193, %v7318
        %v7320 = vpop.f32.mrb[0].mxu0
        %7321 = vmatprep.mubr.f32.mxu0 0.0
        %v7322 = vand.u32 %v2367, 4294901760
        %7323 = vmatmul.mubr.f32.gmra.mrb[0].mxu0 %v7322
        %v7324 = vpop.f32.mrb[0].mxu0
        %v7325 = vadd.f32 %v7203, %v7324
        %v7326 = vpop.f32.mrb[0].mxu0
        %7327 = vmatprep.mubr.f32.mxu0 0.0
        %v7328 = vand.u32 %v7065, 4294901760
        %7329 = vmatmul.mubr.f32.gmra.mrb[0].mxu0 %v7328
        %v7330 = vpop.f32.mrb[0].mxu0
        %v7331 = vadd.f32 %v7213, %v7330
        %v7332 = vpop.f32.mrb[0].mxu0
        %7333 = vdwg.mxu0
        %7334 = vmatprep.subr.mxu0 0.0
        %v7335 = vand.u32 %v7068, 4294901760
        %v7336 = vsub.f32 %v7068, %v7335
        %7337 = vmatpush1.msra.mxu0 %v7336
        %7338 = vmatprep.subr.mxu0 0.0
        %7339 = vmatpush1.msra.mxu0 0.0
        %7340 = vmatprep.subr.mxu0 0.0
        %7341 = vmatpush1.msra.mxu0 0.0
        %7342 = vmatprep.subr.mxu0 0.0
        %7343 = vmatpush1.msra.mxu0 0.0
        %7344 = vmatprep.subr.mxu0 0.0
        %7345 = vmatpush1.msra.mxu0 0.0
        %7346 = vmatprep.subr.mxu0 0.0
        %7347 = vmatpush1.msra.mxu0 0.0
        %7348 = vmatprep.subr.mxu0 0.0
        %7349 = vmatpush1.msra.mxu0 0.0
        %7350 = vmatprep.subr.mxu0 0.0
        %7351 = vmatpush1.msra.mxu0 0.0
        %7352 = vmatprep.subr.mxu0 0.0
        %7353 = vmatpush1.msra.mxu0 0.0
        %7354 = vmatprep.subr.mxu0 0.0
        %7355 = vmatpush1.msra.mxu0 0.0
        %7356 = vmatprep.subr.mxu0 0.0
        %7357 = vmatpush1.msra.mxu0 0.0
        %7358 = vmatprep.subr.mxu0 0.0
        %7359 = vmatpush1.msra.mxu0 0.0
        %7360 = vmatprep.subr.mxu0 0.0
        %7361 = vmatpush1.msra.mxu0 0.0
        %7362 = vmatprep.subr.mxu0 0.0
        %7363 = vmatpush1.msra.mxu0 0.0
        %7364 = vmatprep.subr.mxu0 0.0
        %7365 = vmatpush1.msra.mxu0 0.0
        %7366 = vmatprep.subr.mxu0 0.0
        %7367 = vmatpush1.msra.mxu0 0.0
        %7368 = vmatprep.subr.mxu0 0.0
        %7369 = vmatpush1.msra.mxu0 0.0
        %7370 = vmatprep.subr.mxu0 0.0
        %7371 = vmatpush1.msra.mxu0 0.0
        %7372 = vmatprep.subr.mxu0 0.0
        %7373 = vmatpush1.msra.mxu0 0.0
        %7374 = vmatprep.subr.mxu0 0.0
        %7375 = vmatpush1.msra.mxu0 0.0
        %7376 = vmatprep.subr.mxu0 0.0
        %7377 = vmatpush1.msra.mxu0 0.0
        %7378 = vmatprep.subr.mxu0 0.0
        %7379 = vmatpush1.msra.mxu0 0.0
        %7380 = vmatprep.subr.mxu0 0.0
        %7381 = vmatpush1.msra.mxu0 0.0
        %7382 = vmatprep.subr.mxu0 0.0
        %7383 = vmatpush1.msra.mxu0 0.0
        %7384 = vmatprep.subr.mxu0 0.0
        %7385 = vmatpush1.msra.mxu0 0.0
        %7386 = vmatprep.subr.mxu0 0.0
        %7387 = vmatpush1.msra.mxu0 0.0
        %7388 = vmatprep.subr.mxu0 0.0
        %7389 = vmatpush1.msra.mxu0 0.0
        %7390 = vmatprep.subr.mxu0 0.0
        %7391 = vmatpush1.msra.mxu0 0.0
        %7392 = vmatprep.subr.mxu0 0.0
        %7393 = vmatpush1.msra.mxu0 0.0
        %7394 = vmatprep.subr.mxu0 0.0
        %7395 = vmatpush1.msra.mxu0 0.0
        %7396 = vmatprep.subr.mxu0 0.0
        %7397 = vmatpush1.msra.mxu0 0.0
        %7398 = vmatprep.subr.mxu0 0.0
        %7399 = vmatpush1.msra.mxu0 0.0
        %7400 = vmatprep.mubr.f32.mxu0 0.0
        %v7401 = vand.u32 %v2355, 4294901760
        %v7402 = vsub.f32 %v2355, %v7401
        %7403 = vmatmul.mubr.f32.gmra.mrb[0].mxu0 %v7402
        %v7404 = vpop.f32.mrb[0].mxu0
        %v7405 = vadd.f32 %v7289, %v7404
        %v7406 = vpop.f32.mrb[0].mxu0
        %7407 = vmatprep.mubr.f32.mxu0 0.0
        %v7408 = vand.u32 %v2357, 4294901760
        %v7409 = vsub.f32 %v2357, %v7408
        %7410 = vmatmul.mubr.f32.gmra.mrb[0].mxu0 %v7409
        %v7411 = vpop.f32.mrb[0].mxu0
        %v7412 = vadd.f32 %v7295, %v7411
        %v7413 = vpop.f32.mrb[0].mxu0
        %7414 = vmatprep.mubr.f32.mxu0 0.0
        %v7415 = vand.u32 %v2359, 4294901760
        %v7416 = vsub.f32 %v2359, %v7415
        %7417 = vmatmul.mubr.f32.gmra.mrb[0].mxu0 %v7416
        %v7418 = vpop.f32.mrb[0].mxu0
        %v7419 = vadd.f32 %v7301, %v7418
        %v7420 = vpop.f32.mrb[0].mxu0
        %7421 = vmatprep.mubr.f32.mxu0 0.0
        %v7422 = vand.u32 %v2361, 4294901760
        %v7423 = vsub.f32 %v2361, %v7422
        %7424 = vmatmul.mubr.f32.gmra.mrb[0].mxu0 %v7423
        %v7425 = vpop.f32.mrb[0].mxu0
        %v7426 = vadd.f32 %v7307, %v7425
        %v7427 = vpop.f32.mrb[0].mxu0
        %7428 = vmatprep.mubr.f32.mxu0 0.0
        %v7429 = vand.u32 %v2363, 4294901760
        %v7430 = vsub.f32 %v2363, %v7429
        %7431 = vmatmul.mubr.f32.gmra.mrb[0].mxu0 %v7430
        %v7432 = vpop.f32.mrb[0].mxu0
        %v7433 = vadd.f32 %v7313, %v7432
        %v7434 = vpop.f32.mrb[0].mxu0
        %7435 = vmatprep.mubr.f32.mxu0 0.0
        %v7436 = vand.u32 %v2365, 4294901760
        %v7437 = vsub.f32 %v2365, %v7436
        %7438 = vmatmul.mubr.f32.gmra.mrb[0].mxu0 %v7437
        %v7439 = vpop.f32.mrb[0].mxu0
        %v7440 = vadd.f32 %v7319, %v7439
        %v7441 = vpop.f32.mrb[0].mxu0
        %7442 = vmatprep.mubr.f32.mxu0 0.0
        %v7443 = vand.u32 %v2367, 4294901760
        %v7444 = vsub.f32 %v2367, %v7443
        %7445 = vmatmul.mubr.f32.gmra.mrb[0].mxu0 %v7444
        %v7446 = vpop.f32.mrb[0].mxu0
        %v7447 = vadd.f32 %v7325, %v7446
        %v7448 = vpop.f32.mrb[0].mxu0
        %7449 = vmatprep.mubr.f32.mxu0 0.0
        %v7450 = vand.u32 %v7065, 4294901760
        %v7451 = vsub.f32 %v7065, %v7450
        %7452 = vmatmul.mubr.f32.gmra.mrb[0].mxu0 %v7451
        %v7453 = vpop.f32.mrb[0].mxu0
        %v7454 = vadd.f32 %v7331, %v7453
        %v7455 = vpop.f32.mrb[0].mxu0
        %7456 = vdwg.mxu0
        %7457 = vmatprep.subr.mxu0 0.0
        %v7458 = vand.u32 %v7068, 4294901760
        %7459 = vmatpush1.msra.mxu0 %v7458
        %7460 = vmatprep.subr.mxu0 0.0
        %7461 = vmatpush1.msra.mxu0 0.0
        %7462 = vmatprep.subr.mxu0 0.0
        %7463 = vmatpush1.msra.mxu0 0.0
        %7464 = vmatprep.subr.mxu0 0.0
        %7465 = vmatpush1.msra.mxu0 0.0
        %7466 = vmatprep.subr.mxu0 0.0
        %7467 = vmatpush1.msra.mxu0 0.0
        %7468 = vmatprep.subr.mxu0 0.0
        %7469 = vmatpush1.msra.mxu0 0.0
        %7470 = vmatprep.subr.mxu0 0.0
        %7471 = vmatpush1.msra.mxu0 0.0
        %7472 = vmatprep.subr.mxu0 0.0
        %7473 = vmatpush1.msra.mxu0 0.0
        %7474 = vmatprep.subr.mxu0 0.0
        %7475 = vmatpush1.msra.mxu0 0.0
        %7476 = vmatprep.subr.mxu0 0.0
        %7477 = vmatpush1.msra.mxu0 0.0
        %7478 = vmatprep.subr.mxu0 0.0
        %7479 = vmatpush1.msra.mxu0 0.0
        %7480 = vmatprep.subr.mxu0 0.0
        %7481 = vmatpush1.msra.mxu0 0.0
        %7482 = vmatprep.subr.mxu0 0.0
        %7483 = vmatpush1.msra.mxu0 0.0
        %7484 = vmatprep.subr.mxu0 0.0
        %7485 = vmatpush1.msra.mxu0 0.0
        %7486 = vmatprep.subr.mxu0 0.0
        %7487 = vmatpush1.msra.mxu0 0.0
        %7488 = vmatprep.subr.mxu0 0.0
        %7489 = vmatpush1.msra.mxu0 0.0
        %7490 = vmatprep.subr.mxu0 0.0
        %7491 = vmatpush1.msra.mxu0 0.0
        %7492 = vmatprep.subr.mxu0 0.0
        %7493 = vmatpush1.msra.mxu0 0.0
        %7494 = vmatprep.subr.mxu0 0.0
        %7495 = vmatpush1.msra.mxu0 0.0
        %7496 = vmatprep.subr.mxu0 0.0
        %7497 = vmatpush1.msra.mxu0 0.0
        %7498 = vmatprep.subr.mxu0 0.0
        %7499 = vmatpush1.msra.mxu0 0.0
        %7500 = vmatprep.subr.mxu0 0.0
        %7501 = vmatpush1.msra.mxu0 0.0
        %7502 = vmatprep.subr.mxu0 0.0
        %7503 = vmatpush1.msra.mxu0 0.0
        %7504 = vmatprep.subr.mxu0 0.0
        %7505 = vmatpush1.msra.mxu0 0.0
        %7506 = vmatprep.subr.mxu0 0.0
        %7507 = vmatpush1.msra.mxu0 0.0
        %7508 = vmatprep.subr.mxu0 0.0
        %7509 = vmatpush1.msra.mxu0 0.0
        %7510 = vmatprep.subr.mxu0 0.0
        %7511 = vmatpush1.msra.mxu0 0.0
        %7512 = vmatprep.subr.mxu0 0.0
        %7513 = vmatpush1.msra.mxu0 0.0
        %7514 = vmatprep.subr.mxu0 0.0
        %7515 = vmatpush1.msra.mxu0 0.0
        %7516 = vmatprep.subr.mxu0 0.0
        %7517 = vmatpush1.msra.mxu0 0.0
        %7518 = vmatprep.subr.mxu0 0.0
        %7519 = vmatpush1.msra.mxu0 0.0
        %7520 = vmatprep.subr.mxu0 0.0
        %7521 = vmatpush1.msra.mxu0 0.0
        %7522 = vmatprep.mubr.f32.mxu0 0.0
        %v7523 = vand.u32 %v2355, 4294901760
        %v7524 = vsub.f32 %v2355, %v7523
        %v7525 = vand.u32 %v7524, 4294901760
        %7526 = vmatmul.mubr.f32.gmra.mrb[0].mxu0 %v7525
        %v7527 = vpop.f32.mrb[0].mxu0
        %v7528 = vadd.f32 %v7405, %v7527
        %v7529 = vpop.f32.mrb[0].mxu0
        %7530 = vmatprep.mubr.f32.mxu0 0.0
        %v7531 = vand.u32 %v2357, 4294901760
        %v7532 = vsub.f32 %v2357, %v7531
        %v7533 = vand.u32 %v7532, 4294901760
        %7534 = vmatmul.mubr.f32.gmra.mrb[0].mxu0 %v7533
        %v7535 = vpop.f32.mrb[0].mxu0
        %v7536 = vadd.f32 %v7412, %v7535
        %v7537 = vpop.f32.mrb[0].mxu0
        %7538 = vmatprep.mubr.f32.mxu0 0.0
        %v7539 = vand.u32 %v2359, 4294901760
        %v7540 = vsub.f32 %v2359, %v7539
        %v7541 = vand.u32 %v7540, 4294901760
        %7542 = vmatmul.mubr.f32.gmra.mrb[0].mxu0 %v7541
        %v7543 = vpop.f32.mrb[0].mxu0
        %v7544 = vadd.f32 %v7419, %v7543
        %v7545 = vpop.f32.mrb[0].mxu0
        %7546 = vmatprep.mubr.f32.mxu0 0.0
        %v7547 = vand.u32 %v2361, 4294901760
        %v7548 = vsub.f32 %v2361, %v7547
        %v7549 = vand.u32 %v7548, 4294901760
        %7550 = vmatmul.mubr.f32.gmra.mrb[0].mxu0 %v7549
        %v7551 = vpop.f32.mrb[0].mxu0
        %v7552 = vadd.f32 %v7426, %v7551
        %v7553 = vpop.f32.mrb[0].mxu0
        %7554 = vmatprep.mubr.f32.mxu0 0.0
        %v7555 = vand.u32 %v2363, 4294901760
        %v7556 = vsub.f32 %v2363, %v7555
        %v7557 = vand.u32 %v7556, 4294901760
        %7558 = vmatmul.mubr.f32.gmra.mrb[0].mxu0 %v7557
        %v7559 = vpop.f32.mrb[0].mxu0
        %v7560 = vadd.f32 %v7433, %v7559
        %v7561 = vpop.f32.mrb[0].mxu0
        %7562 = vmatprep.mubr.f32.mxu0 0.0
        %v7563 = vand.u32 %v2365, 4294901760
        %v7564 = vsub.f32 %v2365, %v7563
        %v7565 = vand.u32 %v7564, 4294901760
        %7566 = vmatmul.mubr.f32.gmra.mrb[0].mxu0 %v7565
        %v7567 = vpop.f32.mrb[0].mxu0
        %v7568 = vadd.f32 %v7440, %v7567
        %v7569 = vpop.f32.mrb[0].mxu0
        %7570 = vmatprep.mubr.f32.mxu0 0.0
        %v7571 = vand.u32 %v2367, 4294901760
        %v7572 = vsub.f32 %v2367, %v7571
        %v7573 = vand.u32 %v7572, 4294901760
        %7574 = vmatmul.mubr.f32.gmra.mrb[0].mxu0 %v7573
        %v7575 = vpop.f32.mrb[0].mxu0
        %v7576 = vadd.f32 %v7447, %v7575
        %v7577 = vpop.f32.mrb[0].mxu0
        %7578 = vmatprep.mubr.f32.mxu0 0.0
        %v7579 = vand.u32 %v7065, 4294901760
        %v7580 = vsub.f32 %v7065, %v7579
        %v7581 = vand.u32 %v7580, 4294901760
        %7582 = vmatmul.mubr.f32.gmra.mrb[0].mxu0 %v7581
        %v7583 = vpop.f32.mrb[0].mxu0
        %v7584 = vadd.f32 %v7454, %v7583
        %v7585 = vpop.f32.mrb[0].mxu0
        %7586 = vdwg.mxu0
        %7587 = vmatprep.subr.mxu0 0.0
        %v7588 = vand.u32 %v7068, 4294901760
        %v7589 = vsub.f32 %v7068, %v7588
        %v7590 = vand.u32 %v7589, 4294901760
        %7591 = vmatpush1.msra.mxu0 %v7590
        %7592 = vmatprep.subr.mxu0 0.0
        %7593 = vmatpush1.msra.mxu0 0.0
        %7594 = vmatprep.subr.mxu0 0.0
        %7595 = vmatpush1.msra.mxu0 0.0
        %7596 = vmatprep.subr.mxu0 0.0
        %7597 = vmatpush1.msra.mxu0 0.0
        %7598 = vmatprep.subr.mxu0 0.0
        %7599 = vmatpush1.msra.mxu0 0.0
        %7600 = vmatprep.subr.mxu0 0.0
        %7601 = vmatpush1.msra.mxu0 0.0
        %7602 = vmatprep.subr.mxu0 0.0
        %7603 = vmatpush1.msra.mxu0 0.0
        %7604 = vmatprep.subr.mxu0 0.0
        %7605 = vmatpush1.msra.mxu0 0.0
        %7606 = vmatprep.subr.mxu0 0.0
        %7607 = vmatpush1.msra.mxu0 0.0
        %7608 = vmatprep.subr.mxu0 0.0
        %7609 = vmatpush1.msra.mxu0 0.0
        %7610 = vmatprep.subr.mxu0 0.0
        %7611 = vmatpush1.msra.mxu0 0.0
        %7612 = vmatprep.subr.mxu0 0.0
        %7613 = vmatpush1.msra.mxu0 0.0
        %7614 = vmatprep.subr.mxu0 0.0
        %7615 = vmatpush1.msra.mxu0 0.0
        %7616 = vmatprep.subr.mxu0 0.0
        %7617 = vmatpush1.msra.mxu0 0.0
        %7618 = vmatprep.subr.mxu0 0.0
        %7619 = vmatpush1.msra.mxu0 0.0
        %7620 = vmatprep.subr.mxu0 0.0
        %7621 = vmatpush1.msra.mxu0 0.0
        %7622 = vmatprep.subr.mxu0 0.0
        %7623 = vmatpush1.msra.mxu0 0.0
        %7624 = vmatprep.subr.mxu0 0.0
        %7625 = vmatpush1.msra.mxu0 0.0
        %7626 = vmatprep.subr.mxu0 0.0
        %7627 = vmatpush1.msra.mxu0 0.0
        %7628 = vmatprep.subr.mxu0 0.0
        %7629 = vmatpush1.msra.mxu0 0.0
        %7630 = vmatprep.subr.mxu0 0.0
        %7631 = vmatpush1.msra.mxu0 0.0
        %7632 = vmatprep.subr.mxu0 0.0
        %7633 = vmatpush1.msra.mxu0 0.0
        %7634 = vmatprep.subr.mxu0 0.0
        %7635 = vmatpush1.msra.mxu0 0.0
        %7636 = vmatprep.subr.mxu0 0.0
        %7637 = vmatpush1.msra.mxu0 0.0
        %7638 = vmatprep.subr.mxu0 0.0
        %7639 = vmatpush1.msra.mxu0 0.0
        %7640 = vmatprep.subr.mxu0 0.0
        %7641 = vmatpush1.msra.mxu0 0.0
        %7642 = vmatprep.subr.mxu0 0.0
        %7643 = vmatpush1.msra.mxu0 0.0
        %7644 = vmatprep.subr.mxu0 0.0
        %7645 = vmatpush1.msra.mxu0 0.0
        %7646 = vmatprep.subr.mxu0 0.0
        %7647 = vmatpush1.msra.mxu0 0.0
        %7648 = vmatprep.subr.mxu0 0.0
        %7649 = vmatpush1.msra.mxu0 0.0
        %7650 = vmatprep.subr.mxu0 0.0
        %7651 = vmatpush1.msra.mxu0 0.0
        %7652 = vmatprep.subr.mxu0 0.0
        %7653 = vmatpush1.msra.mxu0 0.0
        %7654 = vmatprep.mubr.f32.mxu0 0.0
        %v7655 = vand.u32 %v2355, 4294901760
        %7656 = vmatmul.mubr.f32.gmra.mrb[0].mxu0 %v7655
        %v7657 = vpop.f32.mrb[0].mxu0
        %v7658 = vadd.f32 %v7528, %v7657
        %v7659 = vpop.f32.mrb[0].mxu0
        %7660 = vmatprep.mubr.f32.mxu0 0.0
        %v7661 = vand.u32 %v2357, 4294901760
        %7662 = vmatmul.mubr.f32.gmra.mrb[0].mxu0 %v7661
        %v7663 = vpop.f32.mrb[0].mxu0
        %v7664 = vadd.f32 %v7536, %v7663
        %v7665 = vpop.f32.mrb[0].mxu0
        %7666 = vmatprep.mubr.f32.mxu0 0.0
        %v7667 = vand.u32 %v2359, 4294901760
        %7668 = vmatmul.mubr.f32.gmra.mrb[0].mxu0 %v7667
        %v7669 = vpop.f32.mrb[0].mxu0
        %v7670 = vadd.f32 %v7544, %v7669
        %v7671 = vpop.f32.mrb[0].mxu0
        %7672 = vmatprep.mubr.f32.mxu0 0.0
        %v7673 = vand.u32 %v2361, 4294901760
        %7674 = vmatmul.mubr.f32.gmra.mrb[0].mxu0 %v7673
        %v7675 = vpop.f32.mrb[0].mxu0
        %v7676 = vadd.f32 %v7552, %v7675
        %v7677 = vpop.f32.mrb[0].mxu0
        %7678 = vmatprep.mubr.f32.mxu0 0.0
        %v7679 = vand.u32 %v2363, 4294901760
        %7680 = vmatmul.mubr.f32.gmra.mrb[0].mxu0 %v7679
        %v7681 = vpop.f32.mrb[0].mxu0
        %v7682 = vadd.f32 %v7560, %v7681
        %v7683 = vpop.f32.mrb[0].mxu0
        %7684 = vmatprep.mubr.f32.mxu0 0.0
        %v7685 = vand.u32 %v2365, 4294901760
        %7686 = vmatmul.mubr.f32.gmra.mrb[0].mxu0 %v7685
        %v7687 = vpop.f32.mrb[0].mxu0
        %v7688 = vadd.f32 %v7568, %v7687
        %v7689 = vpop.f32.mrb[0].mxu0
        %7690 = vmatprep.mubr.f32.mxu0 0.0
        %v7691 = vand.u32 %v2367, 4294901760
        %7692 = vmatmul.mubr.f32.gmra.mrb[0].mxu0 %v7691
        %v7693 = vpop.f32.mrb[0].mxu0
        %v7694 = vadd.f32 %v7576, %v7693
        %v7695 = vpop.f32.mrb[0].mxu0
        %7696 = vmatprep.mubr.f32.mxu0 0.0
        %v7697 = vand.u32 %v7065, 4294901760
        %7698 = vmatmul.mubr.f32.gmra.mrb[0].mxu0 %v7697
        %v7699 = vpop.f32.mrb[0].mxu0
        %v7700 = vadd.f32 %v7584, %v7699
        %v7701 = vpop.f32.mrb[0].mxu0
        %7702 = vdwg.mxu0
        %7703 = vmatprep.subr.mxu0 0.0
        %v7704 = vand.u32 %v7068, 4294901760
        %7705 = vmatpush1.msra.mxu0 %v7704
        %7706 = vmatprep.subr.mxu0 0.0
        %7707 = vmatpush1.msra.mxu0 0.0
        %7708 = vmatprep.subr.mxu0 0.0
        %7709 = vmatpush1.msra.mxu0 0.0
        %7710 = vmatprep.subr.mxu0 0.0
        %7711 = vmatpush1.msra.mxu0 0.0
        %7712 = vmatprep.subr.mxu0 0.0
        %7713 = vmatpush1.msra.mxu0 0.0
        %7714 = vmatprep.subr.mxu0 0.0
        %7715 = vmatpush1.msra.mxu0 0.0
        %7716 = vmatprep.subr.mxu0 0.0
        %7717 = vmatpush1.msra.mxu0 0.0
        %7718 = vmatprep.subr.mxu0 0.0
        %7719 = vmatpush1.msra.mxu0 0.0
        %7720 = vmatprep.subr.mxu0 0.0
        %7721 = vmatpush1.msra.mxu0 0.0
        %7722 = vmatprep.subr.mxu0 0.0
        %7723 = vmatpush1.msra.mxu0 0.0
        %7724 = vmatprep.subr.mxu0 0.0
        %7725 = vmatpush1.msra.mxu0 0.0
        %7726 = vmatprep.subr.mxu0 0.0
        %7727 = vmatpush1.msra.mxu0 0.0
        %7728 = vmatprep.subr.mxu0 0.0
        %7729 = vmatpush1.msra.mxu0 0.0
        %7730 = vmatprep.subr.mxu0 0.0
        %7731 = vmatpush1.msra.mxu0 0.0
        %7732 = vmatprep.subr.mxu0 0.0
        %7733 = vmatpush1.msra.mxu0 0.0
        %7734 = vmatprep.subr.mxu0 0.0
        %7735 = vmatpush1.msra.mxu0 0.0
        %7736 = vmatprep.subr.mxu0 0.0
        %7737 = vmatpush1.msra.mxu0 0.0
        %7738 = vmatprep.subr.mxu0 0.0
        %7739 = vmatpush1.msra.mxu0 0.0
        %7740 = vmatprep.subr.mxu0 0.0
        %7741 = vmatpush1.msra.mxu0 0.0
        %7742 = vmatprep.subr.mxu0 0.0
        %7743 = vmatpush1.msra.mxu0 0.0
        %7744 = vmatprep.subr.mxu0 0.0
        %7745 = vmatpush1.msra.mxu0 0.0
        %7746 = vmatprep.subr.mxu0 0.0
        %7747 = vmatpush1.msra.mxu0 0.0
        %7748 = vmatprep.subr.mxu0 0.0
        %7749 = vmatpush1.msra.mxu0 0.0
        %7750 = vmatprep.subr.mxu0 0.0
        %7751 = vmatpush1.msra.mxu0 0.0
        %7752 = vmatprep.subr.mxu0 0.0
        %7753 = vmatpush1.msra.mxu0 0.0
        %7754 = vmatprep.subr.mxu0 0.0
        %7755 = vmatpush1.msra.mxu0 0.0
        %7756 = vmatprep.subr.mxu0 0.0
        %7757 = vmatpush1.msra.mxu0 0.0
        %7758 = vmatprep.subr.mxu0 0.0
        %7759 = vmatpush1.msra.mxu0 0.0
        %7760 = vmatprep.subr.mxu0 0.0
        %7761 = vmatpush1.msra.mxu0 0.0
        %7762 = vmatprep.subr.mxu0 0.0
        %7763 = vmatpush1.msra.mxu0 0.0
        %7764 = vmatprep.subr.mxu0 0.0
        %7765 = vmatpush1.msra.mxu0 0.0
        %7766 = vmatprep.subr.mxu0 0.0
        %7767 = vmatpush1.msra.mxu0 0.0
        %7768 = vmatprep.mubr.f32.mxu0 0.0
        %v7769 = vand.u32 %v2355, 4294901760
        %7770 = vmatmul.mubr.f32.gmra.mrb[0].mxu0 %v7769
        %v7771 = vpop.f32.mrb[0].mxu0
        %v7772 = vadd.f32 %v7658, %v7771
        %v7773 = vpop.f32.mrb[0].mxu0
        %7774 = vmatprep.mubr.f32.mxu0 0.0
        %v7775 = vand.u32 %v2357, 4294901760
        %7776 = vmatmul.mubr.f32.gmra.mrb[0].mxu0 %v7775
        %v7777 = vpop.f32.mrb[0].mxu0
        %v7778 = vadd.f32 %v7664, %v7777
        %v7779 = vpop.f32.mrb[0].mxu0
        %7780 = vmatprep.mubr.f32.mxu0 0.0
        %v7781 = vand.u32 %v2359, 4294901760
        %7782 = vmatmul.mubr.f32.gmra.mrb[0].mxu0 %v7781
        %v7783 = vpop.f32.mrb[0].mxu0
        %v7784 = vadd.f32 %v7670, %v7783
        %v7785 = vpop.f32.mrb[0].mxu0
        %7786 = vmatprep.mubr.f32.mxu0 0.0
        %v7787 = vand.u32 %v2361, 4294901760
        %7788 = vmatmul.mubr.f32.gmra.mrb[0].mxu0 %v7787
        %v7789 = vpop.f32.mrb[0].mxu0
        %v7790 = vadd.f32 %v7676, %v7789
        %v7791 = vpop.f32.mrb[0].mxu0
        %7792 = vmatprep.mubr.f32.mxu0 0.0
        %v7793 = vand.u32 %v2363, 4294901760
        %7794 = vmatmul.mubr.f32.gmra.mrb[0].mxu0 %v7793
        %v7795 = vpop.f32.mrb[0].mxu0
        %v7796 = vadd.f32 %v7682, %v7795
        %v7797 = vpop.f32.mrb[0].mxu0
        %7798 = vmatprep.mubr.f32.mxu0 0.0
        %v7799 = vand.u32 %v2365, 4294901760
        %7800 = vmatmul.mubr.f32.gmra.mrb[0].mxu0 %v7799
        %v7801 = vpop.f32.mrb[0].mxu0
        %v7802 = vadd.f32 %v7688, %v7801
        %v7803 = vpop.f32.mrb[0].mxu0
        %7804 = vmatprep.mubr.f32.mxu0 0.0
        %v7805 = vand.u32 %v2367, 4294901760
        %7806 = vmatmul.mubr.f32.gmra.mrb[0].mxu0 %v7805
        %v7807 = vpop.f32.mrb[0].mxu0
        %v7808 = vadd.f32 %v7694, %v7807
        %v7809 = vpop.f32.mrb[0].mxu0
        %7810 = vmatprep.mubr.f32.mxu0 0.0
        %v7811 = vand.u32 %v7065, 4294901760
        %7812 = vmatmul.mubr.f32.gmra.mrb[0].mxu0 %v7811
        %v7813 = vpop.f32.mrb[0].mxu0
        %v7814 = vadd.f32 %v7700, %v7813
        %v7815 = vpop.f32.mrb[0].mxu0
        %7816 = vdwg.mxu0
        %v7817 = vadd.f32 %v7051, %v7772
        %v7818 = vadd.f32 %v7052, %v7778
        %v7819 = vadd.f32 %v7053, %v7784
        %v7820 = vadd.f32 %v7054, %v7790
        %v7821 = vadd.f32 %v7055, %v7796
        %v7822 = vadd.f32 %v7056, %v7802
        %v7823 = vadd.f32 %v7057, %v7808
        %v7824 = vadd.f32 %v7058, %v7814
        %v7825 = vld [vmem:[%s726] sm:$0x1]
        %v7827 = vlaneseq
        %v7828 = vshrl.u32 %v7827, 7
        %v7829 = vsub.s32 0, %v7828
        %v7830 = vrot.slane %v7825, %v7829
        %v7832 = vadd.f32 %v7817, %v7830
        %v7833 = vadd.f32 %v7818, %v7830
        %v7834 = vadd.f32 %v7819, %v7830
        %v7835 = vadd.f32 %v7820, %v7830
        %v7836 = vadd.f32 %v7821, %v7830
        %v7837 = vadd.f32 %v7822, %v7830
        %v7838 = vadd.f32 %v7823, %v7830
        %v7839 = vadd.f32 %v7824, %v7830
        %7840 = vst [vmem:[%s738] sm:$0xff] %v7832
        %7841 = vst [vmem:[%s738 + $0x8] sm:$0xff] %v7833
        %7842 = vst [vmem:[%s738 + $0x10] sm:$0xff] %v7834
        %7843 = vst [vmem:[%s738 + $0x18] sm:$0xff] %v7835
        %7844 = vst [vmem:[%s738 + $0x20] sm:$0xff] %v7836
        %7845 = vst [vmem:[%s738 + $0x28] sm:$0xff] %v7837
        %7846 = vst [vmem:[%s738 + $0x30] sm:$0xff] %v7838
        %7847 = vst [vmem:[%s738 + $0x38] sm:$0xff] %v7839
        %s7848 = smul.u32 8, %s21
        %p7849 = scmp.lt.s32.totalorder %s20, 1
        %s7850 = scalar_select %p7849, %s20, 1
        %p7851 = scmp.lt.s32.totalorder %s7848, 7
        %s7852 = scalar_select %p7851, %s7848, 7
        %p7853 = scmp.lt.s32.totalorder %s22, 0
        %s7854 = scalar_select %p7853, %s22, 0
        %s7855 = sadd.s32 %s7854, %s7852
        %s7856 = smul.addr %s7850, 8
        %s7857 = sadd.s32 %s7855, %s7856
        %s7858 = smul.addr %s7857, 8
        %s7859 = scalar_lea.vmem %s4, %s7858
        // Predicated region
        $region127: #{downsample_forward.1} parent=117 // pred_check
          %p7860 = pneg %p170
        $region128: #{downsample_forward.1} parent=117 // pred_check_branch
          %7862 = sbr.rel (%p7860) target = $region130
        $region129: #{downsample_forward.1} parent=117 // pred_region
          %s7863 = smul.u32 8, %s21
        $region130: #{downsample_forward.1} parent=117 // pred_fallthru
          _
      $region118: #{downsample_forward.1} parent=5 // pred_fallthru
        _
      %p7864 = scmp.le.s32.totalorder 2, %s10
      // Predicated region
      $region131: #{downsample_forward.1} parent=5 // pred_check
        %p7865 = pneg %p7864
      $region132: #{downsample_forward.1} parent=5 // pred_check_branch
        %7867 = sbr.rel (%p7865) target = $region134
      $region133: #{downsample_forward.1} parent=5 // pred_region
        %s7868 = ssub.s32 %s10, 2
        // Predicated region
        $region135: #{downsample_forward.1} parent=133 // pred_check
          %p7869 = pneg %p176
        $region136: #{downsample_forward.1} parent=133 // pred_check_branch
          %7871 = sbr.rel (%p7869) target = $region138
        $region137: #{downsample_forward.1} parent=133 // pred_region
          %s7872 = smul.u32 8, %s24
          %p7873 = scmp.lt.s32.totalorder %s23, 1
          %s7874 = scalar_select %p7873, %s23, 1
          %p7875 = scmp.lt.s32.totalorder %s7872, 7
          %s7876 = scalar_select %p7875, %s7872, 7
          %p7877 = scmp.lt.s32.totalorder %s25, 0
          %s7878 = scalar_select %p7877, %s25, 0
          %s7879 = sadd.s32 %s7878, %s7876
          %s7880 = smul.addr %s7874, 8
          %s7881 = sadd.s32 %s7879, %s7880
          %s7882 = smul.addr %s7881, 8
          %s7883 = scalar_lea.vmem %s4, %s7882
        $region138: #{downsample_forward.1} parent=133 // pred_fallthru
          _
      $region134: #{downsample_forward.1} parent=5 // pred_fallthru
        _
    $region6: #{downsample_forward.1} parent=1 // loop_footer
      %s14 = sadd.s32 1, %s10
    $region7: #{downsample_forward.1} parent=1 // loop_footer_branch
      %9 = sbr.rel target = $region3
    $region8: #{downsample_forward.1} parent=1 // loop_exit
      _

</llo_original>
